<compile_context>
chip_gen: v7x
topology: tpu7x:2x2x1
jax: 0.10.0
libtpu: 0.0.40
codegen_flags: <defaults>
</compile_context>

<pallas_src>
import functools

import jax
import jax.numpy as jnp
from jax.experimental import pallas as pl
from jax.experimental.pallas import tpu as pltpu


def feature_attention_kernel(x_ref, w1t_ref, w2t_ref, lin_b_ref, a_ref,
                             bias_ref, o_ref, *, alpha, flatten_out):
    # x_ref    : (TB, W, K)   native (batch, window, nodes) layout
    # w1t_ref  : (W, E)       lin weight, first input half, transposed for x @ W^T
    # w2t_ref  : (W, E)       lin weight, second input half, transposed
    # lin_b_ref: (1, E)       lin bias
    # a_ref    : (1, E)       attention vector a (squeezed)
    # bias_ref : (K, K)       attention bias matrix
    # o_ref    : (TB, W*K) if flatten_out else (TB, W, K)
    x = x_ref[...]
    tb, win, k = x.shape
    emb = w1t_ref.shape[1]

    # Node-major view via one XLU transpose (free slot); leading-dim merge to a 2-D operand.
    xk = jnp.transpose(x, (0, 2, 1))                                   # (TB, K, W)
    x2d = xk.reshape(tb * k, win)                                      # (TB*K, W)

    # Projections: two canonical 2-D MXU matmuls sharing one operand.
    p = jnp.dot(x2d, w1t_ref[...], preferred_element_type=jnp.float32)  # (TB*K, E)
    q = jnp.dot(x2d, w2t_ref[...], preferred_element_type=jnp.float32)
    q = q + lin_b_ref[...]
    p3 = p.reshape(tb, k, emb)                                         # (TB, K, E)
    q3 = q.reshape(tb, k, emb)                                         # (TB, K, E)

    # GATv2 pairwise logits: lin([x_i ; x_j]) == x_i @ W1^T + x_j @ W2^T + b.
    s = p3[:, :, None, :] + q3[:, None, :, :]                          # (TB, K, K, E)
    s = jnp.where(s > 0, s, alpha * s)                                 # LeakyReLU
    e_log = jnp.sum(s * a_ref[...][None, None, :, :], axis=-1)         # (TB, K, K)
    e_log = e_log + bias_ref[...][None, :, :]

    # Row softmax (max-stabilized), exact normalization.
    m = jnp.max(e_log, axis=-1, keepdims=True)
    ex = jnp.exp(e_log - m)
    attn = ex / jnp.sum(ex, axis=-1, keepdims=True)

    # Dropout(train=False) is the identity (eval mode): nothing to do.
    # Final product directly in output layout: h[b,w,i] = sum_j x[b,w,j] * attn[b,i,j].
    h = jnp.einsum('bwj,bij->bwi', x, attn, preferred_element_type=jnp.float32)  # (TB, W, K)
    out = 1.0 / (1.0 + jnp.exp(-h))                                    # exact sigmoid
    if flatten_out:
        out = out.reshape(tb, win * k)                                 # lane-dense slab
    o_ref[...] = out.astype(o_ref.dtype)


def _tpu_config():
    """Returns (tensorcores_per_chip, vmem_budget_bytes, vmem_limit_bytes_or_None)."""
    try:
        kind = jax.devices()[0].device_kind.lower()
    except Exception:
        kind = ""
    if "v7" in kind or "7x" in kind:
        # 2 TCs, only 64 MiB physical VMEM: stay well under the 32 MiB scoped default.
        return 2, 20 * 2**20, None
    if "v5" in kind or "v6" in kind:
        # Single TC, 128 MiB physical VMEM: raise the scoped limit and use a big budget.
        return 1, 72 * 2**20, 100 * 2**20
    return 1, 16 * 2**20, None


def _pick_batch_tile(batch, win, n_nodes, emb, *, n_cores=1,
                     vmem_budget=16 * 2**20, itemsize=4):
    """Largest batch tile that fits the VMEM budget; grid=1 on single-TC chips,
    even block count preferred on 2-TC (megacore) chips."""
    # Dominant per-batch-element live footprint: a few copies of the (K,K,E) pairwise
    # tensor + double-buffered (W,K) in/out blocks + (K,E) projections.
    per_elem = (3 * n_nodes * n_nodes * emb + 4 * win * n_nodes + 4 * n_nodes * emb) * itemsize
    max_tb = min(batch, max(1, vmem_budget // max(per_elem, 1)))
    divisors = [d for d in range(1, batch + 1) if batch % d == 0 and d <= max_tb]
    if n_cores >= 2 and batch >= 2:
        even = [d for d in divisors if (batch // d) % 2 == 0]
        if even:
            return max(even)
        multi = [d for d in divisors if batch // d >= 2]
        if multi:
            return max(multi)
    return max(divisors)


def feature_attention_layer(x, w1t, w2t, lin_b, a_vec, bias, *, alpha,
                            batch_tile=None, lane_dense_out=None):
    """x: (B, W, K) float32 -> (B, W, K) float32 (same layout as the PyTorch module)."""
    B, W, K = x.shape
    E = w1t.shape[1]
    n_cores, vmem_budget, vmem_limit = _tpu_config()
    tb = (_pick_batch_tile(B, W, K, E, n_cores=n_cores, vmem_budget=vmem_budget)
          if batch_tile is None else batch_tile)
    assert B % tb == 0, "batch tile must divide batch"

    # Lane-dense output only when it keeps the (8,128) block constraint satisfied.
    flatten_ok = (W * K) % 128 == 0 and (tb % 8 == 0 or tb == B)
    flatten_out = flatten_ok if lane_dense_out is None else (lane_dense_out and flatten_ok)

    if flatten_out:
        out_shape = jax.ShapeDtypeStruct((B, W * K), x.dtype)
        out_spec = pl.BlockSpec((tb, W * K), lambda b: (b, 0))
    else:
        out_shape = jax.ShapeDtypeStruct((B, W, K), x.dtype)
        out_spec = pl.BlockSpec((tb, W, K), lambda b: (b, 0, 0))

    cp_kwargs = dict(dimension_semantics=("parallel",))
    if vmem_limit is not None:
        cp_kwargs["vmem_limit_bytes"] = vmem_limit

    kernel = functools.partial(feature_attention_kernel, alpha=alpha,
                               flatten_out=flatten_out)
    out = pl.pallas_call(
        kernel,
        out_shape=out_shape,
        grid_spec=pltpu.PrefetchScalarGridSpec(
            num_scalar_prefetch=0,
            grid=(B // tb,),
            in_specs=[
                pl.BlockSpec((tb, W, K), lambda b: (b, 0, 0)),   # x (native layout)
                pl.BlockSpec((W, E), lambda b: (0, 0)),          # W1^T (grid-invariant)
                pl.BlockSpec((W, E), lambda b: (0, 0)),          # W2^T
                pl.BlockSpec((1, E), lambda b: (0, 0)),          # lin bias
                pl.BlockSpec((1, E), lambda b: (0, 0)),          # a vector
                pl.BlockSpec((K, K), lambda b: (0, 0)),          # attention bias
            ],
            out_specs=out_spec,
        ),
        compiler_params=pltpu.CompilerParams(**cp_kwargs),
    )(x, w1t, w2t, lin_b, a_vec, bias)

    if flatten_out:
        out = out.reshape(B, W, K)   # row-major HBM reshape, free
    return out


def _reference(x, w1t, w2t, lin_b, a_vec, bias, alpha):
    """Pure-JAX reference mirroring the PyTorch forward (GATv2, use_bias=True, eval)."""
    xk = jnp.transpose(x, (0, 2, 1))                           # (B, K, W)
    p = xk @ w1t                                               # (B, K, E)
    q = xk @ w2t + lin_b                                       # (B, K, E)
    s = p[:, :, None, :] + q[:, None, :, :]                    # (B, K, K, E)
    s = jnp.where(s > 0, s, alpha * s)
    e = jnp.sum(s * a_vec[None, None, :, :], axis=-1) + bias   # (B, K, K)
    attn = jax.nn.softmax(e, axis=-1)
    h = jax.nn.sigmoid(attn @ xk)                              # (B, K, W)
    return jnp.transpose(h, (0, 2, 1))                         # (B, W, K)


if __name__ == "__main__":
    # Module hyper-parameters (small, consistent with the PyTorch __init__):
    n_features = 8        # K : number of nodes
    window_size = 16      # W : sequence length  (W*K = 128 -> lane-dense output slab)
    alpha = 0.2           # LeakyReLU negative slope
    embed_dim = 2 * window_size   # GATv2 doubles embed_dim -> E = 32
    B = 8                 # batch

    key = jax.random.PRNGKey(0)
    kx, kw, kb_lin, ka, kb = jax.random.split(key, 5)

    # Deterministic parameter init (shapes from the module's __init__):
    #   lin: Linear(2*W -> E), a: (E, 1) xavier_uniform(gain=1.414), bias: (K, K)
    lin_in, lin_out = 2 * window_size, embed_dim
    w_bound = (6.0 / (lin_in + lin_out)) ** 0.5
    lin_weight = jax.random.uniform(kw, (lin_out, lin_in), jnp.float32,
                                    -w_bound, w_bound)          # (E, 2W)
    b_bound = 1.0 / (lin_in ** 0.5)
    lin_bias = jax.random.uniform(kb_lin, (1, lin_out), jnp.float32,
                                  -b_bound, b_bound)            # (1, E)
    a_bound = 1.414 * (6.0 / (embed_dim + 1)) ** 0.5
    a_vec = jax.random.uniform(ka, (1, embed_dim), jnp.float32,
                               -a_bound, a_bound)               # (1, E)
    # The module initializes bias to zeros; use a small random value here so the
    # bias-add path is actually exercised by the correctness check.
    bias = 0.1 * jax.random.normal(kb, (n_features, n_features), jnp.float32)

    # Split lin weight for the decomposed concat-matmul (and transpose for x @ W^T).
    w1t = lin_weight[:, :window_size].T                         # (W, E)
    w2t = lin_weight[:, window_size:].T                         # (W, E)

    # Input matching the PyTorch forward: (batch, window_size, n_features).
    x = jax.random.normal(kx, (B, window_size, n_features), jnp.float32)

    try:
        out = jax.block_until_ready(
            feature_attention_layer(x, w1t, w2t, lin_bias, a_vec, bias, alpha=alpha))
    except Exception:
        # Fallback: disable the lane-dense output slab in case this Mosaic version rejects
        # the in-kernel (W,K)->(W*K) minor-dim merge reshape.
        out = jax.block_until_ready(
            feature_attention_layer(x, w1t, w2t, lin_bias, a_vec, bias, alpha=alpha,
                                    lane_dense_out=False))

    ref = _reference(x, w1t, w2t, lin_bias, a_vec, bias, alpha)
    assert out.shape == (B, window_size, n_features)
    # Tolerance leaves headroom for MXU default-precision (bf16-operand) f32 matmuls
    # differing slightly from XLA's reference dots; all elementwise math is exact.
    assert jnp.allclose(out, ref, rtol=5e-3, atol=5e-3), "mismatch vs JAX reference"

    print("KERNEL_OK")
</pallas_src>

<mosaic_0001>
module attributes {stable_mosaic.version = 11 : i64} {
  func.func @feature_attention_kernel(%arg0: i32, %arg1: memref<8x16x8xf32, #tpu.memory_space<vmem>>, %arg2: memref<16x32xf32, #tpu.memory_space<vmem>>, %arg3: memref<16x32xf32, #tpu.memory_space<vmem>>, %arg4: memref<1x32xf32, #tpu.memory_space<vmem>>, %arg5: memref<1x32xf32, #tpu.memory_space<vmem>>, %arg6: memref<8x8xf32, #tpu.memory_space<vmem>>, %arg7: memref<8x128xf32, #tpu.memory_space<vmem>>) attributes {dimension_semantics = [#tpu.dimension_semantics<parallel>], iteration_bounds = array<i64: 1>, scalar_prefetch = 0 : i64, scratch_operands = 0 : i64, tpu.core_type = #tpu.core_type<tc>, window_params = [{transform_indices = @transform_0, window_bounds = array<i64: 8, 16, 8>}, {pipeline_mode = #tpu.pipeline_mode<synchronous>, transform_indices = @transform_1, window_bounds = array<i64: 16, 32>}, {pipeline_mode = #tpu.pipeline_mode<synchronous>, transform_indices = @transform_2, window_bounds = array<i64: 16, 32>}, {pipeline_mode = #tpu.pipeline_mode<synchronous>, transform_indices = @transform_3, window_bounds = array<i64: 1, 32>}, {pipeline_mode = #tpu.pipeline_mode<synchronous>, transform_indices = @transform_4, window_bounds = array<i64: 1, 32>}, {pipeline_mode = #tpu.pipeline_mode<synchronous>, transform_indices = @transform_5, window_bounds = array<i64: 8, 8>}, {transform_indices = @transform_6, window_bounds = array<i64: 8, 128>}]} {
    %c0 = arith.constant 0 : index
    %c0_0 = arith.constant 0 : index
    %c0_1 = arith.constant 0 : index
    %0 = vector.load %arg1[%c0, %c0_0, %c0_1] : memref<8x16x8xf32, #tpu.memory_space<vmem>>, vector<8x16x8xf32>
    %1 = tpu.transpose %0, [0, 2, 1] : vector<8x16x8xf32> -> vector<8x8x16xf32>
    %2 = vector.shape_cast %1 : vector<8x8x16xf32> to vector<64x16xf32>
    %c0_2 = arith.constant 0 : index
    %c0_3 = arith.constant 0 : index
    %3 = vector.load %arg2[%c0_2, %c0_3] : memref<16x32xf32, #tpu.memory_space<vmem>>, vector<16x32xf32>
    %cst = arith.constant dense<0.000000e+00> : vector<64x32xf32>
    %4 = tpu.matmul %2, %3, %cst {dimension_numbers = #tpu.dot_dimension_numbers<[1], [0], [0], [1], [0, 0, 1, 1], [], []>} : vector<64x16xf32>, vector<16x32xf32>, vector<64x32xf32> -> vector<64x32xf32>
    %c0_4 = arith.constant 0 : index
    %c0_5 = arith.constant 0 : index
    %5 = vector.load %arg3[%c0_4, %c0_5] : memref<16x32xf32, #tpu.memory_space<vmem>>, vector<16x32xf32>
    %cst_6 = arith.constant dense<0.000000e+00> : vector<64x32xf32>
    %6 = tpu.matmul %2, %5, %cst_6 {dimension_numbers = #tpu.dot_dimension_numbers<[1], [0], [0], [1], [0, 0, 1, 1], [], []>} : vector<64x16xf32>, vector<16x32xf32>, vector<64x32xf32> -> vector<64x32xf32>
    %c0_7 = arith.constant 0 : index
    %c0_8 = arith.constant 0 : index
    %7 = vector.load %arg4[%c0_7, %c0_8] : memref<1x32xf32, #tpu.memory_space<vmem>>, vector<1x32xf32>
    %8 = vector.broadcast %7 : vector<1x32xf32> to vector<64x32xf32>
    %9 = arith.addf %6, %8 : vector<64x32xf32>
    %10 = vector.shape_cast %4 : vector<64x32xf32> to vector<8x8x32xf32>
    %11 = vector.shape_cast %9 : vector<64x32xf32> to vector<8x8x32xf32>
    %12 = vector.shape_cast %10 : vector<8x8x32xf32> to vector<8x8x1x32xf32>
    %13 = vector.shape_cast %11 : vector<8x8x32xf32> to vector<8x1x8x32xf32>
    %14 = vector.broadcast %12 : vector<8x8x1x32xf32> to vector<8x8x8x32xf32>
    %15 = vector.broadcast %13 : vector<8x1x8x32xf32> to vector<8x8x8x32xf32>
    %16 = arith.addf %14, %15 : vector<8x8x8x32xf32>
    %cst_9 = arith.constant 0.000000e+00 : f32
    %17 = vector.broadcast %cst_9 : f32 to vector<8x8x8x32xf32>
    %18 = arith.cmpf ogt, %16, %17 : vector<8x8x8x32xf32>
    %cst_10 = arith.constant 2.000000e-01 : f32
    %19 = vector.broadcast %cst_10 : f32 to vector<8x8x8x32xf32>
    %20 = arith.mulf %19, %16 : vector<8x8x8x32xf32>
    %21 = arith.select %18, %16, %20 : vector<8x8x8x32xi1>, vector<8x8x8x32xf32>
    %c0_11 = arith.constant 0 : index
    %c0_12 = arith.constant 0 : index
    %22 = vector.load %arg5[%c0_11, %c0_12] : memref<1x32xf32, #tpu.memory_space<vmem>>, vector<1x32xf32>
    %23 = vector.shape_cast %22 : vector<1x32xf32> to vector<1x1x1x32xf32>
    %24 = vector.broadcast %23 : vector<1x1x1x32xf32> to vector<8x8x8x32xf32>
    %25 = arith.mulf %21, %24 : vector<8x8x8x32xf32>
    %cst_13 = arith.constant dense<0.000000e+00> : vector<8x8x8xf32>
    %26 = vector.multi_reduction <add>, %25, %cst_13 [3] : vector<8x8x8x32xf32> to vector<8x8x8xf32>
    %c0_14 = arith.constant 0 : index
    %c0_15 = arith.constant 0 : index
    %27 = vector.load %arg6[%c0_14, %c0_15] : memref<8x8xf32, #tpu.memory_space<vmem>>, vector<8x8xf32>
    %28 = vector.shape_cast %27 : vector<8x8xf32> to vector<1x8x8xf32>
    %29 = vector.broadcast %28 : vector<1x8x8xf32> to vector<8x8x8xf32>
    %30 = arith.addf %26, %29 : vector<8x8x8xf32>
    %cst_16 = arith.constant dense<0xFF800000> : vector<8x8xf32>
    %31 = vector.multi_reduction <maximumf>, %30, %cst_16 [2] : vector<8x8x8xf32> to vector<8x8xf32>
    %32 = vector.shape_cast %31 : vector<8x8xf32> to vector<8x8x1xf32>
    %33 = vector.broadcast %32 : vector<8x8x1xf32> to vector<8x8x8xf32>
    %34 = arith.subf %30, %33 : vector<8x8x8xf32>
    %35 = math.exp %34 : vector<8x8x8xf32>
    %cst_17 = arith.constant dense<0.000000e+00> : vector<8x8xf32>
    %36 = vector.multi_reduction <add>, %35, %cst_17 [2] : vector<8x8x8xf32> to vector<8x8xf32>
    %37 = vector.shape_cast %36 : vector<8x8xf32> to vector<8x8x1xf32>
    %38 = vector.broadcast %37 : vector<8x8x1xf32> to vector<8x8x8xf32>
    %39 = arith.divf %35, %38 : vector<8x8x8xf32>
    "tpu.trace_start"() <{level = 10 : i32, message = "bwj,bij->bwi"}> : () -> ()
    %cst_18 = arith.constant dense<0.000000e+00> : vector<8x16x8xf32>
    %40 = tpu.matmul %0, %39, %cst_18 {dimension_numbers = #tpu.dot_dimension_numbers<[2], [2], [1], [1], [0, 0, 0, 1, 1, 1], [0], [0]>} : vector<8x16x8xf32>, vector<8x8x8xf32>, vector<8x16x8xf32> -> vector<8x16x8xf32>
    "tpu.trace_stop"() : () -> ()
    %cst_19 = arith.constant 0.000000e+00 : f32
    %41 = vector.broadcast %cst_19 : f32 to vector<8x16x8xf32>
    %42 = arith.subf %41, %40 : vector<8x16x8xf32>
    %43 = math.exp %42 : vector<8x16x8xf32>
    %cst_20 = arith.constant 1.000000e+00 : f32
    %44 = vector.broadcast %cst_20 : f32 to vector<8x16x8xf32>
    %45 = arith.addf %44, %43 : vector<8x16x8xf32>
    %cst_21 = arith.constant 1.000000e+00 : f32
    %46 = vector.broadcast %cst_21 : f32 to vector<8x16x8xf32>
    %47 = arith.divf %46, %45 : vector<8x16x8xf32>
    %48 = vector.shape_cast %47 : vector<8x16x8xf32> to vector<8x128xf32>
    %c0_22 = arith.constant 0 : index
    %c0_23 = arith.constant 0 : index
    %49 = vector.load %arg7[%c0_22, %c0_23] : memref<8x128xf32, #tpu.memory_space<vmem>>, vector<8x128xf32>
    tpu.vector_store %arg7[%c0_22, %c0_23], %48 {strides = array<i32>} : memref<8x128xf32, #tpu.memory_space<vmem>>, vector<8x128xf32>,
    return
  }
  func.func @transform_0(%arg0: i32) -> (i32, i32, i32) {
    %c0_i32 = arith.constant 0 : i32
    %c0_i32_0 = arith.constant 0 : i32
    %c0_i32_1 = arith.constant 0 : i32
    return %arg0, %c0_i32, %c0_i32_0 : i32, i32, i32
  }
  func.func @transform_1(%arg0: i32) -> (i32, i32) {
    %c0_i32 = arith.constant 0 : i32
    %c0_i32_0 = arith.constant 0 : i32
    %c0_i32_1 = arith.constant 0 : i32
    return %c0_i32, %c0_i32_0 : i32, i32
  }
  func.func @transform_2(%arg0: i32) -> (i32, i32) {
    %c0_i32 = arith.constant 0 : i32
    %c0_i32_0 = arith.constant 0 : i32
    %c0_i32_1 = arith.constant 0 : i32
    return %c0_i32, %c0_i32_0 : i32, i32
  }
  func.func @transform_3(%arg0: i32) -> (i32, i32) {
    %c0_i32 = arith.constant 0 : i32
    %c0_i32_0 = arith.constant 0 : i32
    %c0_i32_1 = arith.constant 0 : i32
    return %c0_i32, %c0_i32_0 : i32, i32
  }
  func.func @transform_4(%arg0: i32) -> (i32, i32) {
    %c0_i32 = arith.constant 0 : i32
    %c0_i32_0 = arith.constant 0 : i32
    %c0_i32_1 = arith.constant 0 : i32
    return %c0_i32, %c0_i32_0 : i32, i32
  }
  func.func @transform_5(%arg0: i32) -> (i32, i32) {
    %c0_i32 = arith.constant 0 : i32
    %c0_i32_0 = arith.constant 0 : i32
    %c0_i32_1 = arith.constant 0 : i32
    return %c0_i32, %c0_i32_0 : i32, i32
  }
  func.func @transform_6(%arg0: i32) -> (i32, i32) {
    %c0_i32 = arith.constant 0 : i32
    %c0_i32_0 = arith.constant 0 : i32
    return %arg0, %c0_i32 : i32, i32
  }
}

module attributes {stable_mosaic.version = 11 : i64} {
  func.func @feature_attention_kernel(%arg0: i32, %arg1: memref<8x16x8xf32, #tpu.memory_space<vmem>>, %arg2: memref<16x32xf32, #tpu.memory_space<vmem>>, %arg3: memref<16x32xf32, #tpu.memory_space<vmem>>, %arg4: memref<1x32xf32, #tpu.memory_space<vmem>>, %arg5: memref<1x32xf32, #tpu.memory_space<vmem>>, %arg6: memref<8x8xf32, #tpu.memory_space<vmem>>, %arg7: memref<8x16x8xf32, #tpu.memory_space<vmem>>) attributes {dimension_semantics = [#tpu.dimension_semantics<parallel>], iteration_bounds = array<i64: 1>, scalar_prefetch = 0 : i64, scratch_operands = 0 : i64, tpu.core_type = #tpu.core_type<tc>, window_params = [{transform_indices = @transform_0, window_bounds = array<i64: 8, 16, 8>}, {pipeline_mode = #tpu.pipeline_mode<synchronous>, transform_indices = @transform_1, window_bounds = array<i64: 16, 32>}, {pipeline_mode = #tpu.pipeline_mode<synchronous>, transform_indices = @transform_2, window_bounds = array<i64: 16, 32>}, {pipeline_mode = #tpu.pipeline_mode<synchronous>, transform_indices = @transform_3, window_bounds = array<i64: 1, 32>}, {pipeline_mode = #tpu.pipeline_mode<synchronous>, transform_indices = @transform_4, window_bounds = array<i64: 1, 32>}, {pipeline_mode = #tpu.pipeline_mode<synchronous>, transform_indices = @transform_5, window_bounds = array<i64: 8, 8>}, {transform_indices = @transform_6, window_bounds = array<i64: 8, 16, 8>}]} {
    %c0 = arith.constant 0 : index
    %c0_0 = arith.constant 0 : index
    %c0_1 = arith.constant 0 : index
    %0 = vector.load %arg1[%c0, %c0_0, %c0_1] : memref<8x16x8xf32, #tpu.memory_space<vmem>>, vector<8x16x8xf32>
    %1 = tpu.transpose %0, [0, 2, 1] : vector<8x16x8xf32> -> vector<8x8x16xf32>
    %2 = vector.shape_cast %1 : vector<8x8x16xf32> to vector<64x16xf32>
    %c0_2 = arith.constant 0 : index
    %c0_3 = arith.constant 0 : index
    %3 = vector.load %arg2[%c0_2, %c0_3] : memref<16x32xf32, #tpu.memory_space<vmem>>, vector<16x32xf32>
    %cst = arith.constant dense<0.000000e+00> : vector<64x32xf32>
    %4 = tpu.matmul %2, %3, %cst {dimension_numbers = #tpu.dot_dimension_numbers<[1], [0], [0], [1], [0, 0, 1, 1], [], []>} : vector<64x16xf32>, vector<16x32xf32>, vector<64x32xf32> -> vector<64x32xf32>
    %c0_4 = arith.constant 0 : index
    %c0_5 = arith.constant 0 : index
    %5 = vector.load %arg3[%c0_4, %c0_5] : memref<16x32xf32, #tpu.memory_space<vmem>>, vector<16x32xf32>
    %cst_6 = arith.constant dense<0.000000e+00> : vector<64x32xf32>
    %6 = tpu.matmul %2, %5, %cst_6 {dimension_numbers = #tpu.dot_dimension_numbers<[1], [0], [0], [1], [0, 0, 1, 1], [], []>} : vector<64x16xf32>, vector<16x32xf32>, vector<64x32xf32> -> vector<64x32xf32>
    %c0_7 = arith.constant 0 : index
    %c0_8 = arith.constant 0 : index
    %7 = vector.load %arg4[%c0_7, %c0_8] : memref<1x32xf32, #tpu.memory_space<vmem>>, vector<1x32xf32>
    %8 = vector.broadcast %7 : vector<1x32xf32> to vector<64x32xf32>
    %9 = arith.addf %6, %8 : vector<64x32xf32>
    %10 = vector.shape_cast %4 : vector<64x32xf32> to vector<8x8x32xf32>
    %11 = vector.shape_cast %9 : vector<64x32xf32> to vector<8x8x32xf32>
    %12 = vector.shape_cast %10 : vector<8x8x32xf32> to vector<8x8x1x32xf32>
    %13 = vector.shape_cast %11 : vector<8x8x32xf32> to vector<8x1x8x32xf32>
    %14 = vector.broadcast %12 : vector<8x8x1x32xf32> to vector<8x8x8x32xf32>
    %15 = vector.broadcast %13 : vector<8x1x8x32xf32> to vector<8x8x8x32xf32>
    %16 = arith.addf %14, %15 : vector<8x8x8x32xf32>
    %cst_9 = arith.constant 0.000000e+00 : f32
    %17 = vector.broadcast %cst_9 : f32 to vector<8x8x8x32xf32>
    %18 = arith.cmpf ogt, %16, %17 : vector<8x8x8x32xf32>
    %cst_10 = arith.constant 2.000000e-01 : f32
    %19 = vector.broadcast %cst_10 : f32 to vector<8x8x8x32xf32>
    %20 = arith.mulf %19, %16 : vector<8x8x8x32xf32>
    %21 = arith.select %18, %16, %20 : vector<8x8x8x32xi1>, vector<8x8x8x32xf32>
    %c0_11 = arith.constant 0 : index
    %c0_12 = arith.constant 0 : index
    %22 = vector.load %arg5[%c0_11, %c0_12] : memref<1x32xf32, #tpu.memory_space<vmem>>, vector<1x32xf32>
    %23 = vector.shape_cast %22 : vector<1x32xf32> to vector<1x1x1x32xf32>
    %24 = vector.broadcast %23 : vector<1x1x1x32xf32> to vector<8x8x8x32xf32>
    %25 = arith.mulf %21, %24 : vector<8x8x8x32xf32>
    %cst_13 = arith.constant dense<0.000000e+00> : vector<8x8x8xf32>
    %26 = vector.multi_reduction <add>, %25, %cst_13 [3] : vector<8x8x8x32xf32> to vector<8x8x8xf32>
    %c0_14 = arith.constant 0 : index
    %c0_15 = arith.constant 0 : index
    %27 = vector.load %arg6[%c0_14, %c0_15] : memref<8x8xf32, #tpu.memory_space<vmem>>, vector<8x8xf32>
    %28 = vector.shape_cast %27 : vector<8x8xf32> to vector<1x8x8xf32>
    %29 = vector.broadcast %28 : vector<1x8x8xf32> to vector<8x8x8xf32>
    %30 = arith.addf %26, %29 : vector<8x8x8xf32>
    %cst_16 = arith.constant dense<0xFF800000> : vector<8x8xf32>
    %31 = vector.multi_reduction <maximumf>, %30, %cst_16 [2] : vector<8x8x8xf32> to vector<8x8xf32>
    %32 = vector.shape_cast %31 : vector<8x8xf32> to vector<8x8x1xf32>
    %33 = vector.broadcast %32 : vector<8x8x1xf32> to vector<8x8x8xf32>
    %34 = arith.subf %30, %33 : vector<8x8x8xf32>
    %35 = math.exp %34 : vector<8x8x8xf32>
    %cst_17 = arith.constant dense<0.000000e+00> : vector<8x8xf32>
    %36 = vector.multi_reduction <add>, %35, %cst_17 [2] : vector<8x8x8xf32> to vector<8x8xf32>
    %37 = vector.shape_cast %36 : vector<8x8xf32> to vector<8x8x1xf32>
    %38 = vector.broadcast %37 : vector<8x8x1xf32> to vector<8x8x8xf32>
    %39 = arith.divf %35, %38 : vector<8x8x8xf32>
    "tpu.trace_start"() <{level = 10 : i32, message = "bwj,bij->bwi"}> : () -> ()
    %cst_18 = arith.constant dense<0.000000e+00> : vector<8x16x8xf32>
    %40 = tpu.matmul %0, %39, %cst_18 {dimension_numbers = #tpu.dot_dimension_numbers<[2], [2], [1], [1], [0, 0, 0, 1, 1, 1], [0], [0]>} : vector<8x16x8xf32>, vector<8x8x8xf32>, vector<8x16x8xf32> -> vector<8x16x8xf32>
    "tpu.trace_stop"() : () -> ()
    %cst_19 = arith.constant 0.000000e+00 : f32
    %41 = vector.broadcast %cst_19 : f32 to vector<8x16x8xf32>
    %42 = arith.subf %41, %40 : vector<8x16x8xf32>
    %43 = math.exp %42 : vector<8x16x8xf32>
    %cst_20 = arith.constant 1.000000e+00 : f32
    %44 = vector.broadcast %cst_20 : f32 to vector<8x16x8xf32>
    %45 = arith.addf %44, %43 : vector<8x16x8xf32>
    %cst_21 = arith.constant 1.000000e+00 : f32
    %46 = vector.broadcast %cst_21 : f32 to vector<8x16x8xf32>
    %47 = arith.divf %46, %45 : vector<8x16x8xf32>
    %c0_22 = arith.constant 0 : index
    %c0_23 = arith.constant 0 : index
    %c0_24 = arith.constant 0 : index
    %48 = vector.load %arg7[%c0_22, %c0_23, %c0_24] : memref<8x16x8xf32, #tpu.memory_space<vmem>>, vector<8x16x8xf32>
    tpu.vector_store %arg7[%c0_22, %c0_23, %c0_24], %47 {strides = array<i32>} : memref<8x16x8xf32, #tpu.memory_space<vmem>>, vector<8x16x8xf32>,
    return
  }
  func.func @transform_0(%arg0: i32) -> (i32, i32, i32) {
    %c0_i32 = arith.constant 0 : i32
    %c0_i32_0 = arith.constant 0 : i32
    %c0_i32_1 = arith.constant 0 : i32
    return %arg0, %c0_i32, %c0_i32_0 : i32, i32, i32
  }
  func.func @transform_1(%arg0: i32) -> (i32, i32) {
    %c0_i32 = arith.constant 0 : i32
    %c0_i32_0 = arith.constant 0 : i32
    %c0_i32_1 = arith.constant 0 : i32
    return %c0_i32, %c0_i32_0 : i32, i32
  }
  func.func @transform_2(%arg0: i32) -> (i32, i32) {
    %c0_i32 = arith.constant 0 : i32
    %c0_i32_0 = arith.constant 0 : i32
    %c0_i32_1 = arith.constant 0 : i32
    return %c0_i32, %c0_i32_0 : i32, i32
  }
  func.func @transform_3(%arg0: i32) -> (i32, i32) {
    %c0_i32 = arith.constant 0 : i32
    %c0_i32_0 = arith.constant 0 : i32
    %c0_i32_1 = arith.constant 0 : i32
    return %c0_i32, %c0_i32_0 : i32, i32
  }
  func.func @transform_4(%arg0: i32) -> (i32, i32) {
    %c0_i32 = arith.constant 0 : i32
    %c0_i32_0 = arith.constant 0 : i32
    %c0_i32_1 = arith.constant 0 : i32
    return %c0_i32, %c0_i32_0 : i32, i32
  }
  func.func @transform_5(%arg0: i32) -> (i32, i32) {
    %c0_i32 = arith.constant 0 : i32
    %c0_i32_0 = arith.constant 0 : i32
    %c0_i32_1 = arith.constant 0 : i32
    return %c0_i32, %c0_i32_0 : i32, i32
  }
  func.func @transform_6(%arg0: i32) -> (i32, i32, i32) {
    %c0_i32 = arith.constant 0 : i32
    %c0_i32_0 = arith.constant 0 : i32
    %c0_i32_1 = arith.constant 0 : i32
    return %arg0, %c0_i32, %c0_i32_0 : i32, i32, i32
  }
}

</mosaic_0001>

<llo_original>
// kernel: tpu_custom_call.1
$region0: #{tpu_custom_call.1}
  #allocation0 [shape = 'u32[]', space=smem, size = 0x4, offset = 0x4, fixed_abs, tag = 'smem constant byte address 0x4 - core index']
  #allocation1 [shape = 'u32[144,128]{1,0:T(1,128)}', space=vmem, size = 0x12000, scoped, tag = 'internal scratch']
  %s0 = inlined_call_operand.vmem [shape: f32[8,16,8], index: 0, kind: input, shape index: {}]
  %s1 = inlined_call_operand.vmem [shape: f32[16,32], index: 1, kind: input, shape index: {}]
  %s2 = inlined_call_operand.vmem [shape: f32[16,32], index: 2, kind: input, shape index: {}]
  %s3 = inlined_call_operand.vmem [shape: f32[1,32], index: 3, kind: input, shape index: {}]
  %s4 = inlined_call_operand.vmem [shape: f32[1,32], index: 4, kind: input, shape index: {}]
  %s5 = inlined_call_operand.vmem [shape: f32[8,8], index: 5, kind: input, shape index: {}]
  %s6 = inlined_call_operand.hbm [shape: f32[8,128], index: 6, kind: output, shape index: {}]
  %s7 = sld [smem:[#allocation0]]
  $region34: #{tpu_custom_call.1} parent=0
    _
  %s9 = ssub.s32 1, %s7
  %s10 = scalar_select 0, %s9, %s7
  $region1: #{tpu_custom_call.1} parent=0
    #allocation2 [shape = 'u8[4096]{0}', space=vmem, size = 0x1000, scoped, tag = 'output window, operand 0, single buffered']
    #allocation3 [shape = 's32[1]{0}', space=sflag, size = 0x4, scoped, tag = 'scoped memory for tpu_custom_call.1']
    %11 = vsyncpa [#allocation3], 0
    // Predicated region
    $region2: #{tpu_custom_call.1} parent=1 // pred_check
      _
    $region3: #{tpu_custom_call.1} parent=1 // pred_check_branch
      %13 = sbr.rel (0) target = $region5
    $region4: #{tpu_custom_call.1} parent=1 // pred_region
      _
    $region5: #{tpu_custom_call.1} parent=1 // pred_fallthru
      _
    // Predicated region
    $region6: #{tpu_custom_call.1} parent=1 // pred_check
      _
    $region7: #{tpu_custom_call.1} parent=1 // pred_check_branch
      %15 = sbr.rel (0) target = $region9
    $region8: #{tpu_custom_call.1} parent=1 // pred_region
      _
    $region9: #{tpu_custom_call.1} parent=1 // pred_fallthru
      _
    // Predicated region
    $region10: #{tpu_custom_call.1} parent=1 // pred_check
      _
    $region11: #{tpu_custom_call.1} parent=1 // pred_check_branch
      %17 = sbr.rel (0) target = $region13
    $region12: #{tpu_custom_call.1} parent=1 // pred_region
      _
    $region13: #{tpu_custom_call.1} parent=1 // pred_fallthru
      _
    // Predicated region
    $region14: #{tpu_custom_call.1} parent=1 // pred_check
      _
    $region15: #{tpu_custom_call.1} parent=1 // pred_check_branch
      %19 = sbr.rel (0) target = $region17
    $region16: #{tpu_custom_call.1} parent=1 // pred_region
      _
    $region17: #{tpu_custom_call.1} parent=1 // pred_fallthru
      _
    // Predicated region
    $region18: #{tpu_custom_call.1} parent=1 // pred_check
      _
    $region19: #{tpu_custom_call.1} parent=1 // pred_check_branch
      %21 = sbr.rel (0) target = $region21
    $region20: #{tpu_custom_call.1} parent=1 // pred_region
      _
    $region21: #{tpu_custom_call.1} parent=1 // pred_fallthru
      _
    // Predicated region
    $region22: #{tpu_custom_call.1} parent=1 // pred_check
      _
    $region23: #{tpu_custom_call.1} parent=1 // pred_check_branch
      %23 = sbr.rel (0) target = $region25
    $region24: #{tpu_custom_call.1} parent=1 // pred_region
      _
    $region25: #{tpu_custom_call.1} parent=1 // pred_fallthru
      _
    %v24 = vld [vmem:[%s0] sm:$0xff]
    %v25 = vld [vmem:[%s0 + $0x8] sm:$0xff]
    %v26 = vld [vmem:[%s0 + $0x10] sm:$0xff]
    %v27 = vld [vmem:[%s0 + $0x18] sm:$0xff]
    %v28 = vld [vmem:[%s0 + $0x20] sm:$0xff]
    %v29 = vld [vmem:[%s0 + $0x28] sm:$0xff]
    %v30 = vld [vmem:[%s0 + $0x30] sm:$0xff]
    %v31 = vld [vmem:[%s0 + $0x38] sm:$0xff]
    %v32 = vld [vmem:[%s0 + $0x40] sm:$0xff]
    %v33 = vld [vmem:[%s0 + $0x48] sm:$0xff]
    %v34 = vld [vmem:[%s0 + $0x50] sm:$0xff]
    %v35 = vld [vmem:[%s0 + $0x58] sm:$0xff]
    %v36 = vld [vmem:[%s0 + $0x60] sm:$0xff]
    %v37 = vld [vmem:[%s0 + $0x68] sm:$0xff]
    %v38 = vld [vmem:[%s0 + $0x70] sm:$0xff]
    %v39 = vld [vmem:[%s0 + $0x78] sm:$0xff]
    %40 = vxpose.xlu0.b32.start [1/16] %v24, 128
    %41 = vxpose.xlu0.b32.cont [2/16] %v25, 128
    %42 = vxpose.xlu0.b32.cont [3/16] 0.0, 128
    %43 = vxpose.xlu0.b32.cont [4/16] 0.0, 128
    %44 = vxpose.xlu0.b32.cont [5/16] 0.0, 128
    %45 = vxpose.xlu0.b32.cont [6/16] 0.0, 128
    %46 = vxpose.xlu0.b32.cont [7/16] 0.0, 128
    %47 = vxpose.xlu0.b32.cont [8/16] 0.0, 128
    %48 = vxpose.xlu0.b32.cont [9/16] 0.0, 128
    %49 = vxpose.xlu0.b32.cont [10/16] 0.0, 128
    %50 = vxpose.xlu0.b32.cont [11/16] 0.0, 128
    %51 = vxpose.xlu0.b32.cont [12/16] 0.0, 128
    %52 = vxpose.xlu0.b32.cont [13/16] 0.0, 128
    %53 = vxpose.xlu0.b32.cont [14/16] 0.0, 128
    %54 = vxpose.xlu0.b32.cont [15/16] 0.0, 128
    %55 = vxpose.xlu0.b32.end [16/16] 0.0, 128
    %v56 = vpop.trf.xlu0
    %v57 = vpop.trf.xlu0
    %v58 = vpop.trf.xlu0
    %v59 = vpop.trf.xlu0
    %v60 = vpop.trf.xlu0
    %v61 = vpop.trf.xlu0
    %v62 = vpop.trf.xlu0
    %v63 = vpop.trf.xlu0
    %v64 = vpop.trf.xlu0
    %v65 = vpop.trf.xlu0
    %v66 = vpop.trf.xlu0
    %v67 = vpop.trf.xlu0
    %v68 = vpop.trf.xlu0
    %v69 = vpop.trf.xlu0
    %v70 = vpop.trf.xlu0
    %v71 = vpop.trf.xlu0
    %72 = vxpose.xlu0.b32.start [1/16] %v26, 128
    %73 = vxpose.xlu0.b32.cont [2/16] %v27, 128
    %74 = vxpose.xlu0.b32.cont [3/16] 0.0, 128
    %75 = vxpose.xlu0.b32.cont [4/16] 0.0, 128
    %76 = vxpose.xlu0.b32.cont [5/16] 0.0, 128
    %77 = vxpose.xlu0.b32.cont [6/16] 0.0, 128
    %78 = vxpose.xlu0.b32.cont [7/16] 0.0, 128
    %79 = vxpose.xlu0.b32.cont [8/16] 0.0, 128
    %80 = vxpose.xlu0.b32.cont [9/16] 0.0, 128
    %81 = vxpose.xlu0.b32.cont [10/16] 0.0, 128
    %82 = vxpose.xlu0.b32.cont [11/16] 0.0, 128
    %83 = vxpose.xlu0.b32.cont [12/16] 0.0, 128
    %84 = vxpose.xlu0.b32.cont [13/16] 0.0, 128
    %85 = vxpose.xlu0.b32.cont [14/16] 0.0, 128
    %86 = vxpose.xlu0.b32.cont [15/16] 0.0, 128
    %87 = vxpose.xlu0.b32.end [16/16] 0.0, 128
    %v88 = vpop.trf.xlu0
    %v89 = vpop.trf.xlu0
    %v90 = vpop.trf.xlu0
    %v91 = vpop.trf.xlu0
    %v92 = vpop.trf.xlu0
    %v93 = vpop.trf.xlu0
    %v94 = vpop.trf.xlu0
    %v95 = vpop.trf.xlu0
    %v96 = vpop.trf.xlu0
    %v97 = vpop.trf.xlu0
    %v98 = vpop.trf.xlu0
    %v99 = vpop.trf.xlu0
    %v100 = vpop.trf.xlu0
    %v101 = vpop.trf.xlu0
    %v102 = vpop.trf.xlu0
    %v103 = vpop.trf.xlu0
    %104 = vxpose.xlu0.b32.start [1/16] %v28, 128
    %105 = vxpose.xlu0.b32.cont [2/16] %v29, 128
    %106 = vxpose.xlu0.b32.cont [3/16] 0.0, 128
    %107 = vxpose.xlu0.b32.cont [4/16] 0.0, 128
    %108 = vxpose.xlu0.b32.cont [5/16] 0.0, 128
    %109 = vxpose.xlu0.b32.cont [6/16] 0.0, 128
    %110 = vxpose.xlu0.b32.cont [7/16] 0.0, 128
    %111 = vxpose.xlu0.b32.cont [8/16] 0.0, 128
    %112 = vxpose.xlu0.b32.cont [9/16] 0.0, 128
    %113 = vxpose.xlu0.b32.cont [10/16] 0.0, 128
    %114 = vxpose.xlu0.b32.cont [11/16] 0.0, 128
    %115 = vxpose.xlu0.b32.cont [12/16] 0.0, 128
    %116 = vxpose.xlu0.b32.cont [13/16] 0.0, 128
    %117 = vxpose.xlu0.b32.cont [14/16] 0.0, 128
    %118 = vxpose.xlu0.b32.cont [15/16] 0.0, 128
    %119 = vxpose.xlu0.b32.end [16/16] 0.0, 128
    %v120 = vpop.trf.xlu0
    %v121 = vpop.trf.xlu0
    %v122 = vpop.trf.xlu0
    %v123 = vpop.trf.xlu0
    %v124 = vpop.trf.xlu0
    %v125 = vpop.trf.xlu0
    %v126 = vpop.trf.xlu0
    %v127 = vpop.trf.xlu0
    %v128 = vpop.trf.xlu0
    %v129 = vpop.trf.xlu0
    %v130 = vpop.trf.xlu0
    %v131 = vpop.trf.xlu0
    %v132 = vpop.trf.xlu0
    %v133 = vpop.trf.xlu0
    %v134 = vpop.trf.xlu0
    %v135 = vpop.trf.xlu0
    %136 = vxpose.xlu0.b32.start [1/16] %v30, 128
    %137 = vxpose.xlu0.b32.cont [2/16] %v31, 128
    %138 = vxpose.xlu0.b32.cont [3/16] 0.0, 128
    %139 = vxpose.xlu0.b32.cont [4/16] 0.0, 128
    %140 = vxpose.xlu0.b32.cont [5/16] 0.0, 128
    %141 = vxpose.xlu0.b32.cont [6/16] 0.0, 128
    %142 = vxpose.xlu0.b32.cont [7/16] 0.0, 128
    %143 = vxpose.xlu0.b32.cont [8/16] 0.0, 128
    %144 = vxpose.xlu0.b32.cont [9/16] 0.0, 128
    %145 = vxpose.xlu0.b32.cont [10/16] 0.0, 128
    %146 = vxpose.xlu0.b32.cont [11/16] 0.0, 128
    %147 = vxpose.xlu0.b32.cont [12/16] 0.0, 128
    %148 = vxpose.xlu0.b32.cont [13/16] 0.0, 128
    %149 = vxpose.xlu0.b32.cont [14/16] 0.0, 128
    %150 = vxpose.xlu0.b32.cont [15/16] 0.0, 128
    %151 = vxpose.xlu0.b32.end [16/16] 0.0, 128
    %v152 = vpop.trf.xlu0
    %v153 = vpop.trf.xlu0
    %v154 = vpop.trf.xlu0
    %v155 = vpop.trf.xlu0
    %v156 = vpop.trf.xlu0
    %v157 = vpop.trf.xlu0
    %v158 = vpop.trf.xlu0
    %v159 = vpop.trf.xlu0
    %v160 = vpop.trf.xlu0
    %v161 = vpop.trf.xlu0
    %v162 = vpop.trf.xlu0
    %v163 = vpop.trf.xlu0
    %v164 = vpop.trf.xlu0
    %v165 = vpop.trf.xlu0
    %v166 = vpop.trf.xlu0
    %v167 = vpop.trf.xlu0
    %168 = vxpose.xlu0.b32.start [1/16] %v32, 128
    %169 = vxpose.xlu0.b32.cont [2/16] %v33, 128
    %170 = vxpose.xlu0.b32.cont [3/16] 0.0, 128
    %171 = vxpose.xlu0.b32.cont [4/16] 0.0, 128
    %172 = vxpose.xlu0.b32.cont [5/16] 0.0, 128
    %173 = vxpose.xlu0.b32.cont [6/16] 0.0, 128
    %174 = vxpose.xlu0.b32.cont [7/16] 0.0, 128
    %175 = vxpose.xlu0.b32.cont [8/16] 0.0, 128
    %176 = vxpose.xlu0.b32.cont [9/16] 0.0, 128
    %177 = vxpose.xlu0.b32.cont [10/16] 0.0, 128
    %178 = vxpose.xlu0.b32.cont [11/16] 0.0, 128
    %179 = vxpose.xlu0.b32.cont [12/16] 0.0, 128
    %180 = vxpose.xlu0.b32.cont [13/16] 0.0, 128
    %181 = vxpose.xlu0.b32.cont [14/16] 0.0, 128
    %182 = vxpose.xlu0.b32.cont [15/16] 0.0, 128
    %183 = vxpose.xlu0.b32.end [16/16] 0.0, 128
    %v184 = vpop.trf.xlu0
    %v185 = vpop.trf.xlu0
    %v186 = vpop.trf.xlu0
    %v187 = vpop.trf.xlu0
    %v188 = vpop.trf.xlu0
    %v189 = vpop.trf.xlu0
    %v190 = vpop.trf.xlu0
    %v191 = vpop.trf.xlu0
    %v192 = vpop.trf.xlu0
    %v193 = vpop.trf.xlu0
    %v194 = vpop.trf.xlu0
    %v195 = vpop.trf.xlu0
    %v196 = vpop.trf.xlu0
    %v197 = vpop.trf.xlu0
    %v198 = vpop.trf.xlu0
    %v199 = vpop.trf.xlu0
    %200 = vxpose.xlu0.b32.start [1/16] %v34, 128
    %201 = vxpose.xlu0.b32.cont [2/16] %v35, 128
    %202 = vxpose.xlu0.b32.cont [3/16] 0.0, 128
    %203 = vxpose.xlu0.b32.cont [4/16] 0.0, 128
    %204 = vxpose.xlu0.b32.cont [5/16] 0.0, 128
    %205 = vxpose.xlu0.b32.cont [6/16] 0.0, 128
    %206 = vxpose.xlu0.b32.cont [7/16] 0.0, 128
    %207 = vxpose.xlu0.b32.cont [8/16] 0.0, 128
    %208 = vxpose.xlu0.b32.cont [9/16] 0.0, 128
    %209 = vxpose.xlu0.b32.cont [10/16] 0.0, 128
    %210 = vxpose.xlu0.b32.cont [11/16] 0.0, 128
    %211 = vxpose.xlu0.b32.cont [12/16] 0.0, 128
    %212 = vxpose.xlu0.b32.cont [13/16] 0.0, 128
    %213 = vxpose.xlu0.b32.cont [14/16] 0.0, 128
    %214 = vxpose.xlu0.b32.cont [15/16] 0.0, 128
    %215 = vxpose.xlu0.b32.end [16/16] 0.0, 128
    %v216 = vpop.trf.xlu0
    %v217 = vpop.trf.xlu0
    %v218 = vpop.trf.xlu0
    %v219 = vpop.trf.xlu0
    %v220 = vpop.trf.xlu0
    %v221 = vpop.trf.xlu0
    %v222 = vpop.trf.xlu0
    %v223 = vpop.trf.xlu0
    %v224 = vpop.trf.xlu0
    %v225 = vpop.trf.xlu0
    %v226 = vpop.trf.xlu0
    %v227 = vpop.trf.xlu0
    %v228 = vpop.trf.xlu0
    %v229 = vpop.trf.xlu0
    %v230 = vpop.trf.xlu0
    %v231 = vpop.trf.xlu0
    %232 = vxpose.xlu0.b32.start [1/16] %v36, 128
    %233 = vxpose.xlu0.b32.cont [2/16] %v37, 128
    %234 = vxpose.xlu0.b32.cont [3/16] 0.0, 128
    %235 = vxpose.xlu0.b32.cont [4/16] 0.0, 128
    %236 = vxpose.xlu0.b32.cont [5/16] 0.0, 128
    %237 = vxpose.xlu0.b32.cont [6/16] 0.0, 128
    %238 = vxpose.xlu0.b32.cont [7/16] 0.0, 128
    %239 = vxpose.xlu0.b32.cont [8/16] 0.0, 128
    %240 = vxpose.xlu0.b32.cont [9/16] 0.0, 128
    %241 = vxpose.xlu0.b32.cont [10/16] 0.0, 128
    %242 = vxpose.xlu0.b32.cont [11/16] 0.0, 128
    %243 = vxpose.xlu0.b32.cont [12/16] 0.0, 128
    %244 = vxpose.xlu0.b32.cont [13/16] 0.0, 128
    %245 = vxpose.xlu0.b32.cont [14/16] 0.0, 128
    %246 = vxpose.xlu0.b32.cont [15/16] 0.0, 128
    %247 = vxpose.xlu0.b32.end [16/16] 0.0, 128
    %v248 = vpop.trf.xlu0
    %v249 = vpop.trf.xlu0
    %v250 = vpop.trf.xlu0
    %v251 = vpop.trf.xlu0
    %v252 = vpop.trf.xlu0
    %v253 = vpop.trf.xlu0
    %v254 = vpop.trf.xlu0
    %v255 = vpop.trf.xlu0
    %v256 = vpop.trf.xlu0
    %v257 = vpop.trf.xlu0
    %v258 = vpop.trf.xlu0
    %v259 = vpop.trf.xlu0
    %v260 = vpop.trf.xlu0
    %v261 = vpop.trf.xlu0
    %v262 = vpop.trf.xlu0
    %v263 = vpop.trf.xlu0
    %264 = vxpose.xlu0.b32.start [1/16] %v38, 128
    %265 = vxpose.xlu0.b32.cont [2/16] %v39, 128
    %266 = vxpose.xlu0.b32.cont [3/16] 0.0, 128
    %267 = vxpose.xlu0.b32.cont [4/16] 0.0, 128
    %268 = vxpose.xlu0.b32.cont [5/16] 0.0, 128
    %269 = vxpose.xlu0.b32.cont [6/16] 0.0, 128
    %270 = vxpose.xlu0.b32.cont [7/16] 0.0, 128
    %271 = vxpose.xlu0.b32.cont [8/16] 0.0, 128
    %272 = vxpose.xlu0.b32.cont [9/16] 0.0, 128
    %273 = vxpose.xlu0.b32.cont [10/16] 0.0, 128
    %274 = vxpose.xlu0.b32.cont [11/16] 0.0, 128
    %275 = vxpose.xlu0.b32.cont [12/16] 0.0, 128
    %276 = vxpose.xlu0.b32.cont [13/16] 0.0, 128
    %277 = vxpose.xlu0.b32.cont [14/16] 0.0, 128
    %278 = vxpose.xlu0.b32.cont [15/16] 0.0, 128
    %279 = vxpose.xlu0.b32.end [16/16] 0.0, 128
    %v280 = vpop.trf.xlu0
    %v281 = vpop.trf.xlu0
    %v282 = vpop.trf.xlu0
    %v283 = vpop.trf.xlu0
    %v284 = vpop.trf.xlu0
    %v285 = vpop.trf.xlu0
    %v286 = vpop.trf.xlu0
    %v287 = vpop.trf.xlu0
    %v288 = vpop.trf.xlu0
    %v289 = vpop.trf.xlu0
    %v290 = vpop.trf.xlu0
    %v291 = vpop.trf.xlu0
    %v292 = vpop.trf.xlu0
    %v293 = vpop.trf.xlu0
    %v294 = vpop.trf.xlu0
    %v295 = vpop.trf.xlu0
    %v296 = vld [vmem:[%s1] sm:$0xff]
    %v297 = vld [vmem:[%s1 + $0x8] sm:$0xff]
    %vm298 = vcmask 130048
    %v300 = vsel %vm298, %v56, 0
    %v303 = vsel %vm298, %v88, 0
    %v306 = vsel %vm298, %v120, 0
    %v309 = vsel %vm298, %v152, 0
    %v312 = vsel %vm298, %v184, 0
    %v315 = vsel %vm298, %v216, 0
    %v318 = vsel %vm298, %v248, 0
    %v321 = vsel %vm298, %v280, 0
    %323 = vmatprep.subr.mxu0 0.0
    %324 = vmatpush1.msra.mxu0 %v296
    %325 = vmatprep.subr.mxu0 0.0
    %326 = vmatpush1.msra.mxu0 %v297
    %327 = vmatprep.subr.mxu0 0.0
    %328 = vmatpush1.msra.mxu0 0.0
    %329 = vmatprep.subr.mxu0 0.0
    %330 = vmatpush1.msra.mxu0 0.0
    %331 = vmatprep.subr.mxu0 0.0
    %332 = vmatpush1.msra.mxu0 0.0
    %333 = vmatprep.subr.mxu0 0.0
    %334 = vmatpush1.msra.mxu0 0.0
    %335 = vmatprep.subr.mxu0 0.0
    %336 = vmatpush1.msra.mxu0 0.0
    %337 = vmatprep.subr.mxu0 0.0
    %338 = vmatpush1.msra.mxu0 0.0
    %339 = vmatprep.subr.mxu0 0.0
    %340 = vmatpush1.msra.mxu0 0.0
    %341 = vmatprep.subr.mxu0 0.0
    %342 = vmatpush1.msra.mxu0 0.0
    %343 = vmatprep.subr.mxu0 0.0
    %344 = vmatpush1.msra.mxu0 0.0
    %345 = vmatprep.subr.mxu0 0.0
    %346 = vmatpush1.msra.mxu0 0.0
    %347 = vmatprep.subr.mxu0 0.0
    %348 = vmatpush1.msra.mxu0 0.0
    %349 = vmatprep.subr.mxu0 0.0
    %350 = vmatpush1.msra.mxu0 0.0
    %351 = vmatprep.subr.mxu0 0.0
    %352 = vmatpush1.msra.mxu0 0.0
    %353 = vmatprep.subr.mxu0 0.0
    %354 = vmatpush1.msra.mxu0 0.0
    %355 = vmatprep.subr.mxu0 0.0
    %356 = vmatpush1.msra.mxu0 0.0
    %357 = vmatprep.subr.mxu0 0.0
    %358 = vmatpush1.msra.mxu0 0.0
    %359 = vmatprep.subr.mxu0 0.0
    %360 = vmatpush1.msra.mxu0 0.0
    %361 = vmatprep.subr.mxu0 0.0
    %362 = vmatpush1.msra.mxu0 0.0
    %363 = vmatprep.subr.mxu0 0.0
    %364 = vmatpush1.msra.mxu0 0.0
    %365 = vmatprep.subr.mxu0 0.0
    %366 = vmatpush1.msra.mxu0 0.0
    %367 = vmatprep.subr.mxu0 0.0
    %368 = vmatpush1.msra.mxu0 0.0
    %369 = vmatprep.subr.mxu0 0.0
    %370 = vmatpush1.msra.mxu0 0.0
    %371 = vmatprep.subr.mxu0 0.0
    %372 = vmatpush1.msra.mxu0 0.0
    %373 = vmatprep.subr.mxu0 0.0
    %374 = vmatpush1.msra.mxu0 0.0
    %375 = vmatprep.subr.mxu0 0.0
    %376 = vmatpush1.msra.mxu0 0.0
    %377 = vmatprep.subr.mxu0 0.0
    %378 = vmatpush1.msra.mxu0 0.0
    %379 = vmatprep.subr.mxu0 0.0
    %380 = vmatpush1.msra.mxu0 0.0
    %381 = vmatprep.subr.mxu0 0.0
    %382 = vmatpush1.msra.mxu0 0.0
    %383 = vmatprep.subr.mxu0 0.0
    %384 = vmatpush1.msra.mxu0 0.0
    %385 = vmatprep.subr.mxu0 0.0
    %386 = vmatpush1.msra.mxu0 0.0
    %387 = vmatprep.mubr.f32.mxu0 0.0
    %388 = vmatmul.mubr.f32.gmra.mrb[0].mxu0 %v300
    %v389 = vpop.f32.mrb[0].mxu0
    %v390 = vadd.f32 0.0, %v389
    %v391 = vpop.f32.mrb[0].mxu0
    %392 = vmatprep.mubr.f32.mxu0 0.0
    %393 = vmatmul.mubr.f32.gmra.mrb[0].mxu0 %v303
    %v394 = vpop.f32.mrb[0].mxu0
    %v395 = vadd.f32 0.0, %v394
    %v396 = vpop.f32.mrb[0].mxu0
    %397 = vmatprep.mubr.f32.mxu0 0.0
    %398 = vmatmul.mubr.f32.gmra.mrb[0].mxu0 %v306
    %v399 = vpop.f32.mrb[0].mxu0
    %v400 = vadd.f32 0.0, %v399
    %v401 = vpop.f32.mrb[0].mxu0
    %402 = vmatprep.mubr.f32.mxu0 0.0
    %403 = vmatmul.mubr.f32.gmra.mrb[0].mxu0 %v309
    %v404 = vpop.f32.mrb[0].mxu0
    %v405 = vadd.f32 0.0, %v404
    %v406 = vpop.f32.mrb[0].mxu0
    %407 = vmatprep.mubr.f32.mxu0 0.0
    %408 = vmatmul.mubr.f32.gmra.mrb[0].mxu0 %v312
    %v409 = vpop.f32.mrb[0].mxu0
    %v410 = vadd.f32 0.0, %v409
    %v411 = vpop.f32.mrb[0].mxu0
    %412 = vmatprep.mubr.f32.mxu0 0.0
    %413 = vmatmul.mubr.f32.gmra.mrb[0].mxu0 %v315
    %v414 = vpop.f32.mrb[0].mxu0
    %v415 = vadd.f32 0.0, %v414
    %v416 = vpop.f32.mrb[0].mxu0
    %417 = vmatprep.mubr.f32.mxu0 0.0
    %418 = vmatmul.mubr.f32.gmra.mrb[0].mxu0 %v318
    %v419 = vpop.f32.mrb[0].mxu0
    %v420 = vadd.f32 0.0, %v419
    %v421 = vpop.f32.mrb[0].mxu0
    %422 = vmatprep.mubr.f32.mxu0 0.0
    %423 = vmatmul.mubr.f32.gmra.mrb[0].mxu0 %v321
    %v424 = vpop.f32.mrb[0].mxu0
    %v425 = vadd.f32 0.0, %v424
    %v426 = vpop.f32.mrb[0].mxu0
    %427 = vdwg.mxu0
    %v428 = vld [vmem:[%s2] sm:$0xff]
    %v429 = vld [vmem:[%s2 + $0x8] sm:$0xff]
    %v430 = vld [vmem:[%s3] sm:$0x1]
    %v432 = vlaneseq
    %v433 = vshrl.u32 %v432, 7
    %v434 = vsub.s32 0, %v433
    %v435 = vrot.slane %v430, %v434
    %437 = vmatprep.subr.mxu0 0.0
    %438 = vmatpush1.msra.mxu0 %v428
    %439 = vmatprep.subr.mxu0 0.0
    %440 = vmatpush1.msra.mxu0 %v429
    %441 = vmatprep.subr.mxu0 0.0
    %442 = vmatpush1.msra.mxu0 0.0
    %443 = vmatprep.subr.mxu0 0.0
    %444 = vmatpush1.msra.mxu0 0.0
    %445 = vmatprep.subr.mxu0 0.0
    %446 = vmatpush1.msra.mxu0 0.0
    %447 = vmatprep.subr.mxu0 0.0
    %448 = vmatpush1.msra.mxu0 0.0
    %449 = vmatprep.subr.mxu0 0.0
    %450 = vmatpush1.msra.mxu0 0.0
    %451 = vmatprep.subr.mxu0 0.0
    %452 = vmatpush1.msra.mxu0 0.0
    %453 = vmatprep.subr.mxu0 0.0
    %454 = vmatpush1.msra.mxu0 0.0
    %455 = vmatprep.subr.mxu0 0.0
    %456 = vmatpush1.msra.mxu0 0.0
    %457 = vmatprep.subr.mxu0 0.0
    %458 = vmatpush1.msra.mxu0 0.0
    %459 = vmatprep.subr.mxu0 0.0
    %460 = vmatpush1.msra.mxu0 0.0
    %461 = vmatprep.subr.mxu0 0.0
    %462 = vmatpush1.msra.mxu0 0.0
    %463 = vmatprep.subr.mxu0 0.0
    %464 = vmatpush1.msra.mxu0 0.0
    %465 = vmatprep.subr.mxu0 0.0
    %466 = vmatpush1.msra.mxu0 0.0
    %467 = vmatprep.subr.mxu0 0.0
    %468 = vmatpush1.msra.mxu0 0.0
    %469 = vmatprep.subr.mxu0 0.0
    %470 = vmatpush1.msra.mxu0 0.0
    %471 = vmatprep.subr.mxu0 0.0
    %472 = vmatpush1.msra.mxu0 0.0
    %473 = vmatprep.subr.mxu0 0.0
    %474 = vmatpush1.msra.mxu0 0.0
    %475 = vmatprep.subr.mxu0 0.0
    %476 = vmatpush1.msra.mxu0 0.0
    %477 = vmatprep.subr.mxu0 0.0
    %478 = vmatpush1.msra.mxu0 0.0
    %479 = vmatprep.subr.mxu0 0.0
    %480 = vmatpush1.msra.mxu0 0.0
    %481 = vmatprep.subr.mxu0 0.0
    %482 = vmatpush1.msra.mxu0 0.0
    %483 = vmatprep.subr.mxu0 0.0
    %484 = vmatpush1.msra.mxu0 0.0
    %485 = vmatprep.subr.mxu0 0.0
    %486 = vmatpush1.msra.mxu0 0.0
    %487 = vmatprep.subr.mxu0 0.0
    %488 = vmatpush1.msra.mxu0 0.0
    %489 = vmatprep.subr.mxu0 0.0
    %490 = vmatpush1.msra.mxu0 0.0
    %491 = vmatprep.subr.mxu0 0.0
    %492 = vmatpush1.msra.mxu0 0.0
    %493 = vmatprep.subr.mxu0 0.0
    %494 = vmatpush1.msra.mxu0 0.0
    %495 = vmatprep.subr.mxu0 0.0
    %496 = vmatpush1.msra.mxu0 0.0
    %497 = vmatprep.subr.mxu0 0.0
    %498 = vmatpush1.msra.mxu0 0.0
    %499 = vmatprep.subr.mxu0 0.0
    %500 = vmatpush1.msra.mxu0 0.0
    %501 = vmatprep.mubr.f32.mxu0 0.0
    %502 = vmatmul.mubr.f32.gmra.mrb[0].mxu0 %v300
    %v503 = vpop.f32.mrb[0].mxu0
    %v504 = vadd.f32 %v435, %v503
    %v505 = vpop.f32.mrb[0].mxu0
    %506 = vmatprep.mubr.f32.mxu0 0.0
    %507 = vmatmul.mubr.f32.gmra.mrb[0].mxu0 %v303
    %v508 = vpop.f32.mrb[0].mxu0
    %v509 = vadd.f32 %v435, %v508
    %v510 = vpop.f32.mrb[0].mxu0
    %511 = vmatprep.mubr.f32.mxu0 0.0
    %512 = vmatmul.mubr.f32.gmra.mrb[0].mxu0 %v306
    %v513 = vpop.f32.mrb[0].mxu0
    %v514 = vadd.f32 %v435, %v513
    %v515 = vpop.f32.mrb[0].mxu0
    %516 = vmatprep.mubr.f32.mxu0 0.0
    %517 = vmatmul.mubr.f32.gmra.mrb[0].mxu0 %v309
    %v518 = vpop.f32.mrb[0].mxu0
    %v519 = vadd.f32 %v435, %v518
    %v520 = vpop.f32.mrb[0].mxu0
    %521 = vmatprep.mubr.f32.mxu0 0.0
    %522 = vmatmul.mubr.f32.gmra.mrb[0].mxu0 %v312
    %v523 = vpop.f32.mrb[0].mxu0
    %v524 = vadd.f32 %v435, %v523
    %v525 = vpop.f32.mrb[0].mxu0
    %526 = vmatprep.mubr.f32.mxu0 0.0
    %527 = vmatmul.mubr.f32.gmra.mrb[0].mxu0 %v315
    %v528 = vpop.f32.mrb[0].mxu0
    %v529 = vadd.f32 %v435, %v528
    %v530 = vpop.f32.mrb[0].mxu0
    %531 = vmatprep.mubr.f32.mxu0 0.0
    %532 = vmatmul.mubr.f32.gmra.mrb[0].mxu0 %v318
    %v533 = vpop.f32.mrb[0].mxu0
    %v534 = vadd.f32 %v435, %v533
    %v535 = vpop.f32.mrb[0].mxu0
    %536 = vmatprep.mubr.f32.mxu0 0.0
    %537 = vmatmul.mubr.f32.gmra.mrb[0].mxu0 %v321
    %v538 = vpop.f32.mrb[0].mxu0
    %v539 = vadd.f32 %v435, %v538
    %v540 = vpop.f32.mrb[0].mxu0
    %541 = vdwg.mxu0
    %v550 = vcombine.high %v390, %v390
    %v552 = vunpack.c.l.s4 1966171168
    %v553 = vunpack.c.0.s8 %v552
    %v554 = vlaneseq
    %v555 = vshrl.u32 %v554, 7
    %v556 = vsub.s32 %v553, %v555
    %v557 = vrot.slane %v390, %v556
    %v559 = vunpack.c.l.s4 1966171168
    %v560 = vunpack.c.0.s8 %v559
    %v561 = vlaneseq
    %v562 = vshrl.u32 %v561, 7
    %v563 = vsub.s32 %v560, %v562
    %v564 = vrot.slane %v550, %v563
    %v565 = vcombine.high %v557, %v557
    %v566 = vcombine.high %v564, %v564
    %v568 = vunpack.c.l.s4 1966171168
    %v569 = vunpack.c.0.s8 %v568
    %v570 = vlaneseq
    %v571 = vshrl.u32 %v570, 7
    %v572 = vsub.s32 %v569, %v571
    %v573 = vrot.slane %v557, %v572
    %v575 = vunpack.c.l.s4 1966171168
    %v576 = vunpack.c.0.s8 %v575
    %v577 = vlaneseq
    %v578 = vshrl.u32 %v577, 7
    %v579 = vsub.s32 %v576, %v578
    %v580 = vrot.slane %v564, %v579
    %v582 = vunpack.c.l.s4 1966171168
    %v583 = vunpack.c.0.s8 %v582
    %v584 = vlaneseq
    %v585 = vshrl.u32 %v584, 7
    %v586 = vsub.s32 %v583, %v585
    %v587 = vrot.slane %v565, %v586
    %v589 = vunpack.c.l.s4 1966171168
    %v590 = vunpack.c.0.s8 %v589
    %v591 = vlaneseq
    %v592 = vshrl.u32 %v591, 7
    %v593 = vsub.s32 %v590, %v592
    %v594 = vrot.slane %v566, %v593
    %v595 = vcombine.high %v573, %v573
    %v596 = vcombine.high %v580, %v580
    %v597 = vcombine.high %v587, %v587
    %v598 = vcombine.high %v594, %v594
    %v599 = vcombine.high %v395, %v395
    %v601 = vunpack.c.l.s4 1966171168
    %v602 = vunpack.c.0.s8 %v601
    %v603 = vlaneseq
    %v604 = vshrl.u32 %v603, 7
    %v605 = vsub.s32 %v602, %v604
    %v606 = vrot.slane %v395, %v605
    %v608 = vunpack.c.l.s4 1966171168
    %v609 = vunpack.c.0.s8 %v608
    %v610 = vlaneseq
    %v611 = vshrl.u32 %v610, 7
    %v612 = vsub.s32 %v609, %v611
    %v613 = vrot.slane %v599, %v612
    %v614 = vcombine.high %v606, %v606
    %v615 = vcombine.high %v613, %v613
    %v617 = vunpack.c.l.s4 1966171168
    %v618 = vunpack.c.0.s8 %v617
    %v619 = vlaneseq
    %v620 = vshrl.u32 %v619, 7
    %v621 = vsub.s32 %v618, %v620
    %v622 = vrot.slane %v606, %v621
    %v624 = vunpack.c.l.s4 1966171168
    %v625 = vunpack.c.0.s8 %v624
    %v626 = vlaneseq
    %v627 = vshrl.u32 %v626, 7
    %v628 = vsub.s32 %v625, %v627
    %v629 = vrot.slane %v613, %v628
    %v631 = vunpack.c.l.s4 1966171168
    %v632 = vunpack.c.0.s8 %v631
    %v633 = vlaneseq
    %v634 = vshrl.u32 %v633, 7
    %v635 = vsub.s32 %v632, %v634
    %v636 = vrot.slane %v614, %v635
    %v638 = vunpack.c.l.s4 1966171168
    %v639 = vunpack.c.0.s8 %v638
    %v640 = vlaneseq
    %v641 = vshrl.u32 %v640, 7
    %v642 = vsub.s32 %v639, %v641
    %v643 = vrot.slane %v615, %v642
    %v644 = vcombine.high %v622, %v622
    %v645 = vcombine.high %v629, %v629
    %v646 = vcombine.high %v636, %v636
    %v647 = vcombine.high %v643, %v643
    %v648 = vcombine.high %v400, %v400
    %v650 = vunpack.c.l.s4 1966171168
    %v651 = vunpack.c.0.s8 %v650
    %v652 = vlaneseq
    %v653 = vshrl.u32 %v652, 7
    %v654 = vsub.s32 %v651, %v653
    %v655 = vrot.slane %v400, %v654
    %v657 = vunpack.c.l.s4 1966171168
    %v658 = vunpack.c.0.s8 %v657
    %v659 = vlaneseq
    %v660 = vshrl.u32 %v659, 7
    %v661 = vsub.s32 %v658, %v660
    %v662 = vrot.slane %v648, %v661
    %v663 = vcombine.high %v655, %v655
    %v664 = vcombine.high %v662, %v662
    %v666 = vunpack.c.l.s4 1966171168
    %v667 = vunpack.c.0.s8 %v666
    %v668 = vlaneseq
    %v669 = vshrl.u32 %v668, 7
    %v670 = vsub.s32 %v667, %v669
    %v671 = vrot.slane %v655, %v670
    %v673 = vunpack.c.l.s4 1966171168
    %v674 = vunpack.c.0.s8 %v673
    %v675 = vlaneseq
    %v676 = vshrl.u32 %v675, 7
    %v677 = vsub.s32 %v674, %v676
    %v678 = vrot.slane %v662, %v677
    %v680 = vunpack.c.l.s4 1966171168
    %v681 = vunpack.c.0.s8 %v680
    %v682 = vlaneseq
    %v683 = vshrl.u32 %v682, 7
    %v684 = vsub.s32 %v681, %v683
    %v685 = vrot.slane %v663, %v684
    %v687 = vunpack.c.l.s4 1966171168
    %v688 = vunpack.c.0.s8 %v687
    %v689 = vlaneseq
    %v690 = vshrl.u32 %v689, 7
    %v691 = vsub.s32 %v688, %v690
    %v692 = vrot.slane %v664, %v691
    %v693 = vcombine.high %v671, %v671
    %v694 = vcombine.high %v678, %v678
    %v695 = vcombine.high %v685, %v685
    %v696 = vcombine.high %v692, %v692
    %v697 = vcombine.high %v405, %v405
    %v699 = vunpack.c.l.s4 1966171168
    %v700 = vunpack.c.0.s8 %v699
    %v701 = vlaneseq
    %v702 = vshrl.u32 %v701, 7
    %v703 = vsub.s32 %v700, %v702
    %v704 = vrot.slane %v405, %v703
    %v706 = vunpack.c.l.s4 1966171168
    %v707 = vunpack.c.0.s8 %v706
    %v708 = vlaneseq
    %v709 = vshrl.u32 %v708, 7
    %v710 = vsub.s32 %v707, %v709
    %v711 = vrot.slane %v697, %v710
    %v712 = vcombine.high %v704, %v704
    %v713 = vcombine.high %v711, %v711
    %v715 = vunpack.c.l.s4 1966171168
    %v716 = vunpack.c.0.s8 %v715
    %v717 = vlaneseq
    %v718 = vshrl.u32 %v717, 7
    %v719 = vsub.s32 %v716, %v718
    %v720 = vrot.slane %v704, %v719
    %v722 = vunpack.c.l.s4 1966171168
    %v723 = vunpack.c.0.s8 %v722
    %v724 = vlaneseq
    %v725 = vshrl.u32 %v724, 7
    %v726 = vsub.s32 %v723, %v725
    %v727 = vrot.slane %v711, %v726
    %v729 = vunpack.c.l.s4 1966171168
    %v730 = vunpack.c.0.s8 %v729
    %v731 = vlaneseq
    %v732 = vshrl.u32 %v731, 7
    %v733 = vsub.s32 %v730, %v732
    %v734 = vrot.slane %v712, %v733
    %v736 = vunpack.c.l.s4 1966171168
    %v737 = vunpack.c.0.s8 %v736
    %v738 = vlaneseq
    %v739 = vshrl.u32 %v738, 7
    %v740 = vsub.s32 %v737, %v739
    %v741 = vrot.slane %v713, %v740
    %v742 = vcombine.high %v720, %v720
    %v743 = vcombine.high %v727, %v727
    %v744 = vcombine.high %v734, %v734
    %v745 = vcombine.high %v741, %v741
    %v746 = vcombine.high %v410, %v410
    %v748 = vunpack.c.l.s4 1966171168
    %v749 = vunpack.c.0.s8 %v748
    %v750 = vlaneseq
    %v751 = vshrl.u32 %v750, 7
    %v752 = vsub.s32 %v749, %v751
    %v753 = vrot.slane %v410, %v752
    %v755 = vunpack.c.l.s4 1966171168
    %v756 = vunpack.c.0.s8 %v755
    %v757 = vlaneseq
    %v758 = vshrl.u32 %v757, 7
    %v759 = vsub.s32 %v756, %v758
    %v760 = vrot.slane %v746, %v759
    %v761 = vcombine.high %v753, %v753
    %v762 = vcombine.high %v760, %v760
    %v764 = vunpack.c.l.s4 1966171168
    %v765 = vunpack.c.0.s8 %v764
    %v766 = vlaneseq
    %v767 = vshrl.u32 %v766, 7
    %v768 = vsub.s32 %v765, %v767
    %v769 = vrot.slane %v753, %v768
    %v771 = vunpack.c.l.s4 1966171168
    %v772 = vunpack.c.0.s8 %v771
    %v773 = vlaneseq
    %v774 = vshrl.u32 %v773, 7
    %v775 = vsub.s32 %v772, %v774
    %v776 = vrot.slane %v760, %v775
    %v778 = vunpack.c.l.s4 1966171168
    %v779 = vunpack.c.0.s8 %v778
    %v780 = vlaneseq
    %v781 = vshrl.u32 %v780, 7
    %v782 = vsub.s32 %v779, %v781
    %v783 = vrot.slane %v761, %v782
    %v785 = vunpack.c.l.s4 1966171168
    %v786 = vunpack.c.0.s8 %v785
    %v787 = vlaneseq
    %v788 = vshrl.u32 %v787, 7
    %v789 = vsub.s32 %v786, %v788
    %v790 = vrot.slane %v762, %v789
    %v791 = vcombine.high %v769, %v769
    %v792 = vcombine.high %v776, %v776
    %v793 = vcombine.high %v783, %v783
    %v794 = vcombine.high %v790, %v790
    %v795 = vcombine.high %v415, %v415
    %v797 = vunpack.c.l.s4 1966171168
    %v798 = vunpack.c.0.s8 %v797
    %v799 = vlaneseq
    %v800 = vshrl.u32 %v799, 7
    %v801 = vsub.s32 %v798, %v800
    %v802 = vrot.slane %v415, %v801
    %v804 = vunpack.c.l.s4 1966171168
    %v805 = vunpack.c.0.s8 %v804
    %v806 = vlaneseq
    %v807 = vshrl.u32 %v806, 7
    %v808 = vsub.s32 %v805, %v807
    %v809 = vrot.slane %v795, %v808
    %v810 = vcombine.high %v802, %v802
    %v811 = vcombine.high %v809, %v809
    %v813 = vunpack.c.l.s4 1966171168
    %v814 = vunpack.c.0.s8 %v813
    %v815 = vlaneseq
    %v816 = vshrl.u32 %v815, 7
    %v817 = vsub.s32 %v814, %v816
    %v818 = vrot.slane %v802, %v817
    %v820 = vunpack.c.l.s4 1966171168
    %v821 = vunpack.c.0.s8 %v820
    %v822 = vlaneseq
    %v823 = vshrl.u32 %v822, 7
    %v824 = vsub.s32 %v821, %v823
    %v825 = vrot.slane %v809, %v824
    %v827 = vunpack.c.l.s4 1966171168
    %v828 = vunpack.c.0.s8 %v827
    %v829 = vlaneseq
    %v830 = vshrl.u32 %v829, 7
    %v831 = vsub.s32 %v828, %v830
    %v832 = vrot.slane %v810, %v831
    %v834 = vunpack.c.l.s4 1966171168
    %v835 = vunpack.c.0.s8 %v834
    %v836 = vlaneseq
    %v837 = vshrl.u32 %v836, 7
    %v838 = vsub.s32 %v835, %v837
    %v839 = vrot.slane %v811, %v838
    %v840 = vcombine.high %v818, %v818
    %v841 = vcombine.high %v825, %v825
    %v842 = vcombine.high %v832, %v832
    %v843 = vcombine.high %v839, %v839
    %v844 = vcombine.high %v420, %v420
    %v846 = vunpack.c.l.s4 1966171168
    %v847 = vunpack.c.0.s8 %v846
    %v848 = vlaneseq
    %v849 = vshrl.u32 %v848, 7
    %v850 = vsub.s32 %v847, %v849
    %v851 = vrot.slane %v420, %v850
    %v853 = vunpack.c.l.s4 1966171168
    %v854 = vunpack.c.0.s8 %v853
    %v855 = vlaneseq
    %v856 = vshrl.u32 %v855, 7
    %v857 = vsub.s32 %v854, %v856
    %v858 = vrot.slane %v844, %v857
    %v859 = vcombine.high %v851, %v851
    %v860 = vcombine.high %v858, %v858
    %v862 = vunpack.c.l.s4 1966171168
    %v863 = vunpack.c.0.s8 %v862
    %v864 = vlaneseq
    %v865 = vshrl.u32 %v864, 7
    %v866 = vsub.s32 %v863, %v865
    %v867 = vrot.slane %v851, %v866
    %v869 = vunpack.c.l.s4 1966171168
    %v870 = vunpack.c.0.s8 %v869
    %v871 = vlaneseq
    %v872 = vshrl.u32 %v871, 7
    %v873 = vsub.s32 %v870, %v872
    %v874 = vrot.slane %v858, %v873
    %v876 = vunpack.c.l.s4 1966171168
    %v877 = vunpack.c.0.s8 %v876
    %v878 = vlaneseq
    %v879 = vshrl.u32 %v878, 7
    %v880 = vsub.s32 %v877, %v879
    %v881 = vrot.slane %v859, %v880
    %v883 = vunpack.c.l.s4 1966171168
    %v884 = vunpack.c.0.s8 %v883
    %v885 = vlaneseq
    %v886 = vshrl.u32 %v885, 7
    %v887 = vsub.s32 %v884, %v886
    %v888 = vrot.slane %v860, %v887
    %v889 = vcombine.high %v867, %v867
    %v890 = vcombine.high %v874, %v874
    %v891 = vcombine.high %v881, %v881
    %v892 = vcombine.high %v888, %v888
    %v893 = vcombine.high %v425, %v425
    %v895 = vunpack.c.l.s4 1966171168
    %v896 = vunpack.c.0.s8 %v895
    %v897 = vlaneseq
    %v898 = vshrl.u32 %v897, 7
    %v899 = vsub.s32 %v896, %v898
    %v900 = vrot.slane %v425, %v899
    %v902 = vunpack.c.l.s4 1966171168
    %v903 = vunpack.c.0.s8 %v902
    %v904 = vlaneseq
    %v905 = vshrl.u32 %v904, 7
    %v906 = vsub.s32 %v903, %v905
    %v907 = vrot.slane %v893, %v906
    %v908 = vcombine.high %v900, %v900
    %v909 = vcombine.high %v907, %v907
    %v911 = vunpack.c.l.s4 1966171168
    %v912 = vunpack.c.0.s8 %v911
    %v913 = vlaneseq
    %v914 = vshrl.u32 %v913, 7
    %v915 = vsub.s32 %v912, %v914
    %v916 = vrot.slane %v900, %v915
    %v918 = vunpack.c.l.s4 1966171168
    %v919 = vunpack.c.0.s8 %v918
    %v920 = vlaneseq
    %v921 = vshrl.u32 %v920, 7
    %v922 = vsub.s32 %v919, %v921
    %v923 = vrot.slane %v907, %v922
    %v925 = vunpack.c.l.s4 1966171168
    %v926 = vunpack.c.0.s8 %v925
    %v927 = vlaneseq
    %v928 = vshrl.u32 %v927, 7
    %v929 = vsub.s32 %v926, %v928
    %v930 = vrot.slane %v908, %v929
    %v932 = vunpack.c.l.s4 1966171168
    %v933 = vunpack.c.0.s8 %v932
    %v934 = vlaneseq
    %v935 = vshrl.u32 %v934, 7
    %v936 = vsub.s32 %v933, %v935
    %v937 = vrot.slane %v909, %v936
    %v938 = vcombine.high %v916, %v916
    %v939 = vcombine.high %v923, %v923
    %v940 = vcombine.high %v930, %v930
    %v941 = vcombine.high %v937, %v937
    %v942 = vlaneseq
    %v943 = vshrl.u32 %v942, 7
    %v944 = vsub.s32 0, %v943
    %v945 = vrot.slane %v573, %v944
    %v946 = vlaneseq
    %v947 = vshrl.u32 %v946, 7
    %v948 = vsub.s32 0, %v947
    %v949 = vrot.slane %v587, %v948
    %v950 = vlaneseq
    %v951 = vshrl.u32 %v950, 7
    %v952 = vsub.s32 0, %v951
    %v953 = vrot.slane %v595, %v952
    %v954 = vlaneseq
    %v955 = vshrl.u32 %v954, 7
    %v956 = vsub.s32 0, %v955
    %v957 = vrot.slane %v597, %v956
    %v958 = vlaneseq
    %v959 = vshrl.u32 %v958, 7
    %v960 = vsub.s32 0, %v959
    %v961 = vrot.slane %v580, %v960
    %v962 = vlaneseq
    %v963 = vshrl.u32 %v962, 7
    %v964 = vsub.s32 0, %v963
    %v965 = vrot.slane %v594, %v964
    %v966 = vlaneseq
    %v967 = vshrl.u32 %v966, 7
    %v968 = vsub.s32 0, %v967
    %v969 = vrot.slane %v596, %v968
    %v970 = vlaneseq
    %v971 = vshrl.u32 %v970, 7
    %v972 = vsub.s32 0, %v971
    %v973 = vrot.slane %v598, %v972
    %v974 = vlaneseq
    %v975 = vshrl.u32 %v974, 7
    %v976 = vsub.s32 0, %v975
    %v977 = vrot.slane %v622, %v976
    %v978 = vlaneseq
    %v979 = vshrl.u32 %v978, 7
    %v980 = vsub.s32 0, %v979
    %v981 = vrot.slane %v636, %v980
    %v982 = vlaneseq
    %v983 = vshrl.u32 %v982, 7
    %v984 = vsub.s32 0, %v983
    %v985 = vrot.slane %v644, %v984
    %v986 = vlaneseq
    %v987 = vshrl.u32 %v986, 7
    %v988 = vsub.s32 0, %v987
    %v989 = vrot.slane %v646, %v988
    %v990 = vlaneseq
    %v991 = vshrl.u32 %v990, 7
    %v992 = vsub.s32 0, %v991
    %v993 = vrot.slane %v629, %v992
    %v994 = vlaneseq
    %v995 = vshrl.u32 %v994, 7
    %v996 = vsub.s32 0, %v995
    %v997 = vrot.slane %v643, %v996
    %v998 = vlaneseq
    %v999 = vshrl.u32 %v998, 7
    %v1000 = vsub.s32 0, %v999
    %v1001 = vrot.slane %v645, %v1000
    %v1002 = vlaneseq
    %v1003 = vshrl.u32 %v1002, 7
    %v1004 = vsub.s32 0, %v1003
    %v1005 = vrot.slane %v647, %v1004
    %v1006 = vlaneseq
    %v1007 = vshrl.u32 %v1006, 7
    %v1008 = vsub.s32 0, %v1007
    %v1009 = vrot.slane %v671, %v1008
    %v1010 = vlaneseq
    %v1011 = vshrl.u32 %v1010, 7
    %v1012 = vsub.s32 0, %v1011
    %v1013 = vrot.slane %v685, %v1012
    %v1014 = vlaneseq
    %v1015 = vshrl.u32 %v1014, 7
    %v1016 = vsub.s32 0, %v1015
    %v1017 = vrot.slane %v693, %v1016
    %v1018 = vlaneseq
    %v1019 = vshrl.u32 %v1018, 7
    %v1020 = vsub.s32 0, %v1019
    %v1021 = vrot.slane %v695, %v1020
    %v1022 = vlaneseq
    %v1023 = vshrl.u32 %v1022, 7
    %v1024 = vsub.s32 0, %v1023
    %v1025 = vrot.slane %v678, %v1024
    %v1026 = vlaneseq
    %v1027 = vshrl.u32 %v1026, 7
    %v1028 = vsub.s32 0, %v1027
    %v1029 = vrot.slane %v692, %v1028
    %v1030 = vlaneseq
    %v1031 = vshrl.u32 %v1030, 7
    %v1032 = vsub.s32 0, %v1031
    %v1033 = vrot.slane %v694, %v1032
    %v1034 = vlaneseq
    %v1035 = vshrl.u32 %v1034, 7
    %v1036 = vsub.s32 0, %v1035
    %v1037 = vrot.slane %v696, %v1036
    %v1038 = vlaneseq
    %v1039 = vshrl.u32 %v1038, 7
    %v1040 = vsub.s32 0, %v1039
    %v1041 = vrot.slane %v720, %v1040
    %v1042 = vlaneseq
    %v1043 = vshrl.u32 %v1042, 7
    %v1044 = vsub.s32 0, %v1043
    %v1045 = vrot.slane %v734, %v1044
    %v1046 = vlaneseq
    %v1047 = vshrl.u32 %v1046, 7
    %v1048 = vsub.s32 0, %v1047
    %v1049 = vrot.slane %v742, %v1048
    %v1050 = vlaneseq
    %v1051 = vshrl.u32 %v1050, 7
    %v1052 = vsub.s32 0, %v1051
    %v1053 = vrot.slane %v744, %v1052
    %v1054 = vlaneseq
    %v1055 = vshrl.u32 %v1054, 7
    %v1056 = vsub.s32 0, %v1055
    %v1057 = vrot.slane %v727, %v1056
    %v1058 = vlaneseq
    %v1059 = vshrl.u32 %v1058, 7
    %v1060 = vsub.s32 0, %v1059
    %v1061 = vrot.slane %v741, %v1060
    %v1062 = vlaneseq
    %v1063 = vshrl.u32 %v1062, 7
    %v1064 = vsub.s32 0, %v1063
    %v1065 = vrot.slane %v743, %v1064
    %v1066 = vlaneseq
    %v1067 = vshrl.u32 %v1066, 7
    %v1068 = vsub.s32 0, %v1067
    %v1069 = vrot.slane %v745, %v1068
    %v1070 = vlaneseq
    %v1071 = vshrl.u32 %v1070, 7
    %v1072 = vsub.s32 0, %v1071
    %v1073 = vrot.slane %v769, %v1072
    %v1074 = vlaneseq
    %v1075 = vshrl.u32 %v1074, 7
    %v1076 = vsub.s32 0, %v1075
    %v1077 = vrot.slane %v783, %v1076
    %v1078 = vlaneseq
    %v1079 = vshrl.u32 %v1078, 7
    %v1080 = vsub.s32 0, %v1079
    %v1081 = vrot.slane %v791, %v1080
    %v1082 = vlaneseq
    %v1083 = vshrl.u32 %v1082, 7
    %v1084 = vsub.s32 0, %v1083
    %v1085 = vrot.slane %v793, %v1084
    %v1086 = vlaneseq
    %v1087 = vshrl.u32 %v1086, 7
    %v1088 = vsub.s32 0, %v1087
    %v1089 = vrot.slane %v776, %v1088
    %v1090 = vlaneseq
    %v1091 = vshrl.u32 %v1090, 7
    %v1092 = vsub.s32 0, %v1091
    %v1093 = vrot.slane %v790, %v1092
    %v1094 = vlaneseq
    %v1095 = vshrl.u32 %v1094, 7
    %v1096 = vsub.s32 0, %v1095
    %v1097 = vrot.slane %v792, %v1096
    %v1098 = vlaneseq
    %v1099 = vshrl.u32 %v1098, 7
    %v1100 = vsub.s32 0, %v1099
    %v1101 = vrot.slane %v794, %v1100
    %v1102 = vlaneseq
    %v1103 = vshrl.u32 %v1102, 7
    %v1104 = vsub.s32 0, %v1103
    %v1105 = vrot.slane %v818, %v1104
    %v1106 = vlaneseq
    %v1107 = vshrl.u32 %v1106, 7
    %v1108 = vsub.s32 0, %v1107
    %v1109 = vrot.slane %v832, %v1108
    %v1110 = vlaneseq
    %v1111 = vshrl.u32 %v1110, 7
    %v1112 = vsub.s32 0, %v1111
    %v1113 = vrot.slane %v840, %v1112
    %v1114 = vlaneseq
    %v1115 = vshrl.u32 %v1114, 7
    %v1116 = vsub.s32 0, %v1115
    %v1117 = vrot.slane %v842, %v1116
    %v1118 = vlaneseq
    %v1119 = vshrl.u32 %v1118, 7
    %v1120 = vsub.s32 0, %v1119
    %v1121 = vrot.slane %v825, %v1120
    %v1122 = vlaneseq
    %v1123 = vshrl.u32 %v1122, 7
    %v1124 = vsub.s32 0, %v1123
    %v1125 = vrot.slane %v839, %v1124
    %v1126 = vlaneseq
    %v1127 = vshrl.u32 %v1126, 7
    %v1128 = vsub.s32 0, %v1127
    %v1129 = vrot.slane %v841, %v1128
    %v1130 = vlaneseq
    %v1131 = vshrl.u32 %v1130, 7
    %v1132 = vsub.s32 0, %v1131
    %v1133 = vrot.slane %v843, %v1132
    %v1134 = vlaneseq
    %v1135 = vshrl.u32 %v1134, 7
    %v1136 = vsub.s32 0, %v1135
    %v1137 = vrot.slane %v867, %v1136
    %v1138 = vlaneseq
    %v1139 = vshrl.u32 %v1138, 7
    %v1140 = vsub.s32 0, %v1139
    %v1141 = vrot.slane %v881, %v1140
    %v1142 = vlaneseq
    %v1143 = vshrl.u32 %v1142, 7
    %v1144 = vsub.s32 0, %v1143
    %v1145 = vrot.slane %v889, %v1144
    %v1146 = vlaneseq
    %v1147 = vshrl.u32 %v1146, 7
    %v1148 = vsub.s32 0, %v1147
    %v1149 = vrot.slane %v891, %v1148
    %v1150 = vlaneseq
    %v1151 = vshrl.u32 %v1150, 7
    %v1152 = vsub.s32 0, %v1151
    %v1153 = vrot.slane %v874, %v1152
    %v1154 = vlaneseq
    %v1155 = vshrl.u32 %v1154, 7
    %v1156 = vsub.s32 0, %v1155
    %v1157 = vrot.slane %v888, %v1156
    %v1158 = vlaneseq
    %v1159 = vshrl.u32 %v1158, 7
    %v1160 = vsub.s32 0, %v1159
    %v1161 = vrot.slane %v890, %v1160
    %v1162 = vlaneseq
    %v1163 = vshrl.u32 %v1162, 7
    %v1164 = vsub.s32 0, %v1163
    %v1165 = vrot.slane %v892, %v1164
    %v1166 = vlaneseq
    %v1167 = vshrl.u32 %v1166, 7
    %v1168 = vsub.s32 0, %v1167
    %v1169 = vrot.slane %v916, %v1168
    %v1170 = vlaneseq
    %v1171 = vshrl.u32 %v1170, 7
    %v1172 = vsub.s32 0, %v1171
    %v1173 = vrot.slane %v930, %v1172
    %v1174 = vlaneseq
    %v1175 = vshrl.u32 %v1174, 7
    %v1176 = vsub.s32 0, %v1175
    %v1177 = vrot.slane %v938, %v1176
    %v1178 = vlaneseq
    %v1179 = vshrl.u32 %v1178, 7
    %v1180 = vsub.s32 0, %v1179
    %v1181 = vrot.slane %v940, %v1180
    %v1182 = vlaneseq
    %v1183 = vshrl.u32 %v1182, 7
    %v1184 = vsub.s32 0, %v1183
    %v1185 = vrot.slane %v923, %v1184
    %v1186 = vlaneseq
    %v1187 = vshrl.u32 %v1186, 7
    %v1188 = vsub.s32 0, %v1187
    %v1189 = vrot.slane %v937, %v1188
    %v1190 = vlaneseq
    %v1191 = vshrl.u32 %v1190, 7
    %v1192 = vsub.s32 0, %v1191
    %v1193 = vrot.slane %v939, %v1192
    %v1194 = vlaneseq
    %v1195 = vshrl.u32 %v1194, 7
    %v1196 = vsub.s32 0, %v1195
    %v1197 = vrot.slane %v941, %v1196
    %v1262 = vadd.f32 %v945, %v504
    %v1263 = vadd.f32 %v949, %v504
    %v1264 = vadd.f32 %v953, %v504
    %v1265 = vadd.f32 %v957, %v504
    %v1266 = vadd.f32 %v961, %v504
    %v1267 = vadd.f32 %v965, %v504
    %v1268 = vadd.f32 %v969, %v504
    %v1269 = vadd.f32 %v973, %v504
    %v1270 = vadd.f32 %v977, %v509
    %v1271 = vadd.f32 %v981, %v509
    %v1272 = vadd.f32 %v985, %v509
    %v1273 = vadd.f32 %v989, %v509
    %v1274 = vadd.f32 %v993, %v509
    %v1275 = vadd.f32 %v997, %v509
    %v1276 = vadd.f32 %v1001, %v509
    %v1277 = vadd.f32 %v1005, %v509
    %v1278 = vadd.f32 %v1009, %v514
    %v1279 = vadd.f32 %v1013, %v514
    %v1280 = vadd.f32 %v1017, %v514
    %v1281 = vadd.f32 %v1021, %v514
    %v1282 = vadd.f32 %v1025, %v514
    %v1283 = vadd.f32 %v1029, %v514
    %v1284 = vadd.f32 %v1033, %v514
    %v1285 = vadd.f32 %v1037, %v514
    %v1286 = vadd.f32 %v1041, %v519
    %v1287 = vadd.f32 %v1045, %v519
    %v1288 = vadd.f32 %v1049, %v519
    %v1289 = vadd.f32 %v1053, %v519
    %v1290 = vadd.f32 %v1057, %v519
    %v1291 = vadd.f32 %v1061, %v519
    %v1292 = vadd.f32 %v1065, %v519
    %v1293 = vadd.f32 %v1069, %v519
    %v1294 = vadd.f32 %v1073, %v524
    %v1295 = vadd.f32 %v1077, %v524
    %v1296 = vadd.f32 %v1081, %v524
    %v1297 = vadd.f32 %v1085, %v524
    %v1298 = vadd.f32 %v1089, %v524
    %v1299 = vadd.f32 %v1093, %v524
    %v1300 = vadd.f32 %v1097, %v524
    %v1301 = vadd.f32 %v1101, %v524
    %v1302 = vadd.f32 %v1105, %v529
    %v1303 = vadd.f32 %v1109, %v529
    %v1304 = vadd.f32 %v1113, %v529
    %v1305 = vadd.f32 %v1117, %v529
    %v1306 = vadd.f32 %v1121, %v529
    %v1307 = vadd.f32 %v1125, %v529
    %v1308 = vadd.f32 %v1129, %v529
    %v1309 = vadd.f32 %v1133, %v529
    %v1310 = vadd.f32 %v1137, %v534
    %v1311 = vadd.f32 %v1141, %v534
    %v1312 = vadd.f32 %v1145, %v534
    %v1313 = vadd.f32 %v1149, %v534
    %v1314 = vadd.f32 %v1153, %v534
    %v1315 = vadd.f32 %v1157, %v534
    %v1316 = vadd.f32 %v1161, %v534
    %v1317 = vadd.f32 %v1165, %v534
    %v1318 = vadd.f32 %v1169, %v539
    %v1319 = vadd.f32 %v1173, %v539
    %v1320 = vadd.f32 %v1177, %v539
    %v1321 = vadd.f32 %v1181, %v539
    %v1322 = vadd.f32 %v1185, %v539
    %v1323 = vadd.f32 %v1189, %v539
    %v1324 = vadd.f32 %v1193, %v539
    %v1325 = vadd.f32 %v1197, %v539
    %vm1326 = vcmp.gt.f32.partialorder %v1262, 0.0
    %vm1327 = vcmp.gt.f32.partialorder %v1263, 0.0
    %vm1328 = vcmp.gt.f32.partialorder %v1264, 0.0
    %vm1329 = vcmp.gt.f32.partialorder %v1265, 0.0
    %vm1330 = vcmp.gt.f32.partialorder %v1266, 0.0
    %vm1331 = vcmp.gt.f32.partialorder %v1267, 0.0
    %vm1332 = vcmp.gt.f32.partialorder %v1268, 0.0
    %vm1333 = vcmp.gt.f32.partialorder %v1269, 0.0
    %vm1334 = vcmp.gt.f32.partialorder %v1270, 0.0
    %vm1335 = vcmp.gt.f32.partialorder %v1271, 0.0
    %vm1336 = vcmp.gt.f32.partialorder %v1272, 0.0
    %vm1337 = vcmp.gt.f32.partialorder %v1273, 0.0
    %vm1338 = vcmp.gt.f32.partialorder %v1274, 0.0
    %vm1339 = vcmp.gt.f32.partialorder %v1275, 0.0
    %vm1340 = vcmp.gt.f32.partialorder %v1276, 0.0
    %vm1341 = vcmp.gt.f32.partialorder %v1277, 0.0
    %vm1342 = vcmp.gt.f32.partialorder %v1278, 0.0
    %vm1343 = vcmp.gt.f32.partialorder %v1279, 0.0
    %vm1344 = vcmp.gt.f32.partialorder %v1280, 0.0
    %vm1345 = vcmp.gt.f32.partialorder %v1281, 0.0
    %vm1346 = vcmp.gt.f32.partialorder %v1282, 0.0
    %vm1347 = vcmp.gt.f32.partialorder %v1283, 0.0
    %vm1348 = vcmp.gt.f32.partialorder %v1284, 0.0
    %vm1349 = vcmp.gt.f32.partialorder %v1285, 0.0
    %vm1350 = vcmp.gt.f32.partialorder %v1286, 0.0
    %vm1351 = vcmp.gt.f32.partialorder %v1287, 0.0
    %vm1352 = vcmp.gt.f32.partialorder %v1288, 0.0
    %vm1353 = vcmp.gt.f32.partialorder %v1289, 0.0
    %vm1354 = vcmp.gt.f32.partialorder %v1290, 0.0
    %vm1355 = vcmp.gt.f32.partialorder %v1291, 0.0
    %vm1356 = vcmp.gt.f32.partialorder %v1292, 0.0
    %vm1357 = vcmp.gt.f32.partialorder %v1293, 0.0
    %vm1358 = vcmp.gt.f32.partialorder %v1294, 0.0
    %vm1359 = vcmp.gt.f32.partialorder %v1295, 0.0
    %vm1360 = vcmp.gt.f32.partialorder %v1296, 0.0
    %vm1361 = vcmp.gt.f32.partialorder %v1297, 0.0
    %vm1362 = vcmp.gt.f32.partialorder %v1298, 0.0
    %vm1363 = vcmp.gt.f32.partialorder %v1299, 0.0
    %vm1364 = vcmp.gt.f32.partialorder %v1300, 0.0
    %vm1365 = vcmp.gt.f32.partialorder %v1301, 0.0
    %vm1366 = vcmp.gt.f32.partialorder %v1302, 0.0
    %vm1367 = vcmp.gt.f32.partialorder %v1303, 0.0
    %vm1368 = vcmp.gt.f32.partialorder %v1304, 0.0
    %vm1369 = vcmp.gt.f32.partialorder %v1305, 0.0
    %vm1370 = vcmp.gt.f32.partialorder %v1306, 0.0
    %vm1371 = vcmp.gt.f32.partialorder %v1307, 0.0
    %vm1372 = vcmp.gt.f32.partialorder %v1308, 0.0
    %vm1373 = vcmp.gt.f32.partialorder %v1309, 0.0
    %vm1374 = vcmp.gt.f32.partialorder %v1310, 0.0
    %vm1375 = vcmp.gt.f32.partialorder %v1311, 0.0
    %vm1376 = vcmp.gt.f32.partialorder %v1312, 0.0
    %vm1377 = vcmp.gt.f32.partialorder %v1313, 0.0
    %vm1378 = vcmp.gt.f32.partialorder %v1314, 0.0
    %vm1379 = vcmp.gt.f32.partialorder %v1315, 0.0
    %vm1380 = vcmp.gt.f32.partialorder %v1316, 0.0
    %vm1381 = vcmp.gt.f32.partialorder %v1317, 0.0
    %vm1382 = vcmp.gt.f32.partialorder %v1318, 0.0
    %vm1383 = vcmp.gt.f32.partialorder %v1319, 0.0
    %vm1384 = vcmp.gt.f32.partialorder %v1320, 0.0
    %vm1385 = vcmp.gt.f32.partialorder %v1321, 0.0
    %vm1386 = vcmp.gt.f32.partialorder %v1322, 0.0
    %vm1387 = vcmp.gt.f32.partialorder %v1323, 0.0
    %vm1388 = vcmp.gt.f32.partialorder %v1324, 0.0
    %vm1389 = vcmp.gt.f32.partialorder %v1325, 0.0
    %v1390 = vmul.f32 %v1262, 0.2
    %v1391 = vmul.f32 %v1263, 0.2
    %v1392 = vmul.f32 %v1264, 0.2
    %v1393 = vmul.f32 %v1265, 0.2
    %v1394 = vmul.f32 %v1266, 0.2
    %v1395 = vmul.f32 %v1267, 0.2
    %v1396 = vmul.f32 %v1268, 0.2
    %v1397 = vmul.f32 %v1269, 0.2
    %v1398 = vmul.f32 %v1270, 0.2
    %v1399 = vmul.f32 %v1271, 0.2
    %v1400 = vmul.f32 %v1272, 0.2
    %v1401 = vmul.f32 %v1273, 0.2
    %v1402 = vmul.f32 %v1274, 0.2
    %v1403 = vmul.f32 %v1275, 0.2
    %v1404 = vmul.f32 %v1276, 0.2
    %v1405 = vmul.f32 %v1277, 0.2
    %v1406 = vmul.f32 %v1278, 0.2
    %v1407 = vmul.f32 %v1279, 0.2
    %v1408 = vmul.f32 %v1280, 0.2
    %v1409 = vmul.f32 %v1281, 0.2
    %v1410 = vmul.f32 %v1282, 0.2
    %v1411 = vmul.f32 %v1283, 0.2
    %v1412 = vmul.f32 %v1284, 0.2
    %v1413 = vmul.f32 %v1285, 0.2
    %v1414 = vmul.f32 %v1286, 0.2
    %v1415 = vmul.f32 %v1287, 0.2
    %v1416 = vmul.f32 %v1288, 0.2
    %v1417 = vmul.f32 %v1289, 0.2
    %v1418 = vmul.f32 %v1290, 0.2
    %v1419 = vmul.f32 %v1291, 0.2
    %v1420 = vmul.f32 %v1292, 0.2
    %v1421 = vmul.f32 %v1293, 0.2
    %v1422 = vmul.f32 %v1294, 0.2
    %v1423 = vmul.f32 %v1295, 0.2
    %v1424 = vmul.f32 %v1296, 0.2
    %v1425 = vmul.f32 %v1297, 0.2
    %v1426 = vmul.f32 %v1298, 0.2
    %v1427 = vmul.f32 %v1299, 0.2
    %v1428 = vmul.f32 %v1300, 0.2
    %v1429 = vmul.f32 %v1301, 0.2
    %v1430 = vmul.f32 %v1302, 0.2
    %v1431 = vmul.f32 %v1303, 0.2
    %v1432 = vmul.f32 %v1304, 0.2
    %v1433 = vmul.f32 %v1305, 0.2
    %v1434 = vmul.f32 %v1306, 0.2
    %v1435 = vmul.f32 %v1307, 0.2
    %v1436 = vmul.f32 %v1308, 0.2
    %v1437 = vmul.f32 %v1309, 0.2
    %v1438 = vmul.f32 %v1310, 0.2
    %v1439 = vmul.f32 %v1311, 0.2
    %v1440 = vmul.f32 %v1312, 0.2
    %v1441 = vmul.f32 %v1313, 0.2
    %v1442 = vmul.f32 %v1314, 0.2
    %v1443 = vmul.f32 %v1315, 0.2
    %v1444 = vmul.f32 %v1316, 0.2
    %v1445 = vmul.f32 %v1317, 0.2
    %v1446 = vmul.f32 %v1318, 0.2
    %v1447 = vmul.f32 %v1319, 0.2
    %v1448 = vmul.f32 %v1320, 0.2
    %v1449 = vmul.f32 %v1321, 0.2
    %v1450 = vmul.f32 %v1322, 0.2
    %v1451 = vmul.f32 %v1323, 0.2
    %v1452 = vmul.f32 %v1324, 0.2
    %v1453 = vmul.f32 %v1325, 0.2
    %v1454 = vsel %vm1326, %v1262, %v1390
    %v1455 = vsel %vm1327, %v1263, %v1391
    %v1456 = vsel %vm1328, %v1264, %v1392
    %v1457 = vsel %vm1329, %v1265, %v1393
    %v1458 = vsel %vm1330, %v1266, %v1394
    %v1459 = vsel %vm1331, %v1267, %v1395
    %v1460 = vsel %vm1332, %v1268, %v1396
    %v1461 = vsel %vm1333, %v1269, %v1397
    %v1462 = vsel %vm1334, %v1270, %v1398
    %v1463 = vsel %vm1335, %v1271, %v1399
    %v1464 = vsel %vm1336, %v1272, %v1400
    %v1465 = vsel %vm1337, %v1273, %v1401
    %v1466 = vsel %vm1338, %v1274, %v1402
    %v1467 = vsel %vm1339, %v1275, %v1403
    %v1468 = vsel %vm1340, %v1276, %v1404
    %v1469 = vsel %vm1341, %v1277, %v1405
    %v1470 = vsel %vm1342, %v1278, %v1406
    %v1471 = vsel %vm1343, %v1279, %v1407
    %v1472 = vsel %vm1344, %v1280, %v1408
    %v1473 = vsel %vm1345, %v1281, %v1409
    %v1474 = vsel %vm1346, %v1282, %v1410
    %v1475 = vsel %vm1347, %v1283, %v1411
    %v1476 = vsel %vm1348, %v1284, %v1412
    %v1477 = vsel %vm1349, %v1285, %v1413
    %v1478 = vsel %vm1350, %v1286, %v1414
    %v1479 = vsel %vm1351, %v1287, %v1415
    %v1480 = vsel %vm1352, %v1288, %v1416
    %v1481 = vsel %vm1353, %v1289, %v1417
    %v1482 = vsel %vm1354, %v1290, %v1418
    %v1483 = vsel %vm1355, %v1291, %v1419
    %v1484 = vsel %vm1356, %v1292, %v1420
    %v1485 = vsel %vm1357, %v1293, %v1421
    %v1486 = vsel %vm1358, %v1294, %v1422
    %v1487 = vsel %vm1359, %v1295, %v1423
    %v1488 = vsel %vm1360, %v1296, %v1424
    %v1489 = vsel %vm1361, %v1297, %v1425
    %v1490 = vsel %vm1362, %v1298, %v1426
    %v1491 = vsel %vm1363, %v1299, %v1427
    %v1492 = vsel %vm1364, %v1300, %v1428
    %v1493 = vsel %vm1365, %v1301, %v1429
    %v1494 = vsel %vm1366, %v1302, %v1430
    %v1495 = vsel %vm1367, %v1303, %v1431
    %v1496 = vsel %vm1368, %v1304, %v1432
    %v1497 = vsel %vm1369, %v1305, %v1433
    %v1498 = vsel %vm1370, %v1306, %v1434
    %v1499 = vsel %vm1371, %v1307, %v1435
    %v1500 = vsel %vm1372, %v1308, %v1436
    %v1501 = vsel %vm1373, %v1309, %v1437
    %v1502 = vsel %vm1374, %v1310, %v1438
    %v1503 = vsel %vm1375, %v1311, %v1439
    %v1504 = vsel %vm1376, %v1312, %v1440
    %v1505 = vsel %vm1377, %v1313, %v1441
    %v1506 = vsel %vm1378, %v1314, %v1442
    %v1507 = vsel %vm1379, %v1315, %v1443
    %v1508 = vsel %vm1380, %v1316, %v1444
    %v1509 = vsel %vm1381, %v1317, %v1445
    %v1510 = vsel %vm1382, %v1318, %v1446
    %v1511 = vsel %vm1383, %v1319, %v1447
    %v1512 = vsel %vm1384, %v1320, %v1448
    %v1513 = vsel %vm1385, %v1321, %v1449
    %v1514 = vsel %vm1386, %v1322, %v1450
    %v1515 = vsel %vm1387, %v1323, %v1451
    %v1516 = vsel %vm1388, %v1324, %v1452
    %v1517 = vsel %vm1389, %v1325, %v1453
    %v1518 = vld [vmem:[%s4] sm:$0x1]
    %v1520 = vlaneseq
    %v1521 = vshrl.u32 %v1520, 7
    %v1522 = vsub.s32 0, %v1521
    %v1523 = vrot.slane %v1518, %v1522
    %v1525 = vmul.f32 %v1454, %v1523
    %v1526 = vmul.f32 %v1455, %v1523
    %v1527 = vmul.f32 %v1456, %v1523
    %v1528 = vmul.f32 %v1457, %v1523
    %v1529 = vmul.f32 %v1458, %v1523
    %v1530 = vmul.f32 %v1459, %v1523
    %v1531 = vmul.f32 %v1460, %v1523
    %v1532 = vmul.f32 %v1461, %v1523
    %v1533 = vmul.f32 %v1462, %v1523
    %v1534 = vmul.f32 %v1463, %v1523
    %v1535 = vmul.f32 %v1464, %v1523
    %v1536 = vmul.f32 %v1465, %v1523
    %v1537 = vmul.f32 %v1466, %v1523
    %v1538 = vmul.f32 %v1467, %v1523
    %v1539 = vmul.f32 %v1468, %v1523
    %v1540 = vmul.f32 %v1469, %v1523
    %v1541 = vmul.f32 %v1470, %v1523
    %v1542 = vmul.f32 %v1471, %v1523
    %v1543 = vmul.f32 %v1472, %v1523
    %v1544 = vmul.f32 %v1473, %v1523
    %v1545 = vmul.f32 %v1474, %v1523
    %v1546 = vmul.f32 %v1475, %v1523
    %v1547 = vmul.f32 %v1476, %v1523
    %v1548 = vmul.f32 %v1477, %v1523
    %v1549 = vmul.f32 %v1478, %v1523
    %v1550 = vmul.f32 %v1479, %v1523
    %v1551 = vmul.f32 %v1480, %v1523
    %v1552 = vmul.f32 %v1481, %v1523
    %v1553 = vmul.f32 %v1482, %v1523
    %v1554 = vmul.f32 %v1483, %v1523
    %v1555 = vmul.f32 %v1484, %v1523
    %v1556 = vmul.f32 %v1485, %v1523
    %v1557 = vmul.f32 %v1486, %v1523
    %v1558 = vmul.f32 %v1487, %v1523
    %v1559 = vmul.f32 %v1488, %v1523
    %v1560 = vmul.f32 %v1489, %v1523
    %v1561 = vmul.f32 %v1490, %v1523
    %v1562 = vmul.f32 %v1491, %v1523
    %v1563 = vmul.f32 %v1492, %v1523
    %v1564 = vmul.f32 %v1493, %v1523
    %v1565 = vmul.f32 %v1494, %v1523
    %v1566 = vmul.f32 %v1495, %v1523
    %v1567 = vmul.f32 %v1496, %v1523
    %v1568 = vmul.f32 %v1497, %v1523
    %v1569 = vmul.f32 %v1498, %v1523
    %v1570 = vmul.f32 %v1499, %v1523
    %v1571 = vmul.f32 %v1500, %v1523
    %v1572 = vmul.f32 %v1501, %v1523
    %v1573 = vmul.f32 %v1502, %v1523
    %v1574 = vmul.f32 %v1503, %v1523
    %v1575 = vmul.f32 %v1504, %v1523
    %v1576 = vmul.f32 %v1505, %v1523
    %v1577 = vmul.f32 %v1506, %v1523
    %v1578 = vmul.f32 %v1507, %v1523
    %v1579 = vmul.f32 %v1508, %v1523
    %v1580 = vmul.f32 %v1509, %v1523
    %v1581 = vmul.f32 %v1510, %v1523
    %v1582 = vmul.f32 %v1511, %v1523
    %v1583 = vmul.f32 %v1512, %v1523
    %v1584 = vmul.f32 %v1513, %v1523
    %v1585 = vmul.f32 %v1514, %v1523
    %v1586 = vmul.f32 %v1515, %v1523
    %v1587 = vmul.f32 %v1516, %v1523
    %v1588 = vmul.f32 %v1517, %v1523
    %vm1589 = vcmask 261120
    %v1590 = vsel %vm1589, %v1525, 0.0
    %1591 = vadd.xlane.f32.xlu0 %v1590
    %v1592 = vpop.xlane.xlu0 %1591
    %v1593 = vsel %vm1589, %v1526, 0.0
    %1594 = vadd.xlane.f32.xlu0 %v1593
    %v1595 = vpop.xlane.xlu0 %1594
    %v1596 = vsel %vm1589, %v1527, 0.0
    %1597 = vadd.xlane.f32.xlu0 %v1596
    %v1598 = vpop.xlane.xlu0 %1597
    %v1599 = vsel %vm1589, %v1528, 0.0
    %1600 = vadd.xlane.f32.xlu0 %v1599
    %v1601 = vpop.xlane.xlu0 %1600
    %v1602 = vsel %vm1589, %v1529, 0.0
    %1603 = vadd.xlane.f32.xlu0 %v1602
    %v1604 = vpop.xlane.xlu0 %1603
    %v1605 = vsel %vm1589, %v1530, 0.0
    %1606 = vadd.xlane.f32.xlu0 %v1605
    %v1607 = vpop.xlane.xlu0 %1606
    %v1608 = vsel %vm1589, %v1531, 0.0
    %1609 = vadd.xlane.f32.xlu0 %v1608
    %v1610 = vpop.xlane.xlu0 %1609
    %v1611 = vsel %vm1589, %v1532, 0.0
    %1612 = vadd.xlane.f32.xlu0 %v1611
    %v1613 = vpop.xlane.xlu0 %1612
    %v1614 = vsel %vm1589, %v1533, 0.0
    %1615 = vadd.xlane.f32.xlu0 %v1614
    %v1616 = vpop.xlane.xlu0 %1615
    %v1617 = vsel %vm1589, %v1534, 0.0
    %1618 = vadd.xlane.f32.xlu0 %v1617
    %v1619 = vpop.xlane.xlu0 %1618
    %v1620 = vsel %vm1589, %v1535, 0.0
    %1621 = vadd.xlane.f32.xlu0 %v1620
    %v1622 = vpop.xlane.xlu0 %1621
    %v1623 = vsel %vm1589, %v1536, 0.0
    %1624 = vadd.xlane.f32.xlu0 %v1623
    %v1625 = vpop.xlane.xlu0 %1624
    %v1626 = vsel %vm1589, %v1537, 0.0
    %1627 = vadd.xlane.f32.xlu0 %v1626
    %v1628 = vpop.xlane.xlu0 %1627
    %v1629 = vsel %vm1589, %v1538, 0.0
    %1630 = vadd.xlane.f32.xlu0 %v1629
    %v1631 = vpop.xlane.xlu0 %1630
    %v1632 = vsel %vm1589, %v1539, 0.0
    %1633 = vadd.xlane.f32.xlu0 %v1632
    %v1634 = vpop.xlane.xlu0 %1633
    %v1635 = vsel %vm1589, %v1540, 0.0
    %1636 = vadd.xlane.f32.xlu0 %v1635
    %v1637 = vpop.xlane.xlu0 %1636
    %v1638 = vsel %vm1589, %v1541, 0.0
    %1639 = vadd.xlane.f32.xlu0 %v1638
    %v1640 = vpop.xlane.xlu0 %1639
    %v1641 = vsel %vm1589, %v1542, 0.0
    %1642 = vadd.xlane.f32.xlu0 %v1641
    %v1643 = vpop.xlane.xlu0 %1642
    %v1644 = vsel %vm1589, %v1543, 0.0
    %1645 = vadd.xlane.f32.xlu0 %v1644
    %v1646 = vpop.xlane.xlu0 %1645
    %v1647 = vsel %vm1589, %v1544, 0.0
    %1648 = vadd.xlane.f32.xlu0 %v1647
    %v1649 = vpop.xlane.xlu0 %1648
    %v1650 = vsel %vm1589, %v1545, 0.0
    %1651 = vadd.xlane.f32.xlu0 %v1650
    %v1652 = vpop.xlane.xlu0 %1651
    %v1653 = vsel %vm1589, %v1546, 0.0
    %1654 = vadd.xlane.f32.xlu0 %v1653
    %v1655 = vpop.xlane.xlu0 %1654
    %v1656 = vsel %vm1589, %v1547, 0.0
    %1657 = vadd.xlane.f32.xlu0 %v1656
    %v1658 = vpop.xlane.xlu0 %1657
    %v1659 = vsel %vm1589, %v1548, 0.0
    %1660 = vadd.xlane.f32.xlu0 %v1659
    %v1661 = vpop.xlane.xlu0 %1660
    %v1662 = vsel %vm1589, %v1549, 0.0
    %1663 = vadd.xlane.f32.xlu0 %v1662
    %v1664 = vpop.xlane.xlu0 %1663
    %v1665 = vsel %vm1589, %v1550, 0.0
    %1666 = vadd.xlane.f32.xlu0 %v1665
    %v1667 = vpop.xlane.xlu0 %1666
    %v1668 = vsel %vm1589, %v1551, 0.0
    %1669 = vadd.xlane.f32.xlu0 %v1668
    %v1670 = vpop.xlane.xlu0 %1669
    %v1671 = vsel %vm1589, %v1552, 0.0
    %1672 = vadd.xlane.f32.xlu0 %v1671
    %v1673 = vpop.xlane.xlu0 %1672
    %v1674 = vsel %vm1589, %v1553, 0.0
    %1675 = vadd.xlane.f32.xlu0 %v1674
    %v1676 = vpop.xlane.xlu0 %1675
    %v1677 = vsel %vm1589, %v1554, 0.0
    %1678 = vadd.xlane.f32.xlu0 %v1677
    %v1679 = vpop.xlane.xlu0 %1678
    %v1680 = vsel %vm1589, %v1555, 0.0
    %1681 = vadd.xlane.f32.xlu0 %v1680
    %v1682 = vpop.xlane.xlu0 %1681
    %v1683 = vsel %vm1589, %v1556, 0.0
    %1684 = vadd.xlane.f32.xlu0 %v1683
    %v1685 = vpop.xlane.xlu0 %1684
    %v1686 = vsel %vm1589, %v1557, 0.0
    %1687 = vadd.xlane.f32.xlu0 %v1686
    %v1688 = vpop.xlane.xlu0 %1687
    %v1689 = vsel %vm1589, %v1558, 0.0
    %1690 = vadd.xlane.f32.xlu0 %v1689
    %v1691 = vpop.xlane.xlu0 %1690
    %v1692 = vsel %vm1589, %v1559, 0.0
    %1693 = vadd.xlane.f32.xlu0 %v1692
    %v1694 = vpop.xlane.xlu0 %1693
    %v1695 = vsel %vm1589, %v1560, 0.0
    %1696 = vadd.xlane.f32.xlu0 %v1695
    %v1697 = vpop.xlane.xlu0 %1696
    %v1698 = vsel %vm1589, %v1561, 0.0
    %1699 = vadd.xlane.f32.xlu0 %v1698
    %v1700 = vpop.xlane.xlu0 %1699
    %v1701 = vsel %vm1589, %v1562, 0.0
    %1702 = vadd.xlane.f32.xlu0 %v1701
    %v1703 = vpop.xlane.xlu0 %1702
    %v1704 = vsel %vm1589, %v1563, 0.0
    %1705 = vadd.xlane.f32.xlu0 %v1704
    %v1706 = vpop.xlane.xlu0 %1705
    %v1707 = vsel %vm1589, %v1564, 0.0
    %1708 = vadd.xlane.f32.xlu0 %v1707
    %v1709 = vpop.xlane.xlu0 %1708
    %v1710 = vsel %vm1589, %v1565, 0.0
    %1711 = vadd.xlane.f32.xlu0 %v1710
    %v1712 = vpop.xlane.xlu0 %1711
    %v1713 = vsel %vm1589, %v1566, 0.0
    %1714 = vadd.xlane.f32.xlu0 %v1713
    %v1715 = vpop.xlane.xlu0 %1714
    %v1716 = vsel %vm1589, %v1567, 0.0
    %1717 = vadd.xlane.f32.xlu0 %v1716
    %v1718 = vpop.xlane.xlu0 %1717
    %v1719 = vsel %vm1589, %v1568, 0.0
    %1720 = vadd.xlane.f32.xlu0 %v1719
    %v1721 = vpop.xlane.xlu0 %1720
    %v1722 = vsel %vm1589, %v1569, 0.0
    %1723 = vadd.xlane.f32.xlu0 %v1722
    %v1724 = vpop.xlane.xlu0 %1723
    %v1725 = vsel %vm1589, %v1570, 0.0
    %1726 = vadd.xlane.f32.xlu0 %v1725
    %v1727 = vpop.xlane.xlu0 %1726
    %v1728 = vsel %vm1589, %v1571, 0.0
    %1729 = vadd.xlane.f32.xlu0 %v1728
    %v1730 = vpop.xlane.xlu0 %1729
    %v1731 = vsel %vm1589, %v1572, 0.0
    %1732 = vadd.xlane.f32.xlu0 %v1731
    %v1733 = vpop.xlane.xlu0 %1732
    %v1734 = vsel %vm1589, %v1573, 0.0
    %1735 = vadd.xlane.f32.xlu0 %v1734
    %v1736 = vpop.xlane.xlu0 %1735
    %v1737 = vsel %vm1589, %v1574, 0.0
    %1738 = vadd.xlane.f32.xlu0 %v1737
    %v1739 = vpop.xlane.xlu0 %1738
    %v1740 = vsel %vm1589, %v1575, 0.0
    %1741 = vadd.xlane.f32.xlu0 %v1740
    %v1742 = vpop.xlane.xlu0 %1741
    %v1743 = vsel %vm1589, %v1576, 0.0
    %1744 = vadd.xlane.f32.xlu0 %v1743
    %v1745 = vpop.xlane.xlu0 %1744
    %v1746 = vsel %vm1589, %v1577, 0.0
    %1747 = vadd.xlane.f32.xlu0 %v1746
    %v1748 = vpop.xlane.xlu0 %1747
    %v1749 = vsel %vm1589, %v1578, 0.0
    %1750 = vadd.xlane.f32.xlu0 %v1749
    %v1751 = vpop.xlane.xlu0 %1750
    %v1752 = vsel %vm1589, %v1579, 0.0
    %1753 = vadd.xlane.f32.xlu0 %v1752
    %v1754 = vpop.xlane.xlu0 %1753
    %v1755 = vsel %vm1589, %v1580, 0.0
    %1756 = vadd.xlane.f32.xlu0 %v1755
    %v1757 = vpop.xlane.xlu0 %1756
    %v1758 = vsel %vm1589, %v1581, 0.0
    %1759 = vadd.xlane.f32.xlu0 %v1758
    %v1760 = vpop.xlane.xlu0 %1759
    %v1761 = vsel %vm1589, %v1582, 0.0
    %1762 = vadd.xlane.f32.xlu0 %v1761
    %v1763 = vpop.xlane.xlu0 %1762
    %v1764 = vsel %vm1589, %v1583, 0.0
    %1765 = vadd.xlane.f32.xlu0 %v1764
    %v1766 = vpop.xlane.xlu0 %1765
    %v1767 = vsel %vm1589, %v1584, 0.0
    %1768 = vadd.xlane.f32.xlu0 %v1767
    %v1769 = vpop.xlane.xlu0 %1768
    %v1770 = vsel %vm1589, %v1585, 0.0
    %1771 = vadd.xlane.f32.xlu0 %v1770
    %v1772 = vpop.xlane.xlu0 %1771
    %v1773 = vsel %vm1589, %v1586, 0.0
    %1774 = vadd.xlane.f32.xlu0 %v1773
    %v1775 = vpop.xlane.xlu0 %1774
    %v1776 = vsel %vm1589, %v1587, 0.0
    %1777 = vadd.xlane.f32.xlu0 %v1776
    %v1778 = vpop.xlane.xlu0 %1777
    %v1779 = vsel %vm1589, %v1588, 0.0
    %1780 = vadd.xlane.f32.xlu0 %v1779
    %v1781 = vpop.xlane.xlu0 %1780
    %v1782 = vld [vmem:[%s5] sm:$0xff]
    %v1784 = vlaneseq
    %v1785 = vshrl.u32 %v1784, 7
    %v1786 = vsub.s32 0, %v1785
    %v1787 = vrot.slane %v1782, %v1786
    %1789 = vbcast.lane.b32.xlu0 %v1787, 256
    %v1790 = vpop.permute.xlu0 %1789
    %v1791 = vlaneseq
    %v1792 = vshrl.u32 %v1791, 7
    %v1793 = vsub.s32 1, %v1792
    %v1794 = vrot.slane %v1782, %v1793
    %1796 = vbcast.lane.b32.xlu0 %v1794, 256
    %v1797 = vpop.permute.xlu0 %1796
    %v1798 = vlaneseq
    %v1799 = vshrl.u32 %v1798, 7
    %v1800 = vsub.s32 2, %v1799
    %v1801 = vrot.slane %v1782, %v1800
    %1803 = vbcast.lane.b32.xlu0 %v1801, 256
    %v1804 = vpop.permute.xlu0 %1803
    %v1805 = vlaneseq
    %v1806 = vshrl.u32 %v1805, 7
    %v1807 = vsub.s32 3, %v1806
    %v1808 = vrot.slane %v1782, %v1807
    %1810 = vbcast.lane.b32.xlu0 %v1808, 256
    %v1811 = vpop.permute.xlu0 %1810
    %v1812 = vlaneseq
    %v1813 = vshrl.u32 %v1812, 7
    %v1814 = vsub.s32 4, %v1813
    %v1815 = vrot.slane %v1782, %v1814
    %1817 = vbcast.lane.b32.xlu0 %v1815, 256
    %v1818 = vpop.permute.xlu0 %1817
    %v1819 = vlaneseq
    %v1820 = vshrl.u32 %v1819, 7
    %v1821 = vsub.s32 5, %v1820
    %v1822 = vrot.slane %v1782, %v1821
    %1824 = vbcast.lane.b32.xlu0 %v1822, 256
    %v1825 = vpop.permute.xlu0 %1824
    %v1826 = vlaneseq
    %v1827 = vshrl.u32 %v1826, 7
    %v1828 = vsub.s32 6, %v1827
    %v1829 = vrot.slane %v1782, %v1828
    %1831 = vbcast.lane.b32.xlu0 %v1829, 256
    %v1832 = vpop.permute.xlu0 %1831
    %v1833 = vlaneseq
    %v1834 = vshrl.u32 %v1833, 7
    %v1835 = vsub.s32 7, %v1834
    %v1836 = vrot.slane %v1782, %v1835
    %1838 = vbcast.lane.b32.xlu0 %v1836, 256
    %v1839 = vpop.permute.xlu0 %1838
    %v1848 = vadd.f32 %v1592, %v1790
    %v1849 = vadd.f32 %v1595, %v1797
    %v1850 = vadd.f32 %v1598, %v1804
    %v1851 = vadd.f32 %v1601, %v1811
    %v1852 = vadd.f32 %v1604, %v1818
    %v1853 = vadd.f32 %v1607, %v1825
    %v1854 = vadd.f32 %v1610, %v1832
    %v1855 = vadd.f32 %v1613, %v1839
    %v1856 = vadd.f32 %v1616, %v1790
    %v1857 = vadd.f32 %v1619, %v1797
    %v1858 = vadd.f32 %v1622, %v1804
    %v1859 = vadd.f32 %v1625, %v1811
    %v1860 = vadd.f32 %v1628, %v1818
    %v1861 = vadd.f32 %v1631, %v1825
    %v1862 = vadd.f32 %v1634, %v1832
    %v1863 = vadd.f32 %v1637, %v1839
    %v1864 = vadd.f32 %v1640, %v1790
    %v1865 = vadd.f32 %v1643, %v1797
    %v1866 = vadd.f32 %v1646, %v1804
    %v1867 = vadd.f32 %v1649, %v1811
    %v1868 = vadd.f32 %v1652, %v1818
    %v1869 = vadd.f32 %v1655, %v1825
    %v1870 = vadd.f32 %v1658, %v1832
    %v1871 = vadd.f32 %v1661, %v1839
    %v1872 = vadd.f32 %v1664, %v1790
    %v1873 = vadd.f32 %v1667, %v1797
    %v1874 = vadd.f32 %v1670, %v1804
    %v1875 = vadd.f32 %v1673, %v1811
    %v1876 = vadd.f32 %v1676, %v1818
    %v1877 = vadd.f32 %v1679, %v1825
    %v1878 = vadd.f32 %v1682, %v1832
    %v1879 = vadd.f32 %v1685, %v1839
    %v1880 = vadd.f32 %v1688, %v1790
    %v1881 = vadd.f32 %v1691, %v1797
    %v1882 = vadd.f32 %v1694, %v1804
    %v1883 = vadd.f32 %v1697, %v1811
    %v1884 = vadd.f32 %v1700, %v1818
    %v1885 = vadd.f32 %v1703, %v1825
    %v1886 = vadd.f32 %v1706, %v1832
    %v1887 = vadd.f32 %v1709, %v1839
    %v1888 = vadd.f32 %v1712, %v1790
    %v1889 = vadd.f32 %v1715, %v1797
    %v1890 = vadd.f32 %v1718, %v1804
    %v1891 = vadd.f32 %v1721, %v1811
    %v1892 = vadd.f32 %v1724, %v1818
    %v1893 = vadd.f32 %v1727, %v1825
    %v1894 = vadd.f32 %v1730, %v1832
    %v1895 = vadd.f32 %v1733, %v1839
    %v1896 = vadd.f32 %v1736, %v1790
    %v1897 = vadd.f32 %v1739, %v1797
    %v1898 = vadd.f32 %v1742, %v1804
    %v1899 = vadd.f32 %v1745, %v1811
    %v1900 = vadd.f32 %v1748, %v1818
    %v1901 = vadd.f32 %v1751, %v1825
    %v1902 = vadd.f32 %v1754, %v1832
    %v1903 = vadd.f32 %v1757, %v1839
    %v1904 = vadd.f32 %v1760, %v1790
    %v1905 = vadd.f32 %v1763, %v1797
    %v1906 = vadd.f32 %v1766, %v1804
    %v1907 = vadd.f32 %v1769, %v1811
    %v1908 = vadd.f32 %v1772, %v1818
    %v1909 = vadd.f32 %v1775, %v1825
    %v1910 = vadd.f32 %v1778, %v1832
    %v1911 = vadd.f32 %v1781, %v1839
    %1976 = vset.pattern.permute.xlu0 0
    %1977 = vperm.xlu0 %1976, %v1848
    %v1978 = vpop.permute.xlu0 %1977
    %1979 = vset.pattern.permute.xlu0 0
    %1980 = vperm.xlu0 %1979, %v1849
    %v1981 = vpop.permute.xlu0 %1980
    %1982 = vset.pattern.permute.xlu0 0
    %1983 = vperm.xlu0 %1982, %v1850
    %v1984 = vpop.permute.xlu0 %1983
    %1985 = vset.pattern.permute.xlu0 0
    %1986 = vperm.xlu0 %1985, %v1851
    %v1987 = vpop.permute.xlu0 %1986
    %1988 = vset.pattern.permute.xlu0 0
    %1989 = vperm.xlu0 %1988, %v1852
    %v1990 = vpop.permute.xlu0 %1989
    %1991 = vset.pattern.permute.xlu0 0
    %1992 = vperm.xlu0 %1991, %v1853
    %v1993 = vpop.permute.xlu0 %1992
    %1994 = vset.pattern.permute.xlu0 0
    %1995 = vperm.xlu0 %1994, %v1854
    %v1996 = vpop.permute.xlu0 %1995
    %1997 = vset.pattern.permute.xlu0 0
    %1998 = vperm.xlu0 %1997, %v1855
    %v1999 = vpop.permute.xlu0 %1998
    %2000 = vset.pattern.permute.xlu0 0
    %2001 = vperm.xlu0 %2000, %v1856
    %v2002 = vpop.permute.xlu0 %2001
    %2003 = vset.pattern.permute.xlu0 0
    %2004 = vperm.xlu0 %2003, %v1857
    %v2005 = vpop.permute.xlu0 %2004
    %2006 = vset.pattern.permute.xlu0 0
    %2007 = vperm.xlu0 %2006, %v1858
    %v2008 = vpop.permute.xlu0 %2007
    %2009 = vset.pattern.permute.xlu0 0
    %2010 = vperm.xlu0 %2009, %v1859
    %v2011 = vpop.permute.xlu0 %2010
    %2012 = vset.pattern.permute.xlu0 0
    %2013 = vperm.xlu0 %2012, %v1860
    %v2014 = vpop.permute.xlu0 %2013
    %2015 = vset.pattern.permute.xlu0 0
    %2016 = vperm.xlu0 %2015, %v1861
    %v2017 = vpop.permute.xlu0 %2016
    %2018 = vset.pattern.permute.xlu0 0
    %2019 = vperm.xlu0 %2018, %v1862
    %v2020 = vpop.permute.xlu0 %2019
    %2021 = vset.pattern.permute.xlu0 0
    %2022 = vperm.xlu0 %2021, %v1863
    %v2023 = vpop.permute.xlu0 %2022
    %2024 = vset.pattern.permute.xlu0 0
    %2025 = vperm.xlu0 %2024, %v1864
    %v2026 = vpop.permute.xlu0 %2025
    %2027 = vset.pattern.permute.xlu0 0
    %2028 = vperm.xlu0 %2027, %v1865
    %v2029 = vpop.permute.xlu0 %2028
    %2030 = vset.pattern.permute.xlu0 0
    %2031 = vperm.xlu0 %2030, %v1866
    %v2032 = vpop.permute.xlu0 %2031
    %2033 = vset.pattern.permute.xlu0 0
    %2034 = vperm.xlu0 %2033, %v1867
    %v2035 = vpop.permute.xlu0 %2034
    %2036 = vset.pattern.permute.xlu0 0
    %2037 = vperm.xlu0 %2036, %v1868
    %v2038 = vpop.permute.xlu0 %2037
    %2039 = vset.pattern.permute.xlu0 0
    %2040 = vperm.xlu0 %2039, %v1869
    %v2041 = vpop.permute.xlu0 %2040
    %2042 = vset.pattern.permute.xlu0 0
    %2043 = vperm.xlu0 %2042, %v1870
    %v2044 = vpop.permute.xlu0 %2043
    %2045 = vset.pattern.permute.xlu0 0
    %2046 = vperm.xlu0 %2045, %v1871
    %v2047 = vpop.permute.xlu0 %2046
    %2048 = vset.pattern.permute.xlu0 0
    %2049 = vperm.xlu0 %2048, %v1872
    %v2050 = vpop.permute.xlu0 %2049
    %2051 = vset.pattern.permute.xlu0 0
    %2052 = vperm.xlu0 %2051, %v1873
    %v2053 = vpop.permute.xlu0 %2052
    %2054 = vset.pattern.permute.xlu0 0
    %2055 = vperm.xlu0 %2054, %v1874
    %v2056 = vpop.permute.xlu0 %2055
    %2057 = vset.pattern.permute.xlu0 0
    %2058 = vperm.xlu0 %2057, %v1875
    %v2059 = vpop.permute.xlu0 %2058
    %2060 = vset.pattern.permute.xlu0 0
    %2061 = vperm.xlu0 %2060, %v1876
    %v2062 = vpop.permute.xlu0 %2061
    %2063 = vset.pattern.permute.xlu0 0
    %2064 = vperm.xlu0 %2063, %v1877
    %v2065 = vpop.permute.xlu0 %2064
    %2066 = vset.pattern.permute.xlu0 0
    %2067 = vperm.xlu0 %2066, %v1878
    %v2068 = vpop.permute.xlu0 %2067
    %2069 = vset.pattern.permute.xlu0 0
    %2070 = vperm.xlu0 %2069, %v1879
    %v2071 = vpop.permute.xlu0 %2070
    %2072 = vset.pattern.permute.xlu0 0
    %2073 = vperm.xlu0 %2072, %v1880
    %v2074 = vpop.permute.xlu0 %2073
    %2075 = vset.pattern.permute.xlu0 0
    %2076 = vperm.xlu0 %2075, %v1881
    %v2077 = vpop.permute.xlu0 %2076
    %2078 = vset.pattern.permute.xlu0 0
    %2079 = vperm.xlu0 %2078, %v1882
    %v2080 = vpop.permute.xlu0 %2079
    %2081 = vset.pattern.permute.xlu0 0
    %2082 = vperm.xlu0 %2081, %v1883
    %v2083 = vpop.permute.xlu0 %2082
    %2084 = vset.pattern.permute.xlu0 0
    %2085 = vperm.xlu0 %2084, %v1884
    %v2086 = vpop.permute.xlu0 %2085
    %2087 = vset.pattern.permute.xlu0 0
    %2088 = vperm.xlu0 %2087, %v1885
    %v2089 = vpop.permute.xlu0 %2088
    %2090 = vset.pattern.permute.xlu0 0
    %2091 = vperm.xlu0 %2090, %v1886
    %v2092 = vpop.permute.xlu0 %2091
    %2093 = vset.pattern.permute.xlu0 0
    %2094 = vperm.xlu0 %2093, %v1887
    %v2095 = vpop.permute.xlu0 %2094
    %2096 = vset.pattern.permute.xlu0 0
    %2097 = vperm.xlu0 %2096, %v1888
    %v2098 = vpop.permute.xlu0 %2097
    %2099 = vset.pattern.permute.xlu0 0
    %2100 = vperm.xlu0 %2099, %v1889
    %v2101 = vpop.permute.xlu0 %2100
    %2102 = vset.pattern.permute.xlu0 0
    %2103 = vperm.xlu0 %2102, %v1890
    %v2104 = vpop.permute.xlu0 %2103
    %2105 = vset.pattern.permute.xlu0 0
    %2106 = vperm.xlu0 %2105, %v1891
    %v2107 = vpop.permute.xlu0 %2106
    %2108 = vset.pattern.permute.xlu0 0
    %2109 = vperm.xlu0 %2108, %v1892
    %v2110 = vpop.permute.xlu0 %2109
    %2111 = vset.pattern.permute.xlu0 0
    %2112 = vperm.xlu0 %2111, %v1893
    %v2113 = vpop.permute.xlu0 %2112
    %2114 = vset.pattern.permute.xlu0 0
    %2115 = vperm.xlu0 %2114, %v1894
    %v2116 = vpop.permute.xlu0 %2115
    %2117 = vset.pattern.permute.xlu0 0
    %2118 = vperm.xlu0 %2117, %v1895
    %v2119 = vpop.permute.xlu0 %2118
    %2120 = vset.pattern.permute.xlu0 0
    %2121 = vperm.xlu0 %2120, %v1896
    %v2122 = vpop.permute.xlu0 %2121
    %2123 = vset.pattern.permute.xlu0 0
    %2124 = vperm.xlu0 %2123, %v1897
    %v2125 = vpop.permute.xlu0 %2124
    %2126 = vset.pattern.permute.xlu0 0
    %2127 = vperm.xlu0 %2126, %v1898
    %v2128 = vpop.permute.xlu0 %2127
    %2129 = vset.pattern.permute.xlu0 0
    %2130 = vperm.xlu0 %2129, %v1899
    %v2131 = vpop.permute.xlu0 %2130
    %2132 = vset.pattern.permute.xlu0 0
    %2133 = vperm.xlu0 %2132, %v1900
    %v2134 = vpop.permute.xlu0 %2133
    %2135 = vset.pattern.permute.xlu0 0
    %2136 = vperm.xlu0 %2135, %v1901
    %v2137 = vpop.permute.xlu0 %2136
    %2138 = vset.pattern.permute.xlu0 0
    %2139 = vperm.xlu0 %2138, %v1902
    %v2140 = vpop.permute.xlu0 %2139
    %2141 = vset.pattern.permute.xlu0 0
    %2142 = vperm.xlu0 %2141, %v1903
    %v2143 = vpop.permute.xlu0 %2142
    %2144 = vset.pattern.permute.xlu0 0
    %2145 = vperm.xlu0 %2144, %v1904
    %v2146 = vpop.permute.xlu0 %2145
    %2147 = vset.pattern.permute.xlu0 0
    %2148 = vperm.xlu0 %2147, %v1905
    %v2149 = vpop.permute.xlu0 %2148
    %2150 = vset.pattern.permute.xlu0 0
    %2151 = vperm.xlu0 %2150, %v1906
    %v2152 = vpop.permute.xlu0 %2151
    %2153 = vset.pattern.permute.xlu0 0
    %2154 = vperm.xlu0 %2153, %v1907
    %v2155 = vpop.permute.xlu0 %2154
    %2156 = vset.pattern.permute.xlu0 0
    %2157 = vperm.xlu0 %2156, %v1908
    %v2158 = vpop.permute.xlu0 %2157
    %2159 = vset.pattern.permute.xlu0 0
    %2160 = vperm.xlu0 %2159, %v1909
    %v2161 = vpop.permute.xlu0 %2160
    %2162 = vset.pattern.permute.xlu0 0
    %2163 = vperm.xlu0 %2162, %v1910
    %v2164 = vpop.permute.xlu0 %2163
    %2165 = vset.pattern.permute.xlu0 0
    %2166 = vperm.xlu0 %2165, %v1911
    %v2167 = vpop.permute.xlu0 %2166
    %v2168 = vlaneseq
    %v2169 = vand.u32 %v2168, 127
    %v2170 = vlaneseq
    %v2171 = vshrl.u32 %v2170, 7
    %v2172 = vsub.s32 %v2169, %v2171
    %v2173 = vrot.slane %v1978, %v2172
    %v2174 = vlaneseq
    %v2175 = vshrl.u32 %v2174, 7
    %v2176 = vsub.s32 %v2169, %v2175
    %v2177 = vrot.slane %v1981, %v2176
    %v2178 = vlaneseq
    %v2179 = vshrl.u32 %v2178, 7
    %v2180 = vsub.s32 %v2169, %v2179
    %v2181 = vrot.slane %v1984, %v2180
    %v2182 = vlaneseq
    %v2183 = vshrl.u32 %v2182, 7
    %v2184 = vsub.s32 %v2169, %v2183
    %v2185 = vrot.slane %v1987, %v2184
    %v2186 = vlaneseq
    %v2187 = vshrl.u32 %v2186, 7
    %v2188 = vsub.s32 %v2169, %v2187
    %v2189 = vrot.slane %v1990, %v2188
    %v2190 = vlaneseq
    %v2191 = vshrl.u32 %v2190, 7
    %v2192 = vsub.s32 %v2169, %v2191
    %v2193 = vrot.slane %v1993, %v2192
    %v2194 = vlaneseq
    %v2195 = vshrl.u32 %v2194, 7
    %v2196 = vsub.s32 %v2169, %v2195
    %v2197 = vrot.slane %v1996, %v2196
    %v2198 = vlaneseq
    %v2199 = vshrl.u32 %v2198, 7
    %v2200 = vsub.s32 %v2169, %v2199
    %v2201 = vrot.slane %v1999, %v2200
    %v2202 = vlaneseq
    %v2203 = vshrl.u32 %v2202, 7
    %v2204 = vsub.s32 %v2169, %v2203
    %v2205 = vrot.slane %v2002, %v2204
    %v2206 = vlaneseq
    %v2207 = vshrl.u32 %v2206, 7
    %v2208 = vsub.s32 %v2169, %v2207
    %v2209 = vrot.slane %v2005, %v2208
    %v2210 = vlaneseq
    %v2211 = vshrl.u32 %v2210, 7
    %v2212 = vsub.s32 %v2169, %v2211
    %v2213 = vrot.slane %v2008, %v2212
    %v2214 = vlaneseq
    %v2215 = vshrl.u32 %v2214, 7
    %v2216 = vsub.s32 %v2169, %v2215
    %v2217 = vrot.slane %v2011, %v2216
    %v2218 = vlaneseq
    %v2219 = vshrl.u32 %v2218, 7
    %v2220 = vsub.s32 %v2169, %v2219
    %v2221 = vrot.slane %v2014, %v2220
    %v2222 = vlaneseq
    %v2223 = vshrl.u32 %v2222, 7
    %v2224 = vsub.s32 %v2169, %v2223
    %v2225 = vrot.slane %v2017, %v2224
    %v2226 = vlaneseq
    %v2227 = vshrl.u32 %v2226, 7
    %v2228 = vsub.s32 %v2169, %v2227
    %v2229 = vrot.slane %v2020, %v2228
    %v2230 = vlaneseq
    %v2231 = vshrl.u32 %v2230, 7
    %v2232 = vsub.s32 %v2169, %v2231
    %v2233 = vrot.slane %v2023, %v2232
    %v2234 = vlaneseq
    %v2235 = vshrl.u32 %v2234, 7
    %v2236 = vsub.s32 %v2169, %v2235
    %v2237 = vrot.slane %v2026, %v2236
    %v2238 = vlaneseq
    %v2239 = vshrl.u32 %v2238, 7
    %v2240 = vsub.s32 %v2169, %v2239
    %v2241 = vrot.slane %v2029, %v2240
    %v2242 = vlaneseq
    %v2243 = vshrl.u32 %v2242, 7
    %v2244 = vsub.s32 %v2169, %v2243
    %v2245 = vrot.slane %v2032, %v2244
    %v2246 = vlaneseq
    %v2247 = vshrl.u32 %v2246, 7
    %v2248 = vsub.s32 %v2169, %v2247
    %v2249 = vrot.slane %v2035, %v2248
    %v2250 = vlaneseq
    %v2251 = vshrl.u32 %v2250, 7
    %v2252 = vsub.s32 %v2169, %v2251
    %v2253 = vrot.slane %v2038, %v2252
    %v2254 = vlaneseq
    %v2255 = vshrl.u32 %v2254, 7
    %v2256 = vsub.s32 %v2169, %v2255
    %v2257 = vrot.slane %v2041, %v2256
    %v2258 = vlaneseq
    %v2259 = vshrl.u32 %v2258, 7
    %v2260 = vsub.s32 %v2169, %v2259
    %v2261 = vrot.slane %v2044, %v2260
    %v2262 = vlaneseq
    %v2263 = vshrl.u32 %v2262, 7
    %v2264 = vsub.s32 %v2169, %v2263
    %v2265 = vrot.slane %v2047, %v2264
    %v2266 = vlaneseq
    %v2267 = vshrl.u32 %v2266, 7
    %v2268 = vsub.s32 %v2169, %v2267
    %v2269 = vrot.slane %v2050, %v2268
    %v2270 = vlaneseq
    %v2271 = vshrl.u32 %v2270, 7
    %v2272 = vsub.s32 %v2169, %v2271
    %v2273 = vrot.slane %v2053, %v2272
    %v2274 = vlaneseq
    %v2275 = vshrl.u32 %v2274, 7
    %v2276 = vsub.s32 %v2169, %v2275
    %v2277 = vrot.slane %v2056, %v2276
    %v2278 = vlaneseq
    %v2279 = vshrl.u32 %v2278, 7
    %v2280 = vsub.s32 %v2169, %v2279
    %v2281 = vrot.slane %v2059, %v2280
    %v2282 = vlaneseq
    %v2283 = vshrl.u32 %v2282, 7
    %v2284 = vsub.s32 %v2169, %v2283
    %v2285 = vrot.slane %v2062, %v2284
    %v2286 = vlaneseq
    %v2287 = vshrl.u32 %v2286, 7
    %v2288 = vsub.s32 %v2169, %v2287
    %v2289 = vrot.slane %v2065, %v2288
    %v2290 = vlaneseq
    %v2291 = vshrl.u32 %v2290, 7
    %v2292 = vsub.s32 %v2169, %v2291
    %v2293 = vrot.slane %v2068, %v2292
    %v2294 = vlaneseq
    %v2295 = vshrl.u32 %v2294, 7
    %v2296 = vsub.s32 %v2169, %v2295
    %v2297 = vrot.slane %v2071, %v2296
    %v2298 = vlaneseq
    %v2299 = vshrl.u32 %v2298, 7
    %v2300 = vsub.s32 %v2169, %v2299
    %v2301 = vrot.slane %v2074, %v2300
    %v2302 = vlaneseq
    %v2303 = vshrl.u32 %v2302, 7
    %v2304 = vsub.s32 %v2169, %v2303
    %v2305 = vrot.slane %v2077, %v2304
    %v2306 = vlaneseq
    %v2307 = vshrl.u32 %v2306, 7
    %v2308 = vsub.s32 %v2169, %v2307
    %v2309 = vrot.slane %v2080, %v2308
    %v2310 = vlaneseq
    %v2311 = vshrl.u32 %v2310, 7
    %v2312 = vsub.s32 %v2169, %v2311
    %v2313 = vrot.slane %v2083, %v2312
    %v2314 = vlaneseq
    %v2315 = vshrl.u32 %v2314, 7
    %v2316 = vsub.s32 %v2169, %v2315
    %v2317 = vrot.slane %v2086, %v2316
    %v2318 = vlaneseq
    %v2319 = vshrl.u32 %v2318, 7
    %v2320 = vsub.s32 %v2169, %v2319
    %v2321 = vrot.slane %v2089, %v2320
    %v2322 = vlaneseq
    %v2323 = vshrl.u32 %v2322, 7
    %v2324 = vsub.s32 %v2169, %v2323
    %v2325 = vrot.slane %v2092, %v2324
    %v2326 = vlaneseq
    %v2327 = vshrl.u32 %v2326, 7
    %v2328 = vsub.s32 %v2169, %v2327
    %v2329 = vrot.slane %v2095, %v2328
    %v2330 = vlaneseq
    %v2331 = vshrl.u32 %v2330, 7
    %v2332 = vsub.s32 %v2169, %v2331
    %v2333 = vrot.slane %v2098, %v2332
    %v2334 = vlaneseq
    %v2335 = vshrl.u32 %v2334, 7
    %v2336 = vsub.s32 %v2169, %v2335
    %v2337 = vrot.slane %v2101, %v2336
    %v2338 = vlaneseq
    %v2339 = vshrl.u32 %v2338, 7
    %v2340 = vsub.s32 %v2169, %v2339
    %v2341 = vrot.slane %v2104, %v2340
    %v2342 = vlaneseq
    %v2343 = vshrl.u32 %v2342, 7
    %v2344 = vsub.s32 %v2169, %v2343
    %v2345 = vrot.slane %v2107, %v2344
    %v2346 = vlaneseq
    %v2347 = vshrl.u32 %v2346, 7
    %v2348 = vsub.s32 %v2169, %v2347
    %v2349 = vrot.slane %v2110, %v2348
    %v2350 = vlaneseq
    %v2351 = vshrl.u32 %v2350, 7
    %v2352 = vsub.s32 %v2169, %v2351
    %v2353 = vrot.slane %v2113, %v2352
    %v2354 = vlaneseq
    %v2355 = vshrl.u32 %v2354, 7
    %v2356 = vsub.s32 %v2169, %v2355
    %v2357 = vrot.slane %v2116, %v2356
    %v2358 = vlaneseq
    %v2359 = vshrl.u32 %v2358, 7
    %v2360 = vsub.s32 %v2169, %v2359
    %v2361 = vrot.slane %v2119, %v2360
    %v2362 = vlaneseq
    %v2363 = vshrl.u32 %v2362, 7
    %v2364 = vsub.s32 %v2169, %v2363
    %v2365 = vrot.slane %v2122, %v2364
    %v2366 = vlaneseq
    %v2367 = vshrl.u32 %v2366, 7
    %v2368 = vsub.s32 %v2169, %v2367
    %v2369 = vrot.slane %v2125, %v2368
    %v2370 = vlaneseq
    %v2371 = vshrl.u32 %v2370, 7
    %v2372 = vsub.s32 %v2169, %v2371
    %v2373 = vrot.slane %v2128, %v2372
    %v2374 = vlaneseq
    %v2375 = vshrl.u32 %v2374, 7
    %v2376 = vsub.s32 %v2169, %v2375
    %v2377 = vrot.slane %v2131, %v2376
    %v2378 = vlaneseq
    %v2379 = vshrl.u32 %v2378, 7
    %v2380 = vsub.s32 %v2169, %v2379
    %v2381 = vrot.slane %v2134, %v2380
    %v2382 = vlaneseq
    %v2383 = vshrl.u32 %v2382, 7
    %v2384 = vsub.s32 %v2169, %v2383
    %v2385 = vrot.slane %v2137, %v2384
    %v2386 = vlaneseq
    %v2387 = vshrl.u32 %v2386, 7
    %v2388 = vsub.s32 %v2169, %v2387
    %v2389 = vrot.slane %v2140, %v2388
    %v2390 = vlaneseq
    %v2391 = vshrl.u32 %v2390, 7
    %v2392 = vsub.s32 %v2169, %v2391
    %v2393 = vrot.slane %v2143, %v2392
    %v2394 = vlaneseq
    %v2395 = vshrl.u32 %v2394, 7
    %v2396 = vsub.s32 %v2169, %v2395
    %v2397 = vrot.slane %v2146, %v2396
    %v2398 = vlaneseq
    %v2399 = vshrl.u32 %v2398, 7
    %v2400 = vsub.s32 %v2169, %v2399
    %v2401 = vrot.slane %v2149, %v2400
    %v2402 = vlaneseq
    %v2403 = vshrl.u32 %v2402, 7
    %v2404 = vsub.s32 %v2169, %v2403
    %v2405 = vrot.slane %v2152, %v2404
    %v2406 = vlaneseq
    %v2407 = vshrl.u32 %v2406, 7
    %v2408 = vsub.s32 %v2169, %v2407
    %v2409 = vrot.slane %v2155, %v2408
    %v2410 = vlaneseq
    %v2411 = vshrl.u32 %v2410, 7
    %v2412 = vsub.s32 %v2169, %v2411
    %v2413 = vrot.slane %v2158, %v2412
    %v2414 = vlaneseq
    %v2415 = vshrl.u32 %v2414, 7
    %v2416 = vsub.s32 %v2169, %v2415
    %v2417 = vrot.slane %v2161, %v2416
    %v2418 = vlaneseq
    %v2419 = vshrl.u32 %v2418, 7
    %v2420 = vsub.s32 %v2169, %v2419
    %v2421 = vrot.slane %v2164, %v2420
    %v2422 = vlaneseq
    %v2423 = vshrl.u32 %v2422, 7
    %v2424 = vsub.s32 %v2169, %v2423
    %v2425 = vrot.slane %v2167, %v2424
    %vm2426 = vcmask 1041409
    %v2427 = vsel %vm2426, %v2177, %v2173
    %vm2428 = vcmask 1042434
    %v2429 = vsel %vm2428, %v2181, %v2427
    %vm2430 = vcmask 1043459
    %v2431 = vsel %vm2430, %v2185, %v2429
    %vm2432 = vcmask 1044484
    %v2433 = vsel %vm2432, %v2189, %v2431
    %vm2434 = vcmask 1045509
    %v2435 = vsel %vm2434, %v2193, %v2433
    %vm2436 = vcmask 1046534
    %v2437 = vsel %vm2436, %v2197, %v2435
    %vm2438 = vcmask 1047559
    %v2439 = vsel %vm2438, %v2201, %v2437
    %v2440 = vsel %vm2426, %v2209, %v2205
    %v2441 = vsel %vm2428, %v2213, %v2440
    %v2442 = vsel %vm2430, %v2217, %v2441
    %v2443 = vsel %vm2432, %v2221, %v2442
    %v2444 = vsel %vm2434, %v2225, %v2443
    %v2445 = vsel %vm2436, %v2229, %v2444
    %v2446 = vsel %vm2438, %v2233, %v2445
    %v2447 = vsel %vm2426, %v2241, %v2237
    %v2448 = vsel %vm2428, %v2245, %v2447
    %v2449 = vsel %vm2430, %v2249, %v2448
    %v2450 = vsel %vm2432, %v2253, %v2449
    %v2451 = vsel %vm2434, %v2257, %v2450
    %v2452 = vsel %vm2436, %v2261, %v2451
    %v2453 = vsel %vm2438, %v2265, %v2452
    %v2454 = vsel %vm2426, %v2273, %v2269
    %v2455 = vsel %vm2428, %v2277, %v2454
    %v2456 = vsel %vm2430, %v2281, %v2455
    %v2457 = vsel %vm2432, %v2285, %v2456
    %v2458 = vsel %vm2434, %v2289, %v2457
    %v2459 = vsel %vm2436, %v2293, %v2458
    %v2460 = vsel %vm2438, %v2297, %v2459
    %v2461 = vsel %vm2426, %v2305, %v2301
    %v2462 = vsel %vm2428, %v2309, %v2461
    %v2463 = vsel %vm2430, %v2313, %v2462
    %v2464 = vsel %vm2432, %v2317, %v2463
    %v2465 = vsel %vm2434, %v2321, %v2464
    %v2466 = vsel %vm2436, %v2325, %v2465
    %v2467 = vsel %vm2438, %v2329, %v2466
    %v2468 = vsel %vm2426, %v2337, %v2333
    %v2469 = vsel %vm2428, %v2341, %v2468
    %v2470 = vsel %vm2430, %v2345, %v2469
    %v2471 = vsel %vm2432, %v2349, %v2470
    %v2472 = vsel %vm2434, %v2353, %v2471
    %v2473 = vsel %vm2436, %v2357, %v2472
    %v2474 = vsel %vm2438, %v2361, %v2473
    %v2475 = vsel %vm2426, %v2369, %v2365
    %v2476 = vsel %vm2428, %v2373, %v2475
    %v2477 = vsel %vm2430, %v2377, %v2476
    %v2478 = vsel %vm2432, %v2381, %v2477
    %v2479 = vsel %vm2434, %v2385, %v2478
    %v2480 = vsel %vm2436, %v2389, %v2479
    %v2481 = vsel %vm2438, %v2393, %v2480
    %v2482 = vsel %vm2426, %v2401, %v2397
    %v2483 = vsel %vm2428, %v2405, %v2482
    %v2484 = vsel %vm2430, %v2409, %v2483
    %v2485 = vsel %vm2432, %v2413, %v2484
    %v2486 = vsel %vm2434, %v2417, %v2485
    %v2487 = vsel %vm2436, %v2421, %v2486
    %v2488 = vsel %vm2438, %v2425, %v2487
    %vm2497 = vcmask 64512
    %v2498 = vsel %vm2497, %v2439, -inf
    %2499 = vmax.xlane.f32.xlu0 %v2498
    %v2500 = vpop.xlane.xlu0 %2499
    %v2501 = vsel %vm2497, %v2446, -inf
    %2502 = vmax.xlane.f32.xlu0 %v2501
    %v2503 = vpop.xlane.xlu0 %2502
    %v2504 = vsel %vm2497, %v2453, -inf
    %2505 = vmax.xlane.f32.xlu0 %v2504
    %v2506 = vpop.xlane.xlu0 %2505
    %v2507 = vsel %vm2497, %v2460, -inf
    %2508 = vmax.xlane.f32.xlu0 %v2507
    %v2509 = vpop.xlane.xlu0 %2508
    %v2510 = vsel %vm2497, %v2467, -inf
    %2511 = vmax.xlane.f32.xlu0 %v2510
    %v2512 = vpop.xlane.xlu0 %2511
    %v2513 = vsel %vm2497, %v2474, -inf
    %2514 = vmax.xlane.f32.xlu0 %v2513
    %v2515 = vpop.xlane.xlu0 %2514
    %v2516 = vsel %vm2497, %v2481, -inf
    %2517 = vmax.xlane.f32.xlu0 %v2516
    %v2518 = vpop.xlane.xlu0 %2517
    %v2519 = vsel %vm2497, %v2488, -inf
    %2520 = vmax.xlane.f32.xlu0 %v2519
    %v2521 = vpop.xlane.xlu0 %2520
    %v2530 = vlaneseq
    %v2531 = vshrl.u32 %v2530, 7
    %v2532 = vsub.s32 0, %v2531
    %v2533 = vrot.slane %v2500, %v2532
    %v2534 = vlaneseq
    %v2535 = vshrl.u32 %v2534, 7
    %v2536 = vsub.s32 1, %v2535
    %v2537 = vrot.slane %v2500, %v2536
    %v2538 = vlaneseq
    %v2539 = vshrl.u32 %v2538, 7
    %v2540 = vsub.s32 2, %v2539
    %v2541 = vrot.slane %v2500, %v2540
    %v2542 = vlaneseq
    %v2543 = vshrl.u32 %v2542, 7
    %v2544 = vsub.s32 3, %v2543
    %v2545 = vrot.slane %v2500, %v2544
    %v2546 = vlaneseq
    %v2547 = vshrl.u32 %v2546, 7
    %v2548 = vsub.s32 4, %v2547
    %v2549 = vrot.slane %v2500, %v2548
    %v2550 = vlaneseq
    %v2551 = vshrl.u32 %v2550, 7
    %v2552 = vsub.s32 5, %v2551
    %v2553 = vrot.slane %v2500, %v2552
    %v2554 = vlaneseq
    %v2555 = vshrl.u32 %v2554, 7
    %v2556 = vsub.s32 6, %v2555
    %v2557 = vrot.slane %v2500, %v2556
    %v2558 = vlaneseq
    %v2559 = vshrl.u32 %v2558, 7
    %v2560 = vsub.s32 7, %v2559
    %v2561 = vrot.slane %v2500, %v2560
    %v2562 = vlaneseq
    %v2563 = vshrl.u32 %v2562, 7
    %v2564 = vsub.s32 0, %v2563
    %v2565 = vrot.slane %v2503, %v2564
    %v2566 = vlaneseq
    %v2567 = vshrl.u32 %v2566, 7
    %v2568 = vsub.s32 1, %v2567
    %v2569 = vrot.slane %v2503, %v2568
    %v2570 = vlaneseq
    %v2571 = vshrl.u32 %v2570, 7
    %v2572 = vsub.s32 2, %v2571
    %v2573 = vrot.slane %v2503, %v2572
    %v2574 = vlaneseq
    %v2575 = vshrl.u32 %v2574, 7
    %v2576 = vsub.s32 3, %v2575
    %v2577 = vrot.slane %v2503, %v2576
    %v2578 = vlaneseq
    %v2579 = vshrl.u32 %v2578, 7
    %v2580 = vsub.s32 4, %v2579
    %v2581 = vrot.slane %v2503, %v2580
    %v2582 = vlaneseq
    %v2583 = vshrl.u32 %v2582, 7
    %v2584 = vsub.s32 5, %v2583
    %v2585 = vrot.slane %v2503, %v2584
    %v2586 = vlaneseq
    %v2587 = vshrl.u32 %v2586, 7
    %v2588 = vsub.s32 6, %v2587
    %v2589 = vrot.slane %v2503, %v2588
    %v2590 = vlaneseq
    %v2591 = vshrl.u32 %v2590, 7
    %v2592 = vsub.s32 7, %v2591
    %v2593 = vrot.slane %v2503, %v2592
    %v2594 = vlaneseq
    %v2595 = vshrl.u32 %v2594, 7
    %v2596 = vsub.s32 0, %v2595
    %v2597 = vrot.slane %v2506, %v2596
    %v2598 = vlaneseq
    %v2599 = vshrl.u32 %v2598, 7
    %v2600 = vsub.s32 1, %v2599
    %v2601 = vrot.slane %v2506, %v2600
    %v2602 = vlaneseq
    %v2603 = vshrl.u32 %v2602, 7
    %v2604 = vsub.s32 2, %v2603
    %v2605 = vrot.slane %v2506, %v2604
    %v2606 = vlaneseq
    %v2607 = vshrl.u32 %v2606, 7
    %v2608 = vsub.s32 3, %v2607
    %v2609 = vrot.slane %v2506, %v2608
    %v2610 = vlaneseq
    %v2611 = vshrl.u32 %v2610, 7
    %v2612 = vsub.s32 4, %v2611
    %v2613 = vrot.slane %v2506, %v2612
    %v2614 = vlaneseq
    %v2615 = vshrl.u32 %v2614, 7
    %v2616 = vsub.s32 5, %v2615
    %v2617 = vrot.slane %v2506, %v2616
    %v2618 = vlaneseq
    %v2619 = vshrl.u32 %v2618, 7
    %v2620 = vsub.s32 6, %v2619
    %v2621 = vrot.slane %v2506, %v2620
    %v2622 = vlaneseq
    %v2623 = vshrl.u32 %v2622, 7
    %v2624 = vsub.s32 7, %v2623
    %v2625 = vrot.slane %v2506, %v2624
    %v2626 = vlaneseq
    %v2627 = vshrl.u32 %v2626, 7
    %v2628 = vsub.s32 0, %v2627
    %v2629 = vrot.slane %v2509, %v2628
    %v2630 = vlaneseq
    %v2631 = vshrl.u32 %v2630, 7
    %v2632 = vsub.s32 1, %v2631
    %v2633 = vrot.slane %v2509, %v2632
    %v2634 = vlaneseq
    %v2635 = vshrl.u32 %v2634, 7
    %v2636 = vsub.s32 2, %v2635
    %v2637 = vrot.slane %v2509, %v2636
    %v2638 = vlaneseq
    %v2639 = vshrl.u32 %v2638, 7
    %v2640 = vsub.s32 3, %v2639
    %v2641 = vrot.slane %v2509, %v2640
    %v2642 = vlaneseq
    %v2643 = vshrl.u32 %v2642, 7
    %v2644 = vsub.s32 4, %v2643
    %v2645 = vrot.slane %v2509, %v2644
    %v2646 = vlaneseq
    %v2647 = vshrl.u32 %v2646, 7
    %v2648 = vsub.s32 5, %v2647
    %v2649 = vrot.slane %v2509, %v2648
    %v2650 = vlaneseq
    %v2651 = vshrl.u32 %v2650, 7
    %v2652 = vsub.s32 6, %v2651
    %v2653 = vrot.slane %v2509, %v2652
    %v2654 = vlaneseq
    %v2655 = vshrl.u32 %v2654, 7
    %v2656 = vsub.s32 7, %v2655
    %v2657 = vrot.slane %v2509, %v2656
    %v2658 = vlaneseq
    %v2659 = vshrl.u32 %v2658, 7
    %v2660 = vsub.s32 0, %v2659
    %v2661 = vrot.slane %v2512, %v2660
    %v2662 = vlaneseq
    %v2663 = vshrl.u32 %v2662, 7
    %v2664 = vsub.s32 1, %v2663
    %v2665 = vrot.slane %v2512, %v2664
    %v2666 = vlaneseq
    %v2667 = vshrl.u32 %v2666, 7
    %v2668 = vsub.s32 2, %v2667
    %v2669 = vrot.slane %v2512, %v2668
    %v2670 = vlaneseq
    %v2671 = vshrl.u32 %v2670, 7
    %v2672 = vsub.s32 3, %v2671
    %v2673 = vrot.slane %v2512, %v2672
    %v2674 = vlaneseq
    %v2675 = vshrl.u32 %v2674, 7
    %v2676 = vsub.s32 4, %v2675
    %v2677 = vrot.slane %v2512, %v2676
    %v2678 = vlaneseq
    %v2679 = vshrl.u32 %v2678, 7
    %v2680 = vsub.s32 5, %v2679
    %v2681 = vrot.slane %v2512, %v2680
    %v2682 = vlaneseq
    %v2683 = vshrl.u32 %v2682, 7
    %v2684 = vsub.s32 6, %v2683
    %v2685 = vrot.slane %v2512, %v2684
    %v2686 = vlaneseq
    %v2687 = vshrl.u32 %v2686, 7
    %v2688 = vsub.s32 7, %v2687
    %v2689 = vrot.slane %v2512, %v2688
    %v2690 = vlaneseq
    %v2691 = vshrl.u32 %v2690, 7
    %v2692 = vsub.s32 0, %v2691
    %v2693 = vrot.slane %v2515, %v2692
    %v2694 = vlaneseq
    %v2695 = vshrl.u32 %v2694, 7
    %v2696 = vsub.s32 1, %v2695
    %v2697 = vrot.slane %v2515, %v2696
    %v2698 = vlaneseq
    %v2699 = vshrl.u32 %v2698, 7
    %v2700 = vsub.s32 2, %v2699
    %v2701 = vrot.slane %v2515, %v2700
    %v2702 = vlaneseq
    %v2703 = vshrl.u32 %v2702, 7
    %v2704 = vsub.s32 3, %v2703
    %v2705 = vrot.slane %v2515, %v2704
    %v2706 = vlaneseq
    %v2707 = vshrl.u32 %v2706, 7
    %v2708 = vsub.s32 4, %v2707
    %v2709 = vrot.slane %v2515, %v2708
    %v2710 = vlaneseq
    %v2711 = vshrl.u32 %v2710, 7
    %v2712 = vsub.s32 5, %v2711
    %v2713 = vrot.slane %v2515, %v2712
    %v2714 = vlaneseq
    %v2715 = vshrl.u32 %v2714, 7
    %v2716 = vsub.s32 6, %v2715
    %v2717 = vrot.slane %v2515, %v2716
    %v2718 = vlaneseq
    %v2719 = vshrl.u32 %v2718, 7
    %v2720 = vsub.s32 7, %v2719
    %v2721 = vrot.slane %v2515, %v2720
    %v2722 = vlaneseq
    %v2723 = vshrl.u32 %v2722, 7
    %v2724 = vsub.s32 0, %v2723
    %v2725 = vrot.slane %v2518, %v2724
    %v2726 = vlaneseq
    %v2727 = vshrl.u32 %v2726, 7
    %v2728 = vsub.s32 1, %v2727
    %v2729 = vrot.slane %v2518, %v2728
    %v2730 = vlaneseq
    %v2731 = vshrl.u32 %v2730, 7
    %v2732 = vsub.s32 2, %v2731
    %v2733 = vrot.slane %v2518, %v2732
    %v2734 = vlaneseq
    %v2735 = vshrl.u32 %v2734, 7
    %v2736 = vsub.s32 3, %v2735
    %v2737 = vrot.slane %v2518, %v2736
    %v2738 = vlaneseq
    %v2739 = vshrl.u32 %v2738, 7
    %v2740 = vsub.s32 4, %v2739
    %v2741 = vrot.slane %v2518, %v2740
    %v2742 = vlaneseq
    %v2743 = vshrl.u32 %v2742, 7
    %v2744 = vsub.s32 5, %v2743
    %v2745 = vrot.slane %v2518, %v2744
    %v2746 = vlaneseq
    %v2747 = vshrl.u32 %v2746, 7
    %v2748 = vsub.s32 6, %v2747
    %v2749 = vrot.slane %v2518, %v2748
    %v2750 = vlaneseq
    %v2751 = vshrl.u32 %v2750, 7
    %v2752 = vsub.s32 7, %v2751
    %v2753 = vrot.slane %v2518, %v2752
    %v2754 = vlaneseq
    %v2755 = vshrl.u32 %v2754, 7
    %v2756 = vsub.s32 0, %v2755
    %v2757 = vrot.slane %v2521, %v2756
    %v2758 = vlaneseq
    %v2759 = vshrl.u32 %v2758, 7
    %v2760 = vsub.s32 1, %v2759
    %v2761 = vrot.slane %v2521, %v2760
    %v2762 = vlaneseq
    %v2763 = vshrl.u32 %v2762, 7
    %v2764 = vsub.s32 2, %v2763
    %v2765 = vrot.slane %v2521, %v2764
    %v2766 = vlaneseq
    %v2767 = vshrl.u32 %v2766, 7
    %v2768 = vsub.s32 3, %v2767
    %v2769 = vrot.slane %v2521, %v2768
    %v2770 = vlaneseq
    %v2771 = vshrl.u32 %v2770, 7
    %v2772 = vsub.s32 4, %v2771
    %v2773 = vrot.slane %v2521, %v2772
    %v2774 = vlaneseq
    %v2775 = vshrl.u32 %v2774, 7
    %v2776 = vsub.s32 5, %v2775
    %v2777 = vrot.slane %v2521, %v2776
    %v2778 = vlaneseq
    %v2779 = vshrl.u32 %v2778, 7
    %v2780 = vsub.s32 6, %v2779
    %v2781 = vrot.slane %v2521, %v2780
    %v2782 = vlaneseq
    %v2783 = vshrl.u32 %v2782, 7
    %v2784 = vsub.s32 7, %v2783
    %v2785 = vrot.slane %v2521, %v2784
    %v2850 = vsub.f32 %v1848, %v2533
    %v2851 = vsub.f32 %v1849, %v2537
    %v2852 = vsub.f32 %v1850, %v2541
    %v2853 = vsub.f32 %v1851, %v2545
    %v2854 = vsub.f32 %v1852, %v2549
    %v2855 = vsub.f32 %v1853, %v2553
    %v2856 = vsub.f32 %v1854, %v2557
    %v2857 = vsub.f32 %v1855, %v2561
    %v2858 = vsub.f32 %v1856, %v2565
    %v2859 = vsub.f32 %v1857, %v2569
    %v2860 = vsub.f32 %v1858, %v2573
    %v2861 = vsub.f32 %v1859, %v2577
    %v2862 = vsub.f32 %v1860, %v2581
    %v2863 = vsub.f32 %v1861, %v2585
    %v2864 = vsub.f32 %v1862, %v2589
    %v2865 = vsub.f32 %v1863, %v2593
    %v2866 = vsub.f32 %v1864, %v2597
    %v2867 = vsub.f32 %v1865, %v2601
    %v2868 = vsub.f32 %v1866, %v2605
    %v2869 = vsub.f32 %v1867, %v2609
    %v2870 = vsub.f32 %v1868, %v2613
    %v2871 = vsub.f32 %v1869, %v2617
    %v2872 = vsub.f32 %v1870, %v2621
    %v2873 = vsub.f32 %v1871, %v2625
    %v2874 = vsub.f32 %v1872, %v2629
    %v2875 = vsub.f32 %v1873, %v2633
    %v2876 = vsub.f32 %v1874, %v2637
    %v2877 = vsub.f32 %v1875, %v2641
    %v2878 = vsub.f32 %v1876, %v2645
    %v2879 = vsub.f32 %v1877, %v2649
    %v2880 = vsub.f32 %v1878, %v2653
    %v2881 = vsub.f32 %v1879, %v2657
    %v2882 = vsub.f32 %v1880, %v2661
    %v2883 = vsub.f32 %v1881, %v2665
    %v2884 = vsub.f32 %v1882, %v2669
    %v2885 = vsub.f32 %v1883, %v2673
    %v2886 = vsub.f32 %v1884, %v2677
    %v2887 = vsub.f32 %v1885, %v2681
    %v2888 = vsub.f32 %v1886, %v2685
    %v2889 = vsub.f32 %v1887, %v2689
    %v2890 = vsub.f32 %v1888, %v2693
    %v2891 = vsub.f32 %v1889, %v2697
    %v2892 = vsub.f32 %v1890, %v2701
    %v2893 = vsub.f32 %v1891, %v2705
    %v2894 = vsub.f32 %v1892, %v2709
    %v2895 = vsub.f32 %v1893, %v2713
    %v2896 = vsub.f32 %v1894, %v2717
    %v2897 = vsub.f32 %v1895, %v2721
    %v2898 = vsub.f32 %v1896, %v2725
    %v2899 = vsub.f32 %v1897, %v2729
    %v2900 = vsub.f32 %v1898, %v2733
    %v2901 = vsub.f32 %v1899, %v2737
    %v2902 = vsub.f32 %v1900, %v2741
    %v2903 = vsub.f32 %v1901, %v2745
    %v2904 = vsub.f32 %v1902, %v2749
    %v2905 = vsub.f32 %v1903, %v2753
    %v2906 = vsub.f32 %v1904, %v2757
    %v2907 = vsub.f32 %v1905, %v2761
    %v2908 = vsub.f32 %v1906, %v2765
    %v2909 = vsub.f32 %v1907, %v2769
    %v2910 = vsub.f32 %v1908, %v2773
    %v2911 = vsub.f32 %v1909, %v2777
    %v2912 = vsub.f32 %v1910, %v2781
    %v2913 = vsub.f32 %v1911, %v2785
    %v2914 = vmul.f32 %v2850, 1.442695
    %v2915 = vpow.pop %v2914
    %v2916 = vmul.f32 %v2851, 1.442695
    %v2917 = vpow.pop %v2916
    %v2918 = vmul.f32 %v2852, 1.442695
    %v2919 = vpow.pop %v2918
    %v2920 = vmul.f32 %v2853, 1.442695
    %v2921 = vpow.pop %v2920
    %v2922 = vmul.f32 %v2854, 1.442695
    %v2923 = vpow.pop %v2922
    %v2924 = vmul.f32 %v2855, 1.442695
    %v2925 = vpow.pop %v2924
    %v2926 = vmul.f32 %v2856, 1.442695
    %v2927 = vpow.pop %v2926
    %v2928 = vmul.f32 %v2857, 1.442695
    %v2929 = vpow.pop %v2928
    %v2930 = vmul.f32 %v2858, 1.442695
    %v2931 = vpow.pop %v2930
    %v2932 = vmul.f32 %v2859, 1.442695
    %v2933 = vpow.pop %v2932
    %v2934 = vmul.f32 %v2860, 1.442695
    %v2935 = vpow.pop %v2934
    %v2936 = vmul.f32 %v2861, 1.442695
    %v2937 = vpow.pop %v2936
    %v2938 = vmul.f32 %v2862, 1.442695
    %v2939 = vpow.pop %v2938
    %v2940 = vmul.f32 %v2863, 1.442695
    %v2941 = vpow.pop %v2940
    %v2942 = vmul.f32 %v2864, 1.442695
    %v2943 = vpow.pop %v2942
    %v2944 = vmul.f32 %v2865, 1.442695
    %v2945 = vpow.pop %v2944
    %v2946 = vmul.f32 %v2866, 1.442695
    %v2947 = vpow.pop %v2946
    %v2948 = vmul.f32 %v2867, 1.442695
    %v2949 = vpow.pop %v2948
    %v2950 = vmul.f32 %v2868, 1.442695
    %v2951 = vpow.pop %v2950
    %v2952 = vmul.f32 %v2869, 1.442695
    %v2953 = vpow.pop %v2952
    %v2954 = vmul.f32 %v2870, 1.442695
    %v2955 = vpow.pop %v2954
    %v2956 = vmul.f32 %v2871, 1.442695
    %v2957 = vpow.pop %v2956
    %v2958 = vmul.f32 %v2872, 1.442695
    %v2959 = vpow.pop %v2958
    %v2960 = vmul.f32 %v2873, 1.442695
    %v2961 = vpow.pop %v2960
    %v2962 = vmul.f32 %v2874, 1.442695
    %v2963 = vpow.pop %v2962
    %v2964 = vmul.f32 %v2875, 1.442695
    %v2965 = vpow.pop %v2964
    %v2966 = vmul.f32 %v2876, 1.442695
    %v2967 = vpow.pop %v2966
    %v2968 = vmul.f32 %v2877, 1.442695
    %v2969 = vpow.pop %v2968
    %v2970 = vmul.f32 %v2878, 1.442695
    %v2971 = vpow.pop %v2970
    %v2972 = vmul.f32 %v2879, 1.442695
    %v2973 = vpow.pop %v2972
    %v2974 = vmul.f32 %v2880, 1.442695
    %v2975 = vpow.pop %v2974
    %v2976 = vmul.f32 %v2881, 1.442695
    %v2977 = vpow.pop %v2976
    %v2978 = vmul.f32 %v2882, 1.442695
    %v2979 = vpow.pop %v2978
    %v2980 = vmul.f32 %v2883, 1.442695
    %v2981 = vpow.pop %v2980
    %v2982 = vmul.f32 %v2884, 1.442695
    %v2983 = vpow.pop %v2982
    %v2984 = vmul.f32 %v2885, 1.442695
    %v2985 = vpow.pop %v2984
    %v2986 = vmul.f32 %v2886, 1.442695
    %v2987 = vpow.pop %v2986
    %v2988 = vmul.f32 %v2887, 1.442695
    %v2989 = vpow.pop %v2988
    %v2990 = vmul.f32 %v2888, 1.442695
    %v2991 = vpow.pop %v2990
    %v2992 = vmul.f32 %v2889, 1.442695
    %v2993 = vpow.pop %v2992
    %v2994 = vmul.f32 %v2890, 1.442695
    %v2995 = vpow.pop %v2994
    %v2996 = vmul.f32 %v2891, 1.442695
    %v2997 = vpow.pop %v2996
    %v2998 = vmul.f32 %v2892, 1.442695
    %v2999 = vpow.pop %v2998
    %v3000 = vmul.f32 %v2893, 1.442695
    %v3001 = vpow.pop %v3000
    %v3002 = vmul.f32 %v2894, 1.442695
    %v3003 = vpow.pop %v3002
    %v3004 = vmul.f32 %v2895, 1.442695
    %v3005 = vpow.pop %v3004
    %v3006 = vmul.f32 %v2896, 1.442695
    %v3007 = vpow.pop %v3006
    %v3008 = vmul.f32 %v2897, 1.442695
    %v3009 = vpow.pop %v3008
    %v3010 = vmul.f32 %v2898, 1.442695
    %v3011 = vpow.pop %v3010
    %v3012 = vmul.f32 %v2899, 1.442695
    %v3013 = vpow.pop %v3012
    %v3014 = vmul.f32 %v2900, 1.442695
    %v3015 = vpow.pop %v3014
    %v3016 = vmul.f32 %v2901, 1.442695
    %v3017 = vpow.pop %v3016
    %v3018 = vmul.f32 %v2902, 1.442695
    %v3019 = vpow.pop %v3018
    %v3020 = vmul.f32 %v2903, 1.442695
    %v3021 = vpow.pop %v3020
    %v3022 = vmul.f32 %v2904, 1.442695
    %v3023 = vpow.pop %v3022
    %v3024 = vmul.f32 %v2905, 1.442695
    %v3025 = vpow.pop %v3024
    %v3026 = vmul.f32 %v2906, 1.442695
    %v3027 = vpow.pop %v3026
    %v3028 = vmul.f32 %v2907, 1.442695
    %v3029 = vpow.pop %v3028
    %v3030 = vmul.f32 %v2908, 1.442695
    %v3031 = vpow.pop %v3030
    %v3032 = vmul.f32 %v2909, 1.442695
    %v3033 = vpow.pop %v3032
    %v3034 = vmul.f32 %v2910, 1.442695
    %v3035 = vpow.pop %v3034
    %v3036 = vmul.f32 %v2911, 1.442695
    %v3037 = vpow.pop %v3036
    %v3038 = vmul.f32 %v2912, 1.442695
    %v3039 = vpow.pop %v3038
    %v3040 = vmul.f32 %v2913, 1.442695
    %v3041 = vpow.pop %v3040
    %3106 = vset.pattern.permute.xlu0 0
    %3107 = vperm.xlu0 %3106, %v2915
    %v3108 = vpop.permute.xlu0 %3107
    %3109 = vset.pattern.permute.xlu0 0
    %3110 = vperm.xlu0 %3109, %v2917
    %v3111 = vpop.permute.xlu0 %3110
    %3112 = vset.pattern.permute.xlu0 0
    %3113 = vperm.xlu0 %3112, %v2919
    %v3114 = vpop.permute.xlu0 %3113
    %3115 = vset.pattern.permute.xlu0 0
    %3116 = vperm.xlu0 %3115, %v2921
    %v3117 = vpop.permute.xlu0 %3116
    %3118 = vset.pattern.permute.xlu0 0
    %3119 = vperm.xlu0 %3118, %v2923
    %v3120 = vpop.permute.xlu0 %3119
    %3121 = vset.pattern.permute.xlu0 0
    %3122 = vperm.xlu0 %3121, %v2925
    %v3123 = vpop.permute.xlu0 %3122
    %3124 = vset.pattern.permute.xlu0 0
    %3125 = vperm.xlu0 %3124, %v2927
    %v3126 = vpop.permute.xlu0 %3125
    %3127 = vset.pattern.permute.xlu0 0
    %3128 = vperm.xlu0 %3127, %v2929
    %v3129 = vpop.permute.xlu0 %3128
    %3130 = vset.pattern.permute.xlu0 0
    %3131 = vperm.xlu0 %3130, %v2931
    %v3132 = vpop.permute.xlu0 %3131
    %3133 = vset.pattern.permute.xlu0 0
    %3134 = vperm.xlu0 %3133, %v2933
    %v3135 = vpop.permute.xlu0 %3134
    %3136 = vset.pattern.permute.xlu0 0
    %3137 = vperm.xlu0 %3136, %v2935
    %v3138 = vpop.permute.xlu0 %3137
    %3139 = vset.pattern.permute.xlu0 0
    %3140 = vperm.xlu0 %3139, %v2937
    %v3141 = vpop.permute.xlu0 %3140
    %3142 = vset.pattern.permute.xlu0 0
    %3143 = vperm.xlu0 %3142, %v2939
    %v3144 = vpop.permute.xlu0 %3143
    %3145 = vset.pattern.permute.xlu0 0
    %3146 = vperm.xlu0 %3145, %v2941
    %v3147 = vpop.permute.xlu0 %3146
    %3148 = vset.pattern.permute.xlu0 0
    %3149 = vperm.xlu0 %3148, %v2943
    %v3150 = vpop.permute.xlu0 %3149
    %3151 = vset.pattern.permute.xlu0 0
    %3152 = vperm.xlu0 %3151, %v2945
    %v3153 = vpop.permute.xlu0 %3152
    %3154 = vset.pattern.permute.xlu0 0
    %3155 = vperm.xlu0 %3154, %v2947
    %v3156 = vpop.permute.xlu0 %3155
    %3157 = vset.pattern.permute.xlu0 0
    %3158 = vperm.xlu0 %3157, %v2949
    %v3159 = vpop.permute.xlu0 %3158
    %3160 = vset.pattern.permute.xlu0 0
    %3161 = vperm.xlu0 %3160, %v2951
    %v3162 = vpop.permute.xlu0 %3161
    %3163 = vset.pattern.permute.xlu0 0
    %3164 = vperm.xlu0 %3163, %v2953
    %v3165 = vpop.permute.xlu0 %3164
    %3166 = vset.pattern.permute.xlu0 0
    %3167 = vperm.xlu0 %3166, %v2955
    %v3168 = vpop.permute.xlu0 %3167
    %3169 = vset.pattern.permute.xlu0 0
    %3170 = vperm.xlu0 %3169, %v2957
    %v3171 = vpop.permute.xlu0 %3170
    %3172 = vset.pattern.permute.xlu0 0
    %3173 = vperm.xlu0 %3172, %v2959
    %v3174 = vpop.permute.xlu0 %3173
    %3175 = vset.pattern.permute.xlu0 0
    %3176 = vperm.xlu0 %3175, %v2961
    %v3177 = vpop.permute.xlu0 %3176
    %3178 = vset.pattern.permute.xlu0 0
    %3179 = vperm.xlu0 %3178, %v2963
    %v3180 = vpop.permute.xlu0 %3179
    %3181 = vset.pattern.permute.xlu0 0
    %3182 = vperm.xlu0 %3181, %v2965
    %v3183 = vpop.permute.xlu0 %3182
    %3184 = vset.pattern.permute.xlu0 0
    %3185 = vperm.xlu0 %3184, %v2967
    %v3186 = vpop.permute.xlu0 %3185
    %3187 = vset.pattern.permute.xlu0 0
    %3188 = vperm.xlu0 %3187, %v2969
    %v3189 = vpop.permute.xlu0 %3188
    %3190 = vset.pattern.permute.xlu0 0
    %3191 = vperm.xlu0 %3190, %v2971
    %v3192 = vpop.permute.xlu0 %3191
    %3193 = vset.pattern.permute.xlu0 0
    %3194 = vperm.xlu0 %3193, %v2973
    %v3195 = vpop.permute.xlu0 %3194
    %3196 = vset.pattern.permute.xlu0 0
    %3197 = vperm.xlu0 %3196, %v2975
    %v3198 = vpop.permute.xlu0 %3197
    %3199 = vset.pattern.permute.xlu0 0
    %3200 = vperm.xlu0 %3199, %v2977
    %v3201 = vpop.permute.xlu0 %3200
    %3202 = vset.pattern.permute.xlu0 0
    %3203 = vperm.xlu0 %3202, %v2979
    %v3204 = vpop.permute.xlu0 %3203
    %3205 = vset.pattern.permute.xlu0 0
    %3206 = vperm.xlu0 %3205, %v2981
    %v3207 = vpop.permute.xlu0 %3206
    %3208 = vset.pattern.permute.xlu0 0
    %3209 = vperm.xlu0 %3208, %v2983
    %v3210 = vpop.permute.xlu0 %3209
    %3211 = vset.pattern.permute.xlu0 0
    %3212 = vperm.xlu0 %3211, %v2985
    %v3213 = vpop.permute.xlu0 %3212
    %3214 = vset.pattern.permute.xlu0 0
    %3215 = vperm.xlu0 %3214, %v2987
    %v3216 = vpop.permute.xlu0 %3215
    %3217 = vset.pattern.permute.xlu0 0
    %3218 = vperm.xlu0 %3217, %v2989
    %v3219 = vpop.permute.xlu0 %3218
    %3220 = vset.pattern.permute.xlu0 0
    %3221 = vperm.xlu0 %3220, %v2991
    %v3222 = vpop.permute.xlu0 %3221
    %3223 = vset.pattern.permute.xlu0 0
    %3224 = vperm.xlu0 %3223, %v2993
    %v3225 = vpop.permute.xlu0 %3224
    %3226 = vset.pattern.permute.xlu0 0
    %3227 = vperm.xlu0 %3226, %v2995
    %v3228 = vpop.permute.xlu0 %3227
    %3229 = vset.pattern.permute.xlu0 0
    %3230 = vperm.xlu0 %3229, %v2997
    %v3231 = vpop.permute.xlu0 %3230
    %3232 = vset.pattern.permute.xlu0 0
    %3233 = vperm.xlu0 %3232, %v2999
    %v3234 = vpop.permute.xlu0 %3233
    %3235 = vset.pattern.permute.xlu0 0
    %3236 = vperm.xlu0 %3235, %v3001
    %v3237 = vpop.permute.xlu0 %3236
    %3238 = vset.pattern.permute.xlu0 0
    %3239 = vperm.xlu0 %3238, %v3003
    %v3240 = vpop.permute.xlu0 %3239
    %3241 = vset.pattern.permute.xlu0 0
    %3242 = vperm.xlu0 %3241, %v3005
    %v3243 = vpop.permute.xlu0 %3242
    %3244 = vset.pattern.permute.xlu0 0
    %3245 = vperm.xlu0 %3244, %v3007
    %v3246 = vpop.permute.xlu0 %3245
    %3247 = vset.pattern.permute.xlu0 0
    %3248 = vperm.xlu0 %3247, %v3009
    %v3249 = vpop.permute.xlu0 %3248
    %3250 = vset.pattern.permute.xlu0 0
    %3251 = vperm.xlu0 %3250, %v3011
    %v3252 = vpop.permute.xlu0 %3251
    %3253 = vset.pattern.permute.xlu0 0
    %3254 = vperm.xlu0 %3253, %v3013
    %v3255 = vpop.permute.xlu0 %3254
    %3256 = vset.pattern.permute.xlu0 0
    %3257 = vperm.xlu0 %3256, %v3015
    %v3258 = vpop.permute.xlu0 %3257
    %3259 = vset.pattern.permute.xlu0 0
    %3260 = vperm.xlu0 %3259, %v3017
    %v3261 = vpop.permute.xlu0 %3260
    %3262 = vset.pattern.permute.xlu0 0
    %3263 = vperm.xlu0 %3262, %v3019
    %v3264 = vpop.permute.xlu0 %3263
    %3265 = vset.pattern.permute.xlu0 0
    %3266 = vperm.xlu0 %3265, %v3021
    %v3267 = vpop.permute.xlu0 %3266
    %3268 = vset.pattern.permute.xlu0 0
    %3269 = vperm.xlu0 %3268, %v3023
    %v3270 = vpop.permute.xlu0 %3269
    %3271 = vset.pattern.permute.xlu0 0
    %3272 = vperm.xlu0 %3271, %v3025
    %v3273 = vpop.permute.xlu0 %3272
    %3274 = vset.pattern.permute.xlu0 0
    %3275 = vperm.xlu0 %3274, %v3027
    %v3276 = vpop.permute.xlu0 %3275
    %3277 = vset.pattern.permute.xlu0 0
    %3278 = vperm.xlu0 %3277, %v3029
    %v3279 = vpop.permute.xlu0 %3278
    %3280 = vset.pattern.permute.xlu0 0
    %3281 = vperm.xlu0 %3280, %v3031
    %v3282 = vpop.permute.xlu0 %3281
    %3283 = vset.pattern.permute.xlu0 0
    %3284 = vperm.xlu0 %3283, %v3033
    %v3285 = vpop.permute.xlu0 %3284
    %3286 = vset.pattern.permute.xlu0 0
    %3287 = vperm.xlu0 %3286, %v3035
    %v3288 = vpop.permute.xlu0 %3287
    %3289 = vset.pattern.permute.xlu0 0
    %3290 = vperm.xlu0 %3289, %v3037
    %v3291 = vpop.permute.xlu0 %3290
    %3292 = vset.pattern.permute.xlu0 0
    %3293 = vperm.xlu0 %3292, %v3039
    %v3294 = vpop.permute.xlu0 %3293
    %3295 = vset.pattern.permute.xlu0 0
    %3296 = vperm.xlu0 %3295, %v3041
    %v3297 = vpop.permute.xlu0 %3296
    %v3298 = vlaneseq
    %v3299 = vshrl.u32 %v3298, 7
    %v3300 = vsub.s32 %v2169, %v3299
    %v3301 = vrot.slane %v3108, %v3300
    %v3302 = vlaneseq
    %v3303 = vshrl.u32 %v3302, 7
    %v3304 = vsub.s32 %v2169, %v3303
    %v3305 = vrot.slane %v3111, %v3304
    %v3306 = vlaneseq
    %v3307 = vshrl.u32 %v3306, 7
    %v3308 = vsub.s32 %v2169, %v3307
    %v3309 = vrot.slane %v3114, %v3308
    %v3310 = vlaneseq
    %v3311 = vshrl.u32 %v3310, 7
    %v3312 = vsub.s32 %v2169, %v3311
    %v3313 = vrot.slane %v3117, %v3312
    %v3314 = vlaneseq
    %v3315 = vshrl.u32 %v3314, 7
    %v3316 = vsub.s32 %v2169, %v3315
    %v3317 = vrot.slane %v3120, %v3316
    %v3318 = vlaneseq
    %v3319 = vshrl.u32 %v3318, 7
    %v3320 = vsub.s32 %v2169, %v3319
    %v3321 = vrot.slane %v3123, %v3320
    %v3322 = vlaneseq
    %v3323 = vshrl.u32 %v3322, 7
    %v3324 = vsub.s32 %v2169, %v3323
    %v3325 = vrot.slane %v3126, %v3324
    %v3326 = vlaneseq
    %v3327 = vshrl.u32 %v3326, 7
    %v3328 = vsub.s32 %v2169, %v3327
    %v3329 = vrot.slane %v3129, %v3328
    %v3330 = vlaneseq
    %v3331 = vshrl.u32 %v3330, 7
    %v3332 = vsub.s32 %v2169, %v3331
    %v3333 = vrot.slane %v3132, %v3332
    %v3334 = vlaneseq
    %v3335 = vshrl.u32 %v3334, 7
    %v3336 = vsub.s32 %v2169, %v3335
    %v3337 = vrot.slane %v3135, %v3336
    %v3338 = vlaneseq
    %v3339 = vshrl.u32 %v3338, 7
    %v3340 = vsub.s32 %v2169, %v3339
    %v3341 = vrot.slane %v3138, %v3340
    %v3342 = vlaneseq
    %v3343 = vshrl.u32 %v3342, 7
    %v3344 = vsub.s32 %v2169, %v3343
    %v3345 = vrot.slane %v3141, %v3344
    %v3346 = vlaneseq
    %v3347 = vshrl.u32 %v3346, 7
    %v3348 = vsub.s32 %v2169, %v3347
    %v3349 = vrot.slane %v3144, %v3348
    %v3350 = vlaneseq
    %v3351 = vshrl.u32 %v3350, 7
    %v3352 = vsub.s32 %v2169, %v3351
    %v3353 = vrot.slane %v3147, %v3352
    %v3354 = vlaneseq
    %v3355 = vshrl.u32 %v3354, 7
    %v3356 = vsub.s32 %v2169, %v3355
    %v3357 = vrot.slane %v3150, %v3356
    %v3358 = vlaneseq
    %v3359 = vshrl.u32 %v3358, 7
    %v3360 = vsub.s32 %v2169, %v3359
    %v3361 = vrot.slane %v3153, %v3360
    %v3362 = vlaneseq
    %v3363 = vshrl.u32 %v3362, 7
    %v3364 = vsub.s32 %v2169, %v3363
    %v3365 = vrot.slane %v3156, %v3364
    %v3366 = vlaneseq
    %v3367 = vshrl.u32 %v3366, 7
    %v3368 = vsub.s32 %v2169, %v3367
    %v3369 = vrot.slane %v3159, %v3368
    %v3370 = vlaneseq
    %v3371 = vshrl.u32 %v3370, 7
    %v3372 = vsub.s32 %v2169, %v3371
    %v3373 = vrot.slane %v3162, %v3372
    %v3374 = vlaneseq
    %v3375 = vshrl.u32 %v3374, 7
    %v3376 = vsub.s32 %v2169, %v3375
    %v3377 = vrot.slane %v3165, %v3376
    %v3378 = vlaneseq
    %v3379 = vshrl.u32 %v3378, 7
    %v3380 = vsub.s32 %v2169, %v3379
    %v3381 = vrot.slane %v3168, %v3380
    %v3382 = vlaneseq
    %v3383 = vshrl.u32 %v3382, 7
    %v3384 = vsub.s32 %v2169, %v3383
    %v3385 = vrot.slane %v3171, %v3384
    %v3386 = vlaneseq
    %v3387 = vshrl.u32 %v3386, 7
    %v3388 = vsub.s32 %v2169, %v3387
    %v3389 = vrot.slane %v3174, %v3388
    %v3390 = vlaneseq
    %v3391 = vshrl.u32 %v3390, 7
    %v3392 = vsub.s32 %v2169, %v3391
    %v3393 = vrot.slane %v3177, %v3392
    %v3394 = vlaneseq
    %v3395 = vshrl.u32 %v3394, 7
    %v3396 = vsub.s32 %v2169, %v3395
    %v3397 = vrot.slane %v3180, %v3396
    %v3398 = vlaneseq
    %v3399 = vshrl.u32 %v3398, 7
    %v3400 = vsub.s32 %v2169, %v3399
    %v3401 = vrot.slane %v3183, %v3400
    %v3402 = vlaneseq
    %v3403 = vshrl.u32 %v3402, 7
    %v3404 = vsub.s32 %v2169, %v3403
    %v3405 = vrot.slane %v3186, %v3404
    %v3406 = vlaneseq
    %v3407 = vshrl.u32 %v3406, 7
    %v3408 = vsub.s32 %v2169, %v3407
    %v3409 = vrot.slane %v3189, %v3408
    %v3410 = vlaneseq
    %v3411 = vshrl.u32 %v3410, 7
    %v3412 = vsub.s32 %v2169, %v3411
    %v3413 = vrot.slane %v3192, %v3412
    %v3414 = vlaneseq
    %v3415 = vshrl.u32 %v3414, 7
    %v3416 = vsub.s32 %v2169, %v3415
    %v3417 = vrot.slane %v3195, %v3416
    %v3418 = vlaneseq
    %v3419 = vshrl.u32 %v3418, 7
    %v3420 = vsub.s32 %v2169, %v3419
    %v3421 = vrot.slane %v3198, %v3420
    %v3422 = vlaneseq
    %v3423 = vshrl.u32 %v3422, 7
    %v3424 = vsub.s32 %v2169, %v3423
    %v3425 = vrot.slane %v3201, %v3424
    %v3426 = vlaneseq
    %v3427 = vshrl.u32 %v3426, 7
    %v3428 = vsub.s32 %v2169, %v3427
    %v3429 = vrot.slane %v3204, %v3428
    %v3430 = vlaneseq
    %v3431 = vshrl.u32 %v3430, 7
    %v3432 = vsub.s32 %v2169, %v3431
    %v3433 = vrot.slane %v3207, %v3432
    %v3434 = vlaneseq
    %v3435 = vshrl.u32 %v3434, 7
    %v3436 = vsub.s32 %v2169, %v3435
    %v3437 = vrot.slane %v3210, %v3436
    %v3438 = vlaneseq
    %v3439 = vshrl.u32 %v3438, 7
    %v3440 = vsub.s32 %v2169, %v3439
    %v3441 = vrot.slane %v3213, %v3440
    %v3442 = vlaneseq
    %v3443 = vshrl.u32 %v3442, 7
    %v3444 = vsub.s32 %v2169, %v3443
    %v3445 = vrot.slane %v3216, %v3444
    %v3446 = vlaneseq
    %v3447 = vshrl.u32 %v3446, 7
    %v3448 = vsub.s32 %v2169, %v3447
    %v3449 = vrot.slane %v3219, %v3448
    %v3450 = vlaneseq
    %v3451 = vshrl.u32 %v3450, 7
    %v3452 = vsub.s32 %v2169, %v3451
    %v3453 = vrot.slane %v3222, %v3452
    %v3454 = vlaneseq
    %v3455 = vshrl.u32 %v3454, 7
    %v3456 = vsub.s32 %v2169, %v3455
    %v3457 = vrot.slane %v3225, %v3456
    %v3458 = vlaneseq
    %v3459 = vshrl.u32 %v3458, 7
    %v3460 = vsub.s32 %v2169, %v3459
    %v3461 = vrot.slane %v3228, %v3460
    %v3462 = vlaneseq
    %v3463 = vshrl.u32 %v3462, 7
    %v3464 = vsub.s32 %v2169, %v3463
    %v3465 = vrot.slane %v3231, %v3464
    %v3466 = vlaneseq
    %v3467 = vshrl.u32 %v3466, 7
    %v3468 = vsub.s32 %v2169, %v3467
    %v3469 = vrot.slane %v3234, %v3468
    %v3470 = vlaneseq
    %v3471 = vshrl.u32 %v3470, 7
    %v3472 = vsub.s32 %v2169, %v3471
    %v3473 = vrot.slane %v3237, %v3472
    %v3474 = vlaneseq
    %v3475 = vshrl.u32 %v3474, 7
    %v3476 = vsub.s32 %v2169, %v3475
    %v3477 = vrot.slane %v3240, %v3476
    %v3478 = vlaneseq
    %v3479 = vshrl.u32 %v3478, 7
    %v3480 = vsub.s32 %v2169, %v3479
    %v3481 = vrot.slane %v3243, %v3480
    %v3482 = vlaneseq
    %v3483 = vshrl.u32 %v3482, 7
    %v3484 = vsub.s32 %v2169, %v3483
    %v3485 = vrot.slane %v3246, %v3484
    %v3486 = vlaneseq
    %v3487 = vshrl.u32 %v3486, 7
    %v3488 = vsub.s32 %v2169, %v3487
    %v3489 = vrot.slane %v3249, %v3488
    %v3490 = vlaneseq
    %v3491 = vshrl.u32 %v3490, 7
    %v3492 = vsub.s32 %v2169, %v3491
    %v3493 = vrot.slane %v3252, %v3492
    %v3494 = vlaneseq
    %v3495 = vshrl.u32 %v3494, 7
    %v3496 = vsub.s32 %v2169, %v3495
    %v3497 = vrot.slane %v3255, %v3496
    %v3498 = vlaneseq
    %v3499 = vshrl.u32 %v3498, 7
    %v3500 = vsub.s32 %v2169, %v3499
    %v3501 = vrot.slane %v3258, %v3500
    %v3502 = vlaneseq
    %v3503 = vshrl.u32 %v3502, 7
    %v3504 = vsub.s32 %v2169, %v3503
    %v3505 = vrot.slane %v3261, %v3504
    %v3506 = vlaneseq
    %v3507 = vshrl.u32 %v3506, 7
    %v3508 = vsub.s32 %v2169, %v3507
    %v3509 = vrot.slane %v3264, %v3508
    %v3510 = vlaneseq
    %v3511 = vshrl.u32 %v3510, 7
    %v3512 = vsub.s32 %v2169, %v3511
    %v3513 = vrot.slane %v3267, %v3512
    %v3514 = vlaneseq
    %v3515 = vshrl.u32 %v3514, 7
    %v3516 = vsub.s32 %v2169, %v3515
    %v3517 = vrot.slane %v3270, %v3516
    %v3518 = vlaneseq
    %v3519 = vshrl.u32 %v3518, 7
    %v3520 = vsub.s32 %v2169, %v3519
    %v3521 = vrot.slane %v3273, %v3520
    %v3522 = vlaneseq
    %v3523 = vshrl.u32 %v3522, 7
    %v3524 = vsub.s32 %v2169, %v3523
    %v3525 = vrot.slane %v3276, %v3524
    %v3526 = vlaneseq
    %v3527 = vshrl.u32 %v3526, 7
    %v3528 = vsub.s32 %v2169, %v3527
    %v3529 = vrot.slane %v3279, %v3528
    %v3530 = vlaneseq
    %v3531 = vshrl.u32 %v3530, 7
    %v3532 = vsub.s32 %v2169, %v3531
    %v3533 = vrot.slane %v3282, %v3532
    %v3534 = vlaneseq
    %v3535 = vshrl.u32 %v3534, 7
    %v3536 = vsub.s32 %v2169, %v3535
    %v3537 = vrot.slane %v3285, %v3536
    %v3538 = vlaneseq
    %v3539 = vshrl.u32 %v3538, 7
    %v3540 = vsub.s32 %v2169, %v3539
    %v3541 = vrot.slane %v3288, %v3540
    %v3542 = vlaneseq
    %v3543 = vshrl.u32 %v3542, 7
    %v3544 = vsub.s32 %v2169, %v3543
    %v3545 = vrot.slane %v3291, %v3544
    %v3546 = vlaneseq
    %v3547 = vshrl.u32 %v3546, 7
    %v3548 = vsub.s32 %v2169, %v3547
    %v3549 = vrot.slane %v3294, %v3548
    %v3550 = vlaneseq
    %v3551 = vshrl.u32 %v3550, 7
    %v3552 = vsub.s32 %v2169, %v3551
    %v3553 = vrot.slane %v3297, %v3552
    %v3554 = vsel %vm2426, %v3305, %v3301
    %v3555 = vsel %vm2428, %v3309, %v3554
    %v3556 = vsel %vm2430, %v3313, %v3555
    %v3557 = vsel %vm2432, %v3317, %v3556
    %v3558 = vsel %vm2434, %v3321, %v3557
    %v3559 = vsel %vm2436, %v3325, %v3558
    %v3560 = vsel %vm2438, %v3329, %v3559
    %v3561 = vsel %vm2426, %v3337, %v3333
    %v3562 = vsel %vm2428, %v3341, %v3561
    %v3563 = vsel %vm2430, %v3345, %v3562
    %v3564 = vsel %vm2432, %v3349, %v3563
    %v3565 = vsel %vm2434, %v3353, %v3564
    %v3566 = vsel %vm2436, %v3357, %v3565
    %v3567 = vsel %vm2438, %v3361, %v3566
    %v3568 = vsel %vm2426, %v3369, %v3365
    %v3569 = vsel %vm2428, %v3373, %v3568
    %v3570 = vsel %vm2430, %v3377, %v3569
    %v3571 = vsel %vm2432, %v3381, %v3570
    %v3572 = vsel %vm2434, %v3385, %v3571
    %v3573 = vsel %vm2436, %v3389, %v3572
    %v3574 = vsel %vm2438, %v3393, %v3573
    %v3575 = vsel %vm2426, %v3401, %v3397
    %v3576 = vsel %vm2428, %v3405, %v3575
    %v3577 = vsel %vm2430, %v3409, %v3576
    %v3578 = vsel %vm2432, %v3413, %v3577
    %v3579 = vsel %vm2434, %v3417, %v3578
    %v3580 = vsel %vm2436, %v3421, %v3579
    %v3581 = vsel %vm2438, %v3425, %v3580
    %v3582 = vsel %vm2426, %v3433, %v3429
    %v3583 = vsel %vm2428, %v3437, %v3582
    %v3584 = vsel %vm2430, %v3441, %v3583
    %v3585 = vsel %vm2432, %v3445, %v3584
    %v3586 = vsel %vm2434, %v3449, %v3585
    %v3587 = vsel %vm2436, %v3453, %v3586
    %v3588 = vsel %vm2438, %v3457, %v3587
    %v3589 = vsel %vm2426, %v3465, %v3461
    %v3590 = vsel %vm2428, %v3469, %v3589
    %v3591 = vsel %vm2430, %v3473, %v3590
    %v3592 = vsel %vm2432, %v3477, %v3591
    %v3593 = vsel %vm2434, %v3481, %v3592
    %v3594 = vsel %vm2436, %v3485, %v3593
    %v3595 = vsel %vm2438, %v3489, %v3594
    %v3596 = vsel %vm2426, %v3497, %v3493
    %v3597 = vsel %vm2428, %v3501, %v3596
    %v3598 = vsel %vm2430, %v3505, %v3597
    %v3599 = vsel %vm2432, %v3509, %v3598
    %v3600 = vsel %vm2434, %v3513, %v3599
    %v3601 = vsel %vm2436, %v3517, %v3600
    %v3602 = vsel %vm2438, %v3521, %v3601
    %v3603 = vsel %vm2426, %v3529, %v3525
    %v3604 = vsel %vm2428, %v3533, %v3603
    %v3605 = vsel %vm2430, %v3537, %v3604
    %v3606 = vsel %vm2432, %v3541, %v3605
    %v3607 = vsel %vm2434, %v3545, %v3606
    %v3608 = vsel %vm2436, %v3549, %v3607
    %v3609 = vsel %vm2438, %v3553, %v3608
    %v3618 = vsel %vm2497, %v3560, 0.0
    %3619 = vadd.xlane.f32.xlu0 %v3618
    %v3620 = vpop.xlane.xlu0 %3619
    %v3621 = vsel %vm2497, %v3567, 0.0
    %3622 = vadd.xlane.f32.xlu0 %v3621
    %v3623 = vpop.xlane.xlu0 %3622
    %v3624 = vsel %vm2497, %v3574, 0.0
    %3625 = vadd.xlane.f32.xlu0 %v3624
    %v3626 = vpop.xlane.xlu0 %3625
    %v3627 = vsel %vm2497, %v3581, 0.0
    %3628 = vadd.xlane.f32.xlu0 %v3627
    %v3629 = vpop.xlane.xlu0 %3628
    %v3630 = vsel %vm2497, %v3588, 0.0
    %3631 = vadd.xlane.f32.xlu0 %v3630
    %v3632 = vpop.xlane.xlu0 %3631
    %v3633 = vsel %vm2497, %v3595, 0.0
    %3634 = vadd.xlane.f32.xlu0 %v3633
    %v3635 = vpop.xlane.xlu0 %3634
    %v3636 = vsel %vm2497, %v3602, 0.0
    %3637 = vadd.xlane.f32.xlu0 %v3636
    %v3638 = vpop.xlane.xlu0 %3637
    %v3639 = vsel %vm2497, %v3609, 0.0
    %3640 = vadd.xlane.f32.xlu0 %v3639
    %v3641 = vpop.xlane.xlu0 %3640
    %v3650 = vlaneseq
    %v3651 = vshrl.u32 %v3650, 7
    %v3652 = vsub.s32 0, %v3651
    %v3653 = vrot.slane %v3620, %v3652
    %v3654 = vlaneseq
    %v3655 = vshrl.u32 %v3654, 7
    %v3656 = vsub.s32 1, %v3655
    %v3657 = vrot.slane %v3620, %v3656
    %v3658 = vlaneseq
    %v3659 = vshrl.u32 %v3658, 7
    %v3660 = vsub.s32 2, %v3659
    %v3661 = vrot.slane %v3620, %v3660
    %v3662 = vlaneseq
    %v3663 = vshrl.u32 %v3662, 7
    %v3664 = vsub.s32 3, %v3663
    %v3665 = vrot.slane %v3620, %v3664
    %v3666 = vlaneseq
    %v3667 = vshrl.u32 %v3666, 7
    %v3668 = vsub.s32 4, %v3667
    %v3669 = vrot.slane %v3620, %v3668
    %v3670 = vlaneseq
    %v3671 = vshrl.u32 %v3670, 7
    %v3672 = vsub.s32 5, %v3671
    %v3673 = vrot.slane %v3620, %v3672
    %v3674 = vlaneseq
    %v3675 = vshrl.u32 %v3674, 7
    %v3676 = vsub.s32 6, %v3675
    %v3677 = vrot.slane %v3620, %v3676
    %v3678 = vlaneseq
    %v3679 = vshrl.u32 %v3678, 7
    %v3680 = vsub.s32 7, %v3679
    %v3681 = vrot.slane %v3620, %v3680
    %v3682 = vlaneseq
    %v3683 = vshrl.u32 %v3682, 7
    %v3684 = vsub.s32 0, %v3683
    %v3685 = vrot.slane %v3623, %v3684
    %v3686 = vlaneseq
    %v3687 = vshrl.u32 %v3686, 7
    %v3688 = vsub.s32 1, %v3687
    %v3689 = vrot.slane %v3623, %v3688
    %v3690 = vlaneseq
    %v3691 = vshrl.u32 %v3690, 7
    %v3692 = vsub.s32 2, %v3691
    %v3693 = vrot.slane %v3623, %v3692
    %v3694 = vlaneseq
    %v3695 = vshrl.u32 %v3694, 7
    %v3696 = vsub.s32 3, %v3695
    %v3697 = vrot.slane %v3623, %v3696
    %v3698 = vlaneseq
    %v3699 = vshrl.u32 %v3698, 7
    %v3700 = vsub.s32 4, %v3699
    %v3701 = vrot.slane %v3623, %v3700
    %v3702 = vlaneseq
    %v3703 = vshrl.u32 %v3702, 7
    %v3704 = vsub.s32 5, %v3703
    %v3705 = vrot.slane %v3623, %v3704
    %v3706 = vlaneseq
    %v3707 = vshrl.u32 %v3706, 7
    %v3708 = vsub.s32 6, %v3707
    %v3709 = vrot.slane %v3623, %v3708
    %v3710 = vlaneseq
    %v3711 = vshrl.u32 %v3710, 7
    %v3712 = vsub.s32 7, %v3711
    %v3713 = vrot.slane %v3623, %v3712
    %v3714 = vlaneseq
    %v3715 = vshrl.u32 %v3714, 7
    %v3716 = vsub.s32 0, %v3715
    %v3717 = vrot.slane %v3626, %v3716
    %v3718 = vlaneseq
    %v3719 = vshrl.u32 %v3718, 7
    %v3720 = vsub.s32 1, %v3719
    %v3721 = vrot.slane %v3626, %v3720
    %v3722 = vlaneseq
    %v3723 = vshrl.u32 %v3722, 7
    %v3724 = vsub.s32 2, %v3723
    %v3725 = vrot.slane %v3626, %v3724
    %v3726 = vlaneseq
    %v3727 = vshrl.u32 %v3726, 7
    %v3728 = vsub.s32 3, %v3727
    %v3729 = vrot.slane %v3626, %v3728
    %v3730 = vlaneseq
    %v3731 = vshrl.u32 %v3730, 7
    %v3732 = vsub.s32 4, %v3731
    %v3733 = vrot.slane %v3626, %v3732
    %v3734 = vlaneseq
    %v3735 = vshrl.u32 %v3734, 7
    %v3736 = vsub.s32 5, %v3735
    %v3737 = vrot.slane %v3626, %v3736
    %v3738 = vlaneseq
    %v3739 = vshrl.u32 %v3738, 7
    %v3740 = vsub.s32 6, %v3739
    %v3741 = vrot.slane %v3626, %v3740
    %v3742 = vlaneseq
    %v3743 = vshrl.u32 %v3742, 7
    %v3744 = vsub.s32 7, %v3743
    %v3745 = vrot.slane %v3626, %v3744
    %v3746 = vlaneseq
    %v3747 = vshrl.u32 %v3746, 7
    %v3748 = vsub.s32 0, %v3747
    %v3749 = vrot.slane %v3629, %v3748
    %v3750 = vlaneseq
    %v3751 = vshrl.u32 %v3750, 7
    %v3752 = vsub.s32 1, %v3751
    %v3753 = vrot.slane %v3629, %v3752
    %v3754 = vlaneseq
    %v3755 = vshrl.u32 %v3754, 7
    %v3756 = vsub.s32 2, %v3755
    %v3757 = vrot.slane %v3629, %v3756
    %v3758 = vlaneseq
    %v3759 = vshrl.u32 %v3758, 7
    %v3760 = vsub.s32 3, %v3759
    %v3761 = vrot.slane %v3629, %v3760
    %v3762 = vlaneseq
    %v3763 = vshrl.u32 %v3762, 7
    %v3764 = vsub.s32 4, %v3763
    %v3765 = vrot.slane %v3629, %v3764
    %v3766 = vlaneseq
    %v3767 = vshrl.u32 %v3766, 7
    %v3768 = vsub.s32 5, %v3767
    %v3769 = vrot.slane %v3629, %v3768
    %v3770 = vlaneseq
    %v3771 = vshrl.u32 %v3770, 7
    %v3772 = vsub.s32 6, %v3771
    %v3773 = vrot.slane %v3629, %v3772
    %v3774 = vlaneseq
    %v3775 = vshrl.u32 %v3774, 7
    %v3776 = vsub.s32 7, %v3775
    %v3777 = vrot.slane %v3629, %v3776
    %v3778 = vlaneseq
    %v3779 = vshrl.u32 %v3778, 7
    %v3780 = vsub.s32 0, %v3779
    %v3781 = vrot.slane %v3632, %v3780
    %v3782 = vlaneseq
    %v3783 = vshrl.u32 %v3782, 7
    %v3784 = vsub.s32 1, %v3783
    %v3785 = vrot.slane %v3632, %v3784
    %v3786 = vlaneseq
    %v3787 = vshrl.u32 %v3786, 7
    %v3788 = vsub.s32 2, %v3787
    %v3789 = vrot.slane %v3632, %v3788
    %v3790 = vlaneseq
    %v3791 = vshrl.u32 %v3790, 7
    %v3792 = vsub.s32 3, %v3791
    %v3793 = vrot.slane %v3632, %v3792
    %v3794 = vlaneseq
    %v3795 = vshrl.u32 %v3794, 7
    %v3796 = vsub.s32 4, %v3795
    %v3797 = vrot.slane %v3632, %v3796
    %v3798 = vlaneseq
    %v3799 = vshrl.u32 %v3798, 7
    %v3800 = vsub.s32 5, %v3799
    %v3801 = vrot.slane %v3632, %v3800
    %v3802 = vlaneseq
    %v3803 = vshrl.u32 %v3802, 7
    %v3804 = vsub.s32 6, %v3803
    %v3805 = vrot.slane %v3632, %v3804
    %v3806 = vlaneseq
    %v3807 = vshrl.u32 %v3806, 7
    %v3808 = vsub.s32 7, %v3807
    %v3809 = vrot.slane %v3632, %v3808
    %v3810 = vlaneseq
    %v3811 = vshrl.u32 %v3810, 7
    %v3812 = vsub.s32 0, %v3811
    %v3813 = vrot.slane %v3635, %v3812
    %v3814 = vlaneseq
    %v3815 = vshrl.u32 %v3814, 7
    %v3816 = vsub.s32 1, %v3815
    %v3817 = vrot.slane %v3635, %v3816
    %v3818 = vlaneseq
    %v3819 = vshrl.u32 %v3818, 7
    %v3820 = vsub.s32 2, %v3819
    %v3821 = vrot.slane %v3635, %v3820
    %v3822 = vlaneseq
    %v3823 = vshrl.u32 %v3822, 7
    %v3824 = vsub.s32 3, %v3823
    %v3825 = vrot.slane %v3635, %v3824
    %v3826 = vlaneseq
    %v3827 = vshrl.u32 %v3826, 7
    %v3828 = vsub.s32 4, %v3827
    %v3829 = vrot.slane %v3635, %v3828
    %v3830 = vlaneseq
    %v3831 = vshrl.u32 %v3830, 7
    %v3832 = vsub.s32 5, %v3831
    %v3833 = vrot.slane %v3635, %v3832
    %v3834 = vlaneseq
    %v3835 = vshrl.u32 %v3834, 7
    %v3836 = vsub.s32 6, %v3835
    %v3837 = vrot.slane %v3635, %v3836
    %v3838 = vlaneseq
    %v3839 = vshrl.u32 %v3838, 7
    %v3840 = vsub.s32 7, %v3839
    %v3841 = vrot.slane %v3635, %v3840
    %v3842 = vlaneseq
    %v3843 = vshrl.u32 %v3842, 7
    %v3844 = vsub.s32 0, %v3843
    %v3845 = vrot.slane %v3638, %v3844
    %v3846 = vlaneseq
    %v3847 = vshrl.u32 %v3846, 7
    %v3848 = vsub.s32 1, %v3847
    %v3849 = vrot.slane %v3638, %v3848
    %v3850 = vlaneseq
    %v3851 = vshrl.u32 %v3850, 7
    %v3852 = vsub.s32 2, %v3851
    %v3853 = vrot.slane %v3638, %v3852
    %v3854 = vlaneseq
    %v3855 = vshrl.u32 %v3854, 7
    %v3856 = vsub.s32 3, %v3855
    %v3857 = vrot.slane %v3638, %v3856
    %v3858 = vlaneseq
    %v3859 = vshrl.u32 %v3858, 7
    %v3860 = vsub.s32 4, %v3859
    %v3861 = vrot.slane %v3638, %v3860
    %v3862 = vlaneseq
    %v3863 = vshrl.u32 %v3862, 7
    %v3864 = vsub.s32 5, %v3863
    %v3865 = vrot.slane %v3638, %v3864
    %v3866 = vlaneseq
    %v3867 = vshrl.u32 %v3866, 7
    %v3868 = vsub.s32 6, %v3867
    %v3869 = vrot.slane %v3638, %v3868
    %v3870 = vlaneseq
    %v3871 = vshrl.u32 %v3870, 7
    %v3872 = vsub.s32 7, %v3871
    %v3873 = vrot.slane %v3638, %v3872
    %v3874 = vlaneseq
    %v3875 = vshrl.u32 %v3874, 7
    %v3876 = vsub.s32 0, %v3875
    %v3877 = vrot.slane %v3641, %v3876
    %v3878 = vlaneseq
    %v3879 = vshrl.u32 %v3878, 7
    %v3880 = vsub.s32 1, %v3879
    %v3881 = vrot.slane %v3641, %v3880
    %v3882 = vlaneseq
    %v3883 = vshrl.u32 %v3882, 7
    %v3884 = vsub.s32 2, %v3883
    %v3885 = vrot.slane %v3641, %v3884
    %v3886 = vlaneseq
    %v3887 = vshrl.u32 %v3886, 7
    %v3888 = vsub.s32 3, %v3887
    %v3889 = vrot.slane %v3641, %v3888
    %v3890 = vlaneseq
    %v3891 = vshrl.u32 %v3890, 7
    %v3892 = vsub.s32 4, %v3891
    %v3893 = vrot.slane %v3641, %v3892
    %v3894 = vlaneseq
    %v3895 = vshrl.u32 %v3894, 7
    %v3896 = vsub.s32 5, %v3895
    %v3897 = vrot.slane %v3641, %v3896
    %v3898 = vlaneseq
    %v3899 = vshrl.u32 %v3898, 7
    %v3900 = vsub.s32 6, %v3899
    %v3901 = vrot.slane %v3641, %v3900
    %v3902 = vlaneseq
    %v3903 = vshrl.u32 %v3902, 7
    %v3904 = vsub.s32 7, %v3903
    %v3905 = vrot.slane %v3641, %v3904
    %v3970 = vrcp.pop %v3653
    %v3971 = vmul.f32 %v2915, %v3970
    %v3972 = vrcp.pop %v3657
    %v3973 = vmul.f32 %v2917, %v3972
    %v3974 = vrcp.pop %v3661
    %v3975 = vmul.f32 %v2919, %v3974
    %v3976 = vrcp.pop %v3665
    %v3977 = vmul.f32 %v2921, %v3976
    %v3978 = vrcp.pop %v3669
    %v3979 = vmul.f32 %v2923, %v3978
    %v3980 = vrcp.pop %v3673
    %v3981 = vmul.f32 %v2925, %v3980
    %v3982 = vrcp.pop %v3677
    %v3983 = vmul.f32 %v2927, %v3982
    %v3984 = vrcp.pop %v3681
    %v3985 = vmul.f32 %v2929, %v3984
    %v3986 = vrcp.pop %v3685
    %v3987 = vmul.f32 %v2931, %v3986
    %v3988 = vrcp.pop %v3689
    %v3989 = vmul.f32 %v2933, %v3988
    %v3990 = vrcp.pop %v3693
    %v3991 = vmul.f32 %v2935, %v3990
    %v3992 = vrcp.pop %v3697
    %v3993 = vmul.f32 %v2937, %v3992
    %v3994 = vrcp.pop %v3701
    %v3995 = vmul.f32 %v2939, %v3994
    %v3996 = vrcp.pop %v3705
    %v3997 = vmul.f32 %v2941, %v3996
    %v3998 = vrcp.pop %v3709
    %v3999 = vmul.f32 %v2943, %v3998
    %v4000 = vrcp.pop %v3713
    %v4001 = vmul.f32 %v2945, %v4000
    %v4002 = vrcp.pop %v3717
    %v4003 = vmul.f32 %v2947, %v4002
    %v4004 = vrcp.pop %v3721
    %v4005 = vmul.f32 %v2949, %v4004
    %v4006 = vrcp.pop %v3725
    %v4007 = vmul.f32 %v2951, %v4006
    %v4008 = vrcp.pop %v3729
    %v4009 = vmul.f32 %v2953, %v4008
    %v4010 = vrcp.pop %v3733
    %v4011 = vmul.f32 %v2955, %v4010
    %v4012 = vrcp.pop %v3737
    %v4013 = vmul.f32 %v2957, %v4012
    %v4014 = vrcp.pop %v3741
    %v4015 = vmul.f32 %v2959, %v4014
    %v4016 = vrcp.pop %v3745
    %v4017 = vmul.f32 %v2961, %v4016
    %v4018 = vrcp.pop %v3749
    %v4019 = vmul.f32 %v2963, %v4018
    %v4020 = vrcp.pop %v3753
    %v4021 = vmul.f32 %v2965, %v4020
    %v4022 = vrcp.pop %v3757
    %v4023 = vmul.f32 %v2967, %v4022
    %v4024 = vrcp.pop %v3761
    %v4025 = vmul.f32 %v2969, %v4024
    %v4026 = vrcp.pop %v3765
    %v4027 = vmul.f32 %v2971, %v4026
    %v4028 = vrcp.pop %v3769
    %v4029 = vmul.f32 %v2973, %v4028
    %v4030 = vrcp.pop %v3773
    %v4031 = vmul.f32 %v2975, %v4030
    %v4032 = vrcp.pop %v3777
    %v4033 = vmul.f32 %v2977, %v4032
    %v4034 = vrcp.pop %v3781
    %v4035 = vmul.f32 %v2979, %v4034
    %v4036 = vrcp.pop %v3785
    %v4037 = vmul.f32 %v2981, %v4036
    %v4038 = vrcp.pop %v3789
    %v4039 = vmul.f32 %v2983, %v4038
    %v4040 = vrcp.pop %v3793
    %v4041 = vmul.f32 %v2985, %v4040
    %v4042 = vrcp.pop %v3797
    %v4043 = vmul.f32 %v2987, %v4042
    %v4044 = vrcp.pop %v3801
    %v4045 = vmul.f32 %v2989, %v4044
    %v4046 = vrcp.pop %v3805
    %v4047 = vmul.f32 %v2991, %v4046
    %v4048 = vrcp.pop %v3809
    %v4049 = vmul.f32 %v2993, %v4048
    %v4050 = vrcp.pop %v3813
    %v4051 = vmul.f32 %v2995, %v4050
    %v4052 = vrcp.pop %v3817
    %v4053 = vmul.f32 %v2997, %v4052
    %v4054 = vrcp.pop %v3821
    %v4055 = vmul.f32 %v2999, %v4054
    %v4056 = vrcp.pop %v3825
    %v4057 = vmul.f32 %v3001, %v4056
    %v4058 = vrcp.pop %v3829
    %v4059 = vmul.f32 %v3003, %v4058
    %v4060 = vrcp.pop %v3833
    %v4061 = vmul.f32 %v3005, %v4060
    %v4062 = vrcp.pop %v3837
    %v4063 = vmul.f32 %v3007, %v4062
    %v4064 = vrcp.pop %v3841
    %v4065 = vmul.f32 %v3009, %v4064
    %v4066 = vrcp.pop %v3845
    %v4067 = vmul.f32 %v3011, %v4066
    %v4068 = vrcp.pop %v3849
    %v4069 = vmul.f32 %v3013, %v4068
    %v4070 = vrcp.pop %v3853
    %v4071 = vmul.f32 %v3015, %v4070
    %v4072 = vrcp.pop %v3857
    %v4073 = vmul.f32 %v3017, %v4072
    %v4074 = vrcp.pop %v3861
    %v4075 = vmul.f32 %v3019, %v4074
    %v4076 = vrcp.pop %v3865
    %v4077 = vmul.f32 %v3021, %v4076
    %v4078 = vrcp.pop %v3869
    %v4079 = vmul.f32 %v3023, %v4078
    %v4080 = vrcp.pop %v3873
    %v4081 = vmul.f32 %v3025, %v4080
    %v4082 = vrcp.pop %v3877
    %v4083 = vmul.f32 %v3027, %v4082
    %v4084 = vrcp.pop %v3881
    %v4085 = vmul.f32 %v3029, %v4084
    %v4086 = vrcp.pop %v3885
    %v4087 = vmul.f32 %v3031, %v4086
    %v4088 = vrcp.pop %v3889
    %v4089 = vmul.f32 %v3033, %v4088
    %v4090 = vrcp.pop %v3893
    %v4091 = vmul.f32 %v3035, %v4090
    %v4092 = vrcp.pop %v3897
    %v4093 = vmul.f32 %v3037, %v4092
    %v4094 = vrcp.pop %v3901
    %v4095 = vmul.f32 %v3039, %v4094
    %v4096 = vrcp.pop %v3905
    %v4097 = vmul.f32 %v3041, %v4096
    %4106 = vset.pattern.permute.xlu0 0
    %4107 = vperm.xlu0 %4106, %v3971
    %v4108 = vpop.permute.xlu0 %4107
    %4109 = vset.pattern.permute.xlu0 0
    %4110 = vperm.xlu0 %4109, %v3973
    %v4111 = vpop.permute.xlu0 %4110
    %4112 = vset.pattern.permute.xlu0 0
    %4113 = vperm.xlu0 %4112, %v3975
    %v4114 = vpop.permute.xlu0 %4113
    %4115 = vset.pattern.permute.xlu0 0
    %4116 = vperm.xlu0 %4115, %v3977
    %v4117 = vpop.permute.xlu0 %4116
    %4118 = vset.pattern.permute.xlu0 0
    %4119 = vperm.xlu0 %4118, %v3979
    %v4120 = vpop.permute.xlu0 %4119
    %4121 = vset.pattern.permute.xlu0 0
    %4122 = vperm.xlu0 %4121, %v3981
    %v4123 = vpop.permute.xlu0 %4122
    %4124 = vset.pattern.permute.xlu0 0
    %4125 = vperm.xlu0 %4124, %v3983
    %v4126 = vpop.permute.xlu0 %4125
    %4127 = vset.pattern.permute.xlu0 0
    %4128 = vperm.xlu0 %4127, %v3985
    %v4129 = vpop.permute.xlu0 %4128
    %v4130 = vlaneseq
    %v4131 = vshrl.u32 %v4130, 7
    %v4132 = vsub.s32 %v2169, %v4131
    %v4133 = vrot.slane %v4108, %v4132
    %v4134 = vlaneseq
    %v4135 = vshrl.u32 %v4134, 7
    %v4136 = vsub.s32 %v2169, %v4135
    %v4137 = vrot.slane %v4111, %v4136
    %v4138 = vlaneseq
    %v4139 = vshrl.u32 %v4138, 7
    %v4140 = vsub.s32 %v2169, %v4139
    %v4141 = vrot.slane %v4114, %v4140
    %v4142 = vlaneseq
    %v4143 = vshrl.u32 %v4142, 7
    %v4144 = vsub.s32 %v2169, %v4143
    %v4145 = vrot.slane %v4117, %v4144
    %v4146 = vlaneseq
    %v4147 = vshrl.u32 %v4146, 7
    %v4148 = vsub.s32 %v2169, %v4147
    %v4149 = vrot.slane %v4120, %v4148
    %v4150 = vlaneseq
    %v4151 = vshrl.u32 %v4150, 7
    %v4152 = vsub.s32 %v2169, %v4151
    %v4153 = vrot.slane %v4123, %v4152
    %v4154 = vlaneseq
    %v4155 = vshrl.u32 %v4154, 7
    %v4156 = vsub.s32 %v2169, %v4155
    %v4157 = vrot.slane %v4126, %v4156
    %v4158 = vlaneseq
    %v4159 = vshrl.u32 %v4158, 7
    %v4160 = vsub.s32 %v2169, %v4159
    %v4161 = vrot.slane %v4129, %v4160
    %v4162 = vsel %vm2426, %v4137, %v4133
    %v4163 = vsel %vm2428, %v4141, %v4162
    %v4164 = vsel %vm2430, %v4145, %v4163
    %v4165 = vsel %vm2432, %v4149, %v4164
    %v4166 = vsel %vm2434, %v4153, %v4165
    %v4167 = vsel %vm2436, %v4157, %v4166
    %v4168 = vsel %vm2438, %v4161, %v4167
    %v4170 = vsel %vm2497, %v24, 0
    %v4173 = vsel %vm2497, %v25, 0
    %v4175 = vsel %vm2497, %v4168, 0
    %4177 = vmatprep.subr.mxu0 0.0
    %4178 = vmatpush1.xpose.msra.mxu0 %v4175
    %4179 = vmatprep.subr.mxu0 0.0
    %4180 = vmatpush1.xpose.msra.mxu0 0.0
    %4181 = vmatprep.subr.mxu0 0.0
    %4182 = vmatpush1.xpose.msra.mxu0 0.0
    %4183 = vmatprep.subr.mxu0 0.0
    %4184 = vmatpush1.xpose.msra.mxu0 0.0
    %4185 = vmatprep.subr.mxu0 0.0
    %4186 = vmatpush1.xpose.msra.mxu0 0.0
    %4187 = vmatprep.subr.mxu0 0.0
    %4188 = vmatpush1.xpose.msra.mxu0 0.0
    %4189 = vmatprep.subr.mxu0 0.0
    %4190 = vmatpush1.xpose.msra.mxu0 0.0
    %4191 = vmatprep.subr.mxu0 0.0
    %4192 = vmatpush1.xpose.msra.mxu0 0.0
    %4193 = vmatprep.subr.mxu0 0.0
    %4194 = vmatpush1.xpose.msra.mxu0 0.0
    %4195 = vmatprep.subr.mxu0 0.0
    %4196 = vmatpush1.xpose.msra.mxu0 0.0
    %4197 = vmatprep.subr.mxu0 0.0
    %4198 = vmatpush1.xpose.msra.mxu0 0.0
    %4199 = vmatprep.subr.mxu0 0.0
    %4200 = vmatpush1.xpose.msra.mxu0 0.0
    %4201 = vmatprep.subr.mxu0 0.0
    %4202 = vmatpush1.xpose.msra.mxu0 0.0
    %4203 = vmatprep.subr.mxu0 0.0
    %4204 = vmatpush1.xpose.msra.mxu0 0.0
    %4205 = vmatprep.subr.mxu0 0.0
    %4206 = vmatpush1.xpose.msra.mxu0 0.0
    %4207 = vmatprep.subr.mxu0 0.0
    %4208 = vmatpush1.xpose.msra.mxu0 0.0
    %4209 = vmatprep.subr.mxu0 0.0
    %4210 = vmatpush1.xpose.msra.mxu0 0.0
    %4211 = vmatprep.subr.mxu0 0.0
    %4212 = vmatpush1.xpose.msra.mxu0 0.0
    %4213 = vmatprep.subr.mxu0 0.0
    %4214 = vmatpush1.xpose.msra.mxu0 0.0
    %4215 = vmatprep.subr.mxu0 0.0
    %4216 = vmatpush1.xpose.msra.mxu0 0.0
    %4217 = vmatprep.subr.mxu0 0.0
    %4218 = vmatpush1.xpose.msra.mxu0 0.0
    %4219 = vmatprep.subr.mxu0 0.0
    %4220 = vmatpush1.xpose.msra.mxu0 0.0
    %4221 = vmatprep.subr.mxu0 0.0
    %4222 = vmatpush1.xpose.msra.mxu0 0.0
    %4223 = vmatprep.subr.mxu0 0.0
    %4224 = vmatpush1.xpose.msra.mxu0 0.0
    %4225 = vmatprep.subr.mxu0 0.0
    %4226 = vmatpush1.xpose.msra.mxu0 0.0
    %4227 = vmatprep.subr.mxu0 0.0
    %4228 = vmatpush1.xpose.msra.mxu0 0.0
    %4229 = vmatprep.subr.mxu0 0.0
    %4230 = vmatpush1.xpose.msra.mxu0 0.0
    %4231 = vmatprep.subr.mxu0 0.0
    %4232 = vmatpush1.xpose.msra.mxu0 0.0
    %4233 = vmatprep.subr.mxu0 0.0
    %4234 = vmatpush1.xpose.msra.mxu0 0.0
    %4235 = vmatprep.subr.mxu0 0.0
    %4236 = vmatpush1.xpose.msra.mxu0 0.0
    %4237 = vmatprep.subr.mxu0 0.0
    %4238 = vmatpush1.xpose.msra.mxu0 0.0
    %4239 = vmatprep.subr.mxu0 0.0
    %4240 = vmatpush1.xpose.msra.mxu0 0.0
    %4241 = vmatprep.mubr.f32.mxu0 0.0
    %4242 = vmatmul.mubr.f32.gmra.mrb[0].mxu0 %v4170
    %v4243 = vpop.f32.mrb[0].mxu0
    %v4244 = vadd.f32 0.0, %v4243
    %v4245 = vpop.f32.mrb[0].mxu0
    %4246 = vmatprep.mubr.f32.mxu0 0.0
    %4247 = vmatmul.mubr.f32.gmra.mrb[0].mxu0 %v4173
    %v4248 = vpop.f32.mrb[0].mxu0
    %v4249 = vadd.f32 0.0, %v4248
    %v4250 = vpop.f32.mrb[0].mxu0
    %4251 = vdwg.mxu0
    %4260 = vset.pattern.permute.xlu0 0
    %4261 = vperm.xlu0 %4260, %v3987
    %v4262 = vpop.permute.xlu0 %4261
    %4263 = vset.pattern.permute.xlu0 0
    %4264 = vperm.xlu0 %4263, %v3989
    %v4265 = vpop.permute.xlu0 %4264
    %4266 = vset.pattern.permute.xlu0 0
    %4267 = vperm.xlu0 %4266, %v3991
    %v4268 = vpop.permute.xlu0 %4267
    %4269 = vset.pattern.permute.xlu0 0
    %4270 = vperm.xlu0 %4269, %v3993
    %v4271 = vpop.permute.xlu0 %4270
    %4272 = vset.pattern.permute.xlu0 0
    %4273 = vperm.xlu0 %4272, %v3995
    %v4274 = vpop.permute.xlu0 %4273
    %4275 = vset.pattern.permute.xlu0 0
    %4276 = vperm.xlu0 %4275, %v3997
    %v4277 = vpop.permute.xlu0 %4276
    %4278 = vset.pattern.permute.xlu0 0
    %4279 = vperm.xlu0 %4278, %v3999
    %v4280 = vpop.permute.xlu0 %4279
    %4281 = vset.pattern.permute.xlu0 0
    %4282 = vperm.xlu0 %4281, %v4001
    %v4283 = vpop.permute.xlu0 %4282
    %v4284 = vlaneseq
    %v4285 = vshrl.u32 %v4284, 7
    %v4286 = vsub.s32 %v2169, %v4285
    %v4287 = vrot.slane %v4262, %v4286
    %v4288 = vlaneseq
    %v4289 = vshrl.u32 %v4288, 7
    %v4290 = vsub.s32 %v2169, %v4289
    %v4291 = vrot.slane %v4265, %v4290
    %v4292 = vlaneseq
    %v4293 = vshrl.u32 %v4292, 7
    %v4294 = vsub.s32 %v2169, %v4293
    %v4295 = vrot.slane %v4268, %v4294
    %v4296 = vlaneseq
    %v4297 = vshrl.u32 %v4296, 7
    %v4298 = vsub.s32 %v2169, %v4297
    %v4299 = vrot.slane %v4271, %v4298
    %v4300 = vlaneseq
    %v4301 = vshrl.u32 %v4300, 7
    %v4302 = vsub.s32 %v2169, %v4301
    %v4303 = vrot.slane %v4274, %v4302
    %v4304 = vlaneseq
    %v4305 = vshrl.u32 %v4304, 7
    %v4306 = vsub.s32 %v2169, %v4305
    %v4307 = vrot.slane %v4277, %v4306
    %v4308 = vlaneseq
    %v4309 = vshrl.u32 %v4308, 7
    %v4310 = vsub.s32 %v2169, %v4309
    %v4311 = vrot.slane %v4280, %v4310
    %v4312 = vlaneseq
    %v4313 = vshrl.u32 %v4312, 7
    %v4314 = vsub.s32 %v2169, %v4313
    %v4315 = vrot.slane %v4283, %v4314
    %v4316 = vsel %vm2426, %v4291, %v4287
    %v4317 = vsel %vm2428, %v4295, %v4316
    %v4318 = vsel %vm2430, %v4299, %v4317
    %v4319 = vsel %vm2432, %v4303, %v4318
    %v4320 = vsel %vm2434, %v4307, %v4319
    %v4321 = vsel %vm2436, %v4311, %v4320
    %v4322 = vsel %vm2438, %v4315, %v4321
    %v4324 = vsel %vm2497, %v26, 0
    %v4327 = vsel %vm2497, %v27, 0
    %v4329 = vsel %vm2497, %v4322, 0
    %4331 = vmatprep.subr.mxu0 0.0
    %4332 = vmatpush1.xpose.msra.mxu0 %v4329
    %4333 = vmatprep.subr.mxu0 0.0
    %4334 = vmatpush1.xpose.msra.mxu0 0.0
    %4335 = vmatprep.subr.mxu0 0.0
    %4336 = vmatpush1.xpose.msra.mxu0 0.0
    %4337 = vmatprep.subr.mxu0 0.0
    %4338 = vmatpush1.xpose.msra.mxu0 0.0
    %4339 = vmatprep.subr.mxu0 0.0
    %4340 = vmatpush1.xpose.msra.mxu0 0.0
    %4341 = vmatprep.subr.mxu0 0.0
    %4342 = vmatpush1.xpose.msra.mxu0 0.0
    %4343 = vmatprep.subr.mxu0 0.0
    %4344 = vmatpush1.xpose.msra.mxu0 0.0
    %4345 = vmatprep.subr.mxu0 0.0
    %4346 = vmatpush1.xpose.msra.mxu0 0.0
    %4347 = vmatprep.subr.mxu0 0.0
    %4348 = vmatpush1.xpose.msra.mxu0 0.0
    %4349 = vmatprep.subr.mxu0 0.0
    %4350 = vmatpush1.xpose.msra.mxu0 0.0
    %4351 = vmatprep.subr.mxu0 0.0
    %4352 = vmatpush1.xpose.msra.mxu0 0.0
    %4353 = vmatprep.subr.mxu0 0.0
    %4354 = vmatpush1.xpose.msra.mxu0 0.0
    %4355 = vmatprep.subr.mxu0 0.0
    %4356 = vmatpush1.xpose.msra.mxu0 0.0
    %4357 = vmatprep.subr.mxu0 0.0
    %4358 = vmatpush1.xpose.msra.mxu0 0.0
    %4359 = vmatprep.subr.mxu0 0.0
    %4360 = vmatpush1.xpose.msra.mxu0 0.0
    %4361 = vmatprep.subr.mxu0 0.0
    %4362 = vmatpush1.xpose.msra.mxu0 0.0
    %4363 = vmatprep.subr.mxu0 0.0
    %4364 = vmatpush1.xpose.msra.mxu0 0.0
    %4365 = vmatprep.subr.mxu0 0.0
    %4366 = vmatpush1.xpose.msra.mxu0 0.0
    %4367 = vmatprep.subr.mxu0 0.0
    %4368 = vmatpush1.xpose.msra.mxu0 0.0
    %4369 = vmatprep.subr.mxu0 0.0
    %4370 = vmatpush1.xpose.msra.mxu0 0.0
    %4371 = vmatprep.subr.mxu0 0.0
    %4372 = vmatpush1.xpose.msra.mxu0 0.0
    %4373 = vmatprep.subr.mxu0 0.0
    %4374 = vmatpush1.xpose.msra.mxu0 0.0
    %4375 = vmatprep.subr.mxu0 0.0
    %4376 = vmatpush1.xpose.msra.mxu0 0.0
    %4377 = vmatprep.subr.mxu0 0.0
    %4378 = vmatpush1.xpose.msra.mxu0 0.0
    %4379 = vmatprep.subr.mxu0 0.0
    %4380 = vmatpush1.xpose.msra.mxu0 0.0
    %4381 = vmatprep.subr.mxu0 0.0
    %4382 = vmatpush1.xpose.msra.mxu0 0.0
    %4383 = vmatprep.subr.mxu0 0.0
    %4384 = vmatpush1.xpose.msra.mxu0 0.0
    %4385 = vmatprep.subr.mxu0 0.0
    %4386 = vmatpush1.xpose.msra.mxu0 0.0
    %4387 = vmatprep.subr.mxu0 0.0
    %4388 = vmatpush1.xpose.msra.mxu0 0.0
    %4389 = vmatprep.subr.mxu0 0.0
    %4390 = vmatpush1.xpose.msra.mxu0 0.0
    %4391 = vmatprep.subr.mxu0 0.0
    %4392 = vmatpush1.xpose.msra.mxu0 0.0
    %4393 = vmatprep.subr.mxu0 0.0
    %4394 = vmatpush1.xpose.msra.mxu0 0.0
    %4395 = vmatprep.mubr.f32.mxu0 0.0
    %4396 = vmatmul.mubr.f32.gmra.mrb[0].mxu0 %v4324
    %v4397 = vpop.f32.mrb[0].mxu0
    %v4398 = vadd.f32 0.0, %v4397
    %v4399 = vpop.f32.mrb[0].mxu0
    %4400 = vmatprep.mubr.f32.mxu0 0.0
    %4401 = vmatmul.mubr.f32.gmra.mrb[0].mxu0 %v4327
    %v4402 = vpop.f32.mrb[0].mxu0
    %v4403 = vadd.f32 0.0, %v4402
    %v4404 = vpop.f32.mrb[0].mxu0
    %4405 = vdwg.mxu0
    %4414 = vset.pattern.permute.xlu0 0
    %4415 = vperm.xlu0 %4414, %v4003
    %v4416 = vpop.permute.xlu0 %4415
    %4417 = vset.pattern.permute.xlu0 0
    %4418 = vperm.xlu0 %4417, %v4005
    %v4419 = vpop.permute.xlu0 %4418
    %4420 = vset.pattern.permute.xlu0 0
    %4421 = vperm.xlu0 %4420, %v4007
    %v4422 = vpop.permute.xlu0 %4421
    %4423 = vset.pattern.permute.xlu0 0
    %4424 = vperm.xlu0 %4423, %v4009
    %v4425 = vpop.permute.xlu0 %4424
    %4426 = vset.pattern.permute.xlu0 0
    %4427 = vperm.xlu0 %4426, %v4011
    %v4428 = vpop.permute.xlu0 %4427
    %4429 = vset.pattern.permute.xlu0 0
    %4430 = vperm.xlu0 %4429, %v4013
    %v4431 = vpop.permute.xlu0 %4430
    %4432 = vset.pattern.permute.xlu0 0
    %4433 = vperm.xlu0 %4432, %v4015
    %v4434 = vpop.permute.xlu0 %4433
    %4435 = vset.pattern.permute.xlu0 0
    %4436 = vperm.xlu0 %4435, %v4017
    %v4437 = vpop.permute.xlu0 %4436
    %v4438 = vlaneseq
    %v4439 = vshrl.u32 %v4438, 7
    %v4440 = vsub.s32 %v2169, %v4439
    %v4441 = vrot.slane %v4416, %v4440
    %v4442 = vlaneseq
    %v4443 = vshrl.u32 %v4442, 7
    %v4444 = vsub.s32 %v2169, %v4443
    %v4445 = vrot.slane %v4419, %v4444
    %v4446 = vlaneseq
    %v4447 = vshrl.u32 %v4446, 7
    %v4448 = vsub.s32 %v2169, %v4447
    %v4449 = vrot.slane %v4422, %v4448
    %v4450 = vlaneseq
    %v4451 = vshrl.u32 %v4450, 7
    %v4452 = vsub.s32 %v2169, %v4451
    %v4453 = vrot.slane %v4425, %v4452
    %v4454 = vlaneseq
    %v4455 = vshrl.u32 %v4454, 7
    %v4456 = vsub.s32 %v2169, %v4455
    %v4457 = vrot.slane %v4428, %v4456
    %v4458 = vlaneseq
    %v4459 = vshrl.u32 %v4458, 7
    %v4460 = vsub.s32 %v2169, %v4459
    %v4461 = vrot.slane %v4431, %v4460
    %v4462 = vlaneseq
    %v4463 = vshrl.u32 %v4462, 7
    %v4464 = vsub.s32 %v2169, %v4463
    %v4465 = vrot.slane %v4434, %v4464
    %v4466 = vlaneseq
    %v4467 = vshrl.u32 %v4466, 7
    %v4468 = vsub.s32 %v2169, %v4467
    %v4469 = vrot.slane %v4437, %v4468
    %v4470 = vsel %vm2426, %v4445, %v4441
    %v4471 = vsel %vm2428, %v4449, %v4470
    %v4472 = vsel %vm2430, %v4453, %v4471
    %v4473 = vsel %vm2432, %v4457, %v4472
    %v4474 = vsel %vm2434, %v4461, %v4473
    %v4475 = vsel %vm2436, %v4465, %v4474
    %v4476 = vsel %vm2438, %v4469, %v4475
    %v4478 = vsel %vm2497, %v28, 0
    %v4481 = vsel %vm2497, %v29, 0
    %v4483 = vsel %vm2497, %v4476, 0
    %4485 = vmatprep.subr.mxu0 0.0
    %4486 = vmatpush1.xpose.msra.mxu0 %v4483
    %4487 = vmatprep.subr.mxu0 0.0
    %4488 = vmatpush1.xpose.msra.mxu0 0.0
    %4489 = vmatprep.subr.mxu0 0.0
    %4490 = vmatpush1.xpose.msra.mxu0 0.0
    %4491 = vmatprep.subr.mxu0 0.0
    %4492 = vmatpush1.xpose.msra.mxu0 0.0
    %4493 = vmatprep.subr.mxu0 0.0
    %4494 = vmatpush1.xpose.msra.mxu0 0.0
    %4495 = vmatprep.subr.mxu0 0.0
    %4496 = vmatpush1.xpose.msra.mxu0 0.0
    %4497 = vmatprep.subr.mxu0 0.0
    %4498 = vmatpush1.xpose.msra.mxu0 0.0
    %4499 = vmatprep.subr.mxu0 0.0
    %4500 = vmatpush1.xpose.msra.mxu0 0.0
    %4501 = vmatprep.subr.mxu0 0.0
    %4502 = vmatpush1.xpose.msra.mxu0 0.0
    %4503 = vmatprep.subr.mxu0 0.0
    %4504 = vmatpush1.xpose.msra.mxu0 0.0
    %4505 = vmatprep.subr.mxu0 0.0
    %4506 = vmatpush1.xpose.msra.mxu0 0.0
    %4507 = vmatprep.subr.mxu0 0.0
    %4508 = vmatpush1.xpose.msra.mxu0 0.0
    %4509 = vmatprep.subr.mxu0 0.0
    %4510 = vmatpush1.xpose.msra.mxu0 0.0
    %4511 = vmatprep.subr.mxu0 0.0
    %4512 = vmatpush1.xpose.msra.mxu0 0.0
    %4513 = vmatprep.subr.mxu0 0.0
    %4514 = vmatpush1.xpose.msra.mxu0 0.0
    %4515 = vmatprep.subr.mxu0 0.0
    %4516 = vmatpush1.xpose.msra.mxu0 0.0
    %4517 = vmatprep.subr.mxu0 0.0
    %4518 = vmatpush1.xpose.msra.mxu0 0.0
    %4519 = vmatprep.subr.mxu0 0.0
    %4520 = vmatpush1.xpose.msra.mxu0 0.0
    %4521 = vmatprep.subr.mxu0 0.0
    %4522 = vmatpush1.xpose.msra.mxu0 0.0
    %4523 = vmatprep.subr.mxu0 0.0
    %4524 = vmatpush1.xpose.msra.mxu0 0.0
    %4525 = vmatprep.subr.mxu0 0.0
    %4526 = vmatpush1.xpose.msra.mxu0 0.0
    %4527 = vmatprep.subr.mxu0 0.0
    %4528 = vmatpush1.xpose.msra.mxu0 0.0
    %4529 = vmatprep.subr.mxu0 0.0
    %4530 = vmatpush1.xpose.msra.mxu0 0.0
    %4531 = vmatprep.subr.mxu0 0.0
    %4532 = vmatpush1.xpose.msra.mxu0 0.0
    %4533 = vmatprep.subr.mxu0 0.0
    %4534 = vmatpush1.xpose.msra.mxu0 0.0
    %4535 = vmatprep.subr.mxu0 0.0
    %4536 = vmatpush1.xpose.msra.mxu0 0.0
    %4537 = vmatprep.subr.mxu0 0.0
    %4538 = vmatpush1.xpose.msra.mxu0 0.0
    %4539 = vmatprep.subr.mxu0 0.0
    %4540 = vmatpush1.xpose.msra.mxu0 0.0
    %4541 = vmatprep.subr.mxu0 0.0
    %4542 = vmatpush1.xpose.msra.mxu0 0.0
    %4543 = vmatprep.subr.mxu0 0.0
    %4544 = vmatpush1.xpose.msra.mxu0 0.0
    %4545 = vmatprep.subr.mxu0 0.0
    %4546 = vmatpush1.xpose.msra.mxu0 0.0
    %4547 = vmatprep.subr.mxu0 0.0
    %4548 = vmatpush1.xpose.msra.mxu0 0.0
    %4549 = vmatprep.mubr.f32.mxu0 0.0
    %4550 = vmatmul.mubr.f32.gmra.mrb[0].mxu0 %v4478
    %v4551 = vpop.f32.mrb[0].mxu0
    %v4552 = vadd.f32 0.0, %v4551
    %v4553 = vpop.f32.mrb[0].mxu0
    %4554 = vmatprep.mubr.f32.mxu0 0.0
    %4555 = vmatmul.mubr.f32.gmra.mrb[0].mxu0 %v4481
    %v4556 = vpop.f32.mrb[0].mxu0
    %v4557 = vadd.f32 0.0, %v4556
    %v4558 = vpop.f32.mrb[0].mxu0
    %4559 = vdwg.mxu0
    %4568 = vset.pattern.permute.xlu0 0
    %4569 = vperm.xlu0 %4568, %v4019
    %v4570 = vpop.permute.xlu0 %4569
    %4571 = vset.pattern.permute.xlu0 0
    %4572 = vperm.xlu0 %4571, %v4021
    %v4573 = vpop.permute.xlu0 %4572
    %4574 = vset.pattern.permute.xlu0 0
    %4575 = vperm.xlu0 %4574, %v4023
    %v4576 = vpop.permute.xlu0 %4575
    %4577 = vset.pattern.permute.xlu0 0
    %4578 = vperm.xlu0 %4577, %v4025
    %v4579 = vpop.permute.xlu0 %4578
    %4580 = vset.pattern.permute.xlu0 0
    %4581 = vperm.xlu0 %4580, %v4027
    %v4582 = vpop.permute.xlu0 %4581
    %4583 = vset.pattern.permute.xlu0 0
    %4584 = vperm.xlu0 %4583, %v4029
    %v4585 = vpop.permute.xlu0 %4584
    %4586 = vset.pattern.permute.xlu0 0
    %4587 = vperm.xlu0 %4586, %v4031
    %v4588 = vpop.permute.xlu0 %4587
    %4589 = vset.pattern.permute.xlu0 0
    %4590 = vperm.xlu0 %4589, %v4033
    %v4591 = vpop.permute.xlu0 %4590
    %v4592 = vlaneseq
    %v4593 = vshrl.u32 %v4592, 7
    %v4594 = vsub.s32 %v2169, %v4593
    %v4595 = vrot.slane %v4570, %v4594
    %v4596 = vlaneseq
    %v4597 = vshrl.u32 %v4596, 7
    %v4598 = vsub.s32 %v2169, %v4597
    %v4599 = vrot.slane %v4573, %v4598
    %v4600 = vlaneseq
    %v4601 = vshrl.u32 %v4600, 7
    %v4602 = vsub.s32 %v2169, %v4601
    %v4603 = vrot.slane %v4576, %v4602
    %v4604 = vlaneseq
    %v4605 = vshrl.u32 %v4604, 7
    %v4606 = vsub.s32 %v2169, %v4605
    %v4607 = vrot.slane %v4579, %v4606
    %v4608 = vlaneseq
    %v4609 = vshrl.u32 %v4608, 7
    %v4610 = vsub.s32 %v2169, %v4609
    %v4611 = vrot.slane %v4582, %v4610
    %v4612 = vlaneseq
    %v4613 = vshrl.u32 %v4612, 7
    %v4614 = vsub.s32 %v2169, %v4613
    %v4615 = vrot.slane %v4585, %v4614
    %v4616 = vlaneseq
    %v4617 = vshrl.u32 %v4616, 7
    %v4618 = vsub.s32 %v2169, %v4617
    %v4619 = vrot.slane %v4588, %v4618
    %v4620 = vlaneseq
    %v4621 = vshrl.u32 %v4620, 7
    %v4622 = vsub.s32 %v2169, %v4621
    %v4623 = vrot.slane %v4591, %v4622
    %v4624 = vsel %vm2426, %v4599, %v4595
    %v4625 = vsel %vm2428, %v4603, %v4624
    %v4626 = vsel %vm2430, %v4607, %v4625
    %v4627 = vsel %vm2432, %v4611, %v4626
    %v4628 = vsel %vm2434, %v4615, %v4627
    %v4629 = vsel %vm2436, %v4619, %v4628
    %v4630 = vsel %vm2438, %v4623, %v4629
    %v4632 = vsel %vm2497, %v30, 0
    %v4635 = vsel %vm2497, %v31, 0
    %v4637 = vsel %vm2497, %v4630, 0
    %4639 = vmatprep.subr.mxu0 0.0
    %4640 = vmatpush1.xpose.msra.mxu0 %v4637
    %4641 = vmatprep.subr.mxu0 0.0
    %4642 = vmatpush1.xpose.msra.mxu0 0.0
    %4643 = vmatprep.subr.mxu0 0.0
    %4644 = vmatpush1.xpose.msra.mxu0 0.0
    %4645 = vmatprep.subr.mxu0 0.0
    %4646 = vmatpush1.xpose.msra.mxu0 0.0
    %4647 = vmatprep.subr.mxu0 0.0
    %4648 = vmatpush1.xpose.msra.mxu0 0.0
    %4649 = vmatprep.subr.mxu0 0.0
    %4650 = vmatpush1.xpose.msra.mxu0 0.0
    %4651 = vmatprep.subr.mxu0 0.0
    %4652 = vmatpush1.xpose.msra.mxu0 0.0
    %4653 = vmatprep.subr.mxu0 0.0
    %4654 = vmatpush1.xpose.msra.mxu0 0.0
    %4655 = vmatprep.subr.mxu0 0.0
    %4656 = vmatpush1.xpose.msra.mxu0 0.0
    %4657 = vmatprep.subr.mxu0 0.0
    %4658 = vmatpush1.xpose.msra.mxu0 0.0
    %4659 = vmatprep.subr.mxu0 0.0
    %4660 = vmatpush1.xpose.msra.mxu0 0.0
    %4661 = vmatprep.subr.mxu0 0.0
    %4662 = vmatpush1.xpose.msra.mxu0 0.0
    %4663 = vmatprep.subr.mxu0 0.0
    %4664 = vmatpush1.xpose.msra.mxu0 0.0
    %4665 = vmatprep.subr.mxu0 0.0
    %4666 = vmatpush1.xpose.msra.mxu0 0.0
    %4667 = vmatprep.subr.mxu0 0.0
    %4668 = vmatpush1.xpose.msra.mxu0 0.0
    %4669 = vmatprep.subr.mxu0 0.0
    %4670 = vmatpush1.xpose.msra.mxu0 0.0
    %4671 = vmatprep.subr.mxu0 0.0
    %4672 = vmatpush1.xpose.msra.mxu0 0.0
    %4673 = vmatprep.subr.mxu0 0.0
    %4674 = vmatpush1.xpose.msra.mxu0 0.0
    %4675 = vmatprep.subr.mxu0 0.0
    %4676 = vmatpush1.xpose.msra.mxu0 0.0
    %4677 = vmatprep.subr.mxu0 0.0
    %4678 = vmatpush1.xpose.msra.mxu0 0.0
    %4679 = vmatprep.subr.mxu0 0.0
    %4680 = vmatpush1.xpose.msra.mxu0 0.0
    %4681 = vmatprep.subr.mxu0 0.0
    %4682 = vmatpush1.xpose.msra.mxu0 0.0
    %4683 = vmatprep.subr.mxu0 0.0
    %4684 = vmatpush1.xpose.msra.mxu0 0.0
    %4685 = vmatprep.subr.mxu0 0.0
    %4686 = vmatpush1.xpose.msra.mxu0 0.0
    %4687 = vmatprep.subr.mxu0 0.0
    %4688 = vmatpush1.xpose.msra.mxu0 0.0
    %4689 = vmatprep.subr.mxu0 0.0
    %4690 = vmatpush1.xpose.msra.mxu0 0.0
    %4691 = vmatprep.subr.mxu0 0.0
    %4692 = vmatpush1.xpose.msra.mxu0 0.0
    %4693 = vmatprep.subr.mxu0 0.0
    %4694 = vmatpush1.xpose.msra.mxu0 0.0
    %4695 = vmatprep.subr.mxu0 0.0
    %4696 = vmatpush1.xpose.msra.mxu0 0.0
    %4697 = vmatprep.subr.mxu0 0.0
    %4698 = vmatpush1.xpose.msra.mxu0 0.0
    %4699 = vmatprep.subr.mxu0 0.0
    %4700 = vmatpush1.xpose.msra.mxu0 0.0
    %4701 = vmatprep.subr.mxu0 0.0
    %4702 = vmatpush1.xpose.msra.mxu0 0.0
    %4703 = vmatprep.mubr.f32.mxu0 0.0
    %4704 = vmatmul.mubr.f32.gmra.mrb[0].mxu0 %v4632
    %v4705 = vpop.f32.mrb[0].mxu0
    %v4706 = vadd.f32 0.0, %v4705
    %v4707 = vpop.f32.mrb[0].mxu0
    %4708 = vmatprep.mubr.f32.mxu0 0.0
    %4709 = vmatmul.mubr.f32.gmra.mrb[0].mxu0 %v4635
    %v4710 = vpop.f32.mrb[0].mxu0
    %v4711 = vadd.f32 0.0, %v4710
    %v4712 = vpop.f32.mrb[0].mxu0
    %4713 = vdwg.mxu0
    %4722 = vset.pattern.permute.xlu0 0
    %4723 = vperm.xlu0 %4722, %v4035
    %v4724 = vpop.permute.xlu0 %4723
    %4725 = vset.pattern.permute.xlu0 0
    %4726 = vperm.xlu0 %4725, %v4037
    %v4727 = vpop.permute.xlu0 %4726
    %4728 = vset.pattern.permute.xlu0 0
    %4729 = vperm.xlu0 %4728, %v4039
    %v4730 = vpop.permute.xlu0 %4729
    %4731 = vset.pattern.permute.xlu0 0
    %4732 = vperm.xlu0 %4731, %v4041
    %v4733 = vpop.permute.xlu0 %4732
    %4734 = vset.pattern.permute.xlu0 0
    %4735 = vperm.xlu0 %4734, %v4043
    %v4736 = vpop.permute.xlu0 %4735
    %4737 = vset.pattern.permute.xlu0 0
    %4738 = vperm.xlu0 %4737, %v4045
    %v4739 = vpop.permute.xlu0 %4738
    %4740 = vset.pattern.permute.xlu0 0
    %4741 = vperm.xlu0 %4740, %v4047
    %v4742 = vpop.permute.xlu0 %4741
    %4743 = vset.pattern.permute.xlu0 0
    %4744 = vperm.xlu0 %4743, %v4049
    %v4745 = vpop.permute.xlu0 %4744
    %v4746 = vlaneseq
    %v4747 = vshrl.u32 %v4746, 7
    %v4748 = vsub.s32 %v2169, %v4747
    %v4749 = vrot.slane %v4724, %v4748
    %v4750 = vlaneseq
    %v4751 = vshrl.u32 %v4750, 7
    %v4752 = vsub.s32 %v2169, %v4751
    %v4753 = vrot.slane %v4727, %v4752
    %v4754 = vlaneseq
    %v4755 = vshrl.u32 %v4754, 7
    %v4756 = vsub.s32 %v2169, %v4755
    %v4757 = vrot.slane %v4730, %v4756
    %v4758 = vlaneseq
    %v4759 = vshrl.u32 %v4758, 7
    %v4760 = vsub.s32 %v2169, %v4759
    %v4761 = vrot.slane %v4733, %v4760
    %v4762 = vlaneseq
    %v4763 = vshrl.u32 %v4762, 7
    %v4764 = vsub.s32 %v2169, %v4763
    %v4765 = vrot.slane %v4736, %v4764
    %v4766 = vlaneseq
    %v4767 = vshrl.u32 %v4766, 7
    %v4768 = vsub.s32 %v2169, %v4767
    %v4769 = vrot.slane %v4739, %v4768
    %v4770 = vlaneseq
    %v4771 = vshrl.u32 %v4770, 7
    %v4772 = vsub.s32 %v2169, %v4771
    %v4773 = vrot.slane %v4742, %v4772
    %v4774 = vlaneseq
    %v4775 = vshrl.u32 %v4774, 7
    %v4776 = vsub.s32 %v2169, %v4775
    %v4777 = vrot.slane %v4745, %v4776
    %v4778 = vsel %vm2426, %v4753, %v4749
    %v4779 = vsel %vm2428, %v4757, %v4778
    %v4780 = vsel %vm2430, %v4761, %v4779
    %v4781 = vsel %vm2432, %v4765, %v4780
    %v4782 = vsel %vm2434, %v4769, %v4781
    %v4783 = vsel %vm2436, %v4773, %v4782
    %v4784 = vsel %vm2438, %v4777, %v4783
    %v4786 = vsel %vm2497, %v32, 0
    %v4789 = vsel %vm2497, %v33, 0
    %v4791 = vsel %vm2497, %v4784, 0
    %4793 = vmatprep.subr.mxu0 0.0
    %4794 = vmatpush1.xpose.msra.mxu0 %v4791
    %4795 = vmatprep.subr.mxu0 0.0
    %4796 = vmatpush1.xpose.msra.mxu0 0.0
    %4797 = vmatprep.subr.mxu0 0.0
    %4798 = vmatpush1.xpose.msra.mxu0 0.0
    %4799 = vmatprep.subr.mxu0 0.0
    %4800 = vmatpush1.xpose.msra.mxu0 0.0
    %4801 = vmatprep.subr.mxu0 0.0
    %4802 = vmatpush1.xpose.msra.mxu0 0.0
    %4803 = vmatprep.subr.mxu0 0.0
    %4804 = vmatpush1.xpose.msra.mxu0 0.0
    %4805 = vmatprep.subr.mxu0 0.0
    %4806 = vmatpush1.xpose.msra.mxu0 0.0
    %4807 = vmatprep.subr.mxu0 0.0
    %4808 = vmatpush1.xpose.msra.mxu0 0.0
    %4809 = vmatprep.subr.mxu0 0.0
    %4810 = vmatpush1.xpose.msra.mxu0 0.0
    %4811 = vmatprep.subr.mxu0 0.0
    %4812 = vmatpush1.xpose.msra.mxu0 0.0
    %4813 = vmatprep.subr.mxu0 0.0
    %4814 = vmatpush1.xpose.msra.mxu0 0.0
    %4815 = vmatprep.subr.mxu0 0.0
    %4816 = vmatpush1.xpose.msra.mxu0 0.0
    %4817 = vmatprep.subr.mxu0 0.0
    %4818 = vmatpush1.xpose.msra.mxu0 0.0
    %4819 = vmatprep.subr.mxu0 0.0
    %4820 = vmatpush1.xpose.msra.mxu0 0.0
    %4821 = vmatprep.subr.mxu0 0.0
    %4822 = vmatpush1.xpose.msra.mxu0 0.0
    %4823 = vmatprep.subr.mxu0 0.0
    %4824 = vmatpush1.xpose.msra.mxu0 0.0
    %4825 = vmatprep.subr.mxu0 0.0
    %4826 = vmatpush1.xpose.msra.mxu0 0.0
    %4827 = vmatprep.subr.mxu0 0.0
    %4828 = vmatpush1.xpose.msra.mxu0 0.0
    %4829 = vmatprep.subr.mxu0 0.0
    %4830 = vmatpush1.xpose.msra.mxu0 0.0
    %4831 = vmatprep.subr.mxu0 0.0
    %4832 = vmatpush1.xpose.msra.mxu0 0.0
    %4833 = vmatprep.subr.mxu0 0.0
    %4834 = vmatpush1.xpose.msra.mxu0 0.0
    %4835 = vmatprep.subr.mxu0 0.0
    %4836 = vmatpush1.xpose.msra.mxu0 0.0
    %4837 = vmatprep.subr.mxu0 0.0
    %4838 = vmatpush1.xpose.msra.mxu0 0.0
    %4839 = vmatprep.subr.mxu0 0.0
    %4840 = vmatpush1.xpose.msra.mxu0 0.0
    %4841 = vmatprep.subr.mxu0 0.0
    %4842 = vmatpush1.xpose.msra.mxu0 0.0
    %4843 = vmatprep.subr.mxu0 0.0
    %4844 = vmatpush1.xpose.msra.mxu0 0.0
    %4845 = vmatprep.subr.mxu0 0.0
    %4846 = vmatpush1.xpose.msra.mxu0 0.0
    %4847 = vmatprep.subr.mxu0 0.0
    %4848 = vmatpush1.xpose.msra.mxu0 0.0
    %4849 = vmatprep.subr.mxu0 0.0
    %4850 = vmatpush1.xpose.msra.mxu0 0.0
    %4851 = vmatprep.subr.mxu0 0.0
    %4852 = vmatpush1.xpose.msra.mxu0 0.0
    %4853 = vmatprep.subr.mxu0 0.0
    %4854 = vmatpush1.xpose.msra.mxu0 0.0
    %4855 = vmatprep.subr.mxu0 0.0
    %4856 = vmatpush1.xpose.msra.mxu0 0.0
    %4857 = vmatprep.mubr.f32.mxu0 0.0
    %4858 = vmatmul.mubr.f32.gmra.mrb[0].mxu0 %v4786
    %v4859 = vpop.f32.mrb[0].mxu0
    %v4860 = vadd.f32 0.0, %v4859
    %v4861 = vpop.f32.mrb[0].mxu0
    %4862 = vmatprep.mubr.f32.mxu0 0.0
    %4863 = vmatmul.mubr.f32.gmra.mrb[0].mxu0 %v4789
    %v4864 = vpop.f32.mrb[0].mxu0
    %v4865 = vadd.f32 0.0, %v4864
    %v4866 = vpop.f32.mrb[0].mxu0
    %4867 = vdwg.mxu0
    %4876 = vset.pattern.permute.xlu0 0
    %4877 = vperm.xlu0 %4876, %v4051
    %v4878 = vpop.permute.xlu0 %4877
    %4879 = vset.pattern.permute.xlu0 0
    %4880 = vperm.xlu0 %4879, %v4053
    %v4881 = vpop.permute.xlu0 %4880
    %4882 = vset.pattern.permute.xlu0 0
    %4883 = vperm.xlu0 %4882, %v4055
    %v4884 = vpop.permute.xlu0 %4883
    %4885 = vset.pattern.permute.xlu0 0
    %4886 = vperm.xlu0 %4885, %v4057
    %v4887 = vpop.permute.xlu0 %4886
    %4888 = vset.pattern.permute.xlu0 0
    %4889 = vperm.xlu0 %4888, %v4059
    %v4890 = vpop.permute.xlu0 %4889
    %4891 = vset.pattern.permute.xlu0 0
    %4892 = vperm.xlu0 %4891, %v4061
    %v4893 = vpop.permute.xlu0 %4892
    %4894 = vset.pattern.permute.xlu0 0
    %4895 = vperm.xlu0 %4894, %v4063
    %v4896 = vpop.permute.xlu0 %4895
    %4897 = vset.pattern.permute.xlu0 0
    %4898 = vperm.xlu0 %4897, %v4065
    %v4899 = vpop.permute.xlu0 %4898
    %v4900 = vlaneseq
    %v4901 = vshrl.u32 %v4900, 7
    %v4902 = vsub.s32 %v2169, %v4901
    %v4903 = vrot.slane %v4878, %v4902
    %v4904 = vlaneseq
    %v4905 = vshrl.u32 %v4904, 7
    %v4906 = vsub.s32 %v2169, %v4905
    %v4907 = vrot.slane %v4881, %v4906
    %v4908 = vlaneseq
    %v4909 = vshrl.u32 %v4908, 7
    %v4910 = vsub.s32 %v2169, %v4909
    %v4911 = vrot.slane %v4884, %v4910
    %v4912 = vlaneseq
    %v4913 = vshrl.u32 %v4912, 7
    %v4914 = vsub.s32 %v2169, %v4913
    %v4915 = vrot.slane %v4887, %v4914
    %v4916 = vlaneseq
    %v4917 = vshrl.u32 %v4916, 7
    %v4918 = vsub.s32 %v2169, %v4917
    %v4919 = vrot.slane %v4890, %v4918
    %v4920 = vlaneseq
    %v4921 = vshrl.u32 %v4920, 7
    %v4922 = vsub.s32 %v2169, %v4921
    %v4923 = vrot.slane %v4893, %v4922
    %v4924 = vlaneseq
    %v4925 = vshrl.u32 %v4924, 7
    %v4926 = vsub.s32 %v2169, %v4925
    %v4927 = vrot.slane %v4896, %v4926
    %v4928 = vlaneseq
    %v4929 = vshrl.u32 %v4928, 7
    %v4930 = vsub.s32 %v2169, %v4929
    %v4931 = vrot.slane %v4899, %v4930
    %v4932 = vsel %vm2426, %v4907, %v4903
    %v4933 = vsel %vm2428, %v4911, %v4932
    %v4934 = vsel %vm2430, %v4915, %v4933
    %v4935 = vsel %vm2432, %v4919, %v4934
    %v4936 = vsel %vm2434, %v4923, %v4935
    %v4937 = vsel %vm2436, %v4927, %v4936
    %v4938 = vsel %vm2438, %v4931, %v4937
    %v4940 = vsel %vm2497, %v34, 0
    %v4943 = vsel %vm2497, %v35, 0
    %v4945 = vsel %vm2497, %v4938, 0
    %4947 = vmatprep.subr.mxu0 0.0
    %4948 = vmatpush1.xpose.msra.mxu0 %v4945
    %4949 = vmatprep.subr.mxu0 0.0
    %4950 = vmatpush1.xpose.msra.mxu0 0.0
    %4951 = vmatprep.subr.mxu0 0.0
    %4952 = vmatpush1.xpose.msra.mxu0 0.0
    %4953 = vmatprep.subr.mxu0 0.0
    %4954 = vmatpush1.xpose.msra.mxu0 0.0
    %4955 = vmatprep.subr.mxu0 0.0
    %4956 = vmatpush1.xpose.msra.mxu0 0.0
    %4957 = vmatprep.subr.mxu0 0.0
    %4958 = vmatpush1.xpose.msra.mxu0 0.0
    %4959 = vmatprep.subr.mxu0 0.0
    %4960 = vmatpush1.xpose.msra.mxu0 0.0
    %4961 = vmatprep.subr.mxu0 0.0
    %4962 = vmatpush1.xpose.msra.mxu0 0.0
    %4963 = vmatprep.subr.mxu0 0.0
    %4964 = vmatpush1.xpose.msra.mxu0 0.0
    %4965 = vmatprep.subr.mxu0 0.0
    %4966 = vmatpush1.xpose.msra.mxu0 0.0
    %4967 = vmatprep.subr.mxu0 0.0
    %4968 = vmatpush1.xpose.msra.mxu0 0.0
    %4969 = vmatprep.subr.mxu0 0.0
    %4970 = vmatpush1.xpose.msra.mxu0 0.0
    %4971 = vmatprep.subr.mxu0 0.0
    %4972 = vmatpush1.xpose.msra.mxu0 0.0
    %4973 = vmatprep.subr.mxu0 0.0
    %4974 = vmatpush1.xpose.msra.mxu0 0.0
    %4975 = vmatprep.subr.mxu0 0.0
    %4976 = vmatpush1.xpose.msra.mxu0 0.0
    %4977 = vmatprep.subr.mxu0 0.0
    %4978 = vmatpush1.xpose.msra.mxu0 0.0
    %4979 = vmatprep.subr.mxu0 0.0
    %4980 = vmatpush1.xpose.msra.mxu0 0.0
    %4981 = vmatprep.subr.mxu0 0.0
    %4982 = vmatpush1.xpose.msra.mxu0 0.0
    %4983 = vmatprep.subr.mxu0 0.0
    %4984 = vmatpush1.xpose.msra.mxu0 0.0
    %4985 = vmatprep.subr.mxu0 0.0
    %4986 = vmatpush1.xpose.msra.mxu0 0.0
    %4987 = vmatprep.subr.mxu0 0.0
    %4988 = vmatpush1.xpose.msra.mxu0 0.0
    %4989 = vmatprep.subr.mxu0 0.0
    %4990 = vmatpush1.xpose.msra.mxu0 0.0
    %4991 = vmatprep.subr.mxu0 0.0
    %4992 = vmatpush1.xpose.msra.mxu0 0.0
    %4993 = vmatprep.subr.mxu0 0.0
    %4994 = vmatpush1.xpose.msra.mxu0 0.0
    %4995 = vmatprep.subr.mxu0 0.0
    %4996 = vmatpush1.xpose.msra.mxu0 0.0
    %4997 = vmatprep.subr.mxu0 0.0
    %4998 = vmatpush1.xpose.msra.mxu0 0.0
    %4999 = vmatprep.subr.mxu0 0.0
    %5000 = vmatpush1.xpose.msra.mxu0 0.0
    %5001 = vmatprep.subr.mxu0 0.0
    %5002 = vmatpush1.xpose.msra.mxu0 0.0
    %5003 = vmatprep.subr.mxu0 0.0
    %5004 = vmatpush1.xpose.msra.mxu0 0.0
    %5005 = vmatprep.subr.mxu0 0.0
    %5006 = vmatpush1.xpose.msra.mxu0 0.0
    %5007 = vmatprep.subr.mxu0 0.0
    %5008 = vmatpush1.xpose.msra.mxu0 0.0
    %5009 = vmatprep.subr.mxu0 0.0
    %5010 = vmatpush1.xpose.msra.mxu0 0.0
    %5011 = vmatprep.mubr.f32.mxu0 0.0
    %5012 = vmatmul.mubr.f32.gmra.mrb[0].mxu0 %v4940
    %v5013 = vpop.f32.mrb[0].mxu0
    %v5014 = vadd.f32 0.0, %v5013
    %v5015 = vpop.f32.mrb[0].mxu0
    %5016 = vmatprep.mubr.f32.mxu0 0.0
    %5017 = vmatmul.mubr.f32.gmra.mrb[0].mxu0 %v4943
    %v5018 = vpop.f32.mrb[0].mxu0
    %v5019 = vadd.f32 0.0, %v5018
    %v5020 = vpop.f32.mrb[0].mxu0
    %5021 = vdwg.mxu0
    %5030 = vset.pattern.permute.xlu0 0
    %5031 = vperm.xlu0 %5030, %v4067
    %v5032 = vpop.permute.xlu0 %5031
    %5033 = vset.pattern.permute.xlu0 0
    %5034 = vperm.xlu0 %5033, %v4069
    %v5035 = vpop.permute.xlu0 %5034
    %5036 = vset.pattern.permute.xlu0 0
    %5037 = vperm.xlu0 %5036, %v4071
    %v5038 = vpop.permute.xlu0 %5037
    %5039 = vset.pattern.permute.xlu0 0
    %5040 = vperm.xlu0 %5039, %v4073
    %v5041 = vpop.permute.xlu0 %5040
    %5042 = vset.pattern.permute.xlu0 0
    %5043 = vperm.xlu0 %5042, %v4075
    %v5044 = vpop.permute.xlu0 %5043
    %5045 = vset.pattern.permute.xlu0 0
    %5046 = vperm.xlu0 %5045, %v4077
    %v5047 = vpop.permute.xlu0 %5046
    %5048 = vset.pattern.permute.xlu0 0
    %5049 = vperm.xlu0 %5048, %v4079
    %v5050 = vpop.permute.xlu0 %5049
    %5051 = vset.pattern.permute.xlu0 0
    %5052 = vperm.xlu0 %5051, %v4081
    %v5053 = vpop.permute.xlu0 %5052
    %v5054 = vlaneseq
    %v5055 = vshrl.u32 %v5054, 7
    %v5056 = vsub.s32 %v2169, %v5055
    %v5057 = vrot.slane %v5032, %v5056
    %v5058 = vlaneseq
    %v5059 = vshrl.u32 %v5058, 7
    %v5060 = vsub.s32 %v2169, %v5059
    %v5061 = vrot.slane %v5035, %v5060
    %v5062 = vlaneseq
    %v5063 = vshrl.u32 %v5062, 7
    %v5064 = vsub.s32 %v2169, %v5063
    %v5065 = vrot.slane %v5038, %v5064
    %v5066 = vlaneseq
    %v5067 = vshrl.u32 %v5066, 7
    %v5068 = vsub.s32 %v2169, %v5067
    %v5069 = vrot.slane %v5041, %v5068
    %v5070 = vlaneseq
    %v5071 = vshrl.u32 %v5070, 7
    %v5072 = vsub.s32 %v2169, %v5071
    %v5073 = vrot.slane %v5044, %v5072
    %v5074 = vlaneseq
    %v5075 = vshrl.u32 %v5074, 7
    %v5076 = vsub.s32 %v2169, %v5075
    %v5077 = vrot.slane %v5047, %v5076
    %v5078 = vlaneseq
    %v5079 = vshrl.u32 %v5078, 7
    %v5080 = vsub.s32 %v2169, %v5079
    %v5081 = vrot.slane %v5050, %v5080
    %v5082 = vlaneseq
    %v5083 = vshrl.u32 %v5082, 7
    %v5084 = vsub.s32 %v2169, %v5083
    %v5085 = vrot.slane %v5053, %v5084
    %v5086 = vsel %vm2426, %v5061, %v5057
    %v5087 = vsel %vm2428, %v5065, %v5086
    %v5088 = vsel %vm2430, %v5069, %v5087
    %v5089 = vsel %vm2432, %v5073, %v5088
    %v5090 = vsel %vm2434, %v5077, %v5089
    %v5091 = vsel %vm2436, %v5081, %v5090
    %v5092 = vsel %vm2438, %v5085, %v5091
    %v5094 = vsel %vm2497, %v36, 0
    %v5097 = vsel %vm2497, %v37, 0
    %v5099 = vsel %vm2497, %v5092, 0
    %5101 = vmatprep.subr.mxu0 0.0
    %5102 = vmatpush1.xpose.msra.mxu0 %v5099
    %5103 = vmatprep.subr.mxu0 0.0
    %5104 = vmatpush1.xpose.msra.mxu0 0.0
    %5105 = vmatprep.subr.mxu0 0.0
    %5106 = vmatpush1.xpose.msra.mxu0 0.0
    %5107 = vmatprep.subr.mxu0 0.0
    %5108 = vmatpush1.xpose.msra.mxu0 0.0
    %5109 = vmatprep.subr.mxu0 0.0
    %5110 = vmatpush1.xpose.msra.mxu0 0.0
    %5111 = vmatprep.subr.mxu0 0.0
    %5112 = vmatpush1.xpose.msra.mxu0 0.0
    %5113 = vmatprep.subr.mxu0 0.0
    %5114 = vmatpush1.xpose.msra.mxu0 0.0
    %5115 = vmatprep.subr.mxu0 0.0
    %5116 = vmatpush1.xpose.msra.mxu0 0.0
    %5117 = vmatprep.subr.mxu0 0.0
    %5118 = vmatpush1.xpose.msra.mxu0 0.0
    %5119 = vmatprep.subr.mxu0 0.0
    %5120 = vmatpush1.xpose.msra.mxu0 0.0
    %5121 = vmatprep.subr.mxu0 0.0
    %5122 = vmatpush1.xpose.msra.mxu0 0.0
    %5123 = vmatprep.subr.mxu0 0.0
    %5124 = vmatpush1.xpose.msra.mxu0 0.0
    %5125 = vmatprep.subr.mxu0 0.0
    %5126 = vmatpush1.xpose.msra.mxu0 0.0
    %5127 = vmatprep.subr.mxu0 0.0
    %5128 = vmatpush1.xpose.msra.mxu0 0.0
    %5129 = vmatprep.subr.mxu0 0.0
    %5130 = vmatpush1.xpose.msra.mxu0 0.0
    %5131 = vmatprep.subr.mxu0 0.0
    %5132 = vmatpush1.xpose.msra.mxu0 0.0
    %5133 = vmatprep.subr.mxu0 0.0
    %5134 = vmatpush1.xpose.msra.mxu0 0.0
    %5135 = vmatprep.subr.mxu0 0.0
    %5136 = vmatpush1.xpose.msra.mxu0 0.0
    %5137 = vmatprep.subr.mxu0 0.0
    %5138 = vmatpush1.xpose.msra.mxu0 0.0
    %5139 = vmatprep.subr.mxu0 0.0
    %5140 = vmatpush1.xpose.msra.mxu0 0.0
    %5141 = vmatprep.subr.mxu0 0.0
    %5142 = vmatpush1.xpose.msra.mxu0 0.0
    %5143 = vmatprep.subr.mxu0 0.0
    %5144 = vmatpush1.xpose.msra.mxu0 0.0
    %5145 = vmatprep.subr.mxu0 0.0
    %5146 = vmatpush1.xpose.msra.mxu0 0.0
    %5147 = vmatprep.subr.mxu0 0.0
    %5148 = vmatpush1.xpose.msra.mxu0 0.0
    %5149 = vmatprep.subr.mxu0 0.0
    %5150 = vmatpush1.xpose.msra.mxu0 0.0
    %5151 = vmatprep.subr.mxu0 0.0
    %5152 = vmatpush1.xpose.msra.mxu0 0.0
    %5153 = vmatprep.subr.mxu0 0.0
    %5154 = vmatpush1.xpose.msra.mxu0 0.0
    %5155 = vmatprep.subr.mxu0 0.0
    %5156 = vmatpush1.xpose.msra.mxu0 0.0
    %5157 = vmatprep.subr.mxu0 0.0
    %5158 = vmatpush1.xpose.msra.mxu0 0.0
    %5159 = vmatprep.subr.mxu0 0.0
    %5160 = vmatpush1.xpose.msra.mxu0 0.0
    %5161 = vmatprep.subr.mxu0 0.0
    %5162 = vmatpush1.xpose.msra.mxu0 0.0
    %5163 = vmatprep.subr.mxu0 0.0
    %5164 = vmatpush1.xpose.msra.mxu0 0.0
    %5165 = vmatprep.mubr.f32.mxu0 0.0
    %5166 = vmatmul.mubr.f32.gmra.mrb[0].mxu0 %v5094
    %v5167 = vpop.f32.mrb[0].mxu0
    %v5168 = vadd.f32 0.0, %v5167
    %v5169 = vpop.f32.mrb[0].mxu0
    %5170 = vmatprep.mubr.f32.mxu0 0.0
    %5171 = vmatmul.mubr.f32.gmra.mrb[0].mxu0 %v5097
    %v5172 = vpop.f32.mrb[0].mxu0
    %v5173 = vadd.f32 0.0, %v5172
    %v5174 = vpop.f32.mrb[0].mxu0
    %5175 = vdwg.mxu0
    %5184 = vset.pattern.permute.xlu0 0
    %5185 = vperm.xlu0 %5184, %v4083
    %v5186 = vpop.permute.xlu0 %5185
    %5187 = vset.pattern.permute.xlu0 0
    %5188 = vperm.xlu0 %5187, %v4085
    %v5189 = vpop.permute.xlu0 %5188
    %5190 = vset.pattern.permute.xlu0 0
    %5191 = vperm.xlu0 %5190, %v4087
    %v5192 = vpop.permute.xlu0 %5191
    %5193 = vset.pattern.permute.xlu0 0
    %5194 = vperm.xlu0 %5193, %v4089
    %v5195 = vpop.permute.xlu0 %5194
    %5196 = vset.pattern.permute.xlu0 0
    %5197 = vperm.xlu0 %5196, %v4091
    %v5198 = vpop.permute.xlu0 %5197
    %5199 = vset.pattern.permute.xlu0 0
    %5200 = vperm.xlu0 %5199, %v4093
    %v5201 = vpop.permute.xlu0 %5200
    %5202 = vset.pattern.permute.xlu0 0
    %5203 = vperm.xlu0 %5202, %v4095
    %v5204 = vpop.permute.xlu0 %5203
    %5205 = vset.pattern.permute.xlu0 0
    %5206 = vperm.xlu0 %5205, %v4097
    %v5207 = vpop.permute.xlu0 %5206
    %v5208 = vlaneseq
    %v5209 = vshrl.u32 %v5208, 7
    %v5210 = vsub.s32 %v2169, %v5209
    %v5211 = vrot.slane %v5186, %v5210
    %v5212 = vlaneseq
    %v5213 = vshrl.u32 %v5212, 7
    %v5214 = vsub.s32 %v2169, %v5213
    %v5215 = vrot.slane %v5189, %v5214
    %v5216 = vlaneseq
    %v5217 = vshrl.u32 %v5216, 7
    %v5218 = vsub.s32 %v2169, %v5217
    %v5219 = vrot.slane %v5192, %v5218
    %v5220 = vlaneseq
    %v5221 = vshrl.u32 %v5220, 7
    %v5222 = vsub.s32 %v2169, %v5221
    %v5223 = vrot.slane %v5195, %v5222
    %v5224 = vlaneseq
    %v5225 = vshrl.u32 %v5224, 7
    %v5226 = vsub.s32 %v2169, %v5225
    %v5227 = vrot.slane %v5198, %v5226
    %v5228 = vlaneseq
    %v5229 = vshrl.u32 %v5228, 7
    %v5230 = vsub.s32 %v2169, %v5229
    %v5231 = vrot.slane %v5201, %v5230
    %v5232 = vlaneseq
    %v5233 = vshrl.u32 %v5232, 7
    %v5234 = vsub.s32 %v2169, %v5233
    %v5235 = vrot.slane %v5204, %v5234
    %v5236 = vlaneseq
    %v5237 = vshrl.u32 %v5236, 7
    %v5238 = vsub.s32 %v2169, %v5237
    %v5239 = vrot.slane %v5207, %v5238
    %v5240 = vsel %vm2426, %v5215, %v5211
    %v5241 = vsel %vm2428, %v5219, %v5240
    %v5242 = vsel %vm2430, %v5223, %v5241
    %v5243 = vsel %vm2432, %v5227, %v5242
    %v5244 = vsel %vm2434, %v5231, %v5243
    %v5245 = vsel %vm2436, %v5235, %v5244
    %v5246 = vsel %vm2438, %v5239, %v5245
    %v5248 = vsel %vm2497, %v38, 0
    %v5251 = vsel %vm2497, %v39, 0
    %v5253 = vsel %vm2497, %v5246, 0
    %5255 = vmatprep.subr.mxu0 0.0
    %5256 = vmatpush1.xpose.msra.mxu0 %v5253
    %5257 = vmatprep.subr.mxu0 0.0
    %5258 = vmatpush1.xpose.msra.mxu0 0.0
    %5259 = vmatprep.subr.mxu0 0.0
    %5260 = vmatpush1.xpose.msra.mxu0 0.0
    %5261 = vmatprep.subr.mxu0 0.0
    %5262 = vmatpush1.xpose.msra.mxu0 0.0
    %5263 = vmatprep.subr.mxu0 0.0
    %5264 = vmatpush1.xpose.msra.mxu0 0.0
    %5265 = vmatprep.subr.mxu0 0.0
    %5266 = vmatpush1.xpose.msra.mxu0 0.0
    %5267 = vmatprep.subr.mxu0 0.0
    %5268 = vmatpush1.xpose.msra.mxu0 0.0
    %5269 = vmatprep.subr.mxu0 0.0
    %5270 = vmatpush1.xpose.msra.mxu0 0.0
    %5271 = vmatprep.subr.mxu0 0.0
    %5272 = vmatpush1.xpose.msra.mxu0 0.0
    %5273 = vmatprep.subr.mxu0 0.0
    %5274 = vmatpush1.xpose.msra.mxu0 0.0
    %5275 = vmatprep.subr.mxu0 0.0
    %5276 = vmatpush1.xpose.msra.mxu0 0.0
    %5277 = vmatprep.subr.mxu0 0.0
    %5278 = vmatpush1.xpose.msra.mxu0 0.0
    %5279 = vmatprep.subr.mxu0 0.0
    %5280 = vmatpush1.xpose.msra.mxu0 0.0
    %5281 = vmatprep.subr.mxu0 0.0
    %5282 = vmatpush1.xpose.msra.mxu0 0.0
    %5283 = vmatprep.subr.mxu0 0.0
    %5284 = vmatpush1.xpose.msra.mxu0 0.0
    %5285 = vmatprep.subr.mxu0 0.0
    %5286 = vmatpush1.xpose.msra.mxu0 0.0
    %5287 = vmatprep.subr.mxu0 0.0
    %5288 = vmatpush1.xpose.msra.mxu0 0.0
    %5289 = vmatprep.subr.mxu0 0.0
    %5290 = vmatpush1.xpose.msra.mxu0 0.0
    %5291 = vmatprep.subr.mxu0 0.0
    %5292 = vmatpush1.xpose.msra.mxu0 0.0
    %5293 = vmatprep.subr.mxu0 0.0
    %5294 = vmatpush1.xpose.msra.mxu0 0.0
    %5295 = vmatprep.subr.mxu0 0.0
    %5296 = vmatpush1.xpose.msra.mxu0 0.0
    %5297 = vmatprep.subr.mxu0 0.0
    %5298 = vmatpush1.xpose.msra.mxu0 0.0
    %5299 = vmatprep.subr.mxu0 0.0
    %5300 = vmatpush1.xpose.msra.mxu0 0.0
    %5301 = vmatprep.subr.mxu0 0.0
    %5302 = vmatpush1.xpose.msra.mxu0 0.0
    %5303 = vmatprep.subr.mxu0 0.0
    %5304 = vmatpush1.xpose.msra.mxu0 0.0
    %5305 = vmatprep.subr.mxu0 0.0
    %5306 = vmatpush1.xpose.msra.mxu0 0.0
    %5307 = vmatprep.subr.mxu0 0.0
    %5308 = vmatpush1.xpose.msra.mxu0 0.0
    %5309 = vmatprep.subr.mxu0 0.0
    %5310 = vmatpush1.xpose.msra.mxu0 0.0
    %5311 = vmatprep.subr.mxu0 0.0
    %5312 = vmatpush1.xpose.msra.mxu0 0.0
    %5313 = vmatprep.subr.mxu0 0.0
    %5314 = vmatpush1.xpose.msra.mxu0 0.0
    %5315 = vmatprep.subr.mxu0 0.0
    %5316 = vmatpush1.xpose.msra.mxu0 0.0
    %5317 = vmatprep.subr.mxu0 0.0
    %5318 = vmatpush1.xpose.msra.mxu0 0.0
    %5319 = vmatprep.mubr.f32.mxu0 0.0
    %5320 = vmatmul.mubr.f32.gmra.mrb[0].mxu0 %v5248
    %v5321 = vpop.f32.mrb[0].mxu0
    %v5322 = vadd.f32 0.0, %v5321
    %v5323 = vpop.f32.mrb[0].mxu0
    %5324 = vmatprep.mubr.f32.mxu0 0.0
    %5325 = vmatmul.mubr.f32.gmra.mrb[0].mxu0 %v5251
    %v5326 = vpop.f32.mrb[0].mxu0
    %v5327 = vadd.f32 0.0, %v5326
    %v5328 = vpop.f32.mrb[0].mxu0
    %5329 = vdwg.mxu0
    %v5330 = vsub.f32 0.0, %v4244
    %v5331 = vsub.f32 0.0, %v4249
    %v5332 = vsub.f32 0.0, %v4398
    %v5333 = vsub.f32 0.0, %v4403
    %v5334 = vsub.f32 0.0, %v4552
    %v5335 = vsub.f32 0.0, %v4557
    %v5336 = vsub.f32 0.0, %v4706
    %v5337 = vsub.f32 0.0, %v4711
    %v5338 = vsub.f32 0.0, %v4860
    %v5339 = vsub.f32 0.0, %v4865
    %v5340 = vsub.f32 0.0, %v5014
    %v5341 = vsub.f32 0.0, %v5019
    %v5342 = vsub.f32 0.0, %v5168
    %v5343 = vsub.f32 0.0, %v5173
    %v5344 = vsub.f32 0.0, %v5322
    %v5345 = vsub.f32 0.0, %v5327
    %v5346 = vmul.f32 %v5330, 1.442695
    %v5347 = vpow.pop %v5346
    %v5348 = vmul.f32 %v5331, 1.442695
    %v5349 = vpow.pop %v5348
    %v5350 = vmul.f32 %v5332, 1.442695
    %v5351 = vpow.pop %v5350
    %v5352 = vmul.f32 %v5333, 1.442695
    %v5353 = vpow.pop %v5352
    %v5354 = vmul.f32 %v5334, 1.442695
    %v5355 = vpow.pop %v5354
    %v5356 = vmul.f32 %v5335, 1.442695
    %v5357 = vpow.pop %v5356
    %v5358 = vmul.f32 %v5336, 1.442695
    %v5359 = vpow.pop %v5358
    %v5360 = vmul.f32 %v5337, 1.442695
    %v5361 = vpow.pop %v5360
    %v5362 = vmul.f32 %v5338, 1.442695
    %v5363 = vpow.pop %v5362
    %v5364 = vmul.f32 %v5339, 1.442695
    %v5365 = vpow.pop %v5364
    %v5366 = vmul.f32 %v5340, 1.442695
    %v5367 = vpow.pop %v5366
    %v5368 = vmul.f32 %v5341, 1.442695
    %v5369 = vpow.pop %v5368
    %v5370 = vmul.f32 %v5342, 1.442695
    %v5371 = vpow.pop %v5370
    %v5372 = vmul.f32 %v5343, 1.442695
    %v5373 = vpow.pop %v5372
    %v5374 = vmul.f32 %v5344, 1.442695
    %v5375 = vpow.pop %v5374
    %v5376 = vmul.f32 %v5345, 1.442695
    %v5377 = vpow.pop %v5376
    %v5378 = vadd.f32 %v5347, 1.0
    %v5379 = vadd.f32 %v5349, 1.0
    %v5380 = vadd.f32 %v5351, 1.0
    %v5381 = vadd.f32 %v5353, 1.0
    %v5382 = vadd.f32 %v5355, 1.0
    %v5383 = vadd.f32 %v5357, 1.0
    %v5384 = vadd.f32 %v5359, 1.0
    %v5385 = vadd.f32 %v5361, 1.0
    %v5386 = vadd.f32 %v5363, 1.0
    %v5387 = vadd.f32 %v5365, 1.0
    %v5388 = vadd.f32 %v5367, 1.0
    %v5389 = vadd.f32 %v5369, 1.0
    %v5390 = vadd.f32 %v5371, 1.0
    %v5391 = vadd.f32 %v5373, 1.0
    %v5392 = vadd.f32 %v5375, 1.0
    %v5393 = vadd.f32 %v5377, 1.0
    %v5394 = vrcp.pop %v5378
    %v5395 = vmul.f32 1.0, %v5394
    %v5396 = vrcp.pop %v5379
    %v5397 = vmul.f32 1.0, %v5396
    %v5398 = vrcp.pop %v5380
    %v5399 = vmul.f32 1.0, %v5398
    %v5400 = vrcp.pop %v5381
    %v5401 = vmul.f32 1.0, %v5400
    %v5402 = vrcp.pop %v5382
    %v5403 = vmul.f32 1.0, %v5402
    %v5404 = vrcp.pop %v5383
    %v5405 = vmul.f32 1.0, %v5404
    %v5406 = vrcp.pop %v5384
    %v5407 = vmul.f32 1.0, %v5406
    %v5408 = vrcp.pop %v5385
    %v5409 = vmul.f32 1.0, %v5408
    %v5410 = vrcp.pop %v5386
    %v5411 = vmul.f32 1.0, %v5410
    %v5412 = vrcp.pop %v5387
    %v5413 = vmul.f32 1.0, %v5412
    %v5414 = vrcp.pop %v5388
    %v5415 = vmul.f32 1.0, %v5414
    %v5416 = vrcp.pop %v5389
    %v5417 = vmul.f32 1.0, %v5416
    %v5418 = vrcp.pop %v5390
    %v5419 = vmul.f32 1.0, %v5418
    %v5420 = vrcp.pop %v5391
    %v5421 = vmul.f32 1.0, %v5420
    %v5422 = vrcp.pop %v5392
    %v5423 = vmul.f32 1.0, %v5422
    %v5424 = vrcp.pop %v5393
    %v5425 = vmul.f32 1.0, %v5424
    %v5426 = vcombine.low %v5395, %v5403
    %v5427 = vcombine.high %v5395, %v5403
    %v5429 = vunpack.c.l.s4 1983009808
    %v5430 = vunpack.c.0.s8 %v5429
    %v5431 = vlaneseq
    %v5432 = vshrl.u32 %v5431, 7
    %v5433 = vsub.s32 %v5430, %v5432
    %v5434 = vrot.slane %v5426, %v5433
    %v5436 = vunpack.c.l.s4 1983009808
    %v5437 = vunpack.c.0.s8 %v5436
    %v5438 = vlaneseq
    %v5439 = vshrl.u32 %v5438, 7
    %v5440 = vsub.s32 %v5437, %v5439
    %v5441 = vrot.slane %v5427, %v5440
    %v5442 = vcombine.low %v5399, %v5407
    %v5443 = vcombine.high %v5399, %v5407
    %v5445 = vunpack.c.l.s4 1983009808
    %v5446 = vunpack.c.0.s8 %v5445
    %v5447 = vlaneseq
    %v5448 = vshrl.u32 %v5447, 7
    %v5449 = vsub.s32 %v5446, %v5448
    %v5450 = vrot.slane %v5442, %v5449
    %v5452 = vunpack.c.l.s4 1983009808
    %v5453 = vunpack.c.0.s8 %v5452
    %v5454 = vlaneseq
    %v5455 = vshrl.u32 %v5454, 7
    %v5456 = vsub.s32 %v5453, %v5455
    %v5457 = vrot.slane %v5443, %v5456
    %v5458 = vcombine.low %v5411, %v5419
    %v5459 = vcombine.high %v5411, %v5419
    %v5461 = vunpack.c.l.s4 1983009808
    %v5462 = vunpack.c.0.s8 %v5461
    %v5463 = vlaneseq
    %v5464 = vshrl.u32 %v5463, 7
    %v5465 = vsub.s32 %v5462, %v5464
    %v5466 = vrot.slane %v5458, %v5465
    %v5468 = vunpack.c.l.s4 1983009808
    %v5469 = vunpack.c.0.s8 %v5468
    %v5470 = vlaneseq
    %v5471 = vshrl.u32 %v5470, 7
    %v5472 = vsub.s32 %v5469, %v5471
    %v5473 = vrot.slane %v5459, %v5472
    %v5474 = vcombine.low %v5415, %v5423
    %v5475 = vcombine.high %v5415, %v5423
    %v5477 = vunpack.c.l.s4 1983009808
    %v5478 = vunpack.c.0.s8 %v5477
    %v5479 = vlaneseq
    %v5480 = vshrl.u32 %v5479, 7
    %v5481 = vsub.s32 %v5478, %v5480
    %v5482 = vrot.slane %v5474, %v5481
    %v5484 = vunpack.c.l.s4 1983009808
    %v5485 = vunpack.c.0.s8 %v5484
    %v5486 = vlaneseq
    %v5487 = vshrl.u32 %v5486, 7
    %v5488 = vsub.s32 %v5485, %v5487
    %v5489 = vrot.slane %v5475, %v5488
    %v5490 = vcombine.low %v5434, %v5450
    %v5491 = vcombine.high %v5434, %v5450
    %v5493 = vunpack.c.l.s4 1934713408
    %v5494 = vunpack.c.0.s8 %v5493
    %v5495 = vlaneseq
    %v5496 = vshrl.u32 %v5495, 7
    %v5497 = vsub.s32 %v5494, %v5496
    %v5498 = vrot.slane %v5490, %v5497
    %v5500 = vunpack.c.l.s4 1934713408
    %v5501 = vunpack.c.0.s8 %v5500
    %v5502 = vlaneseq
    %v5503 = vshrl.u32 %v5502, 7
    %v5504 = vsub.s32 %v5501, %v5503
    %v5505 = vrot.slane %v5491, %v5504
    %v5506 = vcombine.low %v5441, %v5457
    %v5507 = vcombine.high %v5441, %v5457
    %v5509 = vunpack.c.l.s4 1934713408
    %v5510 = vunpack.c.0.s8 %v5509
    %v5511 = vlaneseq
    %v5512 = vshrl.u32 %v5511, 7
    %v5513 = vsub.s32 %v5510, %v5512
    %v5514 = vrot.slane %v5506, %v5513
    %v5516 = vunpack.c.l.s4 1934713408
    %v5517 = vunpack.c.0.s8 %v5516
    %v5518 = vlaneseq
    %v5519 = vshrl.u32 %v5518, 7
    %v5520 = vsub.s32 %v5517, %v5519
    %v5521 = vrot.slane %v5507, %v5520
    %v5522 = vcombine.low %v5466, %v5482
    %v5523 = vcombine.high %v5466, %v5482
    %v5525 = vunpack.c.l.s4 1934713408
    %v5526 = vunpack.c.0.s8 %v5525
    %v5527 = vlaneseq
    %v5528 = vshrl.u32 %v5527, 7
    %v5529 = vsub.s32 %v5526, %v5528
    %v5530 = vrot.slane %v5522, %v5529
    %v5532 = vunpack.c.l.s4 1934713408
    %v5533 = vunpack.c.0.s8 %v5532
    %v5534 = vlaneseq
    %v5535 = vshrl.u32 %v5534, 7
    %v5536 = vsub.s32 %v5533, %v5535
    %v5537 = vrot.slane %v5523, %v5536
    %v5538 = vcombine.low %v5473, %v5489
    %v5539 = vcombine.high %v5473, %v5489
    %v5541 = vunpack.c.l.s4 1934713408
    %v5542 = vunpack.c.0.s8 %v5541
    %v5543 = vlaneseq
    %v5544 = vshrl.u32 %v5543, 7
    %v5545 = vsub.s32 %v5542, %v5544
    %v5546 = vrot.slane %v5538, %v5545
    %v5548 = vunpack.c.l.s4 1934713408
    %v5549 = vunpack.c.0.s8 %v5548
    %v5550 = vlaneseq
    %v5551 = vshrl.u32 %v5550, 7
    %v5552 = vsub.s32 %v5549, %v5551
    %v5553 = vrot.slane %v5539, %v5552
    %v5554 = vcombine.low %v5498, %v5530
    %v5555 = vcombine.high %v5498, %v5530
    %v5556 = vcombine.low %v5505, %v5537
    %v5557 = vcombine.high %v5505, %v5537
    %v5558 = vcombine.low %v5514, %v5546
    %v5559 = vcombine.high %v5514, %v5546
    %v5560 = vcombine.low %v5521, %v5553
    %v5561 = vcombine.high %v5521, %v5553
    %v5562 = vcombine.low %v5397, %v5405
    %v5563 = vcombine.high %v5397, %v5405
    %v5565 = vunpack.c.l.s4 1983009808
    %v5566 = vunpack.c.0.s8 %v5565
    %v5567 = vlaneseq
    %v5568 = vshrl.u32 %v5567, 7
    %v5569 = vsub.s32 %v5566, %v5568
    %v5570 = vrot.slane %v5562, %v5569
    %v5572 = vunpack.c.l.s4 1983009808
    %v5573 = vunpack.c.0.s8 %v5572
    %v5574 = vlaneseq
    %v5575 = vshrl.u32 %v5574, 7
    %v5576 = vsub.s32 %v5573, %v5575
    %v5577 = vrot.slane %v5563, %v5576
    %v5578 = vcombine.low %v5401, %v5409
    %v5579 = vcombine.high %v5401, %v5409
    %v5581 = vunpack.c.l.s4 1983009808
    %v5582 = vunpack.c.0.s8 %v5581
    %v5583 = vlaneseq
    %v5584 = vshrl.u32 %v5583, 7
    %v5585 = vsub.s32 %v5582, %v5584
    %v5586 = vrot.slane %v5578, %v5585
    %v5588 = vunpack.c.l.s4 1983009808
    %v5589 = vunpack.c.0.s8 %v5588
    %v5590 = vlaneseq
    %v5591 = vshrl.u32 %v5590, 7
    %v5592 = vsub.s32 %v5589, %v5591
    %v5593 = vrot.slane %v5579, %v5592
    %v5594 = vcombine.low %v5413, %v5421
    %v5595 = vcombine.high %v5413, %v5421
    %v5597 = vunpack.c.l.s4 1983009808
    %v5598 = vunpack.c.0.s8 %v5597
    %v5599 = vlaneseq
    %v5600 = vshrl.u32 %v5599, 7
    %v5601 = vsub.s32 %v5598, %v5600
    %v5602 = vrot.slane %v5594, %v5601
    %v5604 = vunpack.c.l.s4 1983009808
    %v5605 = vunpack.c.0.s8 %v5604
    %v5606 = vlaneseq
    %v5607 = vshrl.u32 %v5606, 7
    %v5608 = vsub.s32 %v5605, %v5607
    %v5609 = vrot.slane %v5595, %v5608
    %v5610 = vcombine.low %v5417, %v5425
    %v5611 = vcombine.high %v5417, %v5425
    %v5613 = vunpack.c.l.s4 1983009808
    %v5614 = vunpack.c.0.s8 %v5613
    %v5615 = vlaneseq
    %v5616 = vshrl.u32 %v5615, 7
    %v5617 = vsub.s32 %v5614, %v5616
    %v5618 = vrot.slane %v5610, %v5617
    %v5620 = vunpack.c.l.s4 1983009808
    %v5621 = vunpack.c.0.s8 %v5620
    %v5622 = vlaneseq
    %v5623 = vshrl.u32 %v5622, 7
    %v5624 = vsub.s32 %v5621, %v5623
    %v5625 = vrot.slane %v5611, %v5624
    %v5626 = vcombine.low %v5570, %v5586
    %v5627 = vcombine.high %v5570, %v5586
    %v5629 = vunpack.c.l.s4 1934713408
    %v5630 = vunpack.c.0.s8 %v5629
    %v5631 = vlaneseq
    %v5632 = vshrl.u32 %v5631, 7
    %v5633 = vsub.s32 %v5630, %v5632
    %v5634 = vrot.slane %v5626, %v5633
    %v5636 = vunpack.c.l.s4 1934713408
    %v5637 = vunpack.c.0.s8 %v5636
    %v5638 = vlaneseq
    %v5639 = vshrl.u32 %v5638, 7
    %v5640 = vsub.s32 %v5637, %v5639
    %v5641 = vrot.slane %v5627, %v5640
    %v5642 = vcombine.low %v5577, %v5593
    %v5643 = vcombine.high %v5577, %v5593
    %v5645 = vunpack.c.l.s4 1934713408
    %v5646 = vunpack.c.0.s8 %v5645
    %v5647 = vlaneseq
    %v5648 = vshrl.u32 %v5647, 7
    %v5649 = vsub.s32 %v5646, %v5648
    %v5650 = vrot.slane %v5642, %v5649
    %v5652 = vunpack.c.l.s4 1934713408
    %v5653 = vunpack.c.0.s8 %v5652
    %v5654 = vlaneseq
    %v5655 = vshrl.u32 %v5654, 7
    %v5656 = vsub.s32 %v5653, %v5655
    %v5657 = vrot.slane %v5643, %v5656
    %v5658 = vcombine.low %v5602, %v5618
    %v5659 = vcombine.high %v5602, %v5618
    %v5661 = vunpack.c.l.s4 1934713408
    %v5662 = vunpack.c.0.s8 %v5661
    %v5663 = vlaneseq
    %v5664 = vshrl.u32 %v5663, 7
    %v5665 = vsub.s32 %v5662, %v5664
    %v5666 = vrot.slane %v5658, %v5665
    %v5668 = vunpack.c.l.s4 1934713408
    %v5669 = vunpack.c.0.s8 %v5668
    %v5670 = vlaneseq
    %v5671 = vshrl.u32 %v5670, 7
    %v5672 = vsub.s32 %v5669, %v5671
    %v5673 = vrot.slane %v5659, %v5672
    %v5674 = vcombine.low %v5609, %v5625
    %v5675 = vcombine.high %v5609, %v5625
    %v5677 = vunpack.c.l.s4 1934713408
    %v5678 = vunpack.c.0.s8 %v5677
    %v5679 = vlaneseq
    %v5680 = vshrl.u32 %v5679, 7
    %v5681 = vsub.s32 %v5678, %v5680
    %v5682 = vrot.slane %v5674, %v5681
    %v5684 = vunpack.c.l.s4 1934713408
    %v5685 = vunpack.c.0.s8 %v5684
    %v5686 = vlaneseq
    %v5687 = vshrl.u32 %v5686, 7
    %v5688 = vsub.s32 %v5685, %v5687
    %v5689 = vrot.slane %v5675, %v5688
    %v5690 = vcombine.low %v5634, %v5666
    %v5691 = vcombine.high %v5634, %v5666
    %v5692 = vcombine.low %v5641, %v5673
    %v5693 = vcombine.high %v5641, %v5673
    %v5694 = vcombine.low %v5650, %v5682
    %v5695 = vcombine.high %v5650, %v5682
    %v5696 = vcombine.low %v5657, %v5689
    %v5697 = vcombine.high %v5657, %v5689
    %5699 = vrot.lane.b32.xlu0 %v5555, 8
    %v5700 = vpop.permute.xlu0 %5699
    %5703 = vrot.lane.b32.xlu0 %v5556, 16
    %v5704 = vpop.permute.xlu0 %5703
    %5707 = vrot.lane.b32.xlu0 %v5557, 24
    %v5708 = vpop.permute.xlu0 %5707
    %5711 = vrot.lane.b32.xlu0 %v5558, 32
    %v5712 = vpop.permute.xlu0 %5711
    %5715 = vrot.lane.b32.xlu0 %v5559, 40
    %v5716 = vpop.permute.xlu0 %5715
    %5719 = vrot.lane.b32.xlu0 %v5560, 48
    %v5720 = vpop.permute.xlu0 %5719
    %5723 = vrot.lane.b32.xlu0 %v5561, 56
    %v5724 = vpop.permute.xlu0 %5723
    %5727 = vrot.lane.b32.xlu0 %v5690, 64
    %v5728 = vpop.permute.xlu0 %5727
    %5731 = vrot.lane.b32.xlu0 %v5691, 72
    %v5732 = vpop.permute.xlu0 %5731
    %5735 = vrot.lane.b32.xlu0 %v5692, 80
    %v5736 = vpop.permute.xlu0 %5735
    %5739 = vrot.lane.b32.xlu0 %v5693, 88
    %v5740 = vpop.permute.xlu0 %5739
    %5743 = vrot.lane.b32.xlu0 %v5694, 96
    %v5744 = vpop.permute.xlu0 %5743
    %5747 = vrot.lane.b32.xlu0 %v5695, 104
    %v5748 = vpop.permute.xlu0 %5747
    %5751 = vrot.lane.b32.xlu0 %v5696, 112
    %v5752 = vpop.permute.xlu0 %5751
    %5755 = vrot.lane.b32.xlu0 %v5697, 120
    %v5756 = vpop.permute.xlu0 %5755
    %v5758 = vsel %vm2497, %v5554, %v5700
    %v5759 = vsel %vm298, %v5758, %v5704
    %vm5760 = vcmask 195584
    %v5761 = vsel %vm5760, %v5759, %v5708
    %v5762 = vsel %vm1589, %v5761, %v5712
    %vm5763 = vcmask 326656
    %v5764 = vsel %vm5763, %v5762, %v5716
    %vm5765 = vcmask 392192
    %v5766 = vsel %vm5765, %v5764, %v5720
    %vm5767 = vcmask 457728
    %v5768 = vsel %vm5767, %v5766, %v5724
    %vm5769 = vcmask 523264
    %v5770 = vsel %vm5769, %v5768, %v5728
    %vm5771 = vcmask 588800
    %v5772 = vsel %vm5771, %v5770, %v5732
    %vm5773 = vcmask 654336
    %v5774 = vsel %vm5773, %v5772, %v5736
    %vm5775 = vcmask 719872
    %v5776 = vsel %vm5775, %v5774, %v5740
    %vm5777 = vcmask 785408
    %v5778 = vsel %vm5777, %v5776, %v5744
    %vm5779 = vcmask 850944
    %v5780 = vsel %vm5779, %v5778, %v5748
    %vm5781 = vcmask 916480
    %v5782 = vsel %vm5781, %v5780, %v5752
    %vm5783 = vcmask 982016
    %v5784 = vsel %vm5783, %v5782, %v5756
    %5785 = vst [vmem:[#allocation2] sm:$0xff] %v5784
    // Predicated region
    $region26: #{tpu_custom_call.1} parent=1 // pred_check
      _
    $region27: #{tpu_custom_call.1} parent=1 // pred_check_branch
      %5787 = sbr.rel (0) target = $region29
    $region28: #{tpu_custom_call.1} parent=1 // pred_region
      %s5789 = ssub.s32 128, 128
      %5790 = vsyncadd [#allocation3], %s5789
      %s5792 = sshll.u32 [#allocation2], 4
      %s5793 = int_to_ptr.vmem [resolvable:$true] %s5792
      %5795 = dma.vmem_to_hbm [thread:$0]  %s5793, 128, %s6, [#allocation3]
    $region29: #{tpu_custom_call.1} parent=1 // pred_fallthru
      _
    // Predicated region
    $region30: #{tpu_custom_call.1} parent=1 // pred_check
      _
    $region31: #{tpu_custom_call.1} parent=1 // pred_check_branch
      %5797 = sbr.rel (0) target = $region33
    $region32: #{tpu_custom_call.1} parent=1 // pred_region
      %5798 = dma.done [#allocation3], 128
    $region33: #{tpu_custom_call.1} parent=1 // pred_fallthru
      _
    %5799 = vsyncpa [#allocation3], 1

// kernel: tpu_custom_call.1
$region0: #{tpu_custom_call.1}
  #allocation0 [shape = 'u32[]', space=smem, size = 0x4, offset = 0x4, fixed_abs, tag = 'smem constant byte address 0x4 - core index']
  #allocation1 [shape = 'u32[144,128]{1,0:T(1,128)}', space=vmem, size = 0x12000, scoped, tag = 'internal scratch']
  %s0 = inlined_call_operand.vmem [shape: f32[8,16,8], index: 0, kind: input, shape index: {}]
  %s1 = inlined_call_operand.vmem [shape: f32[16,32], index: 1, kind: input, shape index: {}]
  %s2 = inlined_call_operand.vmem [shape: f32[16,32], index: 2, kind: input, shape index: {}]
  %s3 = inlined_call_operand.vmem [shape: f32[1,32], index: 3, kind: input, shape index: {}]
  %s4 = inlined_call_operand.vmem [shape: f32[1,32], index: 4, kind: input, shape index: {}]
  %s5 = inlined_call_operand.vmem [shape: f32[8,8], index: 5, kind: input, shape index: {}]
  %s6 = inlined_call_operand.vmem [shape: f32[8,16,8], index: 6, kind: output, shape index: {}]
  %s7 = sld [smem:[#allocation0]]
  $region34: #{tpu_custom_call.1} parent=0
    _
  %s9 = ssub.s32 1, %s7
  %s10 = scalar_select 0, %s9, %s7
  // Predicated region
  $region2: #{tpu_custom_call.1} parent=0 // pred_check
    _
  $region3: #{tpu_custom_call.1} parent=0 // pred_check_branch
    %12 = sbr.rel (0) target = $region5
  $region4: #{tpu_custom_call.1} parent=0 // pred_region
    _
  $region5: #{tpu_custom_call.1} parent=0 // pred_fallthru
    _
  // Predicated region
  $region6: #{tpu_custom_call.1} parent=0 // pred_check
    _
  $region7: #{tpu_custom_call.1} parent=0 // pred_check_branch
    %14 = sbr.rel (0) target = $region9
  $region8: #{tpu_custom_call.1} parent=0 // pred_region
    _
  $region9: #{tpu_custom_call.1} parent=0 // pred_fallthru
    _
  // Predicated region
  $region10: #{tpu_custom_call.1} parent=0 // pred_check
    _
  $region11: #{tpu_custom_call.1} parent=0 // pred_check_branch
    %16 = sbr.rel (0) target = $region13
  $region12: #{tpu_custom_call.1} parent=0 // pred_region
    _
  $region13: #{tpu_custom_call.1} parent=0 // pred_fallthru
    _
  // Predicated region
  $region14: #{tpu_custom_call.1} parent=0 // pred_check
    _
  $region15: #{tpu_custom_call.1} parent=0 // pred_check_branch
    %18 = sbr.rel (0) target = $region17
  $region16: #{tpu_custom_call.1} parent=0 // pred_region
    _
  $region17: #{tpu_custom_call.1} parent=0 // pred_fallthru
    _
  // Predicated region
  $region18: #{tpu_custom_call.1} parent=0 // pred_check
    _
  $region19: #{tpu_custom_call.1} parent=0 // pred_check_branch
    %20 = sbr.rel (0) target = $region21
  $region20: #{tpu_custom_call.1} parent=0 // pred_region
    _
  $region21: #{tpu_custom_call.1} parent=0 // pred_fallthru
    _
  // Predicated region
  $region22: #{tpu_custom_call.1} parent=0 // pred_check
    _
  $region23: #{tpu_custom_call.1} parent=0 // pred_check_branch
    %22 = sbr.rel (0) target = $region25
  $region24: #{tpu_custom_call.1} parent=0 // pred_region
    _
  $region25: #{tpu_custom_call.1} parent=0 // pred_fallthru
    _
  %v23 = vld [vmem:[%s0] sm:$0xff]
  %v24 = vld [vmem:[%s0 + $0x8] sm:$0xff]
  %v25 = vld [vmem:[%s0 + $0x10] sm:$0xff]
  %v26 = vld [vmem:[%s0 + $0x18] sm:$0xff]
  %v27 = vld [vmem:[%s0 + $0x20] sm:$0xff]
  %v28 = vld [vmem:[%s0 + $0x28] sm:$0xff]
  %v29 = vld [vmem:[%s0 + $0x30] sm:$0xff]
  %v30 = vld [vmem:[%s0 + $0x38] sm:$0xff]
  %v31 = vld [vmem:[%s0 + $0x40] sm:$0xff]
  %v32 = vld [vmem:[%s0 + $0x48] sm:$0xff]
  %v33 = vld [vmem:[%s0 + $0x50] sm:$0xff]
  %v34 = vld [vmem:[%s0 + $0x58] sm:$0xff]
  %v35 = vld [vmem:[%s0 + $0x60] sm:$0xff]
  %v36 = vld [vmem:[%s0 + $0x68] sm:$0xff]
  %v37 = vld [vmem:[%s0 + $0x70] sm:$0xff]
  %v38 = vld [vmem:[%s0 + $0x78] sm:$0xff]
  %39 = vxpose.xlu0.b32.start [1/16] %v23, 128
  %40 = vxpose.xlu0.b32.cont [2/16] %v24, 128
  %41 = vxpose.xlu0.b32.cont [3/16] 0.0, 128
  %42 = vxpose.xlu0.b32.cont [4/16] 0.0, 128
  %43 = vxpose.xlu0.b32.cont [5/16] 0.0, 128
  %44 = vxpose.xlu0.b32.cont [6/16] 0.0, 128
  %45 = vxpose.xlu0.b32.cont [7/16] 0.0, 128
  %46 = vxpose.xlu0.b32.cont [8/16] 0.0, 128
  %47 = vxpose.xlu0.b32.cont [9/16] 0.0, 128
  %48 = vxpose.xlu0.b32.cont [10/16] 0.0, 128
  %49 = vxpose.xlu0.b32.cont [11/16] 0.0, 128
  %50 = vxpose.xlu0.b32.cont [12/16] 0.0, 128
  %51 = vxpose.xlu0.b32.cont [13/16] 0.0, 128
  %52 = vxpose.xlu0.b32.cont [14/16] 0.0, 128
  %53 = vxpose.xlu0.b32.cont [15/16] 0.0, 128
  %54 = vxpose.xlu0.b32.end [16/16] 0.0, 128
  %v55 = vpop.trf.xlu0
  %v56 = vpop.trf.xlu0
  %v57 = vpop.trf.xlu0
  %v58 = vpop.trf.xlu0
  %v59 = vpop.trf.xlu0
  %v60 = vpop.trf.xlu0
  %v61 = vpop.trf.xlu0
  %v62 = vpop.trf.xlu0
  %v63 = vpop.trf.xlu0
  %v64 = vpop.trf.xlu0
  %v65 = vpop.trf.xlu0
  %v66 = vpop.trf.xlu0
  %v67 = vpop.trf.xlu0
  %v68 = vpop.trf.xlu0
  %v69 = vpop.trf.xlu0
  %v70 = vpop.trf.xlu0
  %71 = vxpose.xlu0.b32.start [1/16] %v25, 128
  %72 = vxpose.xlu0.b32.cont [2/16] %v26, 128
  %73 = vxpose.xlu0.b32.cont [3/16] 0.0, 128
  %74 = vxpose.xlu0.b32.cont [4/16] 0.0, 128
  %75 = vxpose.xlu0.b32.cont [5/16] 0.0, 128
  %76 = vxpose.xlu0.b32.cont [6/16] 0.0, 128
  %77 = vxpose.xlu0.b32.cont [7/16] 0.0, 128
  %78 = vxpose.xlu0.b32.cont [8/16] 0.0, 128
  %79 = vxpose.xlu0.b32.cont [9/16] 0.0, 128
  %80 = vxpose.xlu0.b32.cont [10/16] 0.0, 128
  %81 = vxpose.xlu0.b32.cont [11/16] 0.0, 128
  %82 = vxpose.xlu0.b32.cont [12/16] 0.0, 128
  %83 = vxpose.xlu0.b32.cont [13/16] 0.0, 128
  %84 = vxpose.xlu0.b32.cont [14/16] 0.0, 128
  %85 = vxpose.xlu0.b32.cont [15/16] 0.0, 128
  %86 = vxpose.xlu0.b32.end [16/16] 0.0, 128
  %v87 = vpop.trf.xlu0
  %v88 = vpop.trf.xlu0
  %v89 = vpop.trf.xlu0
  %v90 = vpop.trf.xlu0
  %v91 = vpop.trf.xlu0
  %v92 = vpop.trf.xlu0
  %v93 = vpop.trf.xlu0
  %v94 = vpop.trf.xlu0
  %v95 = vpop.trf.xlu0
  %v96 = vpop.trf.xlu0
  %v97 = vpop.trf.xlu0
  %v98 = vpop.trf.xlu0
  %v99 = vpop.trf.xlu0
  %v100 = vpop.trf.xlu0
  %v101 = vpop.trf.xlu0
  %v102 = vpop.trf.xlu0
  %103 = vxpose.xlu0.b32.start [1/16] %v27, 128
  %104 = vxpose.xlu0.b32.cont [2/16] %v28, 128
  %105 = vxpose.xlu0.b32.cont [3/16] 0.0, 128
  %106 = vxpose.xlu0.b32.cont [4/16] 0.0, 128
  %107 = vxpose.xlu0.b32.cont [5/16] 0.0, 128
  %108 = vxpose.xlu0.b32.cont [6/16] 0.0, 128
  %109 = vxpose.xlu0.b32.cont [7/16] 0.0, 128
  %110 = vxpose.xlu0.b32.cont [8/16] 0.0, 128
  %111 = vxpose.xlu0.b32.cont [9/16] 0.0, 128
  %112 = vxpose.xlu0.b32.cont [10/16] 0.0, 128
  %113 = vxpose.xlu0.b32.cont [11/16] 0.0, 128
  %114 = vxpose.xlu0.b32.cont [12/16] 0.0, 128
  %115 = vxpose.xlu0.b32.cont [13/16] 0.0, 128
  %116 = vxpose.xlu0.b32.cont [14/16] 0.0, 128
  %117 = vxpose.xlu0.b32.cont [15/16] 0.0, 128
  %118 = vxpose.xlu0.b32.end [16/16] 0.0, 128
  %v119 = vpop.trf.xlu0
  %v120 = vpop.trf.xlu0
  %v121 = vpop.trf.xlu0
  %v122 = vpop.trf.xlu0
  %v123 = vpop.trf.xlu0
  %v124 = vpop.trf.xlu0
  %v125 = vpop.trf.xlu0
  %v126 = vpop.trf.xlu0
  %v127 = vpop.trf.xlu0
  %v128 = vpop.trf.xlu0
  %v129 = vpop.trf.xlu0
  %v130 = vpop.trf.xlu0
  %v131 = vpop.trf.xlu0
  %v132 = vpop.trf.xlu0
  %v133 = vpop.trf.xlu0
  %v134 = vpop.trf.xlu0
  %135 = vxpose.xlu0.b32.start [1/16] %v29, 128
  %136 = vxpose.xlu0.b32.cont [2/16] %v30, 128
  %137 = vxpose.xlu0.b32.cont [3/16] 0.0, 128
  %138 = vxpose.xlu0.b32.cont [4/16] 0.0, 128
  %139 = vxpose.xlu0.b32.cont [5/16] 0.0, 128
  %140 = vxpose.xlu0.b32.cont [6/16] 0.0, 128
  %141 = vxpose.xlu0.b32.cont [7/16] 0.0, 128
  %142 = vxpose.xlu0.b32.cont [8/16] 0.0, 128
  %143 = vxpose.xlu0.b32.cont [9/16] 0.0, 128
  %144 = vxpose.xlu0.b32.cont [10/16] 0.0, 128
  %145 = vxpose.xlu0.b32.cont [11/16] 0.0, 128
  %146 = vxpose.xlu0.b32.cont [12/16] 0.0, 128
  %147 = vxpose.xlu0.b32.cont [13/16] 0.0, 128
  %148 = vxpose.xlu0.b32.cont [14/16] 0.0, 128
  %149 = vxpose.xlu0.b32.cont [15/16] 0.0, 128
  %150 = vxpose.xlu0.b32.end [16/16] 0.0, 128
  %v151 = vpop.trf.xlu0
  %v152 = vpop.trf.xlu0
  %v153 = vpop.trf.xlu0
  %v154 = vpop.trf.xlu0
  %v155 = vpop.trf.xlu0
  %v156 = vpop.trf.xlu0
  %v157 = vpop.trf.xlu0
  %v158 = vpop.trf.xlu0
  %v159 = vpop.trf.xlu0
  %v160 = vpop.trf.xlu0
  %v161 = vpop.trf.xlu0
  %v162 = vpop.trf.xlu0
  %v163 = vpop.trf.xlu0
  %v164 = vpop.trf.xlu0
  %v165 = vpop.trf.xlu0
  %v166 = vpop.trf.xlu0
  %167 = vxpose.xlu0.b32.start [1/16] %v31, 128
  %168 = vxpose.xlu0.b32.cont [2/16] %v32, 128
  %169 = vxpose.xlu0.b32.cont [3/16] 0.0, 128
  %170 = vxpose.xlu0.b32.cont [4/16] 0.0, 128
  %171 = vxpose.xlu0.b32.cont [5/16] 0.0, 128
  %172 = vxpose.xlu0.b32.cont [6/16] 0.0, 128
  %173 = vxpose.xlu0.b32.cont [7/16] 0.0, 128
  %174 = vxpose.xlu0.b32.cont [8/16] 0.0, 128
  %175 = vxpose.xlu0.b32.cont [9/16] 0.0, 128
  %176 = vxpose.xlu0.b32.cont [10/16] 0.0, 128
  %177 = vxpose.xlu0.b32.cont [11/16] 0.0, 128
  %178 = vxpose.xlu0.b32.cont [12/16] 0.0, 128
  %179 = vxpose.xlu0.b32.cont [13/16] 0.0, 128
  %180 = vxpose.xlu0.b32.cont [14/16] 0.0, 128
  %181 = vxpose.xlu0.b32.cont [15/16] 0.0, 128
  %182 = vxpose.xlu0.b32.end [16/16] 0.0, 128
  %v183 = vpop.trf.xlu0
  %v184 = vpop.trf.xlu0
  %v185 = vpop.trf.xlu0
  %v186 = vpop.trf.xlu0
  %v187 = vpop.trf.xlu0
  %v188 = vpop.trf.xlu0
  %v189 = vpop.trf.xlu0
  %v190 = vpop.trf.xlu0
  %v191 = vpop.trf.xlu0
  %v192 = vpop.trf.xlu0
  %v193 = vpop.trf.xlu0
  %v194 = vpop.trf.xlu0
  %v195 = vpop.trf.xlu0
  %v196 = vpop.trf.xlu0
  %v197 = vpop.trf.xlu0
  %v198 = vpop.trf.xlu0
  %199 = vxpose.xlu0.b32.start [1/16] %v33, 128
  %200 = vxpose.xlu0.b32.cont [2/16] %v34, 128
  %201 = vxpose.xlu0.b32.cont [3/16] 0.0, 128
  %202 = vxpose.xlu0.b32.cont [4/16] 0.0, 128
  %203 = vxpose.xlu0.b32.cont [5/16] 0.0, 128
  %204 = vxpose.xlu0.b32.cont [6/16] 0.0, 128
  %205 = vxpose.xlu0.b32.cont [7/16] 0.0, 128
  %206 = vxpose.xlu0.b32.cont [8/16] 0.0, 128
  %207 = vxpose.xlu0.b32.cont [9/16] 0.0, 128
  %208 = vxpose.xlu0.b32.cont [10/16] 0.0, 128
  %209 = vxpose.xlu0.b32.cont [11/16] 0.0, 128
  %210 = vxpose.xlu0.b32.cont [12/16] 0.0, 128
  %211 = vxpose.xlu0.b32.cont [13/16] 0.0, 128
  %212 = vxpose.xlu0.b32.cont [14/16] 0.0, 128
  %213 = vxpose.xlu0.b32.cont [15/16] 0.0, 128
  %214 = vxpose.xlu0.b32.end [16/16] 0.0, 128
  %v215 = vpop.trf.xlu0
  %v216 = vpop.trf.xlu0
  %v217 = vpop.trf.xlu0
  %v218 = vpop.trf.xlu0
  %v219 = vpop.trf.xlu0
  %v220 = vpop.trf.xlu0
  %v221 = vpop.trf.xlu0
  %v222 = vpop.trf.xlu0
  %v223 = vpop.trf.xlu0
  %v224 = vpop.trf.xlu0
  %v225 = vpop.trf.xlu0
  %v226 = vpop.trf.xlu0
  %v227 = vpop.trf.xlu0
  %v228 = vpop.trf.xlu0
  %v229 = vpop.trf.xlu0
  %v230 = vpop.trf.xlu0
  %231 = vxpose.xlu0.b32.start [1/16] %v35, 128
  %232 = vxpose.xlu0.b32.cont [2/16] %v36, 128
  %233 = vxpose.xlu0.b32.cont [3/16] 0.0, 128
  %234 = vxpose.xlu0.b32.cont [4/16] 0.0, 128
  %235 = vxpose.xlu0.b32.cont [5/16] 0.0, 128
  %236 = vxpose.xlu0.b32.cont [6/16] 0.0, 128
  %237 = vxpose.xlu0.b32.cont [7/16] 0.0, 128
  %238 = vxpose.xlu0.b32.cont [8/16] 0.0, 128
  %239 = vxpose.xlu0.b32.cont [9/16] 0.0, 128
  %240 = vxpose.xlu0.b32.cont [10/16] 0.0, 128
  %241 = vxpose.xlu0.b32.cont [11/16] 0.0, 128
  %242 = vxpose.xlu0.b32.cont [12/16] 0.0, 128
  %243 = vxpose.xlu0.b32.cont [13/16] 0.0, 128
  %244 = vxpose.xlu0.b32.cont [14/16] 0.0, 128
  %245 = vxpose.xlu0.b32.cont [15/16] 0.0, 128
  %246 = vxpose.xlu0.b32.end [16/16] 0.0, 128
  %v247 = vpop.trf.xlu0
  %v248 = vpop.trf.xlu0
  %v249 = vpop.trf.xlu0
  %v250 = vpop.trf.xlu0
  %v251 = vpop.trf.xlu0
  %v252 = vpop.trf.xlu0
  %v253 = vpop.trf.xlu0
  %v254 = vpop.trf.xlu0
  %v255 = vpop.trf.xlu0
  %v256 = vpop.trf.xlu0
  %v257 = vpop.trf.xlu0
  %v258 = vpop.trf.xlu0
  %v259 = vpop.trf.xlu0
  %v260 = vpop.trf.xlu0
  %v261 = vpop.trf.xlu0
  %v262 = vpop.trf.xlu0
  %263 = vxpose.xlu0.b32.start [1/16] %v37, 128
  %264 = vxpose.xlu0.b32.cont [2/16] %v38, 128
  %265 = vxpose.xlu0.b32.cont [3/16] 0.0, 128
  %266 = vxpose.xlu0.b32.cont [4/16] 0.0, 128
  %267 = vxpose.xlu0.b32.cont [5/16] 0.0, 128
  %268 = vxpose.xlu0.b32.cont [6/16] 0.0, 128
  %269 = vxpose.xlu0.b32.cont [7/16] 0.0, 128
  %270 = vxpose.xlu0.b32.cont [8/16] 0.0, 128
  %271 = vxpose.xlu0.b32.cont [9/16] 0.0, 128
  %272 = vxpose.xlu0.b32.cont [10/16] 0.0, 128
  %273 = vxpose.xlu0.b32.cont [11/16] 0.0, 128
  %274 = vxpose.xlu0.b32.cont [12/16] 0.0, 128
  %275 = vxpose.xlu0.b32.cont [13/16] 0.0, 128
  %276 = vxpose.xlu0.b32.cont [14/16] 0.0, 128
  %277 = vxpose.xlu0.b32.cont [15/16] 0.0, 128
  %278 = vxpose.xlu0.b32.end [16/16] 0.0, 128
  %v279 = vpop.trf.xlu0
  %v280 = vpop.trf.xlu0
  %v281 = vpop.trf.xlu0
  %v282 = vpop.trf.xlu0
  %v283 = vpop.trf.xlu0
  %v284 = vpop.trf.xlu0
  %v285 = vpop.trf.xlu0
  %v286 = vpop.trf.xlu0
  %v287 = vpop.trf.xlu0
  %v288 = vpop.trf.xlu0
  %v289 = vpop.trf.xlu0
  %v290 = vpop.trf.xlu0
  %v291 = vpop.trf.xlu0
  %v292 = vpop.trf.xlu0
  %v293 = vpop.trf.xlu0
  %v294 = vpop.trf.xlu0
  %v295 = vld [vmem:[%s1] sm:$0xff]
  %v296 = vld [vmem:[%s1 + $0x8] sm:$0xff]
  %vm297 = vcmask 130048
  %v299 = vsel %vm297, %v55, 0
  %v302 = vsel %vm297, %v87, 0
  %v305 = vsel %vm297, %v119, 0
  %v308 = vsel %vm297, %v151, 0
  %v311 = vsel %vm297, %v183, 0
  %v314 = vsel %vm297, %v215, 0
  %v317 = vsel %vm297, %v247, 0
  %v320 = vsel %vm297, %v279, 0
  %322 = vmatprep.subr.mxu0 0.0
  %323 = vmatpush1.msra.mxu0 %v295
  %324 = vmatprep.subr.mxu0 0.0
  %325 = vmatpush1.msra.mxu0 %v296
  %326 = vmatprep.subr.mxu0 0.0
  %327 = vmatpush1.msra.mxu0 0.0
  %328 = vmatprep.subr.mxu0 0.0
  %329 = vmatpush1.msra.mxu0 0.0
  %330 = vmatprep.subr.mxu0 0.0
  %331 = vmatpush1.msra.mxu0 0.0
  %332 = vmatprep.subr.mxu0 0.0
  %333 = vmatpush1.msra.mxu0 0.0
  %334 = vmatprep.subr.mxu0 0.0
  %335 = vmatpush1.msra.mxu0 0.0
  %336 = vmatprep.subr.mxu0 0.0
  %337 = vmatpush1.msra.mxu0 0.0
  %338 = vmatprep.subr.mxu0 0.0
  %339 = vmatpush1.msra.mxu0 0.0
  %340 = vmatprep.subr.mxu0 0.0
  %341 = vmatpush1.msra.mxu0 0.0
  %342 = vmatprep.subr.mxu0 0.0
  %343 = vmatpush1.msra.mxu0 0.0
  %344 = vmatprep.subr.mxu0 0.0
  %345 = vmatpush1.msra.mxu0 0.0
  %346 = vmatprep.subr.mxu0 0.0
  %347 = vmatpush1.msra.mxu0 0.0
  %348 = vmatprep.subr.mxu0 0.0
  %349 = vmatpush1.msra.mxu0 0.0
  %350 = vmatprep.subr.mxu0 0.0
  %351 = vmatpush1.msra.mxu0 0.0
  %352 = vmatprep.subr.mxu0 0.0
  %353 = vmatpush1.msra.mxu0 0.0
  %354 = vmatprep.subr.mxu0 0.0
  %355 = vmatpush1.msra.mxu0 0.0
  %356 = vmatprep.subr.mxu0 0.0
  %357 = vmatpush1.msra.mxu0 0.0
  %358 = vmatprep.subr.mxu0 0.0
  %359 = vmatpush1.msra.mxu0 0.0
  %360 = vmatprep.subr.mxu0 0.0
  %361 = vmatpush1.msra.mxu0 0.0
  %362 = vmatprep.subr.mxu0 0.0
  %363 = vmatpush1.msra.mxu0 0.0
  %364 = vmatprep.subr.mxu0 0.0
  %365 = vmatpush1.msra.mxu0 0.0
  %366 = vmatprep.subr.mxu0 0.0
  %367 = vmatpush1.msra.mxu0 0.0
  %368 = vmatprep.subr.mxu0 0.0
  %369 = vmatpush1.msra.mxu0 0.0
  %370 = vmatprep.subr.mxu0 0.0
  %371 = vmatpush1.msra.mxu0 0.0
  %372 = vmatprep.subr.mxu0 0.0
  %373 = vmatpush1.msra.mxu0 0.0
  %374 = vmatprep.subr.mxu0 0.0
  %375 = vmatpush1.msra.mxu0 0.0
  %376 = vmatprep.subr.mxu0 0.0
  %377 = vmatpush1.msra.mxu0 0.0
  %378 = vmatprep.subr.mxu0 0.0
  %379 = vmatpush1.msra.mxu0 0.0
  %380 = vmatprep.subr.mxu0 0.0
  %381 = vmatpush1.msra.mxu0 0.0
  %382 = vmatprep.subr.mxu0 0.0
  %383 = vmatpush1.msra.mxu0 0.0
  %384 = vmatprep.subr.mxu0 0.0
  %385 = vmatpush1.msra.mxu0 0.0
  %386 = vmatprep.mubr.f32.mxu0 0.0
  %387 = vmatmul.mubr.f32.gmra.mrb[0].mxu0 %v299
  %v388 = vpop.f32.mrb[0].mxu0
  %v389 = vadd.f32 0.0, %v388
  %v390 = vpop.f32.mrb[0].mxu0
  %391 = vmatprep.mubr.f32.mxu0 0.0
  %392 = vmatmul.mubr.f32.gmra.mrb[0].mxu0 %v302
  %v393 = vpop.f32.mrb[0].mxu0
  %v394 = vadd.f32 0.0, %v393
  %v395 = vpop.f32.mrb[0].mxu0
  %396 = vmatprep.mubr.f32.mxu0 0.0
  %397 = vmatmul.mubr.f32.gmra.mrb[0].mxu0 %v305
  %v398 = vpop.f32.mrb[0].mxu0
  %v399 = vadd.f32 0.0, %v398
  %v400 = vpop.f32.mrb[0].mxu0
  %401 = vmatprep.mubr.f32.mxu0 0.0
  %402 = vmatmul.mubr.f32.gmra.mrb[0].mxu0 %v308
  %v403 = vpop.f32.mrb[0].mxu0
  %v404 = vadd.f32 0.0, %v403
  %v405 = vpop.f32.mrb[0].mxu0
  %406 = vmatprep.mubr.f32.mxu0 0.0
  %407 = vmatmul.mubr.f32.gmra.mrb[0].mxu0 %v311
  %v408 = vpop.f32.mrb[0].mxu0
  %v409 = vadd.f32 0.0, %v408
  %v410 = vpop.f32.mrb[0].mxu0
  %411 = vmatprep.mubr.f32.mxu0 0.0
  %412 = vmatmul.mubr.f32.gmra.mrb[0].mxu0 %v314
  %v413 = vpop.f32.mrb[0].mxu0
  %v414 = vadd.f32 0.0, %v413
  %v415 = vpop.f32.mrb[0].mxu0
  %416 = vmatprep.mubr.f32.mxu0 0.0
  %417 = vmatmul.mubr.f32.gmra.mrb[0].mxu0 %v317
  %v418 = vpop.f32.mrb[0].mxu0
  %v419 = vadd.f32 0.0, %v418
  %v420 = vpop.f32.mrb[0].mxu0
  %421 = vmatprep.mubr.f32.mxu0 0.0
  %422 = vmatmul.mubr.f32.gmra.mrb[0].mxu0 %v320
  %v423 = vpop.f32.mrb[0].mxu0
  %v424 = vadd.f32 0.0, %v423
  %v425 = vpop.f32.mrb[0].mxu0
  %426 = vdwg.mxu0
  %v427 = vld [vmem:[%s2] sm:$0xff]
  %v428 = vld [vmem:[%s2 + $0x8] sm:$0xff]
  %v429 = vld [vmem:[%s3] sm:$0x1]
  %v431 = vlaneseq
  %v432 = vshrl.u32 %v431, 7
  %v433 = vsub.s32 0, %v432
  %v434 = vrot.slane %v429, %v433
  %436 = vmatprep.subr.mxu0 0.0
  %437 = vmatpush1.msra.mxu0 %v427
  %438 = vmatprep.subr.mxu0 0.0
  %439 = vmatpush1.msra.mxu0 %v428
  %440 = vmatprep.subr.mxu0 0.0
  %441 = vmatpush1.msra.mxu0 0.0
  %442 = vmatprep.subr.mxu0 0.0
  %443 = vmatpush1.msra.mxu0 0.0
  %444 = vmatprep.subr.mxu0 0.0
  %445 = vmatpush1.msra.mxu0 0.0
  %446 = vmatprep.subr.mxu0 0.0
  %447 = vmatpush1.msra.mxu0 0.0
  %448 = vmatprep.subr.mxu0 0.0
  %449 = vmatpush1.msra.mxu0 0.0
  %450 = vmatprep.subr.mxu0 0.0
  %451 = vmatpush1.msra.mxu0 0.0
  %452 = vmatprep.subr.mxu0 0.0
  %453 = vmatpush1.msra.mxu0 0.0
  %454 = vmatprep.subr.mxu0 0.0
  %455 = vmatpush1.msra.mxu0 0.0
  %456 = vmatprep.subr.mxu0 0.0
  %457 = vmatpush1.msra.mxu0 0.0
  %458 = vmatprep.subr.mxu0 0.0
  %459 = vmatpush1.msra.mxu0 0.0
  %460 = vmatprep.subr.mxu0 0.0
  %461 = vmatpush1.msra.mxu0 0.0
  %462 = vmatprep.subr.mxu0 0.0
  %463 = vmatpush1.msra.mxu0 0.0
  %464 = vmatprep.subr.mxu0 0.0
  %465 = vmatpush1.msra.mxu0 0.0
  %466 = vmatprep.subr.mxu0 0.0
  %467 = vmatpush1.msra.mxu0 0.0
  %468 = vmatprep.subr.mxu0 0.0
  %469 = vmatpush1.msra.mxu0 0.0
  %470 = vmatprep.subr.mxu0 0.0
  %471 = vmatpush1.msra.mxu0 0.0
  %472 = vmatprep.subr.mxu0 0.0
  %473 = vmatpush1.msra.mxu0 0.0
  %474 = vmatprep.subr.mxu0 0.0
  %475 = vmatpush1.msra.mxu0 0.0
  %476 = vmatprep.subr.mxu0 0.0
  %477 = vmatpush1.msra.mxu0 0.0
  %478 = vmatprep.subr.mxu0 0.0
  %479 = vmatpush1.msra.mxu0 0.0
  %480 = vmatprep.subr.mxu0 0.0
  %481 = vmatpush1.msra.mxu0 0.0
  %482 = vmatprep.subr.mxu0 0.0
  %483 = vmatpush1.msra.mxu0 0.0
  %484 = vmatprep.subr.mxu0 0.0
  %485 = vmatpush1.msra.mxu0 0.0
  %486 = vmatprep.subr.mxu0 0.0
  %487 = vmatpush1.msra.mxu0 0.0
  %488 = vmatprep.subr.mxu0 0.0
  %489 = vmatpush1.msra.mxu0 0.0
  %490 = vmatprep.subr.mxu0 0.0
  %491 = vmatpush1.msra.mxu0 0.0
  %492 = vmatprep.subr.mxu0 0.0
  %493 = vmatpush1.msra.mxu0 0.0
  %494 = vmatprep.subr.mxu0 0.0
  %495 = vmatpush1.msra.mxu0 0.0
  %496 = vmatprep.subr.mxu0 0.0
  %497 = vmatpush1.msra.mxu0 0.0
  %498 = vmatprep.subr.mxu0 0.0
  %499 = vmatpush1.msra.mxu0 0.0
  %500 = vmatprep.mubr.f32.mxu0 0.0
  %501 = vmatmul.mubr.f32.gmra.mrb[0].mxu0 %v299
  %v502 = vpop.f32.mrb[0].mxu0
  %v503 = vadd.f32 %v434, %v502
  %v504 = vpop.f32.mrb[0].mxu0
  %505 = vmatprep.mubr.f32.mxu0 0.0
  %506 = vmatmul.mubr.f32.gmra.mrb[0].mxu0 %v302
  %v507 = vpop.f32.mrb[0].mxu0
  %v508 = vadd.f32 %v434, %v507
  %v509 = vpop.f32.mrb[0].mxu0
  %510 = vmatprep.mubr.f32.mxu0 0.0
  %511 = vmatmul.mubr.f32.gmra.mrb[0].mxu0 %v305
  %v512 = vpop.f32.mrb[0].mxu0
  %v513 = vadd.f32 %v434, %v512
  %v514 = vpop.f32.mrb[0].mxu0
  %515 = vmatprep.mubr.f32.mxu0 0.0
  %516 = vmatmul.mubr.f32.gmra.mrb[0].mxu0 %v308
  %v517 = vpop.f32.mrb[0].mxu0
  %v518 = vadd.f32 %v434, %v517
  %v519 = vpop.f32.mrb[0].mxu0
  %520 = vmatprep.mubr.f32.mxu0 0.0
  %521 = vmatmul.mubr.f32.gmra.mrb[0].mxu0 %v311
  %v522 = vpop.f32.mrb[0].mxu0
  %v523 = vadd.f32 %v434, %v522
  %v524 = vpop.f32.mrb[0].mxu0
  %525 = vmatprep.mubr.f32.mxu0 0.0
  %526 = vmatmul.mubr.f32.gmra.mrb[0].mxu0 %v314
  %v527 = vpop.f32.mrb[0].mxu0
  %v528 = vadd.f32 %v434, %v527
  %v529 = vpop.f32.mrb[0].mxu0
  %530 = vmatprep.mubr.f32.mxu0 0.0
  %531 = vmatmul.mubr.f32.gmra.mrb[0].mxu0 %v317
  %v532 = vpop.f32.mrb[0].mxu0
  %v533 = vadd.f32 %v434, %v532
  %v534 = vpop.f32.mrb[0].mxu0
  %535 = vmatprep.mubr.f32.mxu0 0.0
  %536 = vmatmul.mubr.f32.gmra.mrb[0].mxu0 %v320
  %v537 = vpop.f32.mrb[0].mxu0
  %v538 = vadd.f32 %v434, %v537
  %v539 = vpop.f32.mrb[0].mxu0
  %540 = vdwg.mxu0
  %v549 = vcombine.high %v389, %v389
  %v551 = vunpack.c.l.s4 1966171168
  %v552 = vunpack.c.0.s8 %v551
  %v553 = vlaneseq
  %v554 = vshrl.u32 %v553, 7
  %v555 = vsub.s32 %v552, %v554
  %v556 = vrot.slane %v389, %v555
  %v558 = vunpack.c.l.s4 1966171168
  %v559 = vunpack.c.0.s8 %v558
  %v560 = vlaneseq
  %v561 = vshrl.u32 %v560, 7
  %v562 = vsub.s32 %v559, %v561
  %v563 = vrot.slane %v549, %v562
  %v564 = vcombine.high %v556, %v556
  %v565 = vcombine.high %v563, %v563
  %v567 = vunpack.c.l.s4 1966171168
  %v568 = vunpack.c.0.s8 %v567
  %v569 = vlaneseq
  %v570 = vshrl.u32 %v569, 7
  %v571 = vsub.s32 %v568, %v570
  %v572 = vrot.slane %v556, %v571
  %v574 = vunpack.c.l.s4 1966171168
  %v575 = vunpack.c.0.s8 %v574
  %v576 = vlaneseq
  %v577 = vshrl.u32 %v576, 7
  %v578 = vsub.s32 %v575, %v577
  %v579 = vrot.slane %v563, %v578
  %v581 = vunpack.c.l.s4 1966171168
  %v582 = vunpack.c.0.s8 %v581
  %v583 = vlaneseq
  %v584 = vshrl.u32 %v583, 7
  %v585 = vsub.s32 %v582, %v584
  %v586 = vrot.slane %v564, %v585
  %v588 = vunpack.c.l.s4 1966171168
  %v589 = vunpack.c.0.s8 %v588
  %v590 = vlaneseq
  %v591 = vshrl.u32 %v590, 7
  %v592 = vsub.s32 %v589, %v591
  %v593 = vrot.slane %v565, %v592
  %v594 = vcombine.high %v572, %v572
  %v595 = vcombine.high %v579, %v579
  %v596 = vcombine.high %v586, %v586
  %v597 = vcombine.high %v593, %v593
  %v598 = vcombine.high %v394, %v394
  %v600 = vunpack.c.l.s4 1966171168
  %v601 = vunpack.c.0.s8 %v600
  %v602 = vlaneseq
  %v603 = vshrl.u32 %v602, 7
  %v604 = vsub.s32 %v601, %v603
  %v605 = vrot.slane %v394, %v604
  %v607 = vunpack.c.l.s4 1966171168
  %v608 = vunpack.c.0.s8 %v607
  %v609 = vlaneseq
  %v610 = vshrl.u32 %v609, 7
  %v611 = vsub.s32 %v608, %v610
  %v612 = vrot.slane %v598, %v611
  %v613 = vcombine.high %v605, %v605
  %v614 = vcombine.high %v612, %v612
  %v616 = vunpack.c.l.s4 1966171168
  %v617 = vunpack.c.0.s8 %v616
  %v618 = vlaneseq
  %v619 = vshrl.u32 %v618, 7
  %v620 = vsub.s32 %v617, %v619
  %v621 = vrot.slane %v605, %v620
  %v623 = vunpack.c.l.s4 1966171168
  %v624 = vunpack.c.0.s8 %v623
  %v625 = vlaneseq
  %v626 = vshrl.u32 %v625, 7
  %v627 = vsub.s32 %v624, %v626
  %v628 = vrot.slane %v612, %v627
  %v630 = vunpack.c.l.s4 1966171168
  %v631 = vunpack.c.0.s8 %v630
  %v632 = vlaneseq
  %v633 = vshrl.u32 %v632, 7
  %v634 = vsub.s32 %v631, %v633
  %v635 = vrot.slane %v613, %v634
  %v637 = vunpack.c.l.s4 1966171168
  %v638 = vunpack.c.0.s8 %v637
  %v639 = vlaneseq
  %v640 = vshrl.u32 %v639, 7
  %v641 = vsub.s32 %v638, %v640
  %v642 = vrot.slane %v614, %v641
  %v643 = vcombine.high %v621, %v621
  %v644 = vcombine.high %v628, %v628
  %v645 = vcombine.high %v635, %v635
  %v646 = vcombine.high %v642, %v642
  %v647 = vcombine.high %v399, %v399
  %v649 = vunpack.c.l.s4 1966171168
  %v650 = vunpack.c.0.s8 %v649
  %v651 = vlaneseq
  %v652 = vshrl.u32 %v651, 7
  %v653 = vsub.s32 %v650, %v652
  %v654 = vrot.slane %v399, %v653
  %v656 = vunpack.c.l.s4 1966171168
  %v657 = vunpack.c.0.s8 %v656
  %v658 = vlaneseq
  %v659 = vshrl.u32 %v658, 7
  %v660 = vsub.s32 %v657, %v659
  %v661 = vrot.slane %v647, %v660
  %v662 = vcombine.high %v654, %v654
  %v663 = vcombine.high %v661, %v661
  %v665 = vunpack.c.l.s4 1966171168
  %v666 = vunpack.c.0.s8 %v665
  %v667 = vlaneseq
  %v668 = vshrl.u32 %v667, 7
  %v669 = vsub.s32 %v666, %v668
  %v670 = vrot.slane %v654, %v669
  %v672 = vunpack.c.l.s4 1966171168
  %v673 = vunpack.c.0.s8 %v672
  %v674 = vlaneseq
  %v675 = vshrl.u32 %v674, 7
  %v676 = vsub.s32 %v673, %v675
  %v677 = vrot.slane %v661, %v676
  %v679 = vunpack.c.l.s4 1966171168
  %v680 = vunpack.c.0.s8 %v679
  %v681 = vlaneseq
  %v682 = vshrl.u32 %v681, 7
  %v683 = vsub.s32 %v680, %v682
  %v684 = vrot.slane %v662, %v683
  %v686 = vunpack.c.l.s4 1966171168
  %v687 = vunpack.c.0.s8 %v686
  %v688 = vlaneseq
  %v689 = vshrl.u32 %v688, 7
  %v690 = vsub.s32 %v687, %v689
  %v691 = vrot.slane %v663, %v690
  %v692 = vcombine.high %v670, %v670
  %v693 = vcombine.high %v677, %v677
  %v694 = vcombine.high %v684, %v684
  %v695 = vcombine.high %v691, %v691
  %v696 = vcombine.high %v404, %v404
  %v698 = vunpack.c.l.s4 1966171168
  %v699 = vunpack.c.0.s8 %v698
  %v700 = vlaneseq
  %v701 = vshrl.u32 %v700, 7
  %v702 = vsub.s32 %v699, %v701
  %v703 = vrot.slane %v404, %v702
  %v705 = vunpack.c.l.s4 1966171168
  %v706 = vunpack.c.0.s8 %v705
  %v707 = vlaneseq
  %v708 = vshrl.u32 %v707, 7
  %v709 = vsub.s32 %v706, %v708
  %v710 = vrot.slane %v696, %v709
  %v711 = vcombine.high %v703, %v703
  %v712 = vcombine.high %v710, %v710
  %v714 = vunpack.c.l.s4 1966171168
  %v715 = vunpack.c.0.s8 %v714
  %v716 = vlaneseq
  %v717 = vshrl.u32 %v716, 7
  %v718 = vsub.s32 %v715, %v717
  %v719 = vrot.slane %v703, %v718
  %v721 = vunpack.c.l.s4 1966171168
  %v722 = vunpack.c.0.s8 %v721
  %v723 = vlaneseq
  %v724 = vshrl.u32 %v723, 7
  %v725 = vsub.s32 %v722, %v724
  %v726 = vrot.slane %v710, %v725
  %v728 = vunpack.c.l.s4 1966171168
  %v729 = vunpack.c.0.s8 %v728
  %v730 = vlaneseq
  %v731 = vshrl.u32 %v730, 7
  %v732 = vsub.s32 %v729, %v731
  %v733 = vrot.slane %v711, %v732
  %v735 = vunpack.c.l.s4 1966171168
  %v736 = vunpack.c.0.s8 %v735
  %v737 = vlaneseq
  %v738 = vshrl.u32 %v737, 7
  %v739 = vsub.s32 %v736, %v738
  %v740 = vrot.slane %v712, %v739
  %v741 = vcombine.high %v719, %v719
  %v742 = vcombine.high %v726, %v726
  %v743 = vcombine.high %v733, %v733
  %v744 = vcombine.high %v740, %v740
  %v745 = vcombine.high %v409, %v409
  %v747 = vunpack.c.l.s4 1966171168
  %v748 = vunpack.c.0.s8 %v747
  %v749 = vlaneseq
  %v750 = vshrl.u32 %v749, 7
  %v751 = vsub.s32 %v748, %v750
  %v752 = vrot.slane %v409, %v751
  %v754 = vunpack.c.l.s4 1966171168
  %v755 = vunpack.c.0.s8 %v754
  %v756 = vlaneseq
  %v757 = vshrl.u32 %v756, 7
  %v758 = vsub.s32 %v755, %v757
  %v759 = vrot.slane %v745, %v758
  %v760 = vcombine.high %v752, %v752
  %v761 = vcombine.high %v759, %v759
  %v763 = vunpack.c.l.s4 1966171168
  %v764 = vunpack.c.0.s8 %v763
  %v765 = vlaneseq
  %v766 = vshrl.u32 %v765, 7
  %v767 = vsub.s32 %v764, %v766
  %v768 = vrot.slane %v752, %v767
  %v770 = vunpack.c.l.s4 1966171168
  %v771 = vunpack.c.0.s8 %v770
  %v772 = vlaneseq
  %v773 = vshrl.u32 %v772, 7
  %v774 = vsub.s32 %v771, %v773
  %v775 = vrot.slane %v759, %v774
  %v777 = vunpack.c.l.s4 1966171168
  %v778 = vunpack.c.0.s8 %v777
  %v779 = vlaneseq
  %v780 = vshrl.u32 %v779, 7
  %v781 = vsub.s32 %v778, %v780
  %v782 = vrot.slane %v760, %v781
  %v784 = vunpack.c.l.s4 1966171168
  %v785 = vunpack.c.0.s8 %v784
  %v786 = vlaneseq
  %v787 = vshrl.u32 %v786, 7
  %v788 = vsub.s32 %v785, %v787
  %v789 = vrot.slane %v761, %v788
  %v790 = vcombine.high %v768, %v768
  %v791 = vcombine.high %v775, %v775
  %v792 = vcombine.high %v782, %v782
  %v793 = vcombine.high %v789, %v789
  %v794 = vcombine.high %v414, %v414
  %v796 = vunpack.c.l.s4 1966171168
  %v797 = vunpack.c.0.s8 %v796
  %v798 = vlaneseq
  %v799 = vshrl.u32 %v798, 7
  %v800 = vsub.s32 %v797, %v799
  %v801 = vrot.slane %v414, %v800
  %v803 = vunpack.c.l.s4 1966171168
  %v804 = vunpack.c.0.s8 %v803
  %v805 = vlaneseq
  %v806 = vshrl.u32 %v805, 7
  %v807 = vsub.s32 %v804, %v806
  %v808 = vrot.slane %v794, %v807
  %v809 = vcombine.high %v801, %v801
  %v810 = vcombine.high %v808, %v808
  %v812 = vunpack.c.l.s4 1966171168
  %v813 = vunpack.c.0.s8 %v812
  %v814 = vlaneseq
  %v815 = vshrl.u32 %v814, 7
  %v816 = vsub.s32 %v813, %v815
  %v817 = vrot.slane %v801, %v816
  %v819 = vunpack.c.l.s4 1966171168
  %v820 = vunpack.c.0.s8 %v819
  %v821 = vlaneseq
  %v822 = vshrl.u32 %v821, 7
  %v823 = vsub.s32 %v820, %v822
  %v824 = vrot.slane %v808, %v823
  %v826 = vunpack.c.l.s4 1966171168
  %v827 = vunpack.c.0.s8 %v826
  %v828 = vlaneseq
  %v829 = vshrl.u32 %v828, 7
  %v830 = vsub.s32 %v827, %v829
  %v831 = vrot.slane %v809, %v830
  %v833 = vunpack.c.l.s4 1966171168
  %v834 = vunpack.c.0.s8 %v833
  %v835 = vlaneseq
  %v836 = vshrl.u32 %v835, 7
  %v837 = vsub.s32 %v834, %v836
  %v838 = vrot.slane %v810, %v837
  %v839 = vcombine.high %v817, %v817
  %v840 = vcombine.high %v824, %v824
  %v841 = vcombine.high %v831, %v831
  %v842 = vcombine.high %v838, %v838
  %v843 = vcombine.high %v419, %v419
  %v845 = vunpack.c.l.s4 1966171168
  %v846 = vunpack.c.0.s8 %v845
  %v847 = vlaneseq
  %v848 = vshrl.u32 %v847, 7
  %v849 = vsub.s32 %v846, %v848
  %v850 = vrot.slane %v419, %v849
  %v852 = vunpack.c.l.s4 1966171168
  %v853 = vunpack.c.0.s8 %v852
  %v854 = vlaneseq
  %v855 = vshrl.u32 %v854, 7
  %v856 = vsub.s32 %v853, %v855
  %v857 = vrot.slane %v843, %v856
  %v858 = vcombine.high %v850, %v850
  %v859 = vcombine.high %v857, %v857
  %v861 = vunpack.c.l.s4 1966171168
  %v862 = vunpack.c.0.s8 %v861
  %v863 = vlaneseq
  %v864 = vshrl.u32 %v863, 7
  %v865 = vsub.s32 %v862, %v864
  %v866 = vrot.slane %v850, %v865
  %v868 = vunpack.c.l.s4 1966171168
  %v869 = vunpack.c.0.s8 %v868
  %v870 = vlaneseq
  %v871 = vshrl.u32 %v870, 7
  %v872 = vsub.s32 %v869, %v871
  %v873 = vrot.slane %v857, %v872
  %v875 = vunpack.c.l.s4 1966171168
  %v876 = vunpack.c.0.s8 %v875
  %v877 = vlaneseq
  %v878 = vshrl.u32 %v877, 7
  %v879 = vsub.s32 %v876, %v878
  %v880 = vrot.slane %v858, %v879
  %v882 = vunpack.c.l.s4 1966171168
  %v883 = vunpack.c.0.s8 %v882
  %v884 = vlaneseq
  %v885 = vshrl.u32 %v884, 7
  %v886 = vsub.s32 %v883, %v885
  %v887 = vrot.slane %v859, %v886
  %v888 = vcombine.high %v866, %v866
  %v889 = vcombine.high %v873, %v873
  %v890 = vcombine.high %v880, %v880
  %v891 = vcombine.high %v887, %v887
  %v892 = vcombine.high %v424, %v424
  %v894 = vunpack.c.l.s4 1966171168
  %v895 = vunpack.c.0.s8 %v894
  %v896 = vlaneseq
  %v897 = vshrl.u32 %v896, 7
  %v898 = vsub.s32 %v895, %v897
  %v899 = vrot.slane %v424, %v898
  %v901 = vunpack.c.l.s4 1966171168
  %v902 = vunpack.c.0.s8 %v901
  %v903 = vlaneseq
  %v904 = vshrl.u32 %v903, 7
  %v905 = vsub.s32 %v902, %v904
  %v906 = vrot.slane %v892, %v905
  %v907 = vcombine.high %v899, %v899
  %v908 = vcombine.high %v906, %v906
  %v910 = vunpack.c.l.s4 1966171168
  %v911 = vunpack.c.0.s8 %v910
  %v912 = vlaneseq
  %v913 = vshrl.u32 %v912, 7
  %v914 = vsub.s32 %v911, %v913
  %v915 = vrot.slane %v899, %v914
  %v917 = vunpack.c.l.s4 1966171168
  %v918 = vunpack.c.0.s8 %v917
  %v919 = vlaneseq
  %v920 = vshrl.u32 %v919, 7
  %v921 = vsub.s32 %v918, %v920
  %v922 = vrot.slane %v906, %v921
  %v924 = vunpack.c.l.s4 1966171168
  %v925 = vunpack.c.0.s8 %v924
  %v926 = vlaneseq
  %v927 = vshrl.u32 %v926, 7
  %v928 = vsub.s32 %v925, %v927
  %v929 = vrot.slane %v907, %v928
  %v931 = vunpack.c.l.s4 1966171168
  %v932 = vunpack.c.0.s8 %v931
  %v933 = vlaneseq
  %v934 = vshrl.u32 %v933, 7
  %v935 = vsub.s32 %v932, %v934
  %v936 = vrot.slane %v908, %v935
  %v937 = vcombine.high %v915, %v915
  %v938 = vcombine.high %v922, %v922
  %v939 = vcombine.high %v929, %v929
  %v940 = vcombine.high %v936, %v936
  %v941 = vlaneseq
  %v942 = vshrl.u32 %v941, 7
  %v943 = vsub.s32 0, %v942
  %v944 = vrot.slane %v572, %v943
  %v945 = vlaneseq
  %v946 = vshrl.u32 %v945, 7
  %v947 = vsub.s32 0, %v946
  %v948 = vrot.slane %v586, %v947
  %v949 = vlaneseq
  %v950 = vshrl.u32 %v949, 7
  %v951 = vsub.s32 0, %v950
  %v952 = vrot.slane %v594, %v951
  %v953 = vlaneseq
  %v954 = vshrl.u32 %v953, 7
  %v955 = vsub.s32 0, %v954
  %v956 = vrot.slane %v596, %v955
  %v957 = vlaneseq
  %v958 = vshrl.u32 %v957, 7
  %v959 = vsub.s32 0, %v958
  %v960 = vrot.slane %v579, %v959
  %v961 = vlaneseq
  %v962 = vshrl.u32 %v961, 7
  %v963 = vsub.s32 0, %v962
  %v964 = vrot.slane %v593, %v963
  %v965 = vlaneseq
  %v966 = vshrl.u32 %v965, 7
  %v967 = vsub.s32 0, %v966
  %v968 = vrot.slane %v595, %v967
  %v969 = vlaneseq
  %v970 = vshrl.u32 %v969, 7
  %v971 = vsub.s32 0, %v970
  %v972 = vrot.slane %v597, %v971
  %v973 = vlaneseq
  %v974 = vshrl.u32 %v973, 7
  %v975 = vsub.s32 0, %v974
  %v976 = vrot.slane %v621, %v975
  %v977 = vlaneseq
  %v978 = vshrl.u32 %v977, 7
  %v979 = vsub.s32 0, %v978
  %v980 = vrot.slane %v635, %v979
  %v981 = vlaneseq
  %v982 = vshrl.u32 %v981, 7
  %v983 = vsub.s32 0, %v982
  %v984 = vrot.slane %v643, %v983
  %v985 = vlaneseq
  %v986 = vshrl.u32 %v985, 7
  %v987 = vsub.s32 0, %v986
  %v988 = vrot.slane %v645, %v987
  %v989 = vlaneseq
  %v990 = vshrl.u32 %v989, 7
  %v991 = vsub.s32 0, %v990
  %v992 = vrot.slane %v628, %v991
  %v993 = vlaneseq
  %v994 = vshrl.u32 %v993, 7
  %v995 = vsub.s32 0, %v994
  %v996 = vrot.slane %v642, %v995
  %v997 = vlaneseq
  %v998 = vshrl.u32 %v997, 7
  %v999 = vsub.s32 0, %v998
  %v1000 = vrot.slane %v644, %v999
  %v1001 = vlaneseq
  %v1002 = vshrl.u32 %v1001, 7
  %v1003 = vsub.s32 0, %v1002
  %v1004 = vrot.slane %v646, %v1003
  %v1005 = vlaneseq
  %v1006 = vshrl.u32 %v1005, 7
  %v1007 = vsub.s32 0, %v1006
  %v1008 = vrot.slane %v670, %v1007
  %v1009 = vlaneseq
  %v1010 = vshrl.u32 %v1009, 7
  %v1011 = vsub.s32 0, %v1010
  %v1012 = vrot.slane %v684, %v1011
  %v1013 = vlaneseq
  %v1014 = vshrl.u32 %v1013, 7
  %v1015 = vsub.s32 0, %v1014
  %v1016 = vrot.slane %v692, %v1015
  %v1017 = vlaneseq
  %v1018 = vshrl.u32 %v1017, 7
  %v1019 = vsub.s32 0, %v1018
  %v1020 = vrot.slane %v694, %v1019
  %v1021 = vlaneseq
  %v1022 = vshrl.u32 %v1021, 7
  %v1023 = vsub.s32 0, %v1022
  %v1024 = vrot.slane %v677, %v1023
  %v1025 = vlaneseq
  %v1026 = vshrl.u32 %v1025, 7
  %v1027 = vsub.s32 0, %v1026
  %v1028 = vrot.slane %v691, %v1027
  %v1029 = vlaneseq
  %v1030 = vshrl.u32 %v1029, 7
  %v1031 = vsub.s32 0, %v1030
  %v1032 = vrot.slane %v693, %v1031
  %v1033 = vlaneseq
  %v1034 = vshrl.u32 %v1033, 7
  %v1035 = vsub.s32 0, %v1034
  %v1036 = vrot.slane %v695, %v1035
  %v1037 = vlaneseq
  %v1038 = vshrl.u32 %v1037, 7
  %v1039 = vsub.s32 0, %v1038
  %v1040 = vrot.slane %v719, %v1039
  %v1041 = vlaneseq
  %v1042 = vshrl.u32 %v1041, 7
  %v1043 = vsub.s32 0, %v1042
  %v1044 = vrot.slane %v733, %v1043
  %v1045 = vlaneseq
  %v1046 = vshrl.u32 %v1045, 7
  %v1047 = vsub.s32 0, %v1046
  %v1048 = vrot.slane %v741, %v1047
  %v1049 = vlaneseq
  %v1050 = vshrl.u32 %v1049, 7
  %v1051 = vsub.s32 0, %v1050
  %v1052 = vrot.slane %v743, %v1051
  %v1053 = vlaneseq
  %v1054 = vshrl.u32 %v1053, 7
  %v1055 = vsub.s32 0, %v1054
  %v1056 = vrot.slane %v726, %v1055
  %v1057 = vlaneseq
  %v1058 = vshrl.u32 %v1057, 7
  %v1059 = vsub.s32 0, %v1058
  %v1060 = vrot.slane %v740, %v1059
  %v1061 = vlaneseq
  %v1062 = vshrl.u32 %v1061, 7
  %v1063 = vsub.s32 0, %v1062
  %v1064 = vrot.slane %v742, %v1063
  %v1065 = vlaneseq
  %v1066 = vshrl.u32 %v1065, 7
  %v1067 = vsub.s32 0, %v1066
  %v1068 = vrot.slane %v744, %v1067
  %v1069 = vlaneseq
  %v1070 = vshrl.u32 %v1069, 7
  %v1071 = vsub.s32 0, %v1070
  %v1072 = vrot.slane %v768, %v1071
  %v1073 = vlaneseq
  %v1074 = vshrl.u32 %v1073, 7
  %v1075 = vsub.s32 0, %v1074
  %v1076 = vrot.slane %v782, %v1075
  %v1077 = vlaneseq
  %v1078 = vshrl.u32 %v1077, 7
  %v1079 = vsub.s32 0, %v1078
  %v1080 = vrot.slane %v790, %v1079
  %v1081 = vlaneseq
  %v1082 = vshrl.u32 %v1081, 7
  %v1083 = vsub.s32 0, %v1082
  %v1084 = vrot.slane %v792, %v1083
  %v1085 = vlaneseq
  %v1086 = vshrl.u32 %v1085, 7
  %v1087 = vsub.s32 0, %v1086
  %v1088 = vrot.slane %v775, %v1087
  %v1089 = vlaneseq
  %v1090 = vshrl.u32 %v1089, 7
  %v1091 = vsub.s32 0, %v1090
  %v1092 = vrot.slane %v789, %v1091
  %v1093 = vlaneseq
  %v1094 = vshrl.u32 %v1093, 7
  %v1095 = vsub.s32 0, %v1094
  %v1096 = vrot.slane %v791, %v1095
  %v1097 = vlaneseq
  %v1098 = vshrl.u32 %v1097, 7
  %v1099 = vsub.s32 0, %v1098
  %v1100 = vrot.slane %v793, %v1099
  %v1101 = vlaneseq
  %v1102 = vshrl.u32 %v1101, 7
  %v1103 = vsub.s32 0, %v1102
  %v1104 = vrot.slane %v817, %v1103
  %v1105 = vlaneseq
  %v1106 = vshrl.u32 %v1105, 7
  %v1107 = vsub.s32 0, %v1106
  %v1108 = vrot.slane %v831, %v1107
  %v1109 = vlaneseq
  %v1110 = vshrl.u32 %v1109, 7
  %v1111 = vsub.s32 0, %v1110
  %v1112 = vrot.slane %v839, %v1111
  %v1113 = vlaneseq
  %v1114 = vshrl.u32 %v1113, 7
  %v1115 = vsub.s32 0, %v1114
  %v1116 = vrot.slane %v841, %v1115
  %v1117 = vlaneseq
  %v1118 = vshrl.u32 %v1117, 7
  %v1119 = vsub.s32 0, %v1118
  %v1120 = vrot.slane %v824, %v1119
  %v1121 = vlaneseq
  %v1122 = vshrl.u32 %v1121, 7
  %v1123 = vsub.s32 0, %v1122
  %v1124 = vrot.slane %v838, %v1123
  %v1125 = vlaneseq
  %v1126 = vshrl.u32 %v1125, 7
  %v1127 = vsub.s32 0, %v1126
  %v1128 = vrot.slane %v840, %v1127
  %v1129 = vlaneseq
  %v1130 = vshrl.u32 %v1129, 7
  %v1131 = vsub.s32 0, %v1130
  %v1132 = vrot.slane %v842, %v1131
  %v1133 = vlaneseq
  %v1134 = vshrl.u32 %v1133, 7
  %v1135 = vsub.s32 0, %v1134
  %v1136 = vrot.slane %v866, %v1135
  %v1137 = vlaneseq
  %v1138 = vshrl.u32 %v1137, 7
  %v1139 = vsub.s32 0, %v1138
  %v1140 = vrot.slane %v880, %v1139
  %v1141 = vlaneseq
  %v1142 = vshrl.u32 %v1141, 7
  %v1143 = vsub.s32 0, %v1142
  %v1144 = vrot.slane %v888, %v1143
  %v1145 = vlaneseq
  %v1146 = vshrl.u32 %v1145, 7
  %v1147 = vsub.s32 0, %v1146
  %v1148 = vrot.slane %v890, %v1147
  %v1149 = vlaneseq
  %v1150 = vshrl.u32 %v1149, 7
  %v1151 = vsub.s32 0, %v1150
  %v1152 = vrot.slane %v873, %v1151
  %v1153 = vlaneseq
  %v1154 = vshrl.u32 %v1153, 7
  %v1155 = vsub.s32 0, %v1154
  %v1156 = vrot.slane %v887, %v1155
  %v1157 = vlaneseq
  %v1158 = vshrl.u32 %v1157, 7
  %v1159 = vsub.s32 0, %v1158
  %v1160 = vrot.slane %v889, %v1159
  %v1161 = vlaneseq
  %v1162 = vshrl.u32 %v1161, 7
  %v1163 = vsub.s32 0, %v1162
  %v1164 = vrot.slane %v891, %v1163
  %v1165 = vlaneseq
  %v1166 = vshrl.u32 %v1165, 7
  %v1167 = vsub.s32 0, %v1166
  %v1168 = vrot.slane %v915, %v1167
  %v1169 = vlaneseq
  %v1170 = vshrl.u32 %v1169, 7
  %v1171 = vsub.s32 0, %v1170
  %v1172 = vrot.slane %v929, %v1171
  %v1173 = vlaneseq
  %v1174 = vshrl.u32 %v1173, 7
  %v1175 = vsub.s32 0, %v1174
  %v1176 = vrot.slane %v937, %v1175
  %v1177 = vlaneseq
  %v1178 = vshrl.u32 %v1177, 7
  %v1179 = vsub.s32 0, %v1178
  %v1180 = vrot.slane %v939, %v1179
  %v1181 = vlaneseq
  %v1182 = vshrl.u32 %v1181, 7
  %v1183 = vsub.s32 0, %v1182
  %v1184 = vrot.slane %v922, %v1183
  %v1185 = vlaneseq
  %v1186 = vshrl.u32 %v1185, 7
  %v1187 = vsub.s32 0, %v1186
  %v1188 = vrot.slane %v936, %v1187
  %v1189 = vlaneseq
  %v1190 = vshrl.u32 %v1189, 7
  %v1191 = vsub.s32 0, %v1190
  %v1192 = vrot.slane %v938, %v1191
  %v1193 = vlaneseq
  %v1194 = vshrl.u32 %v1193, 7
  %v1195 = vsub.s32 0, %v1194
  %v1196 = vrot.slane %v940, %v1195
  %v1261 = vadd.f32 %v944, %v503
  %v1262 = vadd.f32 %v948, %v503
  %v1263 = vadd.f32 %v952, %v503
  %v1264 = vadd.f32 %v956, %v503
  %v1265 = vadd.f32 %v960, %v503
  %v1266 = vadd.f32 %v964, %v503
  %v1267 = vadd.f32 %v968, %v503
  %v1268 = vadd.f32 %v972, %v503
  %v1269 = vadd.f32 %v976, %v508
  %v1270 = vadd.f32 %v980, %v508
  %v1271 = vadd.f32 %v984, %v508
  %v1272 = vadd.f32 %v988, %v508
  %v1273 = vadd.f32 %v992, %v508
  %v1274 = vadd.f32 %v996, %v508
  %v1275 = vadd.f32 %v1000, %v508
  %v1276 = vadd.f32 %v1004, %v508
  %v1277 = vadd.f32 %v1008, %v513
  %v1278 = vadd.f32 %v1012, %v513
  %v1279 = vadd.f32 %v1016, %v513
  %v1280 = vadd.f32 %v1020, %v513
  %v1281 = vadd.f32 %v1024, %v513
  %v1282 = vadd.f32 %v1028, %v513
  %v1283 = vadd.f32 %v1032, %v513
  %v1284 = vadd.f32 %v1036, %v513
  %v1285 = vadd.f32 %v1040, %v518
  %v1286 = vadd.f32 %v1044, %v518
  %v1287 = vadd.f32 %v1048, %v518
  %v1288 = vadd.f32 %v1052, %v518
  %v1289 = vadd.f32 %v1056, %v518
  %v1290 = vadd.f32 %v1060, %v518
  %v1291 = vadd.f32 %v1064, %v518
  %v1292 = vadd.f32 %v1068, %v518
  %v1293 = vadd.f32 %v1072, %v523
  %v1294 = vadd.f32 %v1076, %v523
  %v1295 = vadd.f32 %v1080, %v523
  %v1296 = vadd.f32 %v1084, %v523
  %v1297 = vadd.f32 %v1088, %v523
  %v1298 = vadd.f32 %v1092, %v523
  %v1299 = vadd.f32 %v1096, %v523
  %v1300 = vadd.f32 %v1100, %v523
  %v1301 = vadd.f32 %v1104, %v528
  %v1302 = vadd.f32 %v1108, %v528
  %v1303 = vadd.f32 %v1112, %v528
  %v1304 = vadd.f32 %v1116, %v528
  %v1305 = vadd.f32 %v1120, %v528
  %v1306 = vadd.f32 %v1124, %v528
  %v1307 = vadd.f32 %v1128, %v528
  %v1308 = vadd.f32 %v1132, %v528
  %v1309 = vadd.f32 %v1136, %v533
  %v1310 = vadd.f32 %v1140, %v533
  %v1311 = vadd.f32 %v1144, %v533
  %v1312 = vadd.f32 %v1148, %v533
  %v1313 = vadd.f32 %v1152, %v533
  %v1314 = vadd.f32 %v1156, %v533
  %v1315 = vadd.f32 %v1160, %v533
  %v1316 = vadd.f32 %v1164, %v533
  %v1317 = vadd.f32 %v1168, %v538
  %v1318 = vadd.f32 %v1172, %v538
  %v1319 = vadd.f32 %v1176, %v538
  %v1320 = vadd.f32 %v1180, %v538
  %v1321 = vadd.f32 %v1184, %v538
  %v1322 = vadd.f32 %v1188, %v538
  %v1323 = vadd.f32 %v1192, %v538
  %v1324 = vadd.f32 %v1196, %v538
  %vm1325 = vcmp.gt.f32.partialorder %v1261, 0.0
  %vm1326 = vcmp.gt.f32.partialorder %v1262, 0.0
  %vm1327 = vcmp.gt.f32.partialorder %v1263, 0.0
  %vm1328 = vcmp.gt.f32.partialorder %v1264, 0.0
  %vm1329 = vcmp.gt.f32.partialorder %v1265, 0.0
  %vm1330 = vcmp.gt.f32.partialorder %v1266, 0.0
  %vm1331 = vcmp.gt.f32.partialorder %v1267, 0.0
  %vm1332 = vcmp.gt.f32.partialorder %v1268, 0.0
  %vm1333 = vcmp.gt.f32.partialorder %v1269, 0.0
  %vm1334 = vcmp.gt.f32.partialorder %v1270, 0.0
  %vm1335 = vcmp.gt.f32.partialorder %v1271, 0.0
  %vm1336 = vcmp.gt.f32.partialorder %v1272, 0.0
  %vm1337 = vcmp.gt.f32.partialorder %v1273, 0.0
  %vm1338 = vcmp.gt.f32.partialorder %v1274, 0.0
  %vm1339 = vcmp.gt.f32.partialorder %v1275, 0.0
  %vm1340 = vcmp.gt.f32.partialorder %v1276, 0.0
  %vm1341 = vcmp.gt.f32.partialorder %v1277, 0.0
  %vm1342 = vcmp.gt.f32.partialorder %v1278, 0.0
  %vm1343 = vcmp.gt.f32.partialorder %v1279, 0.0
  %vm1344 = vcmp.gt.f32.partialorder %v1280, 0.0
  %vm1345 = vcmp.gt.f32.partialorder %v1281, 0.0
  %vm1346 = vcmp.gt.f32.partialorder %v1282, 0.0
  %vm1347 = vcmp.gt.f32.partialorder %v1283, 0.0
  %vm1348 = vcmp.gt.f32.partialorder %v1284, 0.0
  %vm1349 = vcmp.gt.f32.partialorder %v1285, 0.0
  %vm1350 = vcmp.gt.f32.partialorder %v1286, 0.0
  %vm1351 = vcmp.gt.f32.partialorder %v1287, 0.0
  %vm1352 = vcmp.gt.f32.partialorder %v1288, 0.0
  %vm1353 = vcmp.gt.f32.partialorder %v1289, 0.0
  %vm1354 = vcmp.gt.f32.partialorder %v1290, 0.0
  %vm1355 = vcmp.gt.f32.partialorder %v1291, 0.0
  %vm1356 = vcmp.gt.f32.partialorder %v1292, 0.0
  %vm1357 = vcmp.gt.f32.partialorder %v1293, 0.0
  %vm1358 = vcmp.gt.f32.partialorder %v1294, 0.0
  %vm1359 = vcmp.gt.f32.partialorder %v1295, 0.0
  %vm1360 = vcmp.gt.f32.partialorder %v1296, 0.0
  %vm1361 = vcmp.gt.f32.partialorder %v1297, 0.0
  %vm1362 = vcmp.gt.f32.partialorder %v1298, 0.0
  %vm1363 = vcmp.gt.f32.partialorder %v1299, 0.0
  %vm1364 = vcmp.gt.f32.partialorder %v1300, 0.0
  %vm1365 = vcmp.gt.f32.partialorder %v1301, 0.0
  %vm1366 = vcmp.gt.f32.partialorder %v1302, 0.0
  %vm1367 = vcmp.gt.f32.partialorder %v1303, 0.0
  %vm1368 = vcmp.gt.f32.partialorder %v1304, 0.0
  %vm1369 = vcmp.gt.f32.partialorder %v1305, 0.0
  %vm1370 = vcmp.gt.f32.partialorder %v1306, 0.0
  %vm1371 = vcmp.gt.f32.partialorder %v1307, 0.0
  %vm1372 = vcmp.gt.f32.partialorder %v1308, 0.0
  %vm1373 = vcmp.gt.f32.partialorder %v1309, 0.0
  %vm1374 = vcmp.gt.f32.partialorder %v1310, 0.0
  %vm1375 = vcmp.gt.f32.partialorder %v1311, 0.0
  %vm1376 = vcmp.gt.f32.partialorder %v1312, 0.0
  %vm1377 = vcmp.gt.f32.partialorder %v1313, 0.0
  %vm1378 = vcmp.gt.f32.partialorder %v1314, 0.0
  %vm1379 = vcmp.gt.f32.partialorder %v1315, 0.0
  %vm1380 = vcmp.gt.f32.partialorder %v1316, 0.0
  %vm1381 = vcmp.gt.f32.partialorder %v1317, 0.0
  %vm1382 = vcmp.gt.f32.partialorder %v1318, 0.0
  %vm1383 = vcmp.gt.f32.partialorder %v1319, 0.0
  %vm1384 = vcmp.gt.f32.partialorder %v1320, 0.0
  %vm1385 = vcmp.gt.f32.partialorder %v1321, 0.0
  %vm1386 = vcmp.gt.f32.partialorder %v1322, 0.0
  %vm1387 = vcmp.gt.f32.partialorder %v1323, 0.0
  %vm1388 = vcmp.gt.f32.partialorder %v1324, 0.0
  %v1389 = vmul.f32 %v1261, 0.2
  %v1390 = vmul.f32 %v1262, 0.2
  %v1391 = vmul.f32 %v1263, 0.2
  %v1392 = vmul.f32 %v1264, 0.2
  %v1393 = vmul.f32 %v1265, 0.2
  %v1394 = vmul.f32 %v1266, 0.2
  %v1395 = vmul.f32 %v1267, 0.2
  %v1396 = vmul.f32 %v1268, 0.2
  %v1397 = vmul.f32 %v1269, 0.2
  %v1398 = vmul.f32 %v1270, 0.2
  %v1399 = vmul.f32 %v1271, 0.2
  %v1400 = vmul.f32 %v1272, 0.2
  %v1401 = vmul.f32 %v1273, 0.2
  %v1402 = vmul.f32 %v1274, 0.2
  %v1403 = vmul.f32 %v1275, 0.2
  %v1404 = vmul.f32 %v1276, 0.2
  %v1405 = vmul.f32 %v1277, 0.2
  %v1406 = vmul.f32 %v1278, 0.2
  %v1407 = vmul.f32 %v1279, 0.2
  %v1408 = vmul.f32 %v1280, 0.2
  %v1409 = vmul.f32 %v1281, 0.2
  %v1410 = vmul.f32 %v1282, 0.2
  %v1411 = vmul.f32 %v1283, 0.2
  %v1412 = vmul.f32 %v1284, 0.2
  %v1413 = vmul.f32 %v1285, 0.2
  %v1414 = vmul.f32 %v1286, 0.2
  %v1415 = vmul.f32 %v1287, 0.2
  %v1416 = vmul.f32 %v1288, 0.2
  %v1417 = vmul.f32 %v1289, 0.2
  %v1418 = vmul.f32 %v1290, 0.2
  %v1419 = vmul.f32 %v1291, 0.2
  %v1420 = vmul.f32 %v1292, 0.2
  %v1421 = vmul.f32 %v1293, 0.2
  %v1422 = vmul.f32 %v1294, 0.2
  %v1423 = vmul.f32 %v1295, 0.2
  %v1424 = vmul.f32 %v1296, 0.2
  %v1425 = vmul.f32 %v1297, 0.2
  %v1426 = vmul.f32 %v1298, 0.2
  %v1427 = vmul.f32 %v1299, 0.2
  %v1428 = vmul.f32 %v1300, 0.2
  %v1429 = vmul.f32 %v1301, 0.2
  %v1430 = vmul.f32 %v1302, 0.2
  %v1431 = vmul.f32 %v1303, 0.2
  %v1432 = vmul.f32 %v1304, 0.2
  %v1433 = vmul.f32 %v1305, 0.2
  %v1434 = vmul.f32 %v1306, 0.2
  %v1435 = vmul.f32 %v1307, 0.2
  %v1436 = vmul.f32 %v1308, 0.2
  %v1437 = vmul.f32 %v1309, 0.2
  %v1438 = vmul.f32 %v1310, 0.2
  %v1439 = vmul.f32 %v1311, 0.2
  %v1440 = vmul.f32 %v1312, 0.2
  %v1441 = vmul.f32 %v1313, 0.2
  %v1442 = vmul.f32 %v1314, 0.2
  %v1443 = vmul.f32 %v1315, 0.2
  %v1444 = vmul.f32 %v1316, 0.2
  %v1445 = vmul.f32 %v1317, 0.2
  %v1446 = vmul.f32 %v1318, 0.2
  %v1447 = vmul.f32 %v1319, 0.2
  %v1448 = vmul.f32 %v1320, 0.2
  %v1449 = vmul.f32 %v1321, 0.2
  %v1450 = vmul.f32 %v1322, 0.2
  %v1451 = vmul.f32 %v1323, 0.2
  %v1452 = vmul.f32 %v1324, 0.2
  %v1453 = vsel %vm1325, %v1261, %v1389
  %v1454 = vsel %vm1326, %v1262, %v1390
  %v1455 = vsel %vm1327, %v1263, %v1391
  %v1456 = vsel %vm1328, %v1264, %v1392
  %v1457 = vsel %vm1329, %v1265, %v1393
  %v1458 = vsel %vm1330, %v1266, %v1394
  %v1459 = vsel %vm1331, %v1267, %v1395
  %v1460 = vsel %vm1332, %v1268, %v1396
  %v1461 = vsel %vm1333, %v1269, %v1397
  %v1462 = vsel %vm1334, %v1270, %v1398
  %v1463 = vsel %vm1335, %v1271, %v1399
  %v1464 = vsel %vm1336, %v1272, %v1400
  %v1465 = vsel %vm1337, %v1273, %v1401
  %v1466 = vsel %vm1338, %v1274, %v1402
  %v1467 = vsel %vm1339, %v1275, %v1403
  %v1468 = vsel %vm1340, %v1276, %v1404
  %v1469 = vsel %vm1341, %v1277, %v1405
  %v1470 = vsel %vm1342, %v1278, %v1406
  %v1471 = vsel %vm1343, %v1279, %v1407
  %v1472 = vsel %vm1344, %v1280, %v1408
  %v1473 = vsel %vm1345, %v1281, %v1409
  %v1474 = vsel %vm1346, %v1282, %v1410
  %v1475 = vsel %vm1347, %v1283, %v1411
  %v1476 = vsel %vm1348, %v1284, %v1412
  %v1477 = vsel %vm1349, %v1285, %v1413
  %v1478 = vsel %vm1350, %v1286, %v1414
  %v1479 = vsel %vm1351, %v1287, %v1415
  %v1480 = vsel %vm1352, %v1288, %v1416
  %v1481 = vsel %vm1353, %v1289, %v1417
  %v1482 = vsel %vm1354, %v1290, %v1418
  %v1483 = vsel %vm1355, %v1291, %v1419
  %v1484 = vsel %vm1356, %v1292, %v1420
  %v1485 = vsel %vm1357, %v1293, %v1421
  %v1486 = vsel %vm1358, %v1294, %v1422
  %v1487 = vsel %vm1359, %v1295, %v1423
  %v1488 = vsel %vm1360, %v1296, %v1424
  %v1489 = vsel %vm1361, %v1297, %v1425
  %v1490 = vsel %vm1362, %v1298, %v1426
  %v1491 = vsel %vm1363, %v1299, %v1427
  %v1492 = vsel %vm1364, %v1300, %v1428
  %v1493 = vsel %vm1365, %v1301, %v1429
  %v1494 = vsel %vm1366, %v1302, %v1430
  %v1495 = vsel %vm1367, %v1303, %v1431
  %v1496 = vsel %vm1368, %v1304, %v1432
  %v1497 = vsel %vm1369, %v1305, %v1433
  %v1498 = vsel %vm1370, %v1306, %v1434
  %v1499 = vsel %vm1371, %v1307, %v1435
  %v1500 = vsel %vm1372, %v1308, %v1436
  %v1501 = vsel %vm1373, %v1309, %v1437
  %v1502 = vsel %vm1374, %v1310, %v1438
  %v1503 = vsel %vm1375, %v1311, %v1439
  %v1504 = vsel %vm1376, %v1312, %v1440
  %v1505 = vsel %vm1377, %v1313, %v1441
  %v1506 = vsel %vm1378, %v1314, %v1442
  %v1507 = vsel %vm1379, %v1315, %v1443
  %v1508 = vsel %vm1380, %v1316, %v1444
  %v1509 = vsel %vm1381, %v1317, %v1445
  %v1510 = vsel %vm1382, %v1318, %v1446
  %v1511 = vsel %vm1383, %v1319, %v1447
  %v1512 = vsel %vm1384, %v1320, %v1448
  %v1513 = vsel %vm1385, %v1321, %v1449
  %v1514 = vsel %vm1386, %v1322, %v1450
  %v1515 = vsel %vm1387, %v1323, %v1451
  %v1516 = vsel %vm1388, %v1324, %v1452
  %v1517 = vld [vmem:[%s4] sm:$0x1]
  %v1519 = vlaneseq
  %v1520 = vshrl.u32 %v1519, 7
  %v1521 = vsub.s32 0, %v1520
  %v1522 = vrot.slane %v1517, %v1521
  %v1524 = vmul.f32 %v1453, %v1522
  %v1525 = vmul.f32 %v1454, %v1522
  %v1526 = vmul.f32 %v1455, %v1522
  %v1527 = vmul.f32 %v1456, %v1522
  %v1528 = vmul.f32 %v1457, %v1522
  %v1529 = vmul.f32 %v1458, %v1522
  %v1530 = vmul.f32 %v1459, %v1522
  %v1531 = vmul.f32 %v1460, %v1522
  %v1532 = vmul.f32 %v1461, %v1522
  %v1533 = vmul.f32 %v1462, %v1522
  %v1534 = vmul.f32 %v1463, %v1522
  %v1535 = vmul.f32 %v1464, %v1522
  %v1536 = vmul.f32 %v1465, %v1522
  %v1537 = vmul.f32 %v1466, %v1522
  %v1538 = vmul.f32 %v1467, %v1522
  %v1539 = vmul.f32 %v1468, %v1522
  %v1540 = vmul.f32 %v1469, %v1522
  %v1541 = vmul.f32 %v1470, %v1522
  %v1542 = vmul.f32 %v1471, %v1522
  %v1543 = vmul.f32 %v1472, %v1522
  %v1544 = vmul.f32 %v1473, %v1522
  %v1545 = vmul.f32 %v1474, %v1522
  %v1546 = vmul.f32 %v1475, %v1522
  %v1547 = vmul.f32 %v1476, %v1522
  %v1548 = vmul.f32 %v1477, %v1522
  %v1549 = vmul.f32 %v1478, %v1522
  %v1550 = vmul.f32 %v1479, %v1522
  %v1551 = vmul.f32 %v1480, %v1522
  %v1552 = vmul.f32 %v1481, %v1522
  %v1553 = vmul.f32 %v1482, %v1522
  %v1554 = vmul.f32 %v1483, %v1522
  %v1555 = vmul.f32 %v1484, %v1522
  %v1556 = vmul.f32 %v1485, %v1522
  %v1557 = vmul.f32 %v1486, %v1522
  %v1558 = vmul.f32 %v1487, %v1522
  %v1559 = vmul.f32 %v1488, %v1522
  %v1560 = vmul.f32 %v1489, %v1522
  %v1561 = vmul.f32 %v1490, %v1522
  %v1562 = vmul.f32 %v1491, %v1522
  %v1563 = vmul.f32 %v1492, %v1522
  %v1564 = vmul.f32 %v1493, %v1522
  %v1565 = vmul.f32 %v1494, %v1522
  %v1566 = vmul.f32 %v1495, %v1522
  %v1567 = vmul.f32 %v1496, %v1522
  %v1568 = vmul.f32 %v1497, %v1522
  %v1569 = vmul.f32 %v1498, %v1522
  %v1570 = vmul.f32 %v1499, %v1522
  %v1571 = vmul.f32 %v1500, %v1522
  %v1572 = vmul.f32 %v1501, %v1522
  %v1573 = vmul.f32 %v1502, %v1522
  %v1574 = vmul.f32 %v1503, %v1522
  %v1575 = vmul.f32 %v1504, %v1522
  %v1576 = vmul.f32 %v1505, %v1522
  %v1577 = vmul.f32 %v1506, %v1522
  %v1578 = vmul.f32 %v1507, %v1522
  %v1579 = vmul.f32 %v1508, %v1522
  %v1580 = vmul.f32 %v1509, %v1522
  %v1581 = vmul.f32 %v1510, %v1522
  %v1582 = vmul.f32 %v1511, %v1522
  %v1583 = vmul.f32 %v1512, %v1522
  %v1584 = vmul.f32 %v1513, %v1522
  %v1585 = vmul.f32 %v1514, %v1522
  %v1586 = vmul.f32 %v1515, %v1522
  %v1587 = vmul.f32 %v1516, %v1522
  %vm1588 = vcmask 261120
  %v1589 = vsel %vm1588, %v1524, 0.0
  %1590 = vadd.xlane.f32.xlu0 %v1589
  %v1591 = vpop.xlane.xlu0 %1590
  %v1592 = vsel %vm1588, %v1525, 0.0
  %1593 = vadd.xlane.f32.xlu0 %v1592
  %v1594 = vpop.xlane.xlu0 %1593
  %v1595 = vsel %vm1588, %v1526, 0.0
  %1596 = vadd.xlane.f32.xlu0 %v1595
  %v1597 = vpop.xlane.xlu0 %1596
  %v1598 = vsel %vm1588, %v1527, 0.0
  %1599 = vadd.xlane.f32.xlu0 %v1598
  %v1600 = vpop.xlane.xlu0 %1599
  %v1601 = vsel %vm1588, %v1528, 0.0
  %1602 = vadd.xlane.f32.xlu0 %v1601
  %v1603 = vpop.xlane.xlu0 %1602
  %v1604 = vsel %vm1588, %v1529, 0.0
  %1605 = vadd.xlane.f32.xlu0 %v1604
  %v1606 = vpop.xlane.xlu0 %1605
  %v1607 = vsel %vm1588, %v1530, 0.0
  %1608 = vadd.xlane.f32.xlu0 %v1607
  %v1609 = vpop.xlane.xlu0 %1608
  %v1610 = vsel %vm1588, %v1531, 0.0
  %1611 = vadd.xlane.f32.xlu0 %v1610
  %v1612 = vpop.xlane.xlu0 %1611
  %v1613 = vsel %vm1588, %v1532, 0.0
  %1614 = vadd.xlane.f32.xlu0 %v1613
  %v1615 = vpop.xlane.xlu0 %1614
  %v1616 = vsel %vm1588, %v1533, 0.0
  %1617 = vadd.xlane.f32.xlu0 %v1616
  %v1618 = vpop.xlane.xlu0 %1617
  %v1619 = vsel %vm1588, %v1534, 0.0
  %1620 = vadd.xlane.f32.xlu0 %v1619
  %v1621 = vpop.xlane.xlu0 %1620
  %v1622 = vsel %vm1588, %v1535, 0.0
  %1623 = vadd.xlane.f32.xlu0 %v1622
  %v1624 = vpop.xlane.xlu0 %1623
  %v1625 = vsel %vm1588, %v1536, 0.0
  %1626 = vadd.xlane.f32.xlu0 %v1625
  %v1627 = vpop.xlane.xlu0 %1626
  %v1628 = vsel %vm1588, %v1537, 0.0
  %1629 = vadd.xlane.f32.xlu0 %v1628
  %v1630 = vpop.xlane.xlu0 %1629
  %v1631 = vsel %vm1588, %v1538, 0.0
  %1632 = vadd.xlane.f32.xlu0 %v1631
  %v1633 = vpop.xlane.xlu0 %1632
  %v1634 = vsel %vm1588, %v1539, 0.0
  %1635 = vadd.xlane.f32.xlu0 %v1634
  %v1636 = vpop.xlane.xlu0 %1635
  %v1637 = vsel %vm1588, %v1540, 0.0
  %1638 = vadd.xlane.f32.xlu0 %v1637
  %v1639 = vpop.xlane.xlu0 %1638
  %v1640 = vsel %vm1588, %v1541, 0.0
  %1641 = vadd.xlane.f32.xlu0 %v1640
  %v1642 = vpop.xlane.xlu0 %1641
  %v1643 = vsel %vm1588, %v1542, 0.0
  %1644 = vadd.xlane.f32.xlu0 %v1643
  %v1645 = vpop.xlane.xlu0 %1644
  %v1646 = vsel %vm1588, %v1543, 0.0
  %1647 = vadd.xlane.f32.xlu0 %v1646
  %v1648 = vpop.xlane.xlu0 %1647
  %v1649 = vsel %vm1588, %v1544, 0.0
  %1650 = vadd.xlane.f32.xlu0 %v1649
  %v1651 = vpop.xlane.xlu0 %1650
  %v1652 = vsel %vm1588, %v1545, 0.0
  %1653 = vadd.xlane.f32.xlu0 %v1652
  %v1654 = vpop.xlane.xlu0 %1653
  %v1655 = vsel %vm1588, %v1546, 0.0
  %1656 = vadd.xlane.f32.xlu0 %v1655
  %v1657 = vpop.xlane.xlu0 %1656
  %v1658 = vsel %vm1588, %v1547, 0.0
  %1659 = vadd.xlane.f32.xlu0 %v1658
  %v1660 = vpop.xlane.xlu0 %1659
  %v1661 = vsel %vm1588, %v1548, 0.0
  %1662 = vadd.xlane.f32.xlu0 %v1661
  %v1663 = vpop.xlane.xlu0 %1662
  %v1664 = vsel %vm1588, %v1549, 0.0
  %1665 = vadd.xlane.f32.xlu0 %v1664
  %v1666 = vpop.xlane.xlu0 %1665
  %v1667 = vsel %vm1588, %v1550, 0.0
  %1668 = vadd.xlane.f32.xlu0 %v1667
  %v1669 = vpop.xlane.xlu0 %1668
  %v1670 = vsel %vm1588, %v1551, 0.0
  %1671 = vadd.xlane.f32.xlu0 %v1670
  %v1672 = vpop.xlane.xlu0 %1671
  %v1673 = vsel %vm1588, %v1552, 0.0
  %1674 = vadd.xlane.f32.xlu0 %v1673
  %v1675 = vpop.xlane.xlu0 %1674
  %v1676 = vsel %vm1588, %v1553, 0.0
  %1677 = vadd.xlane.f32.xlu0 %v1676
  %v1678 = vpop.xlane.xlu0 %1677
  %v1679 = vsel %vm1588, %v1554, 0.0
  %1680 = vadd.xlane.f32.xlu0 %v1679
  %v1681 = vpop.xlane.xlu0 %1680
  %v1682 = vsel %vm1588, %v1555, 0.0
  %1683 = vadd.xlane.f32.xlu0 %v1682
  %v1684 = vpop.xlane.xlu0 %1683
  %v1685 = vsel %vm1588, %v1556, 0.0
  %1686 = vadd.xlane.f32.xlu0 %v1685
  %v1687 = vpop.xlane.xlu0 %1686
  %v1688 = vsel %vm1588, %v1557, 0.0
  %1689 = vadd.xlane.f32.xlu0 %v1688
  %v1690 = vpop.xlane.xlu0 %1689
  %v1691 = vsel %vm1588, %v1558, 0.0
  %1692 = vadd.xlane.f32.xlu0 %v1691
  %v1693 = vpop.xlane.xlu0 %1692
  %v1694 = vsel %vm1588, %v1559, 0.0
  %1695 = vadd.xlane.f32.xlu0 %v1694
  %v1696 = vpop.xlane.xlu0 %1695
  %v1697 = vsel %vm1588, %v1560, 0.0
  %1698 = vadd.xlane.f32.xlu0 %v1697
  %v1699 = vpop.xlane.xlu0 %1698
  %v1700 = vsel %vm1588, %v1561, 0.0
  %1701 = vadd.xlane.f32.xlu0 %v1700
  %v1702 = vpop.xlane.xlu0 %1701
  %v1703 = vsel %vm1588, %v1562, 0.0
  %1704 = vadd.xlane.f32.xlu0 %v1703
  %v1705 = vpop.xlane.xlu0 %1704
  %v1706 = vsel %vm1588, %v1563, 0.0
  %1707 = vadd.xlane.f32.xlu0 %v1706
  %v1708 = vpop.xlane.xlu0 %1707
  %v1709 = vsel %vm1588, %v1564, 0.0
  %1710 = vadd.xlane.f32.xlu0 %v1709
  %v1711 = vpop.xlane.xlu0 %1710
  %v1712 = vsel %vm1588, %v1565, 0.0
  %1713 = vadd.xlane.f32.xlu0 %v1712
  %v1714 = vpop.xlane.xlu0 %1713
  %v1715 = vsel %vm1588, %v1566, 0.0
  %1716 = vadd.xlane.f32.xlu0 %v1715
  %v1717 = vpop.xlane.xlu0 %1716
  %v1718 = vsel %vm1588, %v1567, 0.0
  %1719 = vadd.xlane.f32.xlu0 %v1718
  %v1720 = vpop.xlane.xlu0 %1719
  %v1721 = vsel %vm1588, %v1568, 0.0
  %1722 = vadd.xlane.f32.xlu0 %v1721
  %v1723 = vpop.xlane.xlu0 %1722
  %v1724 = vsel %vm1588, %v1569, 0.0
  %1725 = vadd.xlane.f32.xlu0 %v1724
  %v1726 = vpop.xlane.xlu0 %1725
  %v1727 = vsel %vm1588, %v1570, 0.0
  %1728 = vadd.xlane.f32.xlu0 %v1727
  %v1729 = vpop.xlane.xlu0 %1728
  %v1730 = vsel %vm1588, %v1571, 0.0
  %1731 = vadd.xlane.f32.xlu0 %v1730
  %v1732 = vpop.xlane.xlu0 %1731
  %v1733 = vsel %vm1588, %v1572, 0.0
  %1734 = vadd.xlane.f32.xlu0 %v1733
  %v1735 = vpop.xlane.xlu0 %1734
  %v1736 = vsel %vm1588, %v1573, 0.0
  %1737 = vadd.xlane.f32.xlu0 %v1736
  %v1738 = vpop.xlane.xlu0 %1737
  %v1739 = vsel %vm1588, %v1574, 0.0
  %1740 = vadd.xlane.f32.xlu0 %v1739
  %v1741 = vpop.xlane.xlu0 %1740
  %v1742 = vsel %vm1588, %v1575, 0.0
  %1743 = vadd.xlane.f32.xlu0 %v1742
  %v1744 = vpop.xlane.xlu0 %1743
  %v1745 = vsel %vm1588, %v1576, 0.0
  %1746 = vadd.xlane.f32.xlu0 %v1745
  %v1747 = vpop.xlane.xlu0 %1746
  %v1748 = vsel %vm1588, %v1577, 0.0
  %1749 = vadd.xlane.f32.xlu0 %v1748
  %v1750 = vpop.xlane.xlu0 %1749
  %v1751 = vsel %vm1588, %v1578, 0.0
  %1752 = vadd.xlane.f32.xlu0 %v1751
  %v1753 = vpop.xlane.xlu0 %1752
  %v1754 = vsel %vm1588, %v1579, 0.0
  %1755 = vadd.xlane.f32.xlu0 %v1754
  %v1756 = vpop.xlane.xlu0 %1755
  %v1757 = vsel %vm1588, %v1580, 0.0
  %1758 = vadd.xlane.f32.xlu0 %v1757
  %v1759 = vpop.xlane.xlu0 %1758
  %v1760 = vsel %vm1588, %v1581, 0.0
  %1761 = vadd.xlane.f32.xlu0 %v1760
  %v1762 = vpop.xlane.xlu0 %1761
  %v1763 = vsel %vm1588, %v1582, 0.0
  %1764 = vadd.xlane.f32.xlu0 %v1763
  %v1765 = vpop.xlane.xlu0 %1764
  %v1766 = vsel %vm1588, %v1583, 0.0
  %1767 = vadd.xlane.f32.xlu0 %v1766
  %v1768 = vpop.xlane.xlu0 %1767
  %v1769 = vsel %vm1588, %v1584, 0.0
  %1770 = vadd.xlane.f32.xlu0 %v1769
  %v1771 = vpop.xlane.xlu0 %1770
  %v1772 = vsel %vm1588, %v1585, 0.0
  %1773 = vadd.xlane.f32.xlu0 %v1772
  %v1774 = vpop.xlane.xlu0 %1773
  %v1775 = vsel %vm1588, %v1586, 0.0
  %1776 = vadd.xlane.f32.xlu0 %v1775
  %v1777 = vpop.xlane.xlu0 %1776
  %v1778 = vsel %vm1588, %v1587, 0.0
  %1779 = vadd.xlane.f32.xlu0 %v1778
  %v1780 = vpop.xlane.xlu0 %1779
  %v1781 = vld [vmem:[%s5] sm:$0xff]
  %v1783 = vlaneseq
  %v1784 = vshrl.u32 %v1783, 7
  %v1785 = vsub.s32 0, %v1784
  %v1786 = vrot.slane %v1781, %v1785
  %1788 = vbcast.lane.b32.xlu0 %v1786, 256
  %v1789 = vpop.permute.xlu0 %1788
  %v1790 = vlaneseq
  %v1791 = vshrl.u32 %v1790, 7
  %v1792 = vsub.s32 1, %v1791
  %v1793 = vrot.slane %v1781, %v1792
  %1795 = vbcast.lane.b32.xlu0 %v1793, 256
  %v1796 = vpop.permute.xlu0 %1795
  %v1797 = vlaneseq
  %v1798 = vshrl.u32 %v1797, 7
  %v1799 = vsub.s32 2, %v1798
  %v1800 = vrot.slane %v1781, %v1799
  %1802 = vbcast.lane.b32.xlu0 %v1800, 256
  %v1803 = vpop.permute.xlu0 %1802
  %v1804 = vlaneseq
  %v1805 = vshrl.u32 %v1804, 7
  %v1806 = vsub.s32 3, %v1805
  %v1807 = vrot.slane %v1781, %v1806
  %1809 = vbcast.lane.b32.xlu0 %v1807, 256
  %v1810 = vpop.permute.xlu0 %1809
  %v1811 = vlaneseq
  %v1812 = vshrl.u32 %v1811, 7
  %v1813 = vsub.s32 4, %v1812
  %v1814 = vrot.slane %v1781, %v1813
  %1816 = vbcast.lane.b32.xlu0 %v1814, 256
  %v1817 = vpop.permute.xlu0 %1816
  %v1818 = vlaneseq
  %v1819 = vshrl.u32 %v1818, 7
  %v1820 = vsub.s32 5, %v1819
  %v1821 = vrot.slane %v1781, %v1820
  %1823 = vbcast.lane.b32.xlu0 %v1821, 256
  %v1824 = vpop.permute.xlu0 %1823
  %v1825 = vlaneseq
  %v1826 = vshrl.u32 %v1825, 7
  %v1827 = vsub.s32 6, %v1826
  %v1828 = vrot.slane %v1781, %v1827
  %1830 = vbcast.lane.b32.xlu0 %v1828, 256
  %v1831 = vpop.permute.xlu0 %1830
  %v1832 = vlaneseq
  %v1833 = vshrl.u32 %v1832, 7
  %v1834 = vsub.s32 7, %v1833
  %v1835 = vrot.slane %v1781, %v1834
  %1837 = vbcast.lane.b32.xlu0 %v1835, 256
  %v1838 = vpop.permute.xlu0 %1837
  %v1847 = vadd.f32 %v1591, %v1789
  %v1848 = vadd.f32 %v1594, %v1796
  %v1849 = vadd.f32 %v1597, %v1803
  %v1850 = vadd.f32 %v1600, %v1810
  %v1851 = vadd.f32 %v1603, %v1817
  %v1852 = vadd.f32 %v1606, %v1824
  %v1853 = vadd.f32 %v1609, %v1831
  %v1854 = vadd.f32 %v1612, %v1838
  %v1855 = vadd.f32 %v1615, %v1789
  %v1856 = vadd.f32 %v1618, %v1796
  %v1857 = vadd.f32 %v1621, %v1803
  %v1858 = vadd.f32 %v1624, %v1810
  %v1859 = vadd.f32 %v1627, %v1817
  %v1860 = vadd.f32 %v1630, %v1824
  %v1861 = vadd.f32 %v1633, %v1831
  %v1862 = vadd.f32 %v1636, %v1838
  %v1863 = vadd.f32 %v1639, %v1789
  %v1864 = vadd.f32 %v1642, %v1796
  %v1865 = vadd.f32 %v1645, %v1803
  %v1866 = vadd.f32 %v1648, %v1810
  %v1867 = vadd.f32 %v1651, %v1817
  %v1868 = vadd.f32 %v1654, %v1824
  %v1869 = vadd.f32 %v1657, %v1831
  %v1870 = vadd.f32 %v1660, %v1838
  %v1871 = vadd.f32 %v1663, %v1789
  %v1872 = vadd.f32 %v1666, %v1796
  %v1873 = vadd.f32 %v1669, %v1803
  %v1874 = vadd.f32 %v1672, %v1810
  %v1875 = vadd.f32 %v1675, %v1817
  %v1876 = vadd.f32 %v1678, %v1824
  %v1877 = vadd.f32 %v1681, %v1831
  %v1878 = vadd.f32 %v1684, %v1838
  %v1879 = vadd.f32 %v1687, %v1789
  %v1880 = vadd.f32 %v1690, %v1796
  %v1881 = vadd.f32 %v1693, %v1803
  %v1882 = vadd.f32 %v1696, %v1810
  %v1883 = vadd.f32 %v1699, %v1817
  %v1884 = vadd.f32 %v1702, %v1824
  %v1885 = vadd.f32 %v1705, %v1831
  %v1886 = vadd.f32 %v1708, %v1838
  %v1887 = vadd.f32 %v1711, %v1789
  %v1888 = vadd.f32 %v1714, %v1796
  %v1889 = vadd.f32 %v1717, %v1803
  %v1890 = vadd.f32 %v1720, %v1810
  %v1891 = vadd.f32 %v1723, %v1817
  %v1892 = vadd.f32 %v1726, %v1824
  %v1893 = vadd.f32 %v1729, %v1831
  %v1894 = vadd.f32 %v1732, %v1838
  %v1895 = vadd.f32 %v1735, %v1789
  %v1896 = vadd.f32 %v1738, %v1796
  %v1897 = vadd.f32 %v1741, %v1803
  %v1898 = vadd.f32 %v1744, %v1810
  %v1899 = vadd.f32 %v1747, %v1817
  %v1900 = vadd.f32 %v1750, %v1824
  %v1901 = vadd.f32 %v1753, %v1831
  %v1902 = vadd.f32 %v1756, %v1838
  %v1903 = vadd.f32 %v1759, %v1789
  %v1904 = vadd.f32 %v1762, %v1796
  %v1905 = vadd.f32 %v1765, %v1803
  %v1906 = vadd.f32 %v1768, %v1810
  %v1907 = vadd.f32 %v1771, %v1817
  %v1908 = vadd.f32 %v1774, %v1824
  %v1909 = vadd.f32 %v1777, %v1831
  %v1910 = vadd.f32 %v1780, %v1838
  %1975 = vset.pattern.permute.xlu0 0
  %1976 = vperm.xlu0 %1975, %v1847
  %v1977 = vpop.permute.xlu0 %1976
  %1978 = vset.pattern.permute.xlu0 0
  %1979 = vperm.xlu0 %1978, %v1848
  %v1980 = vpop.permute.xlu0 %1979
  %1981 = vset.pattern.permute.xlu0 0
  %1982 = vperm.xlu0 %1981, %v1849
  %v1983 = vpop.permute.xlu0 %1982
  %1984 = vset.pattern.permute.xlu0 0
  %1985 = vperm.xlu0 %1984, %v1850
  %v1986 = vpop.permute.xlu0 %1985
  %1987 = vset.pattern.permute.xlu0 0
  %1988 = vperm.xlu0 %1987, %v1851
  %v1989 = vpop.permute.xlu0 %1988
  %1990 = vset.pattern.permute.xlu0 0
  %1991 = vperm.xlu0 %1990, %v1852
  %v1992 = vpop.permute.xlu0 %1991
  %1993 = vset.pattern.permute.xlu0 0
  %1994 = vperm.xlu0 %1993, %v1853
  %v1995 = vpop.permute.xlu0 %1994
  %1996 = vset.pattern.permute.xlu0 0
  %1997 = vperm.xlu0 %1996, %v1854
  %v1998 = vpop.permute.xlu0 %1997
  %1999 = vset.pattern.permute.xlu0 0
  %2000 = vperm.xlu0 %1999, %v1855
  %v2001 = vpop.permute.xlu0 %2000
  %2002 = vset.pattern.permute.xlu0 0
  %2003 = vperm.xlu0 %2002, %v1856
  %v2004 = vpop.permute.xlu0 %2003
  %2005 = vset.pattern.permute.xlu0 0
  %2006 = vperm.xlu0 %2005, %v1857
  %v2007 = vpop.permute.xlu0 %2006
  %2008 = vset.pattern.permute.xlu0 0
  %2009 = vperm.xlu0 %2008, %v1858
  %v2010 = vpop.permute.xlu0 %2009
  %2011 = vset.pattern.permute.xlu0 0
  %2012 = vperm.xlu0 %2011, %v1859
  %v2013 = vpop.permute.xlu0 %2012
  %2014 = vset.pattern.permute.xlu0 0
  %2015 = vperm.xlu0 %2014, %v1860
  %v2016 = vpop.permute.xlu0 %2015
  %2017 = vset.pattern.permute.xlu0 0
  %2018 = vperm.xlu0 %2017, %v1861
  %v2019 = vpop.permute.xlu0 %2018
  %2020 = vset.pattern.permute.xlu0 0
  %2021 = vperm.xlu0 %2020, %v1862
  %v2022 = vpop.permute.xlu0 %2021
  %2023 = vset.pattern.permute.xlu0 0
  %2024 = vperm.xlu0 %2023, %v1863
  %v2025 = vpop.permute.xlu0 %2024
  %2026 = vset.pattern.permute.xlu0 0
  %2027 = vperm.xlu0 %2026, %v1864
  %v2028 = vpop.permute.xlu0 %2027
  %2029 = vset.pattern.permute.xlu0 0
  %2030 = vperm.xlu0 %2029, %v1865
  %v2031 = vpop.permute.xlu0 %2030
  %2032 = vset.pattern.permute.xlu0 0
  %2033 = vperm.xlu0 %2032, %v1866
  %v2034 = vpop.permute.xlu0 %2033
  %2035 = vset.pattern.permute.xlu0 0
  %2036 = vperm.xlu0 %2035, %v1867
  %v2037 = vpop.permute.xlu0 %2036
  %2038 = vset.pattern.permute.xlu0 0
  %2039 = vperm.xlu0 %2038, %v1868
  %v2040 = vpop.permute.xlu0 %2039
  %2041 = vset.pattern.permute.xlu0 0
  %2042 = vperm.xlu0 %2041, %v1869
  %v2043 = vpop.permute.xlu0 %2042
  %2044 = vset.pattern.permute.xlu0 0
  %2045 = vperm.xlu0 %2044, %v1870
  %v2046 = vpop.permute.xlu0 %2045
  %2047 = vset.pattern.permute.xlu0 0
  %2048 = vperm.xlu0 %2047, %v1871
  %v2049 = vpop.permute.xlu0 %2048
  %2050 = vset.pattern.permute.xlu0 0
  %2051 = vperm.xlu0 %2050, %v1872
  %v2052 = vpop.permute.xlu0 %2051
  %2053 = vset.pattern.permute.xlu0 0
  %2054 = vperm.xlu0 %2053, %v1873
  %v2055 = vpop.permute.xlu0 %2054
  %2056 = vset.pattern.permute.xlu0 0
  %2057 = vperm.xlu0 %2056, %v1874
  %v2058 = vpop.permute.xlu0 %2057
  %2059 = vset.pattern.permute.xlu0 0
  %2060 = vperm.xlu0 %2059, %v1875
  %v2061 = vpop.permute.xlu0 %2060
  %2062 = vset.pattern.permute.xlu0 0
  %2063 = vperm.xlu0 %2062, %v1876
  %v2064 = vpop.permute.xlu0 %2063
  %2065 = vset.pattern.permute.xlu0 0
  %2066 = vperm.xlu0 %2065, %v1877
  %v2067 = vpop.permute.xlu0 %2066
  %2068 = vset.pattern.permute.xlu0 0
  %2069 = vperm.xlu0 %2068, %v1878
  %v2070 = vpop.permute.xlu0 %2069
  %2071 = vset.pattern.permute.xlu0 0
  %2072 = vperm.xlu0 %2071, %v1879
  %v2073 = vpop.permute.xlu0 %2072
  %2074 = vset.pattern.permute.xlu0 0
  %2075 = vperm.xlu0 %2074, %v1880
  %v2076 = vpop.permute.xlu0 %2075
  %2077 = vset.pattern.permute.xlu0 0
  %2078 = vperm.xlu0 %2077, %v1881
  %v2079 = vpop.permute.xlu0 %2078
  %2080 = vset.pattern.permute.xlu0 0
  %2081 = vperm.xlu0 %2080, %v1882
  %v2082 = vpop.permute.xlu0 %2081
  %2083 = vset.pattern.permute.xlu0 0
  %2084 = vperm.xlu0 %2083, %v1883
  %v2085 = vpop.permute.xlu0 %2084
  %2086 = vset.pattern.permute.xlu0 0
  %2087 = vperm.xlu0 %2086, %v1884
  %v2088 = vpop.permute.xlu0 %2087
  %2089 = vset.pattern.permute.xlu0 0
  %2090 = vperm.xlu0 %2089, %v1885
  %v2091 = vpop.permute.xlu0 %2090
  %2092 = vset.pattern.permute.xlu0 0
  %2093 = vperm.xlu0 %2092, %v1886
  %v2094 = vpop.permute.xlu0 %2093
  %2095 = vset.pattern.permute.xlu0 0
  %2096 = vperm.xlu0 %2095, %v1887
  %v2097 = vpop.permute.xlu0 %2096
  %2098 = vset.pattern.permute.xlu0 0
  %2099 = vperm.xlu0 %2098, %v1888
  %v2100 = vpop.permute.xlu0 %2099
  %2101 = vset.pattern.permute.xlu0 0
  %2102 = vperm.xlu0 %2101, %v1889
  %v2103 = vpop.permute.xlu0 %2102
  %2104 = vset.pattern.permute.xlu0 0
  %2105 = vperm.xlu0 %2104, %v1890
  %v2106 = vpop.permute.xlu0 %2105
  %2107 = vset.pattern.permute.xlu0 0
  %2108 = vperm.xlu0 %2107, %v1891
  %v2109 = vpop.permute.xlu0 %2108
  %2110 = vset.pattern.permute.xlu0 0
  %2111 = vperm.xlu0 %2110, %v1892
  %v2112 = vpop.permute.xlu0 %2111
  %2113 = vset.pattern.permute.xlu0 0
  %2114 = vperm.xlu0 %2113, %v1893
  %v2115 = vpop.permute.xlu0 %2114
  %2116 = vset.pattern.permute.xlu0 0
  %2117 = vperm.xlu0 %2116, %v1894
  %v2118 = vpop.permute.xlu0 %2117
  %2119 = vset.pattern.permute.xlu0 0
  %2120 = vperm.xlu0 %2119, %v1895
  %v2121 = vpop.permute.xlu0 %2120
  %2122 = vset.pattern.permute.xlu0 0
  %2123 = vperm.xlu0 %2122, %v1896
  %v2124 = vpop.permute.xlu0 %2123
  %2125 = vset.pattern.permute.xlu0 0
  %2126 = vperm.xlu0 %2125, %v1897
  %v2127 = vpop.permute.xlu0 %2126
  %2128 = vset.pattern.permute.xlu0 0
  %2129 = vperm.xlu0 %2128, %v1898
  %v2130 = vpop.permute.xlu0 %2129
  %2131 = vset.pattern.permute.xlu0 0
  %2132 = vperm.xlu0 %2131, %v1899
  %v2133 = vpop.permute.xlu0 %2132
  %2134 = vset.pattern.permute.xlu0 0
  %2135 = vperm.xlu0 %2134, %v1900
  %v2136 = vpop.permute.xlu0 %2135
  %2137 = vset.pattern.permute.xlu0 0
  %2138 = vperm.xlu0 %2137, %v1901
  %v2139 = vpop.permute.xlu0 %2138
  %2140 = vset.pattern.permute.xlu0 0
  %2141 = vperm.xlu0 %2140, %v1902
  %v2142 = vpop.permute.xlu0 %2141
  %2143 = vset.pattern.permute.xlu0 0
  %2144 = vperm.xlu0 %2143, %v1903
  %v2145 = vpop.permute.xlu0 %2144
  %2146 = vset.pattern.permute.xlu0 0
  %2147 = vperm.xlu0 %2146, %v1904
  %v2148 = vpop.permute.xlu0 %2147
  %2149 = vset.pattern.permute.xlu0 0
  %2150 = vperm.xlu0 %2149, %v1905
  %v2151 = vpop.permute.xlu0 %2150
  %2152 = vset.pattern.permute.xlu0 0
  %2153 = vperm.xlu0 %2152, %v1906
  %v2154 = vpop.permute.xlu0 %2153
  %2155 = vset.pattern.permute.xlu0 0
  %2156 = vperm.xlu0 %2155, %v1907
  %v2157 = vpop.permute.xlu0 %2156
  %2158 = vset.pattern.permute.xlu0 0
  %2159 = vperm.xlu0 %2158, %v1908
  %v2160 = vpop.permute.xlu0 %2159
  %2161 = vset.pattern.permute.xlu0 0
  %2162 = vperm.xlu0 %2161, %v1909
  %v2163 = vpop.permute.xlu0 %2162
  %2164 = vset.pattern.permute.xlu0 0
  %2165 = vperm.xlu0 %2164, %v1910
  %v2166 = vpop.permute.xlu0 %2165
  %v2167 = vlaneseq
  %v2168 = vand.u32 %v2167, 127
  %v2169 = vlaneseq
  %v2170 = vshrl.u32 %v2169, 7
  %v2171 = vsub.s32 %v2168, %v2170
  %v2172 = vrot.slane %v1977, %v2171
  %v2173 = vlaneseq
  %v2174 = vshrl.u32 %v2173, 7
  %v2175 = vsub.s32 %v2168, %v2174
  %v2176 = vrot.slane %v1980, %v2175
  %v2177 = vlaneseq
  %v2178 = vshrl.u32 %v2177, 7
  %v2179 = vsub.s32 %v2168, %v2178
  %v2180 = vrot.slane %v1983, %v2179
  %v2181 = vlaneseq
  %v2182 = vshrl.u32 %v2181, 7
  %v2183 = vsub.s32 %v2168, %v2182
  %v2184 = vrot.slane %v1986, %v2183
  %v2185 = vlaneseq
  %v2186 = vshrl.u32 %v2185, 7
  %v2187 = vsub.s32 %v2168, %v2186
  %v2188 = vrot.slane %v1989, %v2187
  %v2189 = vlaneseq
  %v2190 = vshrl.u32 %v2189, 7
  %v2191 = vsub.s32 %v2168, %v2190
  %v2192 = vrot.slane %v1992, %v2191
  %v2193 = vlaneseq
  %v2194 = vshrl.u32 %v2193, 7
  %v2195 = vsub.s32 %v2168, %v2194
  %v2196 = vrot.slane %v1995, %v2195
  %v2197 = vlaneseq
  %v2198 = vshrl.u32 %v2197, 7
  %v2199 = vsub.s32 %v2168, %v2198
  %v2200 = vrot.slane %v1998, %v2199
  %v2201 = vlaneseq
  %v2202 = vshrl.u32 %v2201, 7
  %v2203 = vsub.s32 %v2168, %v2202
  %v2204 = vrot.slane %v2001, %v2203
  %v2205 = vlaneseq
  %v2206 = vshrl.u32 %v2205, 7
  %v2207 = vsub.s32 %v2168, %v2206
  %v2208 = vrot.slane %v2004, %v2207
  %v2209 = vlaneseq
  %v2210 = vshrl.u32 %v2209, 7
  %v2211 = vsub.s32 %v2168, %v2210
  %v2212 = vrot.slane %v2007, %v2211
  %v2213 = vlaneseq
  %v2214 = vshrl.u32 %v2213, 7
  %v2215 = vsub.s32 %v2168, %v2214
  %v2216 = vrot.slane %v2010, %v2215
  %v2217 = vlaneseq
  %v2218 = vshrl.u32 %v2217, 7
  %v2219 = vsub.s32 %v2168, %v2218
  %v2220 = vrot.slane %v2013, %v2219
  %v2221 = vlaneseq
  %v2222 = vshrl.u32 %v2221, 7
  %v2223 = vsub.s32 %v2168, %v2222
  %v2224 = vrot.slane %v2016, %v2223
  %v2225 = vlaneseq
  %v2226 = vshrl.u32 %v2225, 7
  %v2227 = vsub.s32 %v2168, %v2226
  %v2228 = vrot.slane %v2019, %v2227
  %v2229 = vlaneseq
  %v2230 = vshrl.u32 %v2229, 7
  %v2231 = vsub.s32 %v2168, %v2230
  %v2232 = vrot.slane %v2022, %v2231
  %v2233 = vlaneseq
  %v2234 = vshrl.u32 %v2233, 7
  %v2235 = vsub.s32 %v2168, %v2234
  %v2236 = vrot.slane %v2025, %v2235
  %v2237 = vlaneseq
  %v2238 = vshrl.u32 %v2237, 7
  %v2239 = vsub.s32 %v2168, %v2238
  %v2240 = vrot.slane %v2028, %v2239
  %v2241 = vlaneseq
  %v2242 = vshrl.u32 %v2241, 7
  %v2243 = vsub.s32 %v2168, %v2242
  %v2244 = vrot.slane %v2031, %v2243
  %v2245 = vlaneseq
  %v2246 = vshrl.u32 %v2245, 7
  %v2247 = vsub.s32 %v2168, %v2246
  %v2248 = vrot.slane %v2034, %v2247
  %v2249 = vlaneseq
  %v2250 = vshrl.u32 %v2249, 7
  %v2251 = vsub.s32 %v2168, %v2250
  %v2252 = vrot.slane %v2037, %v2251
  %v2253 = vlaneseq
  %v2254 = vshrl.u32 %v2253, 7
  %v2255 = vsub.s32 %v2168, %v2254
  %v2256 = vrot.slane %v2040, %v2255
  %v2257 = vlaneseq
  %v2258 = vshrl.u32 %v2257, 7
  %v2259 = vsub.s32 %v2168, %v2258
  %v2260 = vrot.slane %v2043, %v2259
  %v2261 = vlaneseq
  %v2262 = vshrl.u32 %v2261, 7
  %v2263 = vsub.s32 %v2168, %v2262
  %v2264 = vrot.slane %v2046, %v2263
  %v2265 = vlaneseq
  %v2266 = vshrl.u32 %v2265, 7
  %v2267 = vsub.s32 %v2168, %v2266
  %v2268 = vrot.slane %v2049, %v2267
  %v2269 = vlaneseq
  %v2270 = vshrl.u32 %v2269, 7
  %v2271 = vsub.s32 %v2168, %v2270
  %v2272 = vrot.slane %v2052, %v2271
  %v2273 = vlaneseq
  %v2274 = vshrl.u32 %v2273, 7
  %v2275 = vsub.s32 %v2168, %v2274
  %v2276 = vrot.slane %v2055, %v2275
  %v2277 = vlaneseq
  %v2278 = vshrl.u32 %v2277, 7
  %v2279 = vsub.s32 %v2168, %v2278
  %v2280 = vrot.slane %v2058, %v2279
  %v2281 = vlaneseq
  %v2282 = vshrl.u32 %v2281, 7
  %v2283 = vsub.s32 %v2168, %v2282
  %v2284 = vrot.slane %v2061, %v2283
  %v2285 = vlaneseq
  %v2286 = vshrl.u32 %v2285, 7
  %v2287 = vsub.s32 %v2168, %v2286
  %v2288 = vrot.slane %v2064, %v2287
  %v2289 = vlaneseq
  %v2290 = vshrl.u32 %v2289, 7
  %v2291 = vsub.s32 %v2168, %v2290
  %v2292 = vrot.slane %v2067, %v2291
  %v2293 = vlaneseq
  %v2294 = vshrl.u32 %v2293, 7
  %v2295 = vsub.s32 %v2168, %v2294
  %v2296 = vrot.slane %v2070, %v2295
  %v2297 = vlaneseq
  %v2298 = vshrl.u32 %v2297, 7
  %v2299 = vsub.s32 %v2168, %v2298
  %v2300 = vrot.slane %v2073, %v2299
  %v2301 = vlaneseq
  %v2302 = vshrl.u32 %v2301, 7
  %v2303 = vsub.s32 %v2168, %v2302
  %v2304 = vrot.slane %v2076, %v2303
  %v2305 = vlaneseq
  %v2306 = vshrl.u32 %v2305, 7
  %v2307 = vsub.s32 %v2168, %v2306
  %v2308 = vrot.slane %v2079, %v2307
  %v2309 = vlaneseq
  %v2310 = vshrl.u32 %v2309, 7
  %v2311 = vsub.s32 %v2168, %v2310
  %v2312 = vrot.slane %v2082, %v2311
  %v2313 = vlaneseq
  %v2314 = vshrl.u32 %v2313, 7
  %v2315 = vsub.s32 %v2168, %v2314
  %v2316 = vrot.slane %v2085, %v2315
  %v2317 = vlaneseq
  %v2318 = vshrl.u32 %v2317, 7
  %v2319 = vsub.s32 %v2168, %v2318
  %v2320 = vrot.slane %v2088, %v2319
  %v2321 = vlaneseq
  %v2322 = vshrl.u32 %v2321, 7
  %v2323 = vsub.s32 %v2168, %v2322
  %v2324 = vrot.slane %v2091, %v2323
  %v2325 = vlaneseq
  %v2326 = vshrl.u32 %v2325, 7
  %v2327 = vsub.s32 %v2168, %v2326
  %v2328 = vrot.slane %v2094, %v2327
  %v2329 = vlaneseq
  %v2330 = vshrl.u32 %v2329, 7
  %v2331 = vsub.s32 %v2168, %v2330
  %v2332 = vrot.slane %v2097, %v2331
  %v2333 = vlaneseq
  %v2334 = vshrl.u32 %v2333, 7
  %v2335 = vsub.s32 %v2168, %v2334
  %v2336 = vrot.slane %v2100, %v2335
  %v2337 = vlaneseq
  %v2338 = vshrl.u32 %v2337, 7
  %v2339 = vsub.s32 %v2168, %v2338
  %v2340 = vrot.slane %v2103, %v2339
  %v2341 = vlaneseq
  %v2342 = vshrl.u32 %v2341, 7
  %v2343 = vsub.s32 %v2168, %v2342
  %v2344 = vrot.slane %v2106, %v2343
  %v2345 = vlaneseq
  %v2346 = vshrl.u32 %v2345, 7
  %v2347 = vsub.s32 %v2168, %v2346
  %v2348 = vrot.slane %v2109, %v2347
  %v2349 = vlaneseq
  %v2350 = vshrl.u32 %v2349, 7
  %v2351 = vsub.s32 %v2168, %v2350
  %v2352 = vrot.slane %v2112, %v2351
  %v2353 = vlaneseq
  %v2354 = vshrl.u32 %v2353, 7
  %v2355 = vsub.s32 %v2168, %v2354
  %v2356 = vrot.slane %v2115, %v2355
  %v2357 = vlaneseq
  %v2358 = vshrl.u32 %v2357, 7
  %v2359 = vsub.s32 %v2168, %v2358
  %v2360 = vrot.slane %v2118, %v2359
  %v2361 = vlaneseq
  %v2362 = vshrl.u32 %v2361, 7
  %v2363 = vsub.s32 %v2168, %v2362
  %v2364 = vrot.slane %v2121, %v2363
  %v2365 = vlaneseq
  %v2366 = vshrl.u32 %v2365, 7
  %v2367 = vsub.s32 %v2168, %v2366
  %v2368 = vrot.slane %v2124, %v2367
  %v2369 = vlaneseq
  %v2370 = vshrl.u32 %v2369, 7
  %v2371 = vsub.s32 %v2168, %v2370
  %v2372 = vrot.slane %v2127, %v2371
  %v2373 = vlaneseq
  %v2374 = vshrl.u32 %v2373, 7
  %v2375 = vsub.s32 %v2168, %v2374
  %v2376 = vrot.slane %v2130, %v2375
  %v2377 = vlaneseq
  %v2378 = vshrl.u32 %v2377, 7
  %v2379 = vsub.s32 %v2168, %v2378
  %v2380 = vrot.slane %v2133, %v2379
  %v2381 = vlaneseq
  %v2382 = vshrl.u32 %v2381, 7
  %v2383 = vsub.s32 %v2168, %v2382
  %v2384 = vrot.slane %v2136, %v2383
  %v2385 = vlaneseq
  %v2386 = vshrl.u32 %v2385, 7
  %v2387 = vsub.s32 %v2168, %v2386
  %v2388 = vrot.slane %v2139, %v2387
  %v2389 = vlaneseq
  %v2390 = vshrl.u32 %v2389, 7
  %v2391 = vsub.s32 %v2168, %v2390
  %v2392 = vrot.slane %v2142, %v2391
  %v2393 = vlaneseq
  %v2394 = vshrl.u32 %v2393, 7
  %v2395 = vsub.s32 %v2168, %v2394
  %v2396 = vrot.slane %v2145, %v2395
  %v2397 = vlaneseq
  %v2398 = vshrl.u32 %v2397, 7
  %v2399 = vsub.s32 %v2168, %v2398
  %v2400 = vrot.slane %v2148, %v2399
  %v2401 = vlaneseq
  %v2402 = vshrl.u32 %v2401, 7
  %v2403 = vsub.s32 %v2168, %v2402
  %v2404 = vrot.slane %v2151, %v2403
  %v2405 = vlaneseq
  %v2406 = vshrl.u32 %v2405, 7
  %v2407 = vsub.s32 %v2168, %v2406
  %v2408 = vrot.slane %v2154, %v2407
  %v2409 = vlaneseq
  %v2410 = vshrl.u32 %v2409, 7
  %v2411 = vsub.s32 %v2168, %v2410
  %v2412 = vrot.slane %v2157, %v2411
  %v2413 = vlaneseq
  %v2414 = vshrl.u32 %v2413, 7
  %v2415 = vsub.s32 %v2168, %v2414
  %v2416 = vrot.slane %v2160, %v2415
  %v2417 = vlaneseq
  %v2418 = vshrl.u32 %v2417, 7
  %v2419 = vsub.s32 %v2168, %v2418
  %v2420 = vrot.slane %v2163, %v2419
  %v2421 = vlaneseq
  %v2422 = vshrl.u32 %v2421, 7
  %v2423 = vsub.s32 %v2168, %v2422
  %v2424 = vrot.slane %v2166, %v2423
  %vm2425 = vcmask 1041409
  %v2426 = vsel %vm2425, %v2176, %v2172
  %vm2427 = vcmask 1042434
  %v2428 = vsel %vm2427, %v2180, %v2426
  %vm2429 = vcmask 1043459
  %v2430 = vsel %vm2429, %v2184, %v2428
  %vm2431 = vcmask 1044484
  %v2432 = vsel %vm2431, %v2188, %v2430
  %vm2433 = vcmask 1045509
  %v2434 = vsel %vm2433, %v2192, %v2432
  %vm2435 = vcmask 1046534
  %v2436 = vsel %vm2435, %v2196, %v2434
  %vm2437 = vcmask 1047559
  %v2438 = vsel %vm2437, %v2200, %v2436
  %v2439 = vsel %vm2425, %v2208, %v2204
  %v2440 = vsel %vm2427, %v2212, %v2439
  %v2441 = vsel %vm2429, %v2216, %v2440
  %v2442 = vsel %vm2431, %v2220, %v2441
  %v2443 = vsel %vm2433, %v2224, %v2442
  %v2444 = vsel %vm2435, %v2228, %v2443
  %v2445 = vsel %vm2437, %v2232, %v2444
  %v2446 = vsel %vm2425, %v2240, %v2236
  %v2447 = vsel %vm2427, %v2244, %v2446
  %v2448 = vsel %vm2429, %v2248, %v2447
  %v2449 = vsel %vm2431, %v2252, %v2448
  %v2450 = vsel %vm2433, %v2256, %v2449
  %v2451 = vsel %vm2435, %v2260, %v2450
  %v2452 = vsel %vm2437, %v2264, %v2451
  %v2453 = vsel %vm2425, %v2272, %v2268
  %v2454 = vsel %vm2427, %v2276, %v2453
  %v2455 = vsel %vm2429, %v2280, %v2454
  %v2456 = vsel %vm2431, %v2284, %v2455
  %v2457 = vsel %vm2433, %v2288, %v2456
  %v2458 = vsel %vm2435, %v2292, %v2457
  %v2459 = vsel %vm2437, %v2296, %v2458
  %v2460 = vsel %vm2425, %v2304, %v2300
  %v2461 = vsel %vm2427, %v2308, %v2460
  %v2462 = vsel %vm2429, %v2312, %v2461
  %v2463 = vsel %vm2431, %v2316, %v2462
  %v2464 = vsel %vm2433, %v2320, %v2463
  %v2465 = vsel %vm2435, %v2324, %v2464
  %v2466 = vsel %vm2437, %v2328, %v2465
  %v2467 = vsel %vm2425, %v2336, %v2332
  %v2468 = vsel %vm2427, %v2340, %v2467
  %v2469 = vsel %vm2429, %v2344, %v2468
  %v2470 = vsel %vm2431, %v2348, %v2469
  %v2471 = vsel %vm2433, %v2352, %v2470
  %v2472 = vsel %vm2435, %v2356, %v2471
  %v2473 = vsel %vm2437, %v2360, %v2472
  %v2474 = vsel %vm2425, %v2368, %v2364
  %v2475 = vsel %vm2427, %v2372, %v2474
  %v2476 = vsel %vm2429, %v2376, %v2475
  %v2477 = vsel %vm2431, %v2380, %v2476
  %v2478 = vsel %vm2433, %v2384, %v2477
  %v2479 = vsel %vm2435, %v2388, %v2478
  %v2480 = vsel %vm2437, %v2392, %v2479
  %v2481 = vsel %vm2425, %v2400, %v2396
  %v2482 = vsel %vm2427, %v2404, %v2481
  %v2483 = vsel %vm2429, %v2408, %v2482
  %v2484 = vsel %vm2431, %v2412, %v2483
  %v2485 = vsel %vm2433, %v2416, %v2484
  %v2486 = vsel %vm2435, %v2420, %v2485
  %v2487 = vsel %vm2437, %v2424, %v2486
  %vm2496 = vcmask 64512
  %v2497 = vsel %vm2496, %v2438, -inf
  %2498 = vmax.xlane.f32.xlu0 %v2497
  %v2499 = vpop.xlane.xlu0 %2498
  %v2500 = vsel %vm2496, %v2445, -inf
  %2501 = vmax.xlane.f32.xlu0 %v2500
  %v2502 = vpop.xlane.xlu0 %2501
  %v2503 = vsel %vm2496, %v2452, -inf
  %2504 = vmax.xlane.f32.xlu0 %v2503
  %v2505 = vpop.xlane.xlu0 %2504
  %v2506 = vsel %vm2496, %v2459, -inf
  %2507 = vmax.xlane.f32.xlu0 %v2506
  %v2508 = vpop.xlane.xlu0 %2507
  %v2509 = vsel %vm2496, %v2466, -inf
  %2510 = vmax.xlane.f32.xlu0 %v2509
  %v2511 = vpop.xlane.xlu0 %2510
  %v2512 = vsel %vm2496, %v2473, -inf
  %2513 = vmax.xlane.f32.xlu0 %v2512
  %v2514 = vpop.xlane.xlu0 %2513
  %v2515 = vsel %vm2496, %v2480, -inf
  %2516 = vmax.xlane.f32.xlu0 %v2515
  %v2517 = vpop.xlane.xlu0 %2516
  %v2518 = vsel %vm2496, %v2487, -inf
  %2519 = vmax.xlane.f32.xlu0 %v2518
  %v2520 = vpop.xlane.xlu0 %2519
  %v2529 = vlaneseq
  %v2530 = vshrl.u32 %v2529, 7
  %v2531 = vsub.s32 0, %v2530
  %v2532 = vrot.slane %v2499, %v2531
  %v2533 = vlaneseq
  %v2534 = vshrl.u32 %v2533, 7
  %v2535 = vsub.s32 1, %v2534
  %v2536 = vrot.slane %v2499, %v2535
  %v2537 = vlaneseq
  %v2538 = vshrl.u32 %v2537, 7
  %v2539 = vsub.s32 2, %v2538
  %v2540 = vrot.slane %v2499, %v2539
  %v2541 = vlaneseq
  %v2542 = vshrl.u32 %v2541, 7
  %v2543 = vsub.s32 3, %v2542
  %v2544 = vrot.slane %v2499, %v2543
  %v2545 = vlaneseq
  %v2546 = vshrl.u32 %v2545, 7
  %v2547 = vsub.s32 4, %v2546
  %v2548 = vrot.slane %v2499, %v2547
  %v2549 = vlaneseq
  %v2550 = vshrl.u32 %v2549, 7
  %v2551 = vsub.s32 5, %v2550
  %v2552 = vrot.slane %v2499, %v2551
  %v2553 = vlaneseq
  %v2554 = vshrl.u32 %v2553, 7
  %v2555 = vsub.s32 6, %v2554
  %v2556 = vrot.slane %v2499, %v2555
  %v2557 = vlaneseq
  %v2558 = vshrl.u32 %v2557, 7
  %v2559 = vsub.s32 7, %v2558
  %v2560 = vrot.slane %v2499, %v2559
  %v2561 = vlaneseq
  %v2562 = vshrl.u32 %v2561, 7
  %v2563 = vsub.s32 0, %v2562
  %v2564 = vrot.slane %v2502, %v2563
  %v2565 = vlaneseq
  %v2566 = vshrl.u32 %v2565, 7
  %v2567 = vsub.s32 1, %v2566
  %v2568 = vrot.slane %v2502, %v2567
  %v2569 = vlaneseq
  %v2570 = vshrl.u32 %v2569, 7
  %v2571 = vsub.s32 2, %v2570
  %v2572 = vrot.slane %v2502, %v2571
  %v2573 = vlaneseq
  %v2574 = vshrl.u32 %v2573, 7
  %v2575 = vsub.s32 3, %v2574
  %v2576 = vrot.slane %v2502, %v2575
  %v2577 = vlaneseq
  %v2578 = vshrl.u32 %v2577, 7
  %v2579 = vsub.s32 4, %v2578
  %v2580 = vrot.slane %v2502, %v2579
  %v2581 = vlaneseq
  %v2582 = vshrl.u32 %v2581, 7
  %v2583 = vsub.s32 5, %v2582
  %v2584 = vrot.slane %v2502, %v2583
  %v2585 = vlaneseq
  %v2586 = vshrl.u32 %v2585, 7
  %v2587 = vsub.s32 6, %v2586
  %v2588 = vrot.slane %v2502, %v2587
  %v2589 = vlaneseq
  %v2590 = vshrl.u32 %v2589, 7
  %v2591 = vsub.s32 7, %v2590
  %v2592 = vrot.slane %v2502, %v2591
  %v2593 = vlaneseq
  %v2594 = vshrl.u32 %v2593, 7
  %v2595 = vsub.s32 0, %v2594
  %v2596 = vrot.slane %v2505, %v2595
  %v2597 = vlaneseq
  %v2598 = vshrl.u32 %v2597, 7
  %v2599 = vsub.s32 1, %v2598
  %v2600 = vrot.slane %v2505, %v2599
  %v2601 = vlaneseq
  %v2602 = vshrl.u32 %v2601, 7
  %v2603 = vsub.s32 2, %v2602
  %v2604 = vrot.slane %v2505, %v2603
  %v2605 = vlaneseq
  %v2606 = vshrl.u32 %v2605, 7
  %v2607 = vsub.s32 3, %v2606
  %v2608 = vrot.slane %v2505, %v2607
  %v2609 = vlaneseq
  %v2610 = vshrl.u32 %v2609, 7
  %v2611 = vsub.s32 4, %v2610
  %v2612 = vrot.slane %v2505, %v2611
  %v2613 = vlaneseq
  %v2614 = vshrl.u32 %v2613, 7
  %v2615 = vsub.s32 5, %v2614
  %v2616 = vrot.slane %v2505, %v2615
  %v2617 = vlaneseq
  %v2618 = vshrl.u32 %v2617, 7
  %v2619 = vsub.s32 6, %v2618
  %v2620 = vrot.slane %v2505, %v2619
  %v2621 = vlaneseq
  %v2622 = vshrl.u32 %v2621, 7
  %v2623 = vsub.s32 7, %v2622
  %v2624 = vrot.slane %v2505, %v2623
  %v2625 = vlaneseq
  %v2626 = vshrl.u32 %v2625, 7
  %v2627 = vsub.s32 0, %v2626
  %v2628 = vrot.slane %v2508, %v2627
  %v2629 = vlaneseq
  %v2630 = vshrl.u32 %v2629, 7
  %v2631 = vsub.s32 1, %v2630
  %v2632 = vrot.slane %v2508, %v2631
  %v2633 = vlaneseq
  %v2634 = vshrl.u32 %v2633, 7
  %v2635 = vsub.s32 2, %v2634
  %v2636 = vrot.slane %v2508, %v2635
  %v2637 = vlaneseq
  %v2638 = vshrl.u32 %v2637, 7
  %v2639 = vsub.s32 3, %v2638
  %v2640 = vrot.slane %v2508, %v2639
  %v2641 = vlaneseq
  %v2642 = vshrl.u32 %v2641, 7
  %v2643 = vsub.s32 4, %v2642
  %v2644 = vrot.slane %v2508, %v2643
  %v2645 = vlaneseq
  %v2646 = vshrl.u32 %v2645, 7
  %v2647 = vsub.s32 5, %v2646
  %v2648 = vrot.slane %v2508, %v2647
  %v2649 = vlaneseq
  %v2650 = vshrl.u32 %v2649, 7
  %v2651 = vsub.s32 6, %v2650
  %v2652 = vrot.slane %v2508, %v2651
  %v2653 = vlaneseq
  %v2654 = vshrl.u32 %v2653, 7
  %v2655 = vsub.s32 7, %v2654
  %v2656 = vrot.slane %v2508, %v2655
  %v2657 = vlaneseq
  %v2658 = vshrl.u32 %v2657, 7
  %v2659 = vsub.s32 0, %v2658
  %v2660 = vrot.slane %v2511, %v2659
  %v2661 = vlaneseq
  %v2662 = vshrl.u32 %v2661, 7
  %v2663 = vsub.s32 1, %v2662
  %v2664 = vrot.slane %v2511, %v2663
  %v2665 = vlaneseq
  %v2666 = vshrl.u32 %v2665, 7
  %v2667 = vsub.s32 2, %v2666
  %v2668 = vrot.slane %v2511, %v2667
  %v2669 = vlaneseq
  %v2670 = vshrl.u32 %v2669, 7
  %v2671 = vsub.s32 3, %v2670
  %v2672 = vrot.slane %v2511, %v2671
  %v2673 = vlaneseq
  %v2674 = vshrl.u32 %v2673, 7
  %v2675 = vsub.s32 4, %v2674
  %v2676 = vrot.slane %v2511, %v2675
  %v2677 = vlaneseq
  %v2678 = vshrl.u32 %v2677, 7
  %v2679 = vsub.s32 5, %v2678
  %v2680 = vrot.slane %v2511, %v2679
  %v2681 = vlaneseq
  %v2682 = vshrl.u32 %v2681, 7
  %v2683 = vsub.s32 6, %v2682
  %v2684 = vrot.slane %v2511, %v2683
  %v2685 = vlaneseq
  %v2686 = vshrl.u32 %v2685, 7
  %v2687 = vsub.s32 7, %v2686
  %v2688 = vrot.slane %v2511, %v2687
  %v2689 = vlaneseq
  %v2690 = vshrl.u32 %v2689, 7
  %v2691 = vsub.s32 0, %v2690
  %v2692 = vrot.slane %v2514, %v2691
  %v2693 = vlaneseq
  %v2694 = vshrl.u32 %v2693, 7
  %v2695 = vsub.s32 1, %v2694
  %v2696 = vrot.slane %v2514, %v2695
  %v2697 = vlaneseq
  %v2698 = vshrl.u32 %v2697, 7
  %v2699 = vsub.s32 2, %v2698
  %v2700 = vrot.slane %v2514, %v2699
  %v2701 = vlaneseq
  %v2702 = vshrl.u32 %v2701, 7
  %v2703 = vsub.s32 3, %v2702
  %v2704 = vrot.slane %v2514, %v2703
  %v2705 = vlaneseq
  %v2706 = vshrl.u32 %v2705, 7
  %v2707 = vsub.s32 4, %v2706
  %v2708 = vrot.slane %v2514, %v2707
  %v2709 = vlaneseq
  %v2710 = vshrl.u32 %v2709, 7
  %v2711 = vsub.s32 5, %v2710
  %v2712 = vrot.slane %v2514, %v2711
  %v2713 = vlaneseq
  %v2714 = vshrl.u32 %v2713, 7
  %v2715 = vsub.s32 6, %v2714
  %v2716 = vrot.slane %v2514, %v2715
  %v2717 = vlaneseq
  %v2718 = vshrl.u32 %v2717, 7
  %v2719 = vsub.s32 7, %v2718
  %v2720 = vrot.slane %v2514, %v2719
  %v2721 = vlaneseq
  %v2722 = vshrl.u32 %v2721, 7
  %v2723 = vsub.s32 0, %v2722
  %v2724 = vrot.slane %v2517, %v2723
  %v2725 = vlaneseq
  %v2726 = vshrl.u32 %v2725, 7
  %v2727 = vsub.s32 1, %v2726
  %v2728 = vrot.slane %v2517, %v2727
  %v2729 = vlaneseq
  %v2730 = vshrl.u32 %v2729, 7
  %v2731 = vsub.s32 2, %v2730
  %v2732 = vrot.slane %v2517, %v2731
  %v2733 = vlaneseq
  %v2734 = vshrl.u32 %v2733, 7
  %v2735 = vsub.s32 3, %v2734
  %v2736 = vrot.slane %v2517, %v2735
  %v2737 = vlaneseq
  %v2738 = vshrl.u32 %v2737, 7
  %v2739 = vsub.s32 4, %v2738
  %v2740 = vrot.slane %v2517, %v2739
  %v2741 = vlaneseq
  %v2742 = vshrl.u32 %v2741, 7
  %v2743 = vsub.s32 5, %v2742
  %v2744 = vrot.slane %v2517, %v2743
  %v2745 = vlaneseq
  %v2746 = vshrl.u32 %v2745, 7
  %v2747 = vsub.s32 6, %v2746
  %v2748 = vrot.slane %v2517, %v2747
  %v2749 = vlaneseq
  %v2750 = vshrl.u32 %v2749, 7
  %v2751 = vsub.s32 7, %v2750
  %v2752 = vrot.slane %v2517, %v2751
  %v2753 = vlaneseq
  %v2754 = vshrl.u32 %v2753, 7
  %v2755 = vsub.s32 0, %v2754
  %v2756 = vrot.slane %v2520, %v2755
  %v2757 = vlaneseq
  %v2758 = vshrl.u32 %v2757, 7
  %v2759 = vsub.s32 1, %v2758
  %v2760 = vrot.slane %v2520, %v2759
  %v2761 = vlaneseq
  %v2762 = vshrl.u32 %v2761, 7
  %v2763 = vsub.s32 2, %v2762
  %v2764 = vrot.slane %v2520, %v2763
  %v2765 = vlaneseq
  %v2766 = vshrl.u32 %v2765, 7
  %v2767 = vsub.s32 3, %v2766
  %v2768 = vrot.slane %v2520, %v2767
  %v2769 = vlaneseq
  %v2770 = vshrl.u32 %v2769, 7
  %v2771 = vsub.s32 4, %v2770
  %v2772 = vrot.slane %v2520, %v2771
  %v2773 = vlaneseq
  %v2774 = vshrl.u32 %v2773, 7
  %v2775 = vsub.s32 5, %v2774
  %v2776 = vrot.slane %v2520, %v2775
  %v2777 = vlaneseq
  %v2778 = vshrl.u32 %v2777, 7
  %v2779 = vsub.s32 6, %v2778
  %v2780 = vrot.slane %v2520, %v2779
  %v2781 = vlaneseq
  %v2782 = vshrl.u32 %v2781, 7
  %v2783 = vsub.s32 7, %v2782
  %v2784 = vrot.slane %v2520, %v2783
  %v2849 = vsub.f32 %v1847, %v2532
  %v2850 = vsub.f32 %v1848, %v2536
  %v2851 = vsub.f32 %v1849, %v2540
  %v2852 = vsub.f32 %v1850, %v2544
  %v2853 = vsub.f32 %v1851, %v2548
  %v2854 = vsub.f32 %v1852, %v2552
  %v2855 = vsub.f32 %v1853, %v2556
  %v2856 = vsub.f32 %v1854, %v2560
  %v2857 = vsub.f32 %v1855, %v2564
  %v2858 = vsub.f32 %v1856, %v2568
  %v2859 = vsub.f32 %v1857, %v2572
  %v2860 = vsub.f32 %v1858, %v2576
  %v2861 = vsub.f32 %v1859, %v2580
  %v2862 = vsub.f32 %v1860, %v2584
  %v2863 = vsub.f32 %v1861, %v2588
  %v2864 = vsub.f32 %v1862, %v2592
  %v2865 = vsub.f32 %v1863, %v2596
  %v2866 = vsub.f32 %v1864, %v2600
  %v2867 = vsub.f32 %v1865, %v2604
  %v2868 = vsub.f32 %v1866, %v2608
  %v2869 = vsub.f32 %v1867, %v2612
  %v2870 = vsub.f32 %v1868, %v2616
  %v2871 = vsub.f32 %v1869, %v2620
  %v2872 = vsub.f32 %v1870, %v2624
  %v2873 = vsub.f32 %v1871, %v2628
  %v2874 = vsub.f32 %v1872, %v2632
  %v2875 = vsub.f32 %v1873, %v2636
  %v2876 = vsub.f32 %v1874, %v2640
  %v2877 = vsub.f32 %v1875, %v2644
  %v2878 = vsub.f32 %v1876, %v2648
  %v2879 = vsub.f32 %v1877, %v2652
  %v2880 = vsub.f32 %v1878, %v2656
  %v2881 = vsub.f32 %v1879, %v2660
  %v2882 = vsub.f32 %v1880, %v2664
  %v2883 = vsub.f32 %v1881, %v2668
  %v2884 = vsub.f32 %v1882, %v2672
  %v2885 = vsub.f32 %v1883, %v2676
  %v2886 = vsub.f32 %v1884, %v2680
  %v2887 = vsub.f32 %v1885, %v2684
  %v2888 = vsub.f32 %v1886, %v2688
  %v2889 = vsub.f32 %v1887, %v2692
  %v2890 = vsub.f32 %v1888, %v2696
  %v2891 = vsub.f32 %v1889, %v2700
  %v2892 = vsub.f32 %v1890, %v2704
  %v2893 = vsub.f32 %v1891, %v2708
  %v2894 = vsub.f32 %v1892, %v2712
  %v2895 = vsub.f32 %v1893, %v2716
  %v2896 = vsub.f32 %v1894, %v2720
  %v2897 = vsub.f32 %v1895, %v2724
  %v2898 = vsub.f32 %v1896, %v2728
  %v2899 = vsub.f32 %v1897, %v2732
  %v2900 = vsub.f32 %v1898, %v2736
  %v2901 = vsub.f32 %v1899, %v2740
  %v2902 = vsub.f32 %v1900, %v2744
  %v2903 = vsub.f32 %v1901, %v2748
  %v2904 = vsub.f32 %v1902, %v2752
  %v2905 = vsub.f32 %v1903, %v2756
  %v2906 = vsub.f32 %v1904, %v2760
  %v2907 = vsub.f32 %v1905, %v2764
  %v2908 = vsub.f32 %v1906, %v2768
  %v2909 = vsub.f32 %v1907, %v2772
  %v2910 = vsub.f32 %v1908, %v2776
  %v2911 = vsub.f32 %v1909, %v2780
  %v2912 = vsub.f32 %v1910, %v2784
  %v2913 = vmul.f32 %v2849, 1.442695
  %v2914 = vpow.pop %v2913
  %v2915 = vmul.f32 %v2850, 1.442695
  %v2916 = vpow.pop %v2915
  %v2917 = vmul.f32 %v2851, 1.442695
  %v2918 = vpow.pop %v2917
  %v2919 = vmul.f32 %v2852, 1.442695
  %v2920 = vpow.pop %v2919
  %v2921 = vmul.f32 %v2853, 1.442695
  %v2922 = vpow.pop %v2921
  %v2923 = vmul.f32 %v2854, 1.442695
  %v2924 = vpow.pop %v2923
  %v2925 = vmul.f32 %v2855, 1.442695
  %v2926 = vpow.pop %v2925
  %v2927 = vmul.f32 %v2856, 1.442695
  %v2928 = vpow.pop %v2927
  %v2929 = vmul.f32 %v2857, 1.442695
  %v2930 = vpow.pop %v2929
  %v2931 = vmul.f32 %v2858, 1.442695
  %v2932 = vpow.pop %v2931
  %v2933 = vmul.f32 %v2859, 1.442695
  %v2934 = vpow.pop %v2933
  %v2935 = vmul.f32 %v2860, 1.442695
  %v2936 = vpow.pop %v2935
  %v2937 = vmul.f32 %v2861, 1.442695
  %v2938 = vpow.pop %v2937
  %v2939 = vmul.f32 %v2862, 1.442695
  %v2940 = vpow.pop %v2939
  %v2941 = vmul.f32 %v2863, 1.442695
  %v2942 = vpow.pop %v2941
  %v2943 = vmul.f32 %v2864, 1.442695
  %v2944 = vpow.pop %v2943
  %v2945 = vmul.f32 %v2865, 1.442695
  %v2946 = vpow.pop %v2945
  %v2947 = vmul.f32 %v2866, 1.442695
  %v2948 = vpow.pop %v2947
  %v2949 = vmul.f32 %v2867, 1.442695
  %v2950 = vpow.pop %v2949
  %v2951 = vmul.f32 %v2868, 1.442695
  %v2952 = vpow.pop %v2951
  %v2953 = vmul.f32 %v2869, 1.442695
  %v2954 = vpow.pop %v2953
  %v2955 = vmul.f32 %v2870, 1.442695
  %v2956 = vpow.pop %v2955
  %v2957 = vmul.f32 %v2871, 1.442695
  %v2958 = vpow.pop %v2957
  %v2959 = vmul.f32 %v2872, 1.442695
  %v2960 = vpow.pop %v2959
  %v2961 = vmul.f32 %v2873, 1.442695
  %v2962 = vpow.pop %v2961
  %v2963 = vmul.f32 %v2874, 1.442695
  %v2964 = vpow.pop %v2963
  %v2965 = vmul.f32 %v2875, 1.442695
  %v2966 = vpow.pop %v2965
  %v2967 = vmul.f32 %v2876, 1.442695
  %v2968 = vpow.pop %v2967
  %v2969 = vmul.f32 %v2877, 1.442695
  %v2970 = vpow.pop %v2969
  %v2971 = vmul.f32 %v2878, 1.442695
  %v2972 = vpow.pop %v2971
  %v2973 = vmul.f32 %v2879, 1.442695
  %v2974 = vpow.pop %v2973
  %v2975 = vmul.f32 %v2880, 1.442695
  %v2976 = vpow.pop %v2975
  %v2977 = vmul.f32 %v2881, 1.442695
  %v2978 = vpow.pop %v2977
  %v2979 = vmul.f32 %v2882, 1.442695
  %v2980 = vpow.pop %v2979
  %v2981 = vmul.f32 %v2883, 1.442695
  %v2982 = vpow.pop %v2981
  %v2983 = vmul.f32 %v2884, 1.442695
  %v2984 = vpow.pop %v2983
  %v2985 = vmul.f32 %v2885, 1.442695
  %v2986 = vpow.pop %v2985
  %v2987 = vmul.f32 %v2886, 1.442695
  %v2988 = vpow.pop %v2987
  %v2989 = vmul.f32 %v2887, 1.442695
  %v2990 = vpow.pop %v2989
  %v2991 = vmul.f32 %v2888, 1.442695
  %v2992 = vpow.pop %v2991
  %v2993 = vmul.f32 %v2889, 1.442695
  %v2994 = vpow.pop %v2993
  %v2995 = vmul.f32 %v2890, 1.442695
  %v2996 = vpow.pop %v2995
  %v2997 = vmul.f32 %v2891, 1.442695
  %v2998 = vpow.pop %v2997
  %v2999 = vmul.f32 %v2892, 1.442695
  %v3000 = vpow.pop %v2999
  %v3001 = vmul.f32 %v2893, 1.442695
  %v3002 = vpow.pop %v3001
  %v3003 = vmul.f32 %v2894, 1.442695
  %v3004 = vpow.pop %v3003
  %v3005 = vmul.f32 %v2895, 1.442695
  %v3006 = vpow.pop %v3005
  %v3007 = vmul.f32 %v2896, 1.442695
  %v3008 = vpow.pop %v3007
  %v3009 = vmul.f32 %v2897, 1.442695
  %v3010 = vpow.pop %v3009
  %v3011 = vmul.f32 %v2898, 1.442695
  %v3012 = vpow.pop %v3011
  %v3013 = vmul.f32 %v2899, 1.442695
  %v3014 = vpow.pop %v3013
  %v3015 = vmul.f32 %v2900, 1.442695
  %v3016 = vpow.pop %v3015
  %v3017 = vmul.f32 %v2901, 1.442695
  %v3018 = vpow.pop %v3017
  %v3019 = vmul.f32 %v2902, 1.442695
  %v3020 = vpow.pop %v3019
  %v3021 = vmul.f32 %v2903, 1.442695
  %v3022 = vpow.pop %v3021
  %v3023 = vmul.f32 %v2904, 1.442695
  %v3024 = vpow.pop %v3023
  %v3025 = vmul.f32 %v2905, 1.442695
  %v3026 = vpow.pop %v3025
  %v3027 = vmul.f32 %v2906, 1.442695
  %v3028 = vpow.pop %v3027
  %v3029 = vmul.f32 %v2907, 1.442695
  %v3030 = vpow.pop %v3029
  %v3031 = vmul.f32 %v2908, 1.442695
  %v3032 = vpow.pop %v3031
  %v3033 = vmul.f32 %v2909, 1.442695
  %v3034 = vpow.pop %v3033
  %v3035 = vmul.f32 %v2910, 1.442695
  %v3036 = vpow.pop %v3035
  %v3037 = vmul.f32 %v2911, 1.442695
  %v3038 = vpow.pop %v3037
  %v3039 = vmul.f32 %v2912, 1.442695
  %v3040 = vpow.pop %v3039
  %3105 = vset.pattern.permute.xlu0 0
  %3106 = vperm.xlu0 %3105, %v2914
  %v3107 = vpop.permute.xlu0 %3106
  %3108 = vset.pattern.permute.xlu0 0
  %3109 = vperm.xlu0 %3108, %v2916
  %v3110 = vpop.permute.xlu0 %3109
  %3111 = vset.pattern.permute.xlu0 0
  %3112 = vperm.xlu0 %3111, %v2918
  %v3113 = vpop.permute.xlu0 %3112
  %3114 = vset.pattern.permute.xlu0 0
  %3115 = vperm.xlu0 %3114, %v2920
  %v3116 = vpop.permute.xlu0 %3115
  %3117 = vset.pattern.permute.xlu0 0
  %3118 = vperm.xlu0 %3117, %v2922
  %v3119 = vpop.permute.xlu0 %3118
  %3120 = vset.pattern.permute.xlu0 0
  %3121 = vperm.xlu0 %3120, %v2924
  %v3122 = vpop.permute.xlu0 %3121
  %3123 = vset.pattern.permute.xlu0 0
  %3124 = vperm.xlu0 %3123, %v2926
  %v3125 = vpop.permute.xlu0 %3124
  %3126 = vset.pattern.permute.xlu0 0
  %3127 = vperm.xlu0 %3126, %v2928
  %v3128 = vpop.permute.xlu0 %3127
  %3129 = vset.pattern.permute.xlu0 0
  %3130 = vperm.xlu0 %3129, %v2930
  %v3131 = vpop.permute.xlu0 %3130
  %3132 = vset.pattern.permute.xlu0 0
  %3133 = vperm.xlu0 %3132, %v2932
  %v3134 = vpop.permute.xlu0 %3133
  %3135 = vset.pattern.permute.xlu0 0
  %3136 = vperm.xlu0 %3135, %v2934
  %v3137 = vpop.permute.xlu0 %3136
  %3138 = vset.pattern.permute.xlu0 0
  %3139 = vperm.xlu0 %3138, %v2936
  %v3140 = vpop.permute.xlu0 %3139
  %3141 = vset.pattern.permute.xlu0 0
  %3142 = vperm.xlu0 %3141, %v2938
  %v3143 = vpop.permute.xlu0 %3142
  %3144 = vset.pattern.permute.xlu0 0
  %3145 = vperm.xlu0 %3144, %v2940
  %v3146 = vpop.permute.xlu0 %3145
  %3147 = vset.pattern.permute.xlu0 0
  %3148 = vperm.xlu0 %3147, %v2942
  %v3149 = vpop.permute.xlu0 %3148
  %3150 = vset.pattern.permute.xlu0 0
  %3151 = vperm.xlu0 %3150, %v2944
  %v3152 = vpop.permute.xlu0 %3151
  %3153 = vset.pattern.permute.xlu0 0
  %3154 = vperm.xlu0 %3153, %v2946
  %v3155 = vpop.permute.xlu0 %3154
  %3156 = vset.pattern.permute.xlu0 0
  %3157 = vperm.xlu0 %3156, %v2948
  %v3158 = vpop.permute.xlu0 %3157
  %3159 = vset.pattern.permute.xlu0 0
  %3160 = vperm.xlu0 %3159, %v2950
  %v3161 = vpop.permute.xlu0 %3160
  %3162 = vset.pattern.permute.xlu0 0
  %3163 = vperm.xlu0 %3162, %v2952
  %v3164 = vpop.permute.xlu0 %3163
  %3165 = vset.pattern.permute.xlu0 0
  %3166 = vperm.xlu0 %3165, %v2954
  %v3167 = vpop.permute.xlu0 %3166
  %3168 = vset.pattern.permute.xlu0 0
  %3169 = vperm.xlu0 %3168, %v2956
  %v3170 = vpop.permute.xlu0 %3169
  %3171 = vset.pattern.permute.xlu0 0
  %3172 = vperm.xlu0 %3171, %v2958
  %v3173 = vpop.permute.xlu0 %3172
  %3174 = vset.pattern.permute.xlu0 0
  %3175 = vperm.xlu0 %3174, %v2960
  %v3176 = vpop.permute.xlu0 %3175
  %3177 = vset.pattern.permute.xlu0 0
  %3178 = vperm.xlu0 %3177, %v2962
  %v3179 = vpop.permute.xlu0 %3178
  %3180 = vset.pattern.permute.xlu0 0
  %3181 = vperm.xlu0 %3180, %v2964
  %v3182 = vpop.permute.xlu0 %3181
  %3183 = vset.pattern.permute.xlu0 0
  %3184 = vperm.xlu0 %3183, %v2966
  %v3185 = vpop.permute.xlu0 %3184
  %3186 = vset.pattern.permute.xlu0 0
  %3187 = vperm.xlu0 %3186, %v2968
  %v3188 = vpop.permute.xlu0 %3187
  %3189 = vset.pattern.permute.xlu0 0
  %3190 = vperm.xlu0 %3189, %v2970
  %v3191 = vpop.permute.xlu0 %3190
  %3192 = vset.pattern.permute.xlu0 0
  %3193 = vperm.xlu0 %3192, %v2972
  %v3194 = vpop.permute.xlu0 %3193
  %3195 = vset.pattern.permute.xlu0 0
  %3196 = vperm.xlu0 %3195, %v2974
  %v3197 = vpop.permute.xlu0 %3196
  %3198 = vset.pattern.permute.xlu0 0
  %3199 = vperm.xlu0 %3198, %v2976
  %v3200 = vpop.permute.xlu0 %3199
  %3201 = vset.pattern.permute.xlu0 0
  %3202 = vperm.xlu0 %3201, %v2978
  %v3203 = vpop.permute.xlu0 %3202
  %3204 = vset.pattern.permute.xlu0 0
  %3205 = vperm.xlu0 %3204, %v2980
  %v3206 = vpop.permute.xlu0 %3205
  %3207 = vset.pattern.permute.xlu0 0
  %3208 = vperm.xlu0 %3207, %v2982
  %v3209 = vpop.permute.xlu0 %3208
  %3210 = vset.pattern.permute.xlu0 0
  %3211 = vperm.xlu0 %3210, %v2984
  %v3212 = vpop.permute.xlu0 %3211
  %3213 = vset.pattern.permute.xlu0 0
  %3214 = vperm.xlu0 %3213, %v2986
  %v3215 = vpop.permute.xlu0 %3214
  %3216 = vset.pattern.permute.xlu0 0
  %3217 = vperm.xlu0 %3216, %v2988
  %v3218 = vpop.permute.xlu0 %3217
  %3219 = vset.pattern.permute.xlu0 0
  %3220 = vperm.xlu0 %3219, %v2990
  %v3221 = vpop.permute.xlu0 %3220
  %3222 = vset.pattern.permute.xlu0 0
  %3223 = vperm.xlu0 %3222, %v2992
  %v3224 = vpop.permute.xlu0 %3223
  %3225 = vset.pattern.permute.xlu0 0
  %3226 = vperm.xlu0 %3225, %v2994
  %v3227 = vpop.permute.xlu0 %3226
  %3228 = vset.pattern.permute.xlu0 0
  %3229 = vperm.xlu0 %3228, %v2996
  %v3230 = vpop.permute.xlu0 %3229
  %3231 = vset.pattern.permute.xlu0 0
  %3232 = vperm.xlu0 %3231, %v2998
  %v3233 = vpop.permute.xlu0 %3232
  %3234 = vset.pattern.permute.xlu0 0
  %3235 = vperm.xlu0 %3234, %v3000
  %v3236 = vpop.permute.xlu0 %3235
  %3237 = vset.pattern.permute.xlu0 0
  %3238 = vperm.xlu0 %3237, %v3002
  %v3239 = vpop.permute.xlu0 %3238
  %3240 = vset.pattern.permute.xlu0 0
  %3241 = vperm.xlu0 %3240, %v3004
  %v3242 = vpop.permute.xlu0 %3241
  %3243 = vset.pattern.permute.xlu0 0
  %3244 = vperm.xlu0 %3243, %v3006
  %v3245 = vpop.permute.xlu0 %3244
  %3246 = vset.pattern.permute.xlu0 0
  %3247 = vperm.xlu0 %3246, %v3008
  %v3248 = vpop.permute.xlu0 %3247
  %3249 = vset.pattern.permute.xlu0 0
  %3250 = vperm.xlu0 %3249, %v3010
  %v3251 = vpop.permute.xlu0 %3250
  %3252 = vset.pattern.permute.xlu0 0
  %3253 = vperm.xlu0 %3252, %v3012
  %v3254 = vpop.permute.xlu0 %3253
  %3255 = vset.pattern.permute.xlu0 0
  %3256 = vperm.xlu0 %3255, %v3014
  %v3257 = vpop.permute.xlu0 %3256
  %3258 = vset.pattern.permute.xlu0 0
  %3259 = vperm.xlu0 %3258, %v3016
  %v3260 = vpop.permute.xlu0 %3259
  %3261 = vset.pattern.permute.xlu0 0
  %3262 = vperm.xlu0 %3261, %v3018
  %v3263 = vpop.permute.xlu0 %3262
  %3264 = vset.pattern.permute.xlu0 0
  %3265 = vperm.xlu0 %3264, %v3020
  %v3266 = vpop.permute.xlu0 %3265
  %3267 = vset.pattern.permute.xlu0 0
  %3268 = vperm.xlu0 %3267, %v3022
  %v3269 = vpop.permute.xlu0 %3268
  %3270 = vset.pattern.permute.xlu0 0
  %3271 = vperm.xlu0 %3270, %v3024
  %v3272 = vpop.permute.xlu0 %3271
  %3273 = vset.pattern.permute.xlu0 0
  %3274 = vperm.xlu0 %3273, %v3026
  %v3275 = vpop.permute.xlu0 %3274
  %3276 = vset.pattern.permute.xlu0 0
  %3277 = vperm.xlu0 %3276, %v3028
  %v3278 = vpop.permute.xlu0 %3277
  %3279 = vset.pattern.permute.xlu0 0
  %3280 = vperm.xlu0 %3279, %v3030
  %v3281 = vpop.permute.xlu0 %3280
  %3282 = vset.pattern.permute.xlu0 0
  %3283 = vperm.xlu0 %3282, %v3032
  %v3284 = vpop.permute.xlu0 %3283
  %3285 = vset.pattern.permute.xlu0 0
  %3286 = vperm.xlu0 %3285, %v3034
  %v3287 = vpop.permute.xlu0 %3286
  %3288 = vset.pattern.permute.xlu0 0
  %3289 = vperm.xlu0 %3288, %v3036
  %v3290 = vpop.permute.xlu0 %3289
  %3291 = vset.pattern.permute.xlu0 0
  %3292 = vperm.xlu0 %3291, %v3038
  %v3293 = vpop.permute.xlu0 %3292
  %3294 = vset.pattern.permute.xlu0 0
  %3295 = vperm.xlu0 %3294, %v3040
  %v3296 = vpop.permute.xlu0 %3295
  %v3297 = vlaneseq
  %v3298 = vshrl.u32 %v3297, 7
  %v3299 = vsub.s32 %v2168, %v3298
  %v3300 = vrot.slane %v3107, %v3299
  %v3301 = vlaneseq
  %v3302 = vshrl.u32 %v3301, 7
  %v3303 = vsub.s32 %v2168, %v3302
  %v3304 = vrot.slane %v3110, %v3303
  %v3305 = vlaneseq
  %v3306 = vshrl.u32 %v3305, 7
  %v3307 = vsub.s32 %v2168, %v3306
  %v3308 = vrot.slane %v3113, %v3307
  %v3309 = vlaneseq
  %v3310 = vshrl.u32 %v3309, 7
  %v3311 = vsub.s32 %v2168, %v3310
  %v3312 = vrot.slane %v3116, %v3311
  %v3313 = vlaneseq
  %v3314 = vshrl.u32 %v3313, 7
  %v3315 = vsub.s32 %v2168, %v3314
  %v3316 = vrot.slane %v3119, %v3315
  %v3317 = vlaneseq
  %v3318 = vshrl.u32 %v3317, 7
  %v3319 = vsub.s32 %v2168, %v3318
  %v3320 = vrot.slane %v3122, %v3319
  %v3321 = vlaneseq
  %v3322 = vshrl.u32 %v3321, 7
  %v3323 = vsub.s32 %v2168, %v3322
  %v3324 = vrot.slane %v3125, %v3323
  %v3325 = vlaneseq
  %v3326 = vshrl.u32 %v3325, 7
  %v3327 = vsub.s32 %v2168, %v3326
  %v3328 = vrot.slane %v3128, %v3327
  %v3329 = vlaneseq
  %v3330 = vshrl.u32 %v3329, 7
  %v3331 = vsub.s32 %v2168, %v3330
  %v3332 = vrot.slane %v3131, %v3331
  %v3333 = vlaneseq
  %v3334 = vshrl.u32 %v3333, 7
  %v3335 = vsub.s32 %v2168, %v3334
  %v3336 = vrot.slane %v3134, %v3335
  %v3337 = vlaneseq
  %v3338 = vshrl.u32 %v3337, 7
  %v3339 = vsub.s32 %v2168, %v3338
  %v3340 = vrot.slane %v3137, %v3339
  %v3341 = vlaneseq
  %v3342 = vshrl.u32 %v3341, 7
  %v3343 = vsub.s32 %v2168, %v3342
  %v3344 = vrot.slane %v3140, %v3343
  %v3345 = vlaneseq
  %v3346 = vshrl.u32 %v3345, 7
  %v3347 = vsub.s32 %v2168, %v3346
  %v3348 = vrot.slane %v3143, %v3347
  %v3349 = vlaneseq
  %v3350 = vshrl.u32 %v3349, 7
  %v3351 = vsub.s32 %v2168, %v3350
  %v3352 = vrot.slane %v3146, %v3351
  %v3353 = vlaneseq
  %v3354 = vshrl.u32 %v3353, 7
  %v3355 = vsub.s32 %v2168, %v3354
  %v3356 = vrot.slane %v3149, %v3355
  %v3357 = vlaneseq
  %v3358 = vshrl.u32 %v3357, 7
  %v3359 = vsub.s32 %v2168, %v3358
  %v3360 = vrot.slane %v3152, %v3359
  %v3361 = vlaneseq
  %v3362 = vshrl.u32 %v3361, 7
  %v3363 = vsub.s32 %v2168, %v3362
  %v3364 = vrot.slane %v3155, %v3363
  %v3365 = vlaneseq
  %v3366 = vshrl.u32 %v3365, 7
  %v3367 = vsub.s32 %v2168, %v3366
  %v3368 = vrot.slane %v3158, %v3367
  %v3369 = vlaneseq
  %v3370 = vshrl.u32 %v3369, 7
  %v3371 = vsub.s32 %v2168, %v3370
  %v3372 = vrot.slane %v3161, %v3371
  %v3373 = vlaneseq
  %v3374 = vshrl.u32 %v3373, 7
  %v3375 = vsub.s32 %v2168, %v3374
  %v3376 = vrot.slane %v3164, %v3375
  %v3377 = vlaneseq
  %v3378 = vshrl.u32 %v3377, 7
  %v3379 = vsub.s32 %v2168, %v3378
  %v3380 = vrot.slane %v3167, %v3379
  %v3381 = vlaneseq
  %v3382 = vshrl.u32 %v3381, 7
  %v3383 = vsub.s32 %v2168, %v3382
  %v3384 = vrot.slane %v3170, %v3383
  %v3385 = vlaneseq
  %v3386 = vshrl.u32 %v3385, 7
  %v3387 = vsub.s32 %v2168, %v3386
  %v3388 = vrot.slane %v3173, %v3387
  %v3389 = vlaneseq
  %v3390 = vshrl.u32 %v3389, 7
  %v3391 = vsub.s32 %v2168, %v3390
  %v3392 = vrot.slane %v3176, %v3391
  %v3393 = vlaneseq
  %v3394 = vshrl.u32 %v3393, 7
  %v3395 = vsub.s32 %v2168, %v3394
  %v3396 = vrot.slane %v3179, %v3395
  %v3397 = vlaneseq
  %v3398 = vshrl.u32 %v3397, 7
  %v3399 = vsub.s32 %v2168, %v3398
  %v3400 = vrot.slane %v3182, %v3399
  %v3401 = vlaneseq
  %v3402 = vshrl.u32 %v3401, 7
  %v3403 = vsub.s32 %v2168, %v3402
  %v3404 = vrot.slane %v3185, %v3403
  %v3405 = vlaneseq
  %v3406 = vshrl.u32 %v3405, 7
  %v3407 = vsub.s32 %v2168, %v3406
  %v3408 = vrot.slane %v3188, %v3407
  %v3409 = vlaneseq
  %v3410 = vshrl.u32 %v3409, 7
  %v3411 = vsub.s32 %v2168, %v3410
  %v3412 = vrot.slane %v3191, %v3411
  %v3413 = vlaneseq
  %v3414 = vshrl.u32 %v3413, 7
  %v3415 = vsub.s32 %v2168, %v3414
  %v3416 = vrot.slane %v3194, %v3415
  %v3417 = vlaneseq
  %v3418 = vshrl.u32 %v3417, 7
  %v3419 = vsub.s32 %v2168, %v3418
  %v3420 = vrot.slane %v3197, %v3419
  %v3421 = vlaneseq
  %v3422 = vshrl.u32 %v3421, 7
  %v3423 = vsub.s32 %v2168, %v3422
  %v3424 = vrot.slane %v3200, %v3423
  %v3425 = vlaneseq
  %v3426 = vshrl.u32 %v3425, 7
  %v3427 = vsub.s32 %v2168, %v3426
  %v3428 = vrot.slane %v3203, %v3427
  %v3429 = vlaneseq
  %v3430 = vshrl.u32 %v3429, 7
  %v3431 = vsub.s32 %v2168, %v3430
  %v3432 = vrot.slane %v3206, %v3431
  %v3433 = vlaneseq
  %v3434 = vshrl.u32 %v3433, 7
  %v3435 = vsub.s32 %v2168, %v3434
  %v3436 = vrot.slane %v3209, %v3435
  %v3437 = vlaneseq
  %v3438 = vshrl.u32 %v3437, 7
  %v3439 = vsub.s32 %v2168, %v3438
  %v3440 = vrot.slane %v3212, %v3439
  %v3441 = vlaneseq
  %v3442 = vshrl.u32 %v3441, 7
  %v3443 = vsub.s32 %v2168, %v3442
  %v3444 = vrot.slane %v3215, %v3443
  %v3445 = vlaneseq
  %v3446 = vshrl.u32 %v3445, 7
  %v3447 = vsub.s32 %v2168, %v3446
  %v3448 = vrot.slane %v3218, %v3447
  %v3449 = vlaneseq
  %v3450 = vshrl.u32 %v3449, 7
  %v3451 = vsub.s32 %v2168, %v3450
  %v3452 = vrot.slane %v3221, %v3451
  %v3453 = vlaneseq
  %v3454 = vshrl.u32 %v3453, 7
  %v3455 = vsub.s32 %v2168, %v3454
  %v3456 = vrot.slane %v3224, %v3455
  %v3457 = vlaneseq
  %v3458 = vshrl.u32 %v3457, 7
  %v3459 = vsub.s32 %v2168, %v3458
  %v3460 = vrot.slane %v3227, %v3459
  %v3461 = vlaneseq
  %v3462 = vshrl.u32 %v3461, 7
  %v3463 = vsub.s32 %v2168, %v3462
  %v3464 = vrot.slane %v3230, %v3463
  %v3465 = vlaneseq
  %v3466 = vshrl.u32 %v3465, 7
  %v3467 = vsub.s32 %v2168, %v3466
  %v3468 = vrot.slane %v3233, %v3467
  %v3469 = vlaneseq
  %v3470 = vshrl.u32 %v3469, 7
  %v3471 = vsub.s32 %v2168, %v3470
  %v3472 = vrot.slane %v3236, %v3471
  %v3473 = vlaneseq
  %v3474 = vshrl.u32 %v3473, 7
  %v3475 = vsub.s32 %v2168, %v3474
  %v3476 = vrot.slane %v3239, %v3475
  %v3477 = vlaneseq
  %v3478 = vshrl.u32 %v3477, 7
  %v3479 = vsub.s32 %v2168, %v3478
  %v3480 = vrot.slane %v3242, %v3479
  %v3481 = vlaneseq
  %v3482 = vshrl.u32 %v3481, 7
  %v3483 = vsub.s32 %v2168, %v3482
  %v3484 = vrot.slane %v3245, %v3483
  %v3485 = vlaneseq
  %v3486 = vshrl.u32 %v3485, 7
  %v3487 = vsub.s32 %v2168, %v3486
  %v3488 = vrot.slane %v3248, %v3487
  %v3489 = vlaneseq
  %v3490 = vshrl.u32 %v3489, 7
  %v3491 = vsub.s32 %v2168, %v3490
  %v3492 = vrot.slane %v3251, %v3491
  %v3493 = vlaneseq
  %v3494 = vshrl.u32 %v3493, 7
  %v3495 = vsub.s32 %v2168, %v3494
  %v3496 = vrot.slane %v3254, %v3495
  %v3497 = vlaneseq
  %v3498 = vshrl.u32 %v3497, 7
  %v3499 = vsub.s32 %v2168, %v3498
  %v3500 = vrot.slane %v3257, %v3499
  %v3501 = vlaneseq
  %v3502 = vshrl.u32 %v3501, 7
  %v3503 = vsub.s32 %v2168, %v3502
  %v3504 = vrot.slane %v3260, %v3503
  %v3505 = vlaneseq
  %v3506 = vshrl.u32 %v3505, 7
  %v3507 = vsub.s32 %v2168, %v3506
  %v3508 = vrot.slane %v3263, %v3507
  %v3509 = vlaneseq
  %v3510 = vshrl.u32 %v3509, 7
  %v3511 = vsub.s32 %v2168, %v3510
  %v3512 = vrot.slane %v3266, %v3511
  %v3513 = vlaneseq
  %v3514 = vshrl.u32 %v3513, 7
  %v3515 = vsub.s32 %v2168, %v3514
  %v3516 = vrot.slane %v3269, %v3515
  %v3517 = vlaneseq
  %v3518 = vshrl.u32 %v3517, 7
  %v3519 = vsub.s32 %v2168, %v3518
  %v3520 = vrot.slane %v3272, %v3519
  %v3521 = vlaneseq
  %v3522 = vshrl.u32 %v3521, 7
  %v3523 = vsub.s32 %v2168, %v3522
  %v3524 = vrot.slane %v3275, %v3523
  %v3525 = vlaneseq
  %v3526 = vshrl.u32 %v3525, 7
  %v3527 = vsub.s32 %v2168, %v3526
  %v3528 = vrot.slane %v3278, %v3527
  %v3529 = vlaneseq
  %v3530 = vshrl.u32 %v3529, 7
  %v3531 = vsub.s32 %v2168, %v3530
  %v3532 = vrot.slane %v3281, %v3531
  %v3533 = vlaneseq
  %v3534 = vshrl.u32 %v3533, 7
  %v3535 = vsub.s32 %v2168, %v3534
  %v3536 = vrot.slane %v3284, %v3535
  %v3537 = vlaneseq
  %v3538 = vshrl.u32 %v3537, 7
  %v3539 = vsub.s32 %v2168, %v3538
  %v3540 = vrot.slane %v3287, %v3539
  %v3541 = vlaneseq
  %v3542 = vshrl.u32 %v3541, 7
  %v3543 = vsub.s32 %v2168, %v3542
  %v3544 = vrot.slane %v3290, %v3543
  %v3545 = vlaneseq
  %v3546 = vshrl.u32 %v3545, 7
  %v3547 = vsub.s32 %v2168, %v3546
  %v3548 = vrot.slane %v3293, %v3547
  %v3549 = vlaneseq
  %v3550 = vshrl.u32 %v3549, 7
  %v3551 = vsub.s32 %v2168, %v3550
  %v3552 = vrot.slane %v3296, %v3551
  %v3553 = vsel %vm2425, %v3304, %v3300
  %v3554 = vsel %vm2427, %v3308, %v3553
  %v3555 = vsel %vm2429, %v3312, %v3554
  %v3556 = vsel %vm2431, %v3316, %v3555
  %v3557 = vsel %vm2433, %v3320, %v3556
  %v3558 = vsel %vm2435, %v3324, %v3557
  %v3559 = vsel %vm2437, %v3328, %v3558
  %v3560 = vsel %vm2425, %v3336, %v3332
  %v3561 = vsel %vm2427, %v3340, %v3560
  %v3562 = vsel %vm2429, %v3344, %v3561
  %v3563 = vsel %vm2431, %v3348, %v3562
  %v3564 = vsel %vm2433, %v3352, %v3563
  %v3565 = vsel %vm2435, %v3356, %v3564
  %v3566 = vsel %vm2437, %v3360, %v3565
  %v3567 = vsel %vm2425, %v3368, %v3364
  %v3568 = vsel %vm2427, %v3372, %v3567
  %v3569 = vsel %vm2429, %v3376, %v3568
  %v3570 = vsel %vm2431, %v3380, %v3569
  %v3571 = vsel %vm2433, %v3384, %v3570
  %v3572 = vsel %vm2435, %v3388, %v3571
  %v3573 = vsel %vm2437, %v3392, %v3572
  %v3574 = vsel %vm2425, %v3400, %v3396
  %v3575 = vsel %vm2427, %v3404, %v3574
  %v3576 = vsel %vm2429, %v3408, %v3575
  %v3577 = vsel %vm2431, %v3412, %v3576
  %v3578 = vsel %vm2433, %v3416, %v3577
  %v3579 = vsel %vm2435, %v3420, %v3578
  %v3580 = vsel %vm2437, %v3424, %v3579
  %v3581 = vsel %vm2425, %v3432, %v3428
  %v3582 = vsel %vm2427, %v3436, %v3581
  %v3583 = vsel %vm2429, %v3440, %v3582
  %v3584 = vsel %vm2431, %v3444, %v3583
  %v3585 = vsel %vm2433, %v3448, %v3584
  %v3586 = vsel %vm2435, %v3452, %v3585
  %v3587 = vsel %vm2437, %v3456, %v3586
  %v3588 = vsel %vm2425, %v3464, %v3460
  %v3589 = vsel %vm2427, %v3468, %v3588
  %v3590 = vsel %vm2429, %v3472, %v3589
  %v3591 = vsel %vm2431, %v3476, %v3590
  %v3592 = vsel %vm2433, %v3480, %v3591
  %v3593 = vsel %vm2435, %v3484, %v3592
  %v3594 = vsel %vm2437, %v3488, %v3593
  %v3595 = vsel %vm2425, %v3496, %v3492
  %v3596 = vsel %vm2427, %v3500, %v3595
  %v3597 = vsel %vm2429, %v3504, %v3596
  %v3598 = vsel %vm2431, %v3508, %v3597
  %v3599 = vsel %vm2433, %v3512, %v3598
  %v3600 = vsel %vm2435, %v3516, %v3599
  %v3601 = vsel %vm2437, %v3520, %v3600
  %v3602 = vsel %vm2425, %v3528, %v3524
  %v3603 = vsel %vm2427, %v3532, %v3602
  %v3604 = vsel %vm2429, %v3536, %v3603
  %v3605 = vsel %vm2431, %v3540, %v3604
  %v3606 = vsel %vm2433, %v3544, %v3605
  %v3607 = vsel %vm2435, %v3548, %v3606
  %v3608 = vsel %vm2437, %v3552, %v3607
  %v3617 = vsel %vm2496, %v3559, 0.0
  %3618 = vadd.xlane.f32.xlu0 %v3617
  %v3619 = vpop.xlane.xlu0 %3618
  %v3620 = vsel %vm2496, %v3566, 0.0
  %3621 = vadd.xlane.f32.xlu0 %v3620
  %v3622 = vpop.xlane.xlu0 %3621
  %v3623 = vsel %vm2496, %v3573, 0.0
  %3624 = vadd.xlane.f32.xlu0 %v3623
  %v3625 = vpop.xlane.xlu0 %3624
  %v3626 = vsel %vm2496, %v3580, 0.0
  %3627 = vadd.xlane.f32.xlu0 %v3626
  %v3628 = vpop.xlane.xlu0 %3627
  %v3629 = vsel %vm2496, %v3587, 0.0
  %3630 = vadd.xlane.f32.xlu0 %v3629
  %v3631 = vpop.xlane.xlu0 %3630
  %v3632 = vsel %vm2496, %v3594, 0.0
  %3633 = vadd.xlane.f32.xlu0 %v3632
  %v3634 = vpop.xlane.xlu0 %3633
  %v3635 = vsel %vm2496, %v3601, 0.0
  %3636 = vadd.xlane.f32.xlu0 %v3635
  %v3637 = vpop.xlane.xlu0 %3636
  %v3638 = vsel %vm2496, %v3608, 0.0
  %3639 = vadd.xlane.f32.xlu0 %v3638
  %v3640 = vpop.xlane.xlu0 %3639
  %v3649 = vlaneseq
  %v3650 = vshrl.u32 %v3649, 7
  %v3651 = vsub.s32 0, %v3650
  %v3652 = vrot.slane %v3619, %v3651
  %v3653 = vlaneseq
  %v3654 = vshrl.u32 %v3653, 7
  %v3655 = vsub.s32 1, %v3654
  %v3656 = vrot.slane %v3619, %v3655
  %v3657 = vlaneseq
  %v3658 = vshrl.u32 %v3657, 7
  %v3659 = vsub.s32 2, %v3658
  %v3660 = vrot.slane %v3619, %v3659
  %v3661 = vlaneseq
  %v3662 = vshrl.u32 %v3661, 7
  %v3663 = vsub.s32 3, %v3662
  %v3664 = vrot.slane %v3619, %v3663
  %v3665 = vlaneseq
  %v3666 = vshrl.u32 %v3665, 7
  %v3667 = vsub.s32 4, %v3666
  %v3668 = vrot.slane %v3619, %v3667
  %v3669 = vlaneseq
  %v3670 = vshrl.u32 %v3669, 7
  %v3671 = vsub.s32 5, %v3670
  %v3672 = vrot.slane %v3619, %v3671
  %v3673 = vlaneseq
  %v3674 = vshrl.u32 %v3673, 7
  %v3675 = vsub.s32 6, %v3674
  %v3676 = vrot.slane %v3619, %v3675
  %v3677 = vlaneseq
  %v3678 = vshrl.u32 %v3677, 7
  %v3679 = vsub.s32 7, %v3678
  %v3680 = vrot.slane %v3619, %v3679
  %v3681 = vlaneseq
  %v3682 = vshrl.u32 %v3681, 7
  %v3683 = vsub.s32 0, %v3682
  %v3684 = vrot.slane %v3622, %v3683
  %v3685 = vlaneseq
  %v3686 = vshrl.u32 %v3685, 7
  %v3687 = vsub.s32 1, %v3686
  %v3688 = vrot.slane %v3622, %v3687
  %v3689 = vlaneseq
  %v3690 = vshrl.u32 %v3689, 7
  %v3691 = vsub.s32 2, %v3690
  %v3692 = vrot.slane %v3622, %v3691
  %v3693 = vlaneseq
  %v3694 = vshrl.u32 %v3693, 7
  %v3695 = vsub.s32 3, %v3694
  %v3696 = vrot.slane %v3622, %v3695
  %v3697 = vlaneseq
  %v3698 = vshrl.u32 %v3697, 7
  %v3699 = vsub.s32 4, %v3698
  %v3700 = vrot.slane %v3622, %v3699
  %v3701 = vlaneseq
  %v3702 = vshrl.u32 %v3701, 7
  %v3703 = vsub.s32 5, %v3702
  %v3704 = vrot.slane %v3622, %v3703
  %v3705 = vlaneseq
  %v3706 = vshrl.u32 %v3705, 7
  %v3707 = vsub.s32 6, %v3706
  %v3708 = vrot.slane %v3622, %v3707
  %v3709 = vlaneseq
  %v3710 = vshrl.u32 %v3709, 7
  %v3711 = vsub.s32 7, %v3710
  %v3712 = vrot.slane %v3622, %v3711
  %v3713 = vlaneseq
  %v3714 = vshrl.u32 %v3713, 7
  %v3715 = vsub.s32 0, %v3714
  %v3716 = vrot.slane %v3625, %v3715
  %v3717 = vlaneseq
  %v3718 = vshrl.u32 %v3717, 7
  %v3719 = vsub.s32 1, %v3718
  %v3720 = vrot.slane %v3625, %v3719
  %v3721 = vlaneseq
  %v3722 = vshrl.u32 %v3721, 7
  %v3723 = vsub.s32 2, %v3722
  %v3724 = vrot.slane %v3625, %v3723
  %v3725 = vlaneseq
  %v3726 = vshrl.u32 %v3725, 7
  %v3727 = vsub.s32 3, %v3726
  %v3728 = vrot.slane %v3625, %v3727
  %v3729 = vlaneseq
  %v3730 = vshrl.u32 %v3729, 7
  %v3731 = vsub.s32 4, %v3730
  %v3732 = vrot.slane %v3625, %v3731
  %v3733 = vlaneseq
  %v3734 = vshrl.u32 %v3733, 7
  %v3735 = vsub.s32 5, %v3734
  %v3736 = vrot.slane %v3625, %v3735
  %v3737 = vlaneseq
  %v3738 = vshrl.u32 %v3737, 7
  %v3739 = vsub.s32 6, %v3738
  %v3740 = vrot.slane %v3625, %v3739
  %v3741 = vlaneseq
  %v3742 = vshrl.u32 %v3741, 7
  %v3743 = vsub.s32 7, %v3742
  %v3744 = vrot.slane %v3625, %v3743
  %v3745 = vlaneseq
  %v3746 = vshrl.u32 %v3745, 7
  %v3747 = vsub.s32 0, %v3746
  %v3748 = vrot.slane %v3628, %v3747
  %v3749 = vlaneseq
  %v3750 = vshrl.u32 %v3749, 7
  %v3751 = vsub.s32 1, %v3750
  %v3752 = vrot.slane %v3628, %v3751
  %v3753 = vlaneseq
  %v3754 = vshrl.u32 %v3753, 7
  %v3755 = vsub.s32 2, %v3754
  %v3756 = vrot.slane %v3628, %v3755
  %v3757 = vlaneseq
  %v3758 = vshrl.u32 %v3757, 7
  %v3759 = vsub.s32 3, %v3758
  %v3760 = vrot.slane %v3628, %v3759
  %v3761 = vlaneseq
  %v3762 = vshrl.u32 %v3761, 7
  %v3763 = vsub.s32 4, %v3762
  %v3764 = vrot.slane %v3628, %v3763
  %v3765 = vlaneseq
  %v3766 = vshrl.u32 %v3765, 7
  %v3767 = vsub.s32 5, %v3766
  %v3768 = vrot.slane %v3628, %v3767
  %v3769 = vlaneseq
  %v3770 = vshrl.u32 %v3769, 7
  %v3771 = vsub.s32 6, %v3770
  %v3772 = vrot.slane %v3628, %v3771
  %v3773 = vlaneseq
  %v3774 = vshrl.u32 %v3773, 7
  %v3775 = vsub.s32 7, %v3774
  %v3776 = vrot.slane %v3628, %v3775
  %v3777 = vlaneseq
  %v3778 = vshrl.u32 %v3777, 7
  %v3779 = vsub.s32 0, %v3778
  %v3780 = vrot.slane %v3631, %v3779
  %v3781 = vlaneseq
  %v3782 = vshrl.u32 %v3781, 7
  %v3783 = vsub.s32 1, %v3782
  %v3784 = vrot.slane %v3631, %v3783
  %v3785 = vlaneseq
  %v3786 = vshrl.u32 %v3785, 7
  %v3787 = vsub.s32 2, %v3786
  %v3788 = vrot.slane %v3631, %v3787
  %v3789 = vlaneseq
  %v3790 = vshrl.u32 %v3789, 7
  %v3791 = vsub.s32 3, %v3790
  %v3792 = vrot.slane %v3631, %v3791
  %v3793 = vlaneseq
  %v3794 = vshrl.u32 %v3793, 7
  %v3795 = vsub.s32 4, %v3794
  %v3796 = vrot.slane %v3631, %v3795
  %v3797 = vlaneseq
  %v3798 = vshrl.u32 %v3797, 7
  %v3799 = vsub.s32 5, %v3798
  %v3800 = vrot.slane %v3631, %v3799
  %v3801 = vlaneseq
  %v3802 = vshrl.u32 %v3801, 7
  %v3803 = vsub.s32 6, %v3802
  %v3804 = vrot.slane %v3631, %v3803
  %v3805 = vlaneseq
  %v3806 = vshrl.u32 %v3805, 7
  %v3807 = vsub.s32 7, %v3806
  %v3808 = vrot.slane %v3631, %v3807
  %v3809 = vlaneseq
  %v3810 = vshrl.u32 %v3809, 7
  %v3811 = vsub.s32 0, %v3810
  %v3812 = vrot.slane %v3634, %v3811
  %v3813 = vlaneseq
  %v3814 = vshrl.u32 %v3813, 7
  %v3815 = vsub.s32 1, %v3814
  %v3816 = vrot.slane %v3634, %v3815
  %v3817 = vlaneseq
  %v3818 = vshrl.u32 %v3817, 7
  %v3819 = vsub.s32 2, %v3818
  %v3820 = vrot.slane %v3634, %v3819
  %v3821 = vlaneseq
  %v3822 = vshrl.u32 %v3821, 7
  %v3823 = vsub.s32 3, %v3822
  %v3824 = vrot.slane %v3634, %v3823
  %v3825 = vlaneseq
  %v3826 = vshrl.u32 %v3825, 7
  %v3827 = vsub.s32 4, %v3826
  %v3828 = vrot.slane %v3634, %v3827
  %v3829 = vlaneseq
  %v3830 = vshrl.u32 %v3829, 7
  %v3831 = vsub.s32 5, %v3830
  %v3832 = vrot.slane %v3634, %v3831
  %v3833 = vlaneseq
  %v3834 = vshrl.u32 %v3833, 7
  %v3835 = vsub.s32 6, %v3834
  %v3836 = vrot.slane %v3634, %v3835
  %v3837 = vlaneseq
  %v3838 = vshrl.u32 %v3837, 7
  %v3839 = vsub.s32 7, %v3838
  %v3840 = vrot.slane %v3634, %v3839
  %v3841 = vlaneseq
  %v3842 = vshrl.u32 %v3841, 7
  %v3843 = vsub.s32 0, %v3842
  %v3844 = vrot.slane %v3637, %v3843
  %v3845 = vlaneseq
  %v3846 = vshrl.u32 %v3845, 7
  %v3847 = vsub.s32 1, %v3846
  %v3848 = vrot.slane %v3637, %v3847
  %v3849 = vlaneseq
  %v3850 = vshrl.u32 %v3849, 7
  %v3851 = vsub.s32 2, %v3850
  %v3852 = vrot.slane %v3637, %v3851
  %v3853 = vlaneseq
  %v3854 = vshrl.u32 %v3853, 7
  %v3855 = vsub.s32 3, %v3854
  %v3856 = vrot.slane %v3637, %v3855
  %v3857 = vlaneseq
  %v3858 = vshrl.u32 %v3857, 7
  %v3859 = vsub.s32 4, %v3858
  %v3860 = vrot.slane %v3637, %v3859
  %v3861 = vlaneseq
  %v3862 = vshrl.u32 %v3861, 7
  %v3863 = vsub.s32 5, %v3862
  %v3864 = vrot.slane %v3637, %v3863
  %v3865 = vlaneseq
  %v3866 = vshrl.u32 %v3865, 7
  %v3867 = vsub.s32 6, %v3866
  %v3868 = vrot.slane %v3637, %v3867
  %v3869 = vlaneseq
  %v3870 = vshrl.u32 %v3869, 7
  %v3871 = vsub.s32 7, %v3870
  %v3872 = vrot.slane %v3637, %v3871
  %v3873 = vlaneseq
  %v3874 = vshrl.u32 %v3873, 7
  %v3875 = vsub.s32 0, %v3874
  %v3876 = vrot.slane %v3640, %v3875
  %v3877 = vlaneseq
  %v3878 = vshrl.u32 %v3877, 7
  %v3879 = vsub.s32 1, %v3878
  %v3880 = vrot.slane %v3640, %v3879
  %v3881 = vlaneseq
  %v3882 = vshrl.u32 %v3881, 7
  %v3883 = vsub.s32 2, %v3882
  %v3884 = vrot.slane %v3640, %v3883
  %v3885 = vlaneseq
  %v3886 = vshrl.u32 %v3885, 7
  %v3887 = vsub.s32 3, %v3886
  %v3888 = vrot.slane %v3640, %v3887
  %v3889 = vlaneseq
  %v3890 = vshrl.u32 %v3889, 7
  %v3891 = vsub.s32 4, %v3890
  %v3892 = vrot.slane %v3640, %v3891
  %v3893 = vlaneseq
  %v3894 = vshrl.u32 %v3893, 7
  %v3895 = vsub.s32 5, %v3894
  %v3896 = vrot.slane %v3640, %v3895
  %v3897 = vlaneseq
  %v3898 = vshrl.u32 %v3897, 7
  %v3899 = vsub.s32 6, %v3898
  %v3900 = vrot.slane %v3640, %v3899
  %v3901 = vlaneseq
  %v3902 = vshrl.u32 %v3901, 7
  %v3903 = vsub.s32 7, %v3902
  %v3904 = vrot.slane %v3640, %v3903
  %v3969 = vrcp.pop %v3652
  %v3970 = vmul.f32 %v2914, %v3969
  %v3971 = vrcp.pop %v3656
  %v3972 = vmul.f32 %v2916, %v3971
  %v3973 = vrcp.pop %v3660
  %v3974 = vmul.f32 %v2918, %v3973
  %v3975 = vrcp.pop %v3664
  %v3976 = vmul.f32 %v2920, %v3975
  %v3977 = vrcp.pop %v3668
  %v3978 = vmul.f32 %v2922, %v3977
  %v3979 = vrcp.pop %v3672
  %v3980 = vmul.f32 %v2924, %v3979
  %v3981 = vrcp.pop %v3676
  %v3982 = vmul.f32 %v2926, %v3981
  %v3983 = vrcp.pop %v3680
  %v3984 = vmul.f32 %v2928, %v3983
  %v3985 = vrcp.pop %v3684
  %v3986 = vmul.f32 %v2930, %v3985
  %v3987 = vrcp.pop %v3688
  %v3988 = vmul.f32 %v2932, %v3987
  %v3989 = vrcp.pop %v3692
  %v3990 = vmul.f32 %v2934, %v3989
  %v3991 = vrcp.pop %v3696
  %v3992 = vmul.f32 %v2936, %v3991
  %v3993 = vrcp.pop %v3700
  %v3994 = vmul.f32 %v2938, %v3993
  %v3995 = vrcp.pop %v3704
  %v3996 = vmul.f32 %v2940, %v3995
  %v3997 = vrcp.pop %v3708
  %v3998 = vmul.f32 %v2942, %v3997
  %v3999 = vrcp.pop %v3712
  %v4000 = vmul.f32 %v2944, %v3999
  %v4001 = vrcp.pop %v3716
  %v4002 = vmul.f32 %v2946, %v4001
  %v4003 = vrcp.pop %v3720
  %v4004 = vmul.f32 %v2948, %v4003
  %v4005 = vrcp.pop %v3724
  %v4006 = vmul.f32 %v2950, %v4005
  %v4007 = vrcp.pop %v3728
  %v4008 = vmul.f32 %v2952, %v4007
  %v4009 = vrcp.pop %v3732
  %v4010 = vmul.f32 %v2954, %v4009
  %v4011 = vrcp.pop %v3736
  %v4012 = vmul.f32 %v2956, %v4011
  %v4013 = vrcp.pop %v3740
  %v4014 = vmul.f32 %v2958, %v4013
  %v4015 = vrcp.pop %v3744
  %v4016 = vmul.f32 %v2960, %v4015
  %v4017 = vrcp.pop %v3748
  %v4018 = vmul.f32 %v2962, %v4017
  %v4019 = vrcp.pop %v3752
  %v4020 = vmul.f32 %v2964, %v4019
  %v4021 = vrcp.pop %v3756
  %v4022 = vmul.f32 %v2966, %v4021
  %v4023 = vrcp.pop %v3760
  %v4024 = vmul.f32 %v2968, %v4023
  %v4025 = vrcp.pop %v3764
  %v4026 = vmul.f32 %v2970, %v4025
  %v4027 = vrcp.pop %v3768
  %v4028 = vmul.f32 %v2972, %v4027
  %v4029 = vrcp.pop %v3772
  %v4030 = vmul.f32 %v2974, %v4029
  %v4031 = vrcp.pop %v3776
  %v4032 = vmul.f32 %v2976, %v4031
  %v4033 = vrcp.pop %v3780
  %v4034 = vmul.f32 %v2978, %v4033
  %v4035 = vrcp.pop %v3784
  %v4036 = vmul.f32 %v2980, %v4035
  %v4037 = vrcp.pop %v3788
  %v4038 = vmul.f32 %v2982, %v4037
  %v4039 = vrcp.pop %v3792
  %v4040 = vmul.f32 %v2984, %v4039
  %v4041 = vrcp.pop %v3796
  %v4042 = vmul.f32 %v2986, %v4041
  %v4043 = vrcp.pop %v3800
  %v4044 = vmul.f32 %v2988, %v4043
  %v4045 = vrcp.pop %v3804
  %v4046 = vmul.f32 %v2990, %v4045
  %v4047 = vrcp.pop %v3808
  %v4048 = vmul.f32 %v2992, %v4047
  %v4049 = vrcp.pop %v3812
  %v4050 = vmul.f32 %v2994, %v4049
  %v4051 = vrcp.pop %v3816
  %v4052 = vmul.f32 %v2996, %v4051
  %v4053 = vrcp.pop %v3820
  %v4054 = vmul.f32 %v2998, %v4053
  %v4055 = vrcp.pop %v3824
  %v4056 = vmul.f32 %v3000, %v4055
  %v4057 = vrcp.pop %v3828
  %v4058 = vmul.f32 %v3002, %v4057
  %v4059 = vrcp.pop %v3832
  %v4060 = vmul.f32 %v3004, %v4059
  %v4061 = vrcp.pop %v3836
  %v4062 = vmul.f32 %v3006, %v4061
  %v4063 = vrcp.pop %v3840
  %v4064 = vmul.f32 %v3008, %v4063
  %v4065 = vrcp.pop %v3844
  %v4066 = vmul.f32 %v3010, %v4065
  %v4067 = vrcp.pop %v3848
  %v4068 = vmul.f32 %v3012, %v4067
  %v4069 = vrcp.pop %v3852
  %v4070 = vmul.f32 %v3014, %v4069
  %v4071 = vrcp.pop %v3856
  %v4072 = vmul.f32 %v3016, %v4071
  %v4073 = vrcp.pop %v3860
  %v4074 = vmul.f32 %v3018, %v4073
  %v4075 = vrcp.pop %v3864
  %v4076 = vmul.f32 %v3020, %v4075
  %v4077 = vrcp.pop %v3868
  %v4078 = vmul.f32 %v3022, %v4077
  %v4079 = vrcp.pop %v3872
  %v4080 = vmul.f32 %v3024, %v4079
  %v4081 = vrcp.pop %v3876
  %v4082 = vmul.f32 %v3026, %v4081
  %v4083 = vrcp.pop %v3880
  %v4084 = vmul.f32 %v3028, %v4083
  %v4085 = vrcp.pop %v3884
  %v4086 = vmul.f32 %v3030, %v4085
  %v4087 = vrcp.pop %v3888
  %v4088 = vmul.f32 %v3032, %v4087
  %v4089 = vrcp.pop %v3892
  %v4090 = vmul.f32 %v3034, %v4089
  %v4091 = vrcp.pop %v3896
  %v4092 = vmul.f32 %v3036, %v4091
  %v4093 = vrcp.pop %v3900
  %v4094 = vmul.f32 %v3038, %v4093
  %v4095 = vrcp.pop %v3904
  %v4096 = vmul.f32 %v3040, %v4095
  %4105 = vset.pattern.permute.xlu0 0
  %4106 = vperm.xlu0 %4105, %v3970
  %v4107 = vpop.permute.xlu0 %4106
  %4108 = vset.pattern.permute.xlu0 0
  %4109 = vperm.xlu0 %4108, %v3972
  %v4110 = vpop.permute.xlu0 %4109
  %4111 = vset.pattern.permute.xlu0 0
  %4112 = vperm.xlu0 %4111, %v3974
  %v4113 = vpop.permute.xlu0 %4112
  %4114 = vset.pattern.permute.xlu0 0
  %4115 = vperm.xlu0 %4114, %v3976
  %v4116 = vpop.permute.xlu0 %4115
  %4117 = vset.pattern.permute.xlu0 0
  %4118 = vperm.xlu0 %4117, %v3978
  %v4119 = vpop.permute.xlu0 %4118
  %4120 = vset.pattern.permute.xlu0 0
  %4121 = vperm.xlu0 %4120, %v3980
  %v4122 = vpop.permute.xlu0 %4121
  %4123 = vset.pattern.permute.xlu0 0
  %4124 = vperm.xlu0 %4123, %v3982
  %v4125 = vpop.permute.xlu0 %4124
  %4126 = vset.pattern.permute.xlu0 0
  %4127 = vperm.xlu0 %4126, %v3984
  %v4128 = vpop.permute.xlu0 %4127
  %v4129 = vlaneseq
  %v4130 = vshrl.u32 %v4129, 7
  %v4131 = vsub.s32 %v2168, %v4130
  %v4132 = vrot.slane %v4107, %v4131
  %v4133 = vlaneseq
  %v4134 = vshrl.u32 %v4133, 7
  %v4135 = vsub.s32 %v2168, %v4134
  %v4136 = vrot.slane %v4110, %v4135
  %v4137 = vlaneseq
  %v4138 = vshrl.u32 %v4137, 7
  %v4139 = vsub.s32 %v2168, %v4138
  %v4140 = vrot.slane %v4113, %v4139
  %v4141 = vlaneseq
  %v4142 = vshrl.u32 %v4141, 7
  %v4143 = vsub.s32 %v2168, %v4142
  %v4144 = vrot.slane %v4116, %v4143
  %v4145 = vlaneseq
  %v4146 = vshrl.u32 %v4145, 7
  %v4147 = vsub.s32 %v2168, %v4146
  %v4148 = vrot.slane %v4119, %v4147
  %v4149 = vlaneseq
  %v4150 = vshrl.u32 %v4149, 7
  %v4151 = vsub.s32 %v2168, %v4150
  %v4152 = vrot.slane %v4122, %v4151
  %v4153 = vlaneseq
  %v4154 = vshrl.u32 %v4153, 7
  %v4155 = vsub.s32 %v2168, %v4154
  %v4156 = vrot.slane %v4125, %v4155
  %v4157 = vlaneseq
  %v4158 = vshrl.u32 %v4157, 7
  %v4159 = vsub.s32 %v2168, %v4158
  %v4160 = vrot.slane %v4128, %v4159
  %v4161 = vsel %vm2425, %v4136, %v4132
  %v4162 = vsel %vm2427, %v4140, %v4161
  %v4163 = vsel %vm2429, %v4144, %v4162
  %v4164 = vsel %vm2431, %v4148, %v4163
  %v4165 = vsel %vm2433, %v4152, %v4164
  %v4166 = vsel %vm2435, %v4156, %v4165
  %v4167 = vsel %vm2437, %v4160, %v4166
  %v4169 = vsel %vm2496, %v23, 0
  %v4172 = vsel %vm2496, %v24, 0
  %v4174 = vsel %vm2496, %v4167, 0
  %4176 = vmatprep.subr.mxu0 0.0
  %4177 = vmatpush1.xpose.msra.mxu0 %v4174
  %4178 = vmatprep.subr.mxu0 0.0
  %4179 = vmatpush1.xpose.msra.mxu0 0.0
  %4180 = vmatprep.subr.mxu0 0.0
  %4181 = vmatpush1.xpose.msra.mxu0 0.0
  %4182 = vmatprep.subr.mxu0 0.0
  %4183 = vmatpush1.xpose.msra.mxu0 0.0
  %4184 = vmatprep.subr.mxu0 0.0
  %4185 = vmatpush1.xpose.msra.mxu0 0.0
  %4186 = vmatprep.subr.mxu0 0.0
  %4187 = vmatpush1.xpose.msra.mxu0 0.0
  %4188 = vmatprep.subr.mxu0 0.0
  %4189 = vmatpush1.xpose.msra.mxu0 0.0
  %4190 = vmatprep.subr.mxu0 0.0
  %4191 = vmatpush1.xpose.msra.mxu0 0.0
  %4192 = vmatprep.subr.mxu0 0.0
  %4193 = vmatpush1.xpose.msra.mxu0 0.0
  %4194 = vmatprep.subr.mxu0 0.0
  %4195 = vmatpush1.xpose.msra.mxu0 0.0
  %4196 = vmatprep.subr.mxu0 0.0
  %4197 = vmatpush1.xpose.msra.mxu0 0.0
  %4198 = vmatprep.subr.mxu0 0.0
  %4199 = vmatpush1.xpose.msra.mxu0 0.0
  %4200 = vmatprep.subr.mxu0 0.0
  %4201 = vmatpush1.xpose.msra.mxu0 0.0
  %4202 = vmatprep.subr.mxu0 0.0
  %4203 = vmatpush1.xpose.msra.mxu0 0.0
  %4204 = vmatprep.subr.mxu0 0.0
  %4205 = vmatpush1.xpose.msra.mxu0 0.0
  %4206 = vmatprep.subr.mxu0 0.0
  %4207 = vmatpush1.xpose.msra.mxu0 0.0
  %4208 = vmatprep.subr.mxu0 0.0
  %4209 = vmatpush1.xpose.msra.mxu0 0.0
  %4210 = vmatprep.subr.mxu0 0.0
  %4211 = vmatpush1.xpose.msra.mxu0 0.0
  %4212 = vmatprep.subr.mxu0 0.0
  %4213 = vmatpush1.xpose.msra.mxu0 0.0
  %4214 = vmatprep.subr.mxu0 0.0
  %4215 = vmatpush1.xpose.msra.mxu0 0.0
  %4216 = vmatprep.subr.mxu0 0.0
  %4217 = vmatpush1.xpose.msra.mxu0 0.0
  %4218 = vmatprep.subr.mxu0 0.0
  %4219 = vmatpush1.xpose.msra.mxu0 0.0
  %4220 = vmatprep.subr.mxu0 0.0
  %4221 = vmatpush1.xpose.msra.mxu0 0.0
  %4222 = vmatprep.subr.mxu0 0.0
  %4223 = vmatpush1.xpose.msra.mxu0 0.0
  %4224 = vmatprep.subr.mxu0 0.0
  %4225 = vmatpush1.xpose.msra.mxu0 0.0
  %4226 = vmatprep.subr.mxu0 0.0
  %4227 = vmatpush1.xpose.msra.mxu0 0.0
  %4228 = vmatprep.subr.mxu0 0.0
  %4229 = vmatpush1.xpose.msra.mxu0 0.0
  %4230 = vmatprep.subr.mxu0 0.0
  %4231 = vmatpush1.xpose.msra.mxu0 0.0
  %4232 = vmatprep.subr.mxu0 0.0
  %4233 = vmatpush1.xpose.msra.mxu0 0.0
  %4234 = vmatprep.subr.mxu0 0.0
  %4235 = vmatpush1.xpose.msra.mxu0 0.0
  %4236 = vmatprep.subr.mxu0 0.0
  %4237 = vmatpush1.xpose.msra.mxu0 0.0
  %4238 = vmatprep.subr.mxu0 0.0
  %4239 = vmatpush1.xpose.msra.mxu0 0.0
  %4240 = vmatprep.mubr.f32.mxu0 0.0
  %4241 = vmatmul.mubr.f32.gmra.mrb[0].mxu0 %v4169
  %v4242 = vpop.f32.mrb[0].mxu0
  %v4243 = vadd.f32 0.0, %v4242
  %v4244 = vpop.f32.mrb[0].mxu0
  %4245 = vmatprep.mubr.f32.mxu0 0.0
  %4246 = vmatmul.mubr.f32.gmra.mrb[0].mxu0 %v4172
  %v4247 = vpop.f32.mrb[0].mxu0
  %v4248 = vadd.f32 0.0, %v4247
  %v4249 = vpop.f32.mrb[0].mxu0
  %4250 = vdwg.mxu0
  %4259 = vset.pattern.permute.xlu0 0
  %4260 = vperm.xlu0 %4259, %v3986
  %v4261 = vpop.permute.xlu0 %4260
  %4262 = vset.pattern.permute.xlu0 0
  %4263 = vperm.xlu0 %4262, %v3988
  %v4264 = vpop.permute.xlu0 %4263
  %4265 = vset.pattern.permute.xlu0 0
  %4266 = vperm.xlu0 %4265, %v3990
  %v4267 = vpop.permute.xlu0 %4266
  %4268 = vset.pattern.permute.xlu0 0
  %4269 = vperm.xlu0 %4268, %v3992
  %v4270 = vpop.permute.xlu0 %4269
  %4271 = vset.pattern.permute.xlu0 0
  %4272 = vperm.xlu0 %4271, %v3994
  %v4273 = vpop.permute.xlu0 %4272
  %4274 = vset.pattern.permute.xlu0 0
  %4275 = vperm.xlu0 %4274, %v3996
  %v4276 = vpop.permute.xlu0 %4275
  %4277 = vset.pattern.permute.xlu0 0
  %4278 = vperm.xlu0 %4277, %v3998
  %v4279 = vpop.permute.xlu0 %4278
  %4280 = vset.pattern.permute.xlu0 0
  %4281 = vperm.xlu0 %4280, %v4000
  %v4282 = vpop.permute.xlu0 %4281
  %v4283 = vlaneseq
  %v4284 = vshrl.u32 %v4283, 7
  %v4285 = vsub.s32 %v2168, %v4284
  %v4286 = vrot.slane %v4261, %v4285
  %v4287 = vlaneseq
  %v4288 = vshrl.u32 %v4287, 7
  %v4289 = vsub.s32 %v2168, %v4288
  %v4290 = vrot.slane %v4264, %v4289
  %v4291 = vlaneseq
  %v4292 = vshrl.u32 %v4291, 7
  %v4293 = vsub.s32 %v2168, %v4292
  %v4294 = vrot.slane %v4267, %v4293
  %v4295 = vlaneseq
  %v4296 = vshrl.u32 %v4295, 7
  %v4297 = vsub.s32 %v2168, %v4296
  %v4298 = vrot.slane %v4270, %v4297
  %v4299 = vlaneseq
  %v4300 = vshrl.u32 %v4299, 7
  %v4301 = vsub.s32 %v2168, %v4300
  %v4302 = vrot.slane %v4273, %v4301
  %v4303 = vlaneseq
  %v4304 = vshrl.u32 %v4303, 7
  %v4305 = vsub.s32 %v2168, %v4304
  %v4306 = vrot.slane %v4276, %v4305
  %v4307 = vlaneseq
  %v4308 = vshrl.u32 %v4307, 7
  %v4309 = vsub.s32 %v2168, %v4308
  %v4310 = vrot.slane %v4279, %v4309
  %v4311 = vlaneseq
  %v4312 = vshrl.u32 %v4311, 7
  %v4313 = vsub.s32 %v2168, %v4312
  %v4314 = vrot.slane %v4282, %v4313
  %v4315 = vsel %vm2425, %v4290, %v4286
  %v4316 = vsel %vm2427, %v4294, %v4315
  %v4317 = vsel %vm2429, %v4298, %v4316
  %v4318 = vsel %vm2431, %v4302, %v4317
  %v4319 = vsel %vm2433, %v4306, %v4318
  %v4320 = vsel %vm2435, %v4310, %v4319
  %v4321 = vsel %vm2437, %v4314, %v4320
  %v4323 = vsel %vm2496, %v25, 0
  %v4326 = vsel %vm2496, %v26, 0
  %v4328 = vsel %vm2496, %v4321, 0
  %4330 = vmatprep.subr.mxu0 0.0
  %4331 = vmatpush1.xpose.msra.mxu0 %v4328
  %4332 = vmatprep.subr.mxu0 0.0
  %4333 = vmatpush1.xpose.msra.mxu0 0.0
  %4334 = vmatprep.subr.mxu0 0.0
  %4335 = vmatpush1.xpose.msra.mxu0 0.0
  %4336 = vmatprep.subr.mxu0 0.0
  %4337 = vmatpush1.xpose.msra.mxu0 0.0
  %4338 = vmatprep.subr.mxu0 0.0
  %4339 = vmatpush1.xpose.msra.mxu0 0.0
  %4340 = vmatprep.subr.mxu0 0.0
  %4341 = vmatpush1.xpose.msra.mxu0 0.0
  %4342 = vmatprep.subr.mxu0 0.0
  %4343 = vmatpush1.xpose.msra.mxu0 0.0
  %4344 = vmatprep.subr.mxu0 0.0
  %4345 = vmatpush1.xpose.msra.mxu0 0.0
  %4346 = vmatprep.subr.mxu0 0.0
  %4347 = vmatpush1.xpose.msra.mxu0 0.0
  %4348 = vmatprep.subr.mxu0 0.0
  %4349 = vmatpush1.xpose.msra.mxu0 0.0
  %4350 = vmatprep.subr.mxu0 0.0
  %4351 = vmatpush1.xpose.msra.mxu0 0.0
  %4352 = vmatprep.subr.mxu0 0.0
  %4353 = vmatpush1.xpose.msra.mxu0 0.0
  %4354 = vmatprep.subr.mxu0 0.0
  %4355 = vmatpush1.xpose.msra.mxu0 0.0
  %4356 = vmatprep.subr.mxu0 0.0
  %4357 = vmatpush1.xpose.msra.mxu0 0.0
  %4358 = vmatprep.subr.mxu0 0.0
  %4359 = vmatpush1.xpose.msra.mxu0 0.0
  %4360 = vmatprep.subr.mxu0 0.0
  %4361 = vmatpush1.xpose.msra.mxu0 0.0
  %4362 = vmatprep.subr.mxu0 0.0
  %4363 = vmatpush1.xpose.msra.mxu0 0.0
  %4364 = vmatprep.subr.mxu0 0.0
  %4365 = vmatpush1.xpose.msra.mxu0 0.0
  %4366 = vmatprep.subr.mxu0 0.0
  %4367 = vmatpush1.xpose.msra.mxu0 0.0
  %4368 = vmatprep.subr.mxu0 0.0
  %4369 = vmatpush1.xpose.msra.mxu0 0.0
  %4370 = vmatprep.subr.mxu0 0.0
  %4371 = vmatpush1.xpose.msra.mxu0 0.0
  %4372 = vmatprep.subr.mxu0 0.0
  %4373 = vmatpush1.xpose.msra.mxu0 0.0
  %4374 = vmatprep.subr.mxu0 0.0
  %4375 = vmatpush1.xpose.msra.mxu0 0.0
  %4376 = vmatprep.subr.mxu0 0.0
  %4377 = vmatpush1.xpose.msra.mxu0 0.0
  %4378 = vmatprep.subr.mxu0 0.0
  %4379 = vmatpush1.xpose.msra.mxu0 0.0
  %4380 = vmatprep.subr.mxu0 0.0
  %4381 = vmatpush1.xpose.msra.mxu0 0.0
  %4382 = vmatprep.subr.mxu0 0.0
  %4383 = vmatpush1.xpose.msra.mxu0 0.0
  %4384 = vmatprep.subr.mxu0 0.0
  %4385 = vmatpush1.xpose.msra.mxu0 0.0
  %4386 = vmatprep.subr.mxu0 0.0
  %4387 = vmatpush1.xpose.msra.mxu0 0.0
  %4388 = vmatprep.subr.mxu0 0.0
  %4389 = vmatpush1.xpose.msra.mxu0 0.0
  %4390 = vmatprep.subr.mxu0 0.0
  %4391 = vmatpush1.xpose.msra.mxu0 0.0
  %4392 = vmatprep.subr.mxu0 0.0
  %4393 = vmatpush1.xpose.msra.mxu0 0.0
  %4394 = vmatprep.mubr.f32.mxu0 0.0
  %4395 = vmatmul.mubr.f32.gmra.mrb[0].mxu0 %v4323
  %v4396 = vpop.f32.mrb[0].mxu0
  %v4397 = vadd.f32 0.0, %v4396
  %v4398 = vpop.f32.mrb[0].mxu0
  %4399 = vmatprep.mubr.f32.mxu0 0.0
  %4400 = vmatmul.mubr.f32.gmra.mrb[0].mxu0 %v4326
  %v4401 = vpop.f32.mrb[0].mxu0
  %v4402 = vadd.f32 0.0, %v4401
  %v4403 = vpop.f32.mrb[0].mxu0
  %4404 = vdwg.mxu0
  %4413 = vset.pattern.permute.xlu0 0
  %4414 = vperm.xlu0 %4413, %v4002
  %v4415 = vpop.permute.xlu0 %4414
  %4416 = vset.pattern.permute.xlu0 0
  %4417 = vperm.xlu0 %4416, %v4004
  %v4418 = vpop.permute.xlu0 %4417
  %4419 = vset.pattern.permute.xlu0 0
  %4420 = vperm.xlu0 %4419, %v4006
  %v4421 = vpop.permute.xlu0 %4420
  %4422 = vset.pattern.permute.xlu0 0
  %4423 = vperm.xlu0 %4422, %v4008
  %v4424 = vpop.permute.xlu0 %4423
  %4425 = vset.pattern.permute.xlu0 0
  %4426 = vperm.xlu0 %4425, %v4010
  %v4427 = vpop.permute.xlu0 %4426
  %4428 = vset.pattern.permute.xlu0 0
  %4429 = vperm.xlu0 %4428, %v4012
  %v4430 = vpop.permute.xlu0 %4429
  %4431 = vset.pattern.permute.xlu0 0
  %4432 = vperm.xlu0 %4431, %v4014
  %v4433 = vpop.permute.xlu0 %4432
  %4434 = vset.pattern.permute.xlu0 0
  %4435 = vperm.xlu0 %4434, %v4016
  %v4436 = vpop.permute.xlu0 %4435
  %v4437 = vlaneseq
  %v4438 = vshrl.u32 %v4437, 7
  %v4439 = vsub.s32 %v2168, %v4438
  %v4440 = vrot.slane %v4415, %v4439
  %v4441 = vlaneseq
  %v4442 = vshrl.u32 %v4441, 7
  %v4443 = vsub.s32 %v2168, %v4442
  %v4444 = vrot.slane %v4418, %v4443
  %v4445 = vlaneseq
  %v4446 = vshrl.u32 %v4445, 7
  %v4447 = vsub.s32 %v2168, %v4446
  %v4448 = vrot.slane %v4421, %v4447
  %v4449 = vlaneseq
  %v4450 = vshrl.u32 %v4449, 7
  %v4451 = vsub.s32 %v2168, %v4450
  %v4452 = vrot.slane %v4424, %v4451
  %v4453 = vlaneseq
  %v4454 = vshrl.u32 %v4453, 7
  %v4455 = vsub.s32 %v2168, %v4454
  %v4456 = vrot.slane %v4427, %v4455
  %v4457 = vlaneseq
  %v4458 = vshrl.u32 %v4457, 7
  %v4459 = vsub.s32 %v2168, %v4458
  %v4460 = vrot.slane %v4430, %v4459
  %v4461 = vlaneseq
  %v4462 = vshrl.u32 %v4461, 7
  %v4463 = vsub.s32 %v2168, %v4462
  %v4464 = vrot.slane %v4433, %v4463
  %v4465 = vlaneseq
  %v4466 = vshrl.u32 %v4465, 7
  %v4467 = vsub.s32 %v2168, %v4466
  %v4468 = vrot.slane %v4436, %v4467
  %v4469 = vsel %vm2425, %v4444, %v4440
  %v4470 = vsel %vm2427, %v4448, %v4469
  %v4471 = vsel %vm2429, %v4452, %v4470
  %v4472 = vsel %vm2431, %v4456, %v4471
  %v4473 = vsel %vm2433, %v4460, %v4472
  %v4474 = vsel %vm2435, %v4464, %v4473
  %v4475 = vsel %vm2437, %v4468, %v4474
  %v4477 = vsel %vm2496, %v27, 0
  %v4480 = vsel %vm2496, %v28, 0
  %v4482 = vsel %vm2496, %v4475, 0
  %4484 = vmatprep.subr.mxu0 0.0
  %4485 = vmatpush1.xpose.msra.mxu0 %v4482
  %4486 = vmatprep.subr.mxu0 0.0
  %4487 = vmatpush1.xpose.msra.mxu0 0.0
  %4488 = vmatprep.subr.mxu0 0.0
  %4489 = vmatpush1.xpose.msra.mxu0 0.0
  %4490 = vmatprep.subr.mxu0 0.0
  %4491 = vmatpush1.xpose.msra.mxu0 0.0
  %4492 = vmatprep.subr.mxu0 0.0
  %4493 = vmatpush1.xpose.msra.mxu0 0.0
  %4494 = vmatprep.subr.mxu0 0.0
  %4495 = vmatpush1.xpose.msra.mxu0 0.0
  %4496 = vmatprep.subr.mxu0 0.0
  %4497 = vmatpush1.xpose.msra.mxu0 0.0
  %4498 = vmatprep.subr.mxu0 0.0
  %4499 = vmatpush1.xpose.msra.mxu0 0.0
  %4500 = vmatprep.subr.mxu0 0.0
  %4501 = vmatpush1.xpose.msra.mxu0 0.0
  %4502 = vmatprep.subr.mxu0 0.0
  %4503 = vmatpush1.xpose.msra.mxu0 0.0
  %4504 = vmatprep.subr.mxu0 0.0
  %4505 = vmatpush1.xpose.msra.mxu0 0.0
  %4506 = vmatprep.subr.mxu0 0.0
  %4507 = vmatpush1.xpose.msra.mxu0 0.0
  %4508 = vmatprep.subr.mxu0 0.0
  %4509 = vmatpush1.xpose.msra.mxu0 0.0
  %4510 = vmatprep.subr.mxu0 0.0
  %4511 = vmatpush1.xpose.msra.mxu0 0.0
  %4512 = vmatprep.subr.mxu0 0.0
  %4513 = vmatpush1.xpose.msra.mxu0 0.0
  %4514 = vmatprep.subr.mxu0 0.0
  %4515 = vmatpush1.xpose.msra.mxu0 0.0
  %4516 = vmatprep.subr.mxu0 0.0
  %4517 = vmatpush1.xpose.msra.mxu0 0.0
  %4518 = vmatprep.subr.mxu0 0.0
  %4519 = vmatpush1.xpose.msra.mxu0 0.0
  %4520 = vmatprep.subr.mxu0 0.0
  %4521 = vmatpush1.xpose.msra.mxu0 0.0
  %4522 = vmatprep.subr.mxu0 0.0
  %4523 = vmatpush1.xpose.msra.mxu0 0.0
  %4524 = vmatprep.subr.mxu0 0.0
  %4525 = vmatpush1.xpose.msra.mxu0 0.0
  %4526 = vmatprep.subr.mxu0 0.0
  %4527 = vmatpush1.xpose.msra.mxu0 0.0
  %4528 = vmatprep.subr.mxu0 0.0
  %4529 = vmatpush1.xpose.msra.mxu0 0.0
  %4530 = vmatprep.subr.mxu0 0.0
  %4531 = vmatpush1.xpose.msra.mxu0 0.0
  %4532 = vmatprep.subr.mxu0 0.0
  %4533 = vmatpush1.xpose.msra.mxu0 0.0
  %4534 = vmatprep.subr.mxu0 0.0
  %4535 = vmatpush1.xpose.msra.mxu0 0.0
  %4536 = vmatprep.subr.mxu0 0.0
  %4537 = vmatpush1.xpose.msra.mxu0 0.0
  %4538 = vmatprep.subr.mxu0 0.0
  %4539 = vmatpush1.xpose.msra.mxu0 0.0
  %4540 = vmatprep.subr.mxu0 0.0
  %4541 = vmatpush1.xpose.msra.mxu0 0.0
  %4542 = vmatprep.subr.mxu0 0.0
  %4543 = vmatpush1.xpose.msra.mxu0 0.0
  %4544 = vmatprep.subr.mxu0 0.0
  %4545 = vmatpush1.xpose.msra.mxu0 0.0
  %4546 = vmatprep.subr.mxu0 0.0
  %4547 = vmatpush1.xpose.msra.mxu0 0.0
  %4548 = vmatprep.mubr.f32.mxu0 0.0
  %4549 = vmatmul.mubr.f32.gmra.mrb[0].mxu0 %v4477
  %v4550 = vpop.f32.mrb[0].mxu0
  %v4551 = vadd.f32 0.0, %v4550
  %v4552 = vpop.f32.mrb[0].mxu0
  %4553 = vmatprep.mubr.f32.mxu0 0.0
  %4554 = vmatmul.mubr.f32.gmra.mrb[0].mxu0 %v4480
  %v4555 = vpop.f32.mrb[0].mxu0
  %v4556 = vadd.f32 0.0, %v4555
  %v4557 = vpop.f32.mrb[0].mxu0
  %4558 = vdwg.mxu0
  %4567 = vset.pattern.permute.xlu0 0
  %4568 = vperm.xlu0 %4567, %v4018
  %v4569 = vpop.permute.xlu0 %4568
  %4570 = vset.pattern.permute.xlu0 0
  %4571 = vperm.xlu0 %4570, %v4020
  %v4572 = vpop.permute.xlu0 %4571
  %4573 = vset.pattern.permute.xlu0 0
  %4574 = vperm.xlu0 %4573, %v4022
  %v4575 = vpop.permute.xlu0 %4574
  %4576 = vset.pattern.permute.xlu0 0
  %4577 = vperm.xlu0 %4576, %v4024
  %v4578 = vpop.permute.xlu0 %4577
  %4579 = vset.pattern.permute.xlu0 0
  %4580 = vperm.xlu0 %4579, %v4026
  %v4581 = vpop.permute.xlu0 %4580
  %4582 = vset.pattern.permute.xlu0 0
  %4583 = vperm.xlu0 %4582, %v4028
  %v4584 = vpop.permute.xlu0 %4583
  %4585 = vset.pattern.permute.xlu0 0
  %4586 = vperm.xlu0 %4585, %v4030
  %v4587 = vpop.permute.xlu0 %4586
  %4588 = vset.pattern.permute.xlu0 0
  %4589 = vperm.xlu0 %4588, %v4032
  %v4590 = vpop.permute.xlu0 %4589
  %v4591 = vlaneseq
  %v4592 = vshrl.u32 %v4591, 7
  %v4593 = vsub.s32 %v2168, %v4592
  %v4594 = vrot.slane %v4569, %v4593
  %v4595 = vlaneseq
  %v4596 = vshrl.u32 %v4595, 7
  %v4597 = vsub.s32 %v2168, %v4596
  %v4598 = vrot.slane %v4572, %v4597
  %v4599 = vlaneseq
  %v4600 = vshrl.u32 %v4599, 7
  %v4601 = vsub.s32 %v2168, %v4600
  %v4602 = vrot.slane %v4575, %v4601
  %v4603 = vlaneseq
  %v4604 = vshrl.u32 %v4603, 7
  %v4605 = vsub.s32 %v2168, %v4604
  %v4606 = vrot.slane %v4578, %v4605
  %v4607 = vlaneseq
  %v4608 = vshrl.u32 %v4607, 7
  %v4609 = vsub.s32 %v2168, %v4608
  %v4610 = vrot.slane %v4581, %v4609
  %v4611 = vlaneseq
  %v4612 = vshrl.u32 %v4611, 7
  %v4613 = vsub.s32 %v2168, %v4612
  %v4614 = vrot.slane %v4584, %v4613
  %v4615 = vlaneseq
  %v4616 = vshrl.u32 %v4615, 7
  %v4617 = vsub.s32 %v2168, %v4616
  %v4618 = vrot.slane %v4587, %v4617
  %v4619 = vlaneseq
  %v4620 = vshrl.u32 %v4619, 7
  %v4621 = vsub.s32 %v2168, %v4620
  %v4622 = vrot.slane %v4590, %v4621
  %v4623 = vsel %vm2425, %v4598, %v4594
  %v4624 = vsel %vm2427, %v4602, %v4623
  %v4625 = vsel %vm2429, %v4606, %v4624
  %v4626 = vsel %vm2431, %v4610, %v4625
  %v4627 = vsel %vm2433, %v4614, %v4626
  %v4628 = vsel %vm2435, %v4618, %v4627
  %v4629 = vsel %vm2437, %v4622, %v4628
  %v4631 = vsel %vm2496, %v29, 0
  %v4634 = vsel %vm2496, %v30, 0
  %v4636 = vsel %vm2496, %v4629, 0
  %4638 = vmatprep.subr.mxu0 0.0
  %4639 = vmatpush1.xpose.msra.mxu0 %v4636
  %4640 = vmatprep.subr.mxu0 0.0
  %4641 = vmatpush1.xpose.msra.mxu0 0.0
  %4642 = vmatprep.subr.mxu0 0.0
  %4643 = vmatpush1.xpose.msra.mxu0 0.0
  %4644 = vmatprep.subr.mxu0 0.0
  %4645 = vmatpush1.xpose.msra.mxu0 0.0
  %4646 = vmatprep.subr.mxu0 0.0
  %4647 = vmatpush1.xpose.msra.mxu0 0.0
  %4648 = vmatprep.subr.mxu0 0.0
  %4649 = vmatpush1.xpose.msra.mxu0 0.0
  %4650 = vmatprep.subr.mxu0 0.0
  %4651 = vmatpush1.xpose.msra.mxu0 0.0
  %4652 = vmatprep.subr.mxu0 0.0
  %4653 = vmatpush1.xpose.msra.mxu0 0.0
  %4654 = vmatprep.subr.mxu0 0.0
  %4655 = vmatpush1.xpose.msra.mxu0 0.0
  %4656 = vmatprep.subr.mxu0 0.0
  %4657 = vmatpush1.xpose.msra.mxu0 0.0
  %4658 = vmatprep.subr.mxu0 0.0
  %4659 = vmatpush1.xpose.msra.mxu0 0.0
  %4660 = vmatprep.subr.mxu0 0.0
  %4661 = vmatpush1.xpose.msra.mxu0 0.0
  %4662 = vmatprep.subr.mxu0 0.0
  %4663 = vmatpush1.xpose.msra.mxu0 0.0
  %4664 = vmatprep.subr.mxu0 0.0
  %4665 = vmatpush1.xpose.msra.mxu0 0.0
  %4666 = vmatprep.subr.mxu0 0.0
  %4667 = vmatpush1.xpose.msra.mxu0 0.0
  %4668 = vmatprep.subr.mxu0 0.0
  %4669 = vmatpush1.xpose.msra.mxu0 0.0
  %4670 = vmatprep.subr.mxu0 0.0
  %4671 = vmatpush1.xpose.msra.mxu0 0.0
  %4672 = vmatprep.subr.mxu0 0.0
  %4673 = vmatpush1.xpose.msra.mxu0 0.0
  %4674 = vmatprep.subr.mxu0 0.0
  %4675 = vmatpush1.xpose.msra.mxu0 0.0
  %4676 = vmatprep.subr.mxu0 0.0
  %4677 = vmatpush1.xpose.msra.mxu0 0.0
  %4678 = vmatprep.subr.mxu0 0.0
  %4679 = vmatpush1.xpose.msra.mxu0 0.0
  %4680 = vmatprep.subr.mxu0 0.0
  %4681 = vmatpush1.xpose.msra.mxu0 0.0
  %4682 = vmatprep.subr.mxu0 0.0
  %4683 = vmatpush1.xpose.msra.mxu0 0.0
  %4684 = vmatprep.subr.mxu0 0.0
  %4685 = vmatpush1.xpose.msra.mxu0 0.0
  %4686 = vmatprep.subr.mxu0 0.0
  %4687 = vmatpush1.xpose.msra.mxu0 0.0
  %4688 = vmatprep.subr.mxu0 0.0
  %4689 = vmatpush1.xpose.msra.mxu0 0.0
  %4690 = vmatprep.subr.mxu0 0.0
  %4691 = vmatpush1.xpose.msra.mxu0 0.0
  %4692 = vmatprep.subr.mxu0 0.0
  %4693 = vmatpush1.xpose.msra.mxu0 0.0
  %4694 = vmatprep.subr.mxu0 0.0
  %4695 = vmatpush1.xpose.msra.mxu0 0.0
  %4696 = vmatprep.subr.mxu0 0.0
  %4697 = vmatpush1.xpose.msra.mxu0 0.0
  %4698 = vmatprep.subr.mxu0 0.0
  %4699 = vmatpush1.xpose.msra.mxu0 0.0
  %4700 = vmatprep.subr.mxu0 0.0
  %4701 = vmatpush1.xpose.msra.mxu0 0.0
  %4702 = vmatprep.mubr.f32.mxu0 0.0
  %4703 = vmatmul.mubr.f32.gmra.mrb[0].mxu0 %v4631
  %v4704 = vpop.f32.mrb[0].mxu0
  %v4705 = vadd.f32 0.0, %v4704
  %v4706 = vpop.f32.mrb[0].mxu0
  %4707 = vmatprep.mubr.f32.mxu0 0.0
  %4708 = vmatmul.mubr.f32.gmra.mrb[0].mxu0 %v4634
  %v4709 = vpop.f32.mrb[0].mxu0
  %v4710 = vadd.f32 0.0, %v4709
  %v4711 = vpop.f32.mrb[0].mxu0
  %4712 = vdwg.mxu0
  %4721 = vset.pattern.permute.xlu0 0
  %4722 = vperm.xlu0 %4721, %v4034
  %v4723 = vpop.permute.xlu0 %4722
  %4724 = vset.pattern.permute.xlu0 0
  %4725 = vperm.xlu0 %4724, %v4036
  %v4726 = vpop.permute.xlu0 %4725
  %4727 = vset.pattern.permute.xlu0 0
  %4728 = vperm.xlu0 %4727, %v4038
  %v4729 = vpop.permute.xlu0 %4728
  %4730 = vset.pattern.permute.xlu0 0
  %4731 = vperm.xlu0 %4730, %v4040
  %v4732 = vpop.permute.xlu0 %4731
  %4733 = vset.pattern.permute.xlu0 0
  %4734 = vperm.xlu0 %4733, %v4042
  %v4735 = vpop.permute.xlu0 %4734
  %4736 = vset.pattern.permute.xlu0 0
  %4737 = vperm.xlu0 %4736, %v4044
  %v4738 = vpop.permute.xlu0 %4737
  %4739 = vset.pattern.permute.xlu0 0
  %4740 = vperm.xlu0 %4739, %v4046
  %v4741 = vpop.permute.xlu0 %4740
  %4742 = vset.pattern.permute.xlu0 0
  %4743 = vperm.xlu0 %4742, %v4048
  %v4744 = vpop.permute.xlu0 %4743
  %v4745 = vlaneseq
  %v4746 = vshrl.u32 %v4745, 7
  %v4747 = vsub.s32 %v2168, %v4746
  %v4748 = vrot.slane %v4723, %v4747
  %v4749 = vlaneseq
  %v4750 = vshrl.u32 %v4749, 7
  %v4751 = vsub.s32 %v2168, %v4750
  %v4752 = vrot.slane %v4726, %v4751
  %v4753 = vlaneseq
  %v4754 = vshrl.u32 %v4753, 7
  %v4755 = vsub.s32 %v2168, %v4754
  %v4756 = vrot.slane %v4729, %v4755
  %v4757 = vlaneseq
  %v4758 = vshrl.u32 %v4757, 7
  %v4759 = vsub.s32 %v2168, %v4758
  %v4760 = vrot.slane %v4732, %v4759
  %v4761 = vlaneseq
  %v4762 = vshrl.u32 %v4761, 7
  %v4763 = vsub.s32 %v2168, %v4762
  %v4764 = vrot.slane %v4735, %v4763
  %v4765 = vlaneseq
  %v4766 = vshrl.u32 %v4765, 7
  %v4767 = vsub.s32 %v2168, %v4766
  %v4768 = vrot.slane %v4738, %v4767
  %v4769 = vlaneseq
  %v4770 = vshrl.u32 %v4769, 7
  %v4771 = vsub.s32 %v2168, %v4770
  %v4772 = vrot.slane %v4741, %v4771
  %v4773 = vlaneseq
  %v4774 = vshrl.u32 %v4773, 7
  %v4775 = vsub.s32 %v2168, %v4774
  %v4776 = vrot.slane %v4744, %v4775
  %v4777 = vsel %vm2425, %v4752, %v4748
  %v4778 = vsel %vm2427, %v4756, %v4777
  %v4779 = vsel %vm2429, %v4760, %v4778
  %v4780 = vsel %vm2431, %v4764, %v4779
  %v4781 = vsel %vm2433, %v4768, %v4780
  %v4782 = vsel %vm2435, %v4772, %v4781
  %v4783 = vsel %vm2437, %v4776, %v4782
  %v4785 = vsel %vm2496, %v31, 0
  %v4788 = vsel %vm2496, %v32, 0
  %v4790 = vsel %vm2496, %v4783, 0
  %4792 = vmatprep.subr.mxu0 0.0
  %4793 = vmatpush1.xpose.msra.mxu0 %v4790
  %4794 = vmatprep.subr.mxu0 0.0
  %4795 = vmatpush1.xpose.msra.mxu0 0.0
  %4796 = vmatprep.subr.mxu0 0.0
  %4797 = vmatpush1.xpose.msra.mxu0 0.0
  %4798 = vmatprep.subr.mxu0 0.0
  %4799 = vmatpush1.xpose.msra.mxu0 0.0
  %4800 = vmatprep.subr.mxu0 0.0
  %4801 = vmatpush1.xpose.msra.mxu0 0.0
  %4802 = vmatprep.subr.mxu0 0.0
  %4803 = vmatpush1.xpose.msra.mxu0 0.0
  %4804 = vmatprep.subr.mxu0 0.0
  %4805 = vmatpush1.xpose.msra.mxu0 0.0
  %4806 = vmatprep.subr.mxu0 0.0
  %4807 = vmatpush1.xpose.msra.mxu0 0.0
  %4808 = vmatprep.subr.mxu0 0.0
  %4809 = vmatpush1.xpose.msra.mxu0 0.0
  %4810 = vmatprep.subr.mxu0 0.0
  %4811 = vmatpush1.xpose.msra.mxu0 0.0
  %4812 = vmatprep.subr.mxu0 0.0
  %4813 = vmatpush1.xpose.msra.mxu0 0.0
  %4814 = vmatprep.subr.mxu0 0.0
  %4815 = vmatpush1.xpose.msra.mxu0 0.0
  %4816 = vmatprep.subr.mxu0 0.0
  %4817 = vmatpush1.xpose.msra.mxu0 0.0
  %4818 = vmatprep.subr.mxu0 0.0
  %4819 = vmatpush1.xpose.msra.mxu0 0.0
  %4820 = vmatprep.subr.mxu0 0.0
  %4821 = vmatpush1.xpose.msra.mxu0 0.0
  %4822 = vmatprep.subr.mxu0 0.0
  %4823 = vmatpush1.xpose.msra.mxu0 0.0
  %4824 = vmatprep.subr.mxu0 0.0
  %4825 = vmatpush1.xpose.msra.mxu0 0.0
  %4826 = vmatprep.subr.mxu0 0.0
  %4827 = vmatpush1.xpose.msra.mxu0 0.0
  %4828 = vmatprep.subr.mxu0 0.0
  %4829 = vmatpush1.xpose.msra.mxu0 0.0
  %4830 = vmatprep.subr.mxu0 0.0
  %4831 = vmatpush1.xpose.msra.mxu0 0.0
  %4832 = vmatprep.subr.mxu0 0.0
  %4833 = vmatpush1.xpose.msra.mxu0 0.0
  %4834 = vmatprep.subr.mxu0 0.0
  %4835 = vmatpush1.xpose.msra.mxu0 0.0
  %4836 = vmatprep.subr.mxu0 0.0
  %4837 = vmatpush1.xpose.msra.mxu0 0.0
  %4838 = vmatprep.subr.mxu0 0.0
  %4839 = vmatpush1.xpose.msra.mxu0 0.0
  %4840 = vmatprep.subr.mxu0 0.0
  %4841 = vmatpush1.xpose.msra.mxu0 0.0
  %4842 = vmatprep.subr.mxu0 0.0
  %4843 = vmatpush1.xpose.msra.mxu0 0.0
  %4844 = vmatprep.subr.mxu0 0.0
  %4845 = vmatpush1.xpose.msra.mxu0 0.0
  %4846 = vmatprep.subr.mxu0 0.0
  %4847 = vmatpush1.xpose.msra.mxu0 0.0
  %4848 = vmatprep.subr.mxu0 0.0
  %4849 = vmatpush1.xpose.msra.mxu0 0.0
  %4850 = vmatprep.subr.mxu0 0.0
  %4851 = vmatpush1.xpose.msra.mxu0 0.0
  %4852 = vmatprep.subr.mxu0 0.0
  %4853 = vmatpush1.xpose.msra.mxu0 0.0
  %4854 = vmatprep.subr.mxu0 0.0
  %4855 = vmatpush1.xpose.msra.mxu0 0.0
  %4856 = vmatprep.mubr.f32.mxu0 0.0
  %4857 = vmatmul.mubr.f32.gmra.mrb[0].mxu0 %v4785
  %v4858 = vpop.f32.mrb[0].mxu0
  %v4859 = vadd.f32 0.0, %v4858
  %v4860 = vpop.f32.mrb[0].mxu0
  %4861 = vmatprep.mubr.f32.mxu0 0.0
  %4862 = vmatmul.mubr.f32.gmra.mrb[0].mxu0 %v4788
  %v4863 = vpop.f32.mrb[0].mxu0
  %v4864 = vadd.f32 0.0, %v4863
  %v4865 = vpop.f32.mrb[0].mxu0
  %4866 = vdwg.mxu0
  %4875 = vset.pattern.permute.xlu0 0
  %4876 = vperm.xlu0 %4875, %v4050
  %v4877 = vpop.permute.xlu0 %4876
  %4878 = vset.pattern.permute.xlu0 0
  %4879 = vperm.xlu0 %4878, %v4052
  %v4880 = vpop.permute.xlu0 %4879
  %4881 = vset.pattern.permute.xlu0 0
  %4882 = vperm.xlu0 %4881, %v4054
  %v4883 = vpop.permute.xlu0 %4882
  %4884 = vset.pattern.permute.xlu0 0
  %4885 = vperm.xlu0 %4884, %v4056
  %v4886 = vpop.permute.xlu0 %4885
  %4887 = vset.pattern.permute.xlu0 0
  %4888 = vperm.xlu0 %4887, %v4058
  %v4889 = vpop.permute.xlu0 %4888
  %4890 = vset.pattern.permute.xlu0 0
  %4891 = vperm.xlu0 %4890, %v4060
  %v4892 = vpop.permute.xlu0 %4891
  %4893 = vset.pattern.permute.xlu0 0
  %4894 = vperm.xlu0 %4893, %v4062
  %v4895 = vpop.permute.xlu0 %4894
  %4896 = vset.pattern.permute.xlu0 0
  %4897 = vperm.xlu0 %4896, %v4064
  %v4898 = vpop.permute.xlu0 %4897
  %v4899 = vlaneseq
  %v4900 = vshrl.u32 %v4899, 7
  %v4901 = vsub.s32 %v2168, %v4900
  %v4902 = vrot.slane %v4877, %v4901
  %v4903 = vlaneseq
  %v4904 = vshrl.u32 %v4903, 7
  %v4905 = vsub.s32 %v2168, %v4904
  %v4906 = vrot.slane %v4880, %v4905
  %v4907 = vlaneseq
  %v4908 = vshrl.u32 %v4907, 7
  %v4909 = vsub.s32 %v2168, %v4908
  %v4910 = vrot.slane %v4883, %v4909
  %v4911 = vlaneseq
  %v4912 = vshrl.u32 %v4911, 7
  %v4913 = vsub.s32 %v2168, %v4912
  %v4914 = vrot.slane %v4886, %v4913
  %v4915 = vlaneseq
  %v4916 = vshrl.u32 %v4915, 7
  %v4917 = vsub.s32 %v2168, %v4916
  %v4918 = vrot.slane %v4889, %v4917
  %v4919 = vlaneseq
  %v4920 = vshrl.u32 %v4919, 7
  %v4921 = vsub.s32 %v2168, %v4920
  %v4922 = vrot.slane %v4892, %v4921
  %v4923 = vlaneseq
  %v4924 = vshrl.u32 %v4923, 7
  %v4925 = vsub.s32 %v2168, %v4924
  %v4926 = vrot.slane %v4895, %v4925
  %v4927 = vlaneseq
  %v4928 = vshrl.u32 %v4927, 7
  %v4929 = vsub.s32 %v2168, %v4928
  %v4930 = vrot.slane %v4898, %v4929
  %v4931 = vsel %vm2425, %v4906, %v4902
  %v4932 = vsel %vm2427, %v4910, %v4931
  %v4933 = vsel %vm2429, %v4914, %v4932
  %v4934 = vsel %vm2431, %v4918, %v4933
  %v4935 = vsel %vm2433, %v4922, %v4934
  %v4936 = vsel %vm2435, %v4926, %v4935
  %v4937 = vsel %vm2437, %v4930, %v4936
  %v4939 = vsel %vm2496, %v33, 0
  %v4942 = vsel %vm2496, %v34, 0
  %v4944 = vsel %vm2496, %v4937, 0
  %4946 = vmatprep.subr.mxu0 0.0
  %4947 = vmatpush1.xpose.msra.mxu0 %v4944
  %4948 = vmatprep.subr.mxu0 0.0
  %4949 = vmatpush1.xpose.msra.mxu0 0.0
  %4950 = vmatprep.subr.mxu0 0.0
  %4951 = vmatpush1.xpose.msra.mxu0 0.0
  %4952 = vmatprep.subr.mxu0 0.0
  %4953 = vmatpush1.xpose.msra.mxu0 0.0
  %4954 = vmatprep.subr.mxu0 0.0
  %4955 = vmatpush1.xpose.msra.mxu0 0.0
  %4956 = vmatprep.subr.mxu0 0.0
  %4957 = vmatpush1.xpose.msra.mxu0 0.0
  %4958 = vmatprep.subr.mxu0 0.0
  %4959 = vmatpush1.xpose.msra.mxu0 0.0
  %4960 = vmatprep.subr.mxu0 0.0
  %4961 = vmatpush1.xpose.msra.mxu0 0.0
  %4962 = vmatprep.subr.mxu0 0.0
  %4963 = vmatpush1.xpose.msra.mxu0 0.0
  %4964 = vmatprep.subr.mxu0 0.0
  %4965 = vmatpush1.xpose.msra.mxu0 0.0
  %4966 = vmatprep.subr.mxu0 0.0
  %4967 = vmatpush1.xpose.msra.mxu0 0.0
  %4968 = vmatprep.subr.mxu0 0.0
  %4969 = vmatpush1.xpose.msra.mxu0 0.0
  %4970 = vmatprep.subr.mxu0 0.0
  %4971 = vmatpush1.xpose.msra.mxu0 0.0
  %4972 = vmatprep.subr.mxu0 0.0
  %4973 = vmatpush1.xpose.msra.mxu0 0.0
  %4974 = vmatprep.subr.mxu0 0.0
  %4975 = vmatpush1.xpose.msra.mxu0 0.0
  %4976 = vmatprep.subr.mxu0 0.0
  %4977 = vmatpush1.xpose.msra.mxu0 0.0
  %4978 = vmatprep.subr.mxu0 0.0
  %4979 = vmatpush1.xpose.msra.mxu0 0.0
  %4980 = vmatprep.subr.mxu0 0.0
  %4981 = vmatpush1.xpose.msra.mxu0 0.0
  %4982 = vmatprep.subr.mxu0 0.0
  %4983 = vmatpush1.xpose.msra.mxu0 0.0
  %4984 = vmatprep.subr.mxu0 0.0
  %4985 = vmatpush1.xpose.msra.mxu0 0.0
  %4986 = vmatprep.subr.mxu0 0.0
  %4987 = vmatpush1.xpose.msra.mxu0 0.0
  %4988 = vmatprep.subr.mxu0 0.0
  %4989 = vmatpush1.xpose.msra.mxu0 0.0
  %4990 = vmatprep.subr.mxu0 0.0
  %4991 = vmatpush1.xpose.msra.mxu0 0.0
  %4992 = vmatprep.subr.mxu0 0.0
  %4993 = vmatpush1.xpose.msra.mxu0 0.0
  %4994 = vmatprep.subr.mxu0 0.0
  %4995 = vmatpush1.xpose.msra.mxu0 0.0
  %4996 = vmatprep.subr.mxu0 0.0
  %4997 = vmatpush1.xpose.msra.mxu0 0.0
  %4998 = vmatprep.subr.mxu0 0.0
  %4999 = vmatpush1.xpose.msra.mxu0 0.0
  %5000 = vmatprep.subr.mxu0 0.0
  %5001 = vmatpush1.xpose.msra.mxu0 0.0
  %5002 = vmatprep.subr.mxu0 0.0
  %5003 = vmatpush1.xpose.msra.mxu0 0.0
  %5004 = vmatprep.subr.mxu0 0.0
  %5005 = vmatpush1.xpose.msra.mxu0 0.0
  %5006 = vmatprep.subr.mxu0 0.0
  %5007 = vmatpush1.xpose.msra.mxu0 0.0
  %5008 = vmatprep.subr.mxu0 0.0
  %5009 = vmatpush1.xpose.msra.mxu0 0.0
  %5010 = vmatprep.mubr.f32.mxu0 0.0
  %5011 = vmatmul.mubr.f32.gmra.mrb[0].mxu0 %v4939
  %v5012 = vpop.f32.mrb[0].mxu0
  %v5013 = vadd.f32 0.0, %v5012
  %v5014 = vpop.f32.mrb[0].mxu0
  %5015 = vmatprep.mubr.f32.mxu0 0.0
  %5016 = vmatmul.mubr.f32.gmra.mrb[0].mxu0 %v4942
  %v5017 = vpop.f32.mrb[0].mxu0
  %v5018 = vadd.f32 0.0, %v5017
  %v5019 = vpop.f32.mrb[0].mxu0
  %5020 = vdwg.mxu0
  %5029 = vset.pattern.permute.xlu0 0
  %5030 = vperm.xlu0 %5029, %v4066
  %v5031 = vpop.permute.xlu0 %5030
  %5032 = vset.pattern.permute.xlu0 0
  %5033 = vperm.xlu0 %5032, %v4068
  %v5034 = vpop.permute.xlu0 %5033
  %5035 = vset.pattern.permute.xlu0 0
  %5036 = vperm.xlu0 %5035, %v4070
  %v5037 = vpop.permute.xlu0 %5036
  %5038 = vset.pattern.permute.xlu0 0
  %5039 = vperm.xlu0 %5038, %v4072
  %v5040 = vpop.permute.xlu0 %5039
  %5041 = vset.pattern.permute.xlu0 0
  %5042 = vperm.xlu0 %5041, %v4074
  %v5043 = vpop.permute.xlu0 %5042
  %5044 = vset.pattern.permute.xlu0 0
  %5045 = vperm.xlu0 %5044, %v4076
  %v5046 = vpop.permute.xlu0 %5045
  %5047 = vset.pattern.permute.xlu0 0
  %5048 = vperm.xlu0 %5047, %v4078
  %v5049 = vpop.permute.xlu0 %5048
  %5050 = vset.pattern.permute.xlu0 0
  %5051 = vperm.xlu0 %5050, %v4080
  %v5052 = vpop.permute.xlu0 %5051
  %v5053 = vlaneseq
  %v5054 = vshrl.u32 %v5053, 7
  %v5055 = vsub.s32 %v2168, %v5054
  %v5056 = vrot.slane %v5031, %v5055
  %v5057 = vlaneseq
  %v5058 = vshrl.u32 %v5057, 7
  %v5059 = vsub.s32 %v2168, %v5058
  %v5060 = vrot.slane %v5034, %v5059
  %v5061 = vlaneseq
  %v5062 = vshrl.u32 %v5061, 7
  %v5063 = vsub.s32 %v2168, %v5062
  %v5064 = vrot.slane %v5037, %v5063
  %v5065 = vlaneseq
  %v5066 = vshrl.u32 %v5065, 7
  %v5067 = vsub.s32 %v2168, %v5066
  %v5068 = vrot.slane %v5040, %v5067
  %v5069 = vlaneseq
  %v5070 = vshrl.u32 %v5069, 7
  %v5071 = vsub.s32 %v2168, %v5070
  %v5072 = vrot.slane %v5043, %v5071
  %v5073 = vlaneseq
  %v5074 = vshrl.u32 %v5073, 7
  %v5075 = vsub.s32 %v2168, %v5074
  %v5076 = vrot.slane %v5046, %v5075
  %v5077 = vlaneseq
  %v5078 = vshrl.u32 %v5077, 7
  %v5079 = vsub.s32 %v2168, %v5078
  %v5080 = vrot.slane %v5049, %v5079
  %v5081 = vlaneseq
  %v5082 = vshrl.u32 %v5081, 7
  %v5083 = vsub.s32 %v2168, %v5082
  %v5084 = vrot.slane %v5052, %v5083
  %v5085 = vsel %vm2425, %v5060, %v5056
  %v5086 = vsel %vm2427, %v5064, %v5085
  %v5087 = vsel %vm2429, %v5068, %v5086
  %v5088 = vsel %vm2431, %v5072, %v5087
  %v5089 = vsel %vm2433, %v5076, %v5088
  %v5090 = vsel %vm2435, %v5080, %v5089
  %v5091 = vsel %vm2437, %v5084, %v5090
  %v5093 = vsel %vm2496, %v35, 0
  %v5096 = vsel %vm2496, %v36, 0
  %v5098 = vsel %vm2496, %v5091, 0
  %5100 = vmatprep.subr.mxu0 0.0
  %5101 = vmatpush1.xpose.msra.mxu0 %v5098
  %5102 = vmatprep.subr.mxu0 0.0
  %5103 = vmatpush1.xpose.msra.mxu0 0.0
  %5104 = vmatprep.subr.mxu0 0.0
  %5105 = vmatpush1.xpose.msra.mxu0 0.0
  %5106 = vmatprep.subr.mxu0 0.0
  %5107 = vmatpush1.xpose.msra.mxu0 0.0
  %5108 = vmatprep.subr.mxu0 0.0
  %5109 = vmatpush1.xpose.msra.mxu0 0.0
  %5110 = vmatprep.subr.mxu0 0.0
  %5111 = vmatpush1.xpose.msra.mxu0 0.0
  %5112 = vmatprep.subr.mxu0 0.0
  %5113 = vmatpush1.xpose.msra.mxu0 0.0
  %5114 = vmatprep.subr.mxu0 0.0
  %5115 = vmatpush1.xpose.msra.mxu0 0.0
  %5116 = vmatprep.subr.mxu0 0.0
  %5117 = vmatpush1.xpose.msra.mxu0 0.0
  %5118 = vmatprep.subr.mxu0 0.0
  %5119 = vmatpush1.xpose.msra.mxu0 0.0
  %5120 = vmatprep.subr.mxu0 0.0
  %5121 = vmatpush1.xpose.msra.mxu0 0.0
  %5122 = vmatprep.subr.mxu0 0.0
  %5123 = vmatpush1.xpose.msra.mxu0 0.0
  %5124 = vmatprep.subr.mxu0 0.0
  %5125 = vmatpush1.xpose.msra.mxu0 0.0
  %5126 = vmatprep.subr.mxu0 0.0
  %5127 = vmatpush1.xpose.msra.mxu0 0.0
  %5128 = vmatprep.subr.mxu0 0.0
  %5129 = vmatpush1.xpose.msra.mxu0 0.0
  %5130 = vmatprep.subr.mxu0 0.0
  %5131 = vmatpush1.xpose.msra.mxu0 0.0
  %5132 = vmatprep.subr.mxu0 0.0
  %5133 = vmatpush1.xpose.msra.mxu0 0.0
  %5134 = vmatprep.subr.mxu0 0.0
  %5135 = vmatpush1.xpose.msra.mxu0 0.0
  %5136 = vmatprep.subr.mxu0 0.0
  %5137 = vmatpush1.xpose.msra.mxu0 0.0
  %5138 = vmatprep.subr.mxu0 0.0
  %5139 = vmatpush1.xpose.msra.mxu0 0.0
  %5140 = vmatprep.subr.mxu0 0.0
  %5141 = vmatpush1.xpose.msra.mxu0 0.0
  %5142 = vmatprep.subr.mxu0 0.0
  %5143 = vmatpush1.xpose.msra.mxu0 0.0
  %5144 = vmatprep.subr.mxu0 0.0
  %5145 = vmatpush1.xpose.msra.mxu0 0.0
  %5146 = vmatprep.subr.mxu0 0.0
  %5147 = vmatpush1.xpose.msra.mxu0 0.0
  %5148 = vmatprep.subr.mxu0 0.0
  %5149 = vmatpush1.xpose.msra.mxu0 0.0
  %5150 = vmatprep.subr.mxu0 0.0
  %5151 = vmatpush1.xpose.msra.mxu0 0.0
  %5152 = vmatprep.subr.mxu0 0.0
  %5153 = vmatpush1.xpose.msra.mxu0 0.0
  %5154 = vmatprep.subr.mxu0 0.0
  %5155 = vmatpush1.xpose.msra.mxu0 0.0
  %5156 = vmatprep.subr.mxu0 0.0
  %5157 = vmatpush1.xpose.msra.mxu0 0.0
  %5158 = vmatprep.subr.mxu0 0.0
  %5159 = vmatpush1.xpose.msra.mxu0 0.0
  %5160 = vmatprep.subr.mxu0 0.0
  %5161 = vmatpush1.xpose.msra.mxu0 0.0
  %5162 = vmatprep.subr.mxu0 0.0
  %5163 = vmatpush1.xpose.msra.mxu0 0.0
  %5164 = vmatprep.mubr.f32.mxu0 0.0
  %5165 = vmatmul.mubr.f32.gmra.mrb[0].mxu0 %v5093
  %v5166 = vpop.f32.mrb[0].mxu0
  %v5167 = vadd.f32 0.0, %v5166
  %v5168 = vpop.f32.mrb[0].mxu0
  %5169 = vmatprep.mubr.f32.mxu0 0.0
  %5170 = vmatmul.mubr.f32.gmra.mrb[0].mxu0 %v5096
  %v5171 = vpop.f32.mrb[0].mxu0
  %v5172 = vadd.f32 0.0, %v5171
  %v5173 = vpop.f32.mrb[0].mxu0
  %5174 = vdwg.mxu0
  %5183 = vset.pattern.permute.xlu0 0
  %5184 = vperm.xlu0 %5183, %v4082
  %v5185 = vpop.permute.xlu0 %5184
  %5186 = vset.pattern.permute.xlu0 0
  %5187 = vperm.xlu0 %5186, %v4084
  %v5188 = vpop.permute.xlu0 %5187
  %5189 = vset.pattern.permute.xlu0 0
  %5190 = vperm.xlu0 %5189, %v4086
  %v5191 = vpop.permute.xlu0 %5190
  %5192 = vset.pattern.permute.xlu0 0
  %5193 = vperm.xlu0 %5192, %v4088
  %v5194 = vpop.permute.xlu0 %5193
  %5195 = vset.pattern.permute.xlu0 0
  %5196 = vperm.xlu0 %5195, %v4090
  %v5197 = vpop.permute.xlu0 %5196
  %5198 = vset.pattern.permute.xlu0 0
  %5199 = vperm.xlu0 %5198, %v4092
  %v5200 = vpop.permute.xlu0 %5199
  %5201 = vset.pattern.permute.xlu0 0
  %5202 = vperm.xlu0 %5201, %v4094
  %v5203 = vpop.permute.xlu0 %5202
  %5204 = vset.pattern.permute.xlu0 0
  %5205 = vperm.xlu0 %5204, %v4096
  %v5206 = vpop.permute.xlu0 %5205
  %v5207 = vlaneseq
  %v5208 = vshrl.u32 %v5207, 7
  %v5209 = vsub.s32 %v2168, %v5208
  %v5210 = vrot.slane %v5185, %v5209
  %v5211 = vlaneseq
  %v5212 = vshrl.u32 %v5211, 7
  %v5213 = vsub.s32 %v2168, %v5212
  %v5214 = vrot.slane %v5188, %v5213
  %v5215 = vlaneseq
  %v5216 = vshrl.u32 %v5215, 7
  %v5217 = vsub.s32 %v2168, %v5216
  %v5218 = vrot.slane %v5191, %v5217
  %v5219 = vlaneseq
  %v5220 = vshrl.u32 %v5219, 7
  %v5221 = vsub.s32 %v2168, %v5220
  %v5222 = vrot.slane %v5194, %v5221
  %v5223 = vlaneseq
  %v5224 = vshrl.u32 %v5223, 7
  %v5225 = vsub.s32 %v2168, %v5224
  %v5226 = vrot.slane %v5197, %v5225
  %v5227 = vlaneseq
  %v5228 = vshrl.u32 %v5227, 7
  %v5229 = vsub.s32 %v2168, %v5228
  %v5230 = vrot.slane %v5200, %v5229
  %v5231 = vlaneseq
  %v5232 = vshrl.u32 %v5231, 7
  %v5233 = vsub.s32 %v2168, %v5232
  %v5234 = vrot.slane %v5203, %v5233
  %v5235 = vlaneseq
  %v5236 = vshrl.u32 %v5235, 7
  %v5237 = vsub.s32 %v2168, %v5236
  %v5238 = vrot.slane %v5206, %v5237
  %v5239 = vsel %vm2425, %v5214, %v5210
  %v5240 = vsel %vm2427, %v5218, %v5239
  %v5241 = vsel %vm2429, %v5222, %v5240
  %v5242 = vsel %vm2431, %v5226, %v5241
  %v5243 = vsel %vm2433, %v5230, %v5242
  %v5244 = vsel %vm2435, %v5234, %v5243
  %v5245 = vsel %vm2437, %v5238, %v5244
  %v5247 = vsel %vm2496, %v37, 0
  %v5250 = vsel %vm2496, %v38, 0
  %v5252 = vsel %vm2496, %v5245, 0
  %5254 = vmatprep.subr.mxu0 0.0
  %5255 = vmatpush1.xpose.msra.mxu0 %v5252
  %5256 = vmatprep.subr.mxu0 0.0
  %5257 = vmatpush1.xpose.msra.mxu0 0.0
  %5258 = vmatprep.subr.mxu0 0.0
  %5259 = vmatpush1.xpose.msra.mxu0 0.0
  %5260 = vmatprep.subr.mxu0 0.0
  %5261 = vmatpush1.xpose.msra.mxu0 0.0
  %5262 = vmatprep.subr.mxu0 0.0
  %5263 = vmatpush1.xpose.msra.mxu0 0.0
  %5264 = vmatprep.subr.mxu0 0.0
  %5265 = vmatpush1.xpose.msra.mxu0 0.0
  %5266 = vmatprep.subr.mxu0 0.0
  %5267 = vmatpush1.xpose.msra.mxu0 0.0
  %5268 = vmatprep.subr.mxu0 0.0
  %5269 = vmatpush1.xpose.msra.mxu0 0.0
  %5270 = vmatprep.subr.mxu0 0.0
  %5271 = vmatpush1.xpose.msra.mxu0 0.0
  %5272 = vmatprep.subr.mxu0 0.0
  %5273 = vmatpush1.xpose.msra.mxu0 0.0
  %5274 = vmatprep.subr.mxu0 0.0
  %5275 = vmatpush1.xpose.msra.mxu0 0.0
  %5276 = vmatprep.subr.mxu0 0.0
  %5277 = vmatpush1.xpose.msra.mxu0 0.0
  %5278 = vmatprep.subr.mxu0 0.0
  %5279 = vmatpush1.xpose.msra.mxu0 0.0
  %5280 = vmatprep.subr.mxu0 0.0
  %5281 = vmatpush1.xpose.msra.mxu0 0.0
  %5282 = vmatprep.subr.mxu0 0.0
  %5283 = vmatpush1.xpose.msra.mxu0 0.0
  %5284 = vmatprep.subr.mxu0 0.0
  %5285 = vmatpush1.xpose.msra.mxu0 0.0
  %5286 = vmatprep.subr.mxu0 0.0
  %5287 = vmatpush1.xpose.msra.mxu0 0.0
  %5288 = vmatprep.subr.mxu0 0.0
  %5289 = vmatpush1.xpose.msra.mxu0 0.0
  %5290 = vmatprep.subr.mxu0 0.0
  %5291 = vmatpush1.xpose.msra.mxu0 0.0
  %5292 = vmatprep.subr.mxu0 0.0
  %5293 = vmatpush1.xpose.msra.mxu0 0.0
  %5294 = vmatprep.subr.mxu0 0.0
  %5295 = vmatpush1.xpose.msra.mxu0 0.0
  %5296 = vmatprep.subr.mxu0 0.0
  %5297 = vmatpush1.xpose.msra.mxu0 0.0
  %5298 = vmatprep.subr.mxu0 0.0
  %5299 = vmatpush1.xpose.msra.mxu0 0.0
  %5300 = vmatprep.subr.mxu0 0.0
  %5301 = vmatpush1.xpose.msra.mxu0 0.0
  %5302 = vmatprep.subr.mxu0 0.0
  %5303 = vmatpush1.xpose.msra.mxu0 0.0
  %5304 = vmatprep.subr.mxu0 0.0
  %5305 = vmatpush1.xpose.msra.mxu0 0.0
  %5306 = vmatprep.subr.mxu0 0.0
  %5307 = vmatpush1.xpose.msra.mxu0 0.0
  %5308 = vmatprep.subr.mxu0 0.0
  %5309 = vmatpush1.xpose.msra.mxu0 0.0
  %5310 = vmatprep.subr.mxu0 0.0
  %5311 = vmatpush1.xpose.msra.mxu0 0.0
  %5312 = vmatprep.subr.mxu0 0.0
  %5313 = vmatpush1.xpose.msra.mxu0 0.0
  %5314 = vmatprep.subr.mxu0 0.0
  %5315 = vmatpush1.xpose.msra.mxu0 0.0
  %5316 = vmatprep.subr.mxu0 0.0
  %5317 = vmatpush1.xpose.msra.mxu0 0.0
  %5318 = vmatprep.mubr.f32.mxu0 0.0
  %5319 = vmatmul.mubr.f32.gmra.mrb[0].mxu0 %v5247
  %v5320 = vpop.f32.mrb[0].mxu0
  %v5321 = vadd.f32 0.0, %v5320
  %v5322 = vpop.f32.mrb[0].mxu0
  %5323 = vmatprep.mubr.f32.mxu0 0.0
  %5324 = vmatmul.mubr.f32.gmra.mrb[0].mxu0 %v5250
  %v5325 = vpop.f32.mrb[0].mxu0
  %v5326 = vadd.f32 0.0, %v5325
  %v5327 = vpop.f32.mrb[0].mxu0
  %5328 = vdwg.mxu0
  %v5329 = vsub.f32 0.0, %v4243
  %v5330 = vsub.f32 0.0, %v4248
  %v5331 = vsub.f32 0.0, %v4397
  %v5332 = vsub.f32 0.0, %v4402
  %v5333 = vsub.f32 0.0, %v4551
  %v5334 = vsub.f32 0.0, %v4556
  %v5335 = vsub.f32 0.0, %v4705
  %v5336 = vsub.f32 0.0, %v4710
  %v5337 = vsub.f32 0.0, %v4859
  %v5338 = vsub.f32 0.0, %v4864
  %v5339 = vsub.f32 0.0, %v5013
  %v5340 = vsub.f32 0.0, %v5018
  %v5341 = vsub.f32 0.0, %v5167
  %v5342 = vsub.f32 0.0, %v5172
  %v5343 = vsub.f32 0.0, %v5321
  %v5344 = vsub.f32 0.0, %v5326
  %v5345 = vmul.f32 %v5329, 1.442695
  %v5346 = vpow.pop %v5345
  %v5347 = vmul.f32 %v5330, 1.442695
  %v5348 = vpow.pop %v5347
  %v5349 = vmul.f32 %v5331, 1.442695
  %v5350 = vpow.pop %v5349
  %v5351 = vmul.f32 %v5332, 1.442695
  %v5352 = vpow.pop %v5351
  %v5353 = vmul.f32 %v5333, 1.442695
  %v5354 = vpow.pop %v5353
  %v5355 = vmul.f32 %v5334, 1.442695
  %v5356 = vpow.pop %v5355
  %v5357 = vmul.f32 %v5335, 1.442695
  %v5358 = vpow.pop %v5357
  %v5359 = vmul.f32 %v5336, 1.442695
  %v5360 = vpow.pop %v5359
  %v5361 = vmul.f32 %v5337, 1.442695
  %v5362 = vpow.pop %v5361
  %v5363 = vmul.f32 %v5338, 1.442695
  %v5364 = vpow.pop %v5363
  %v5365 = vmul.f32 %v5339, 1.442695
  %v5366 = vpow.pop %v5365
  %v5367 = vmul.f32 %v5340, 1.442695
  %v5368 = vpow.pop %v5367
  %v5369 = vmul.f32 %v5341, 1.442695
  %v5370 = vpow.pop %v5369
  %v5371 = vmul.f32 %v5342, 1.442695
  %v5372 = vpow.pop %v5371
  %v5373 = vmul.f32 %v5343, 1.442695
  %v5374 = vpow.pop %v5373
  %v5375 = vmul.f32 %v5344, 1.442695
  %v5376 = vpow.pop %v5375
  %v5377 = vadd.f32 %v5346, 1.0
  %v5378 = vadd.f32 %v5348, 1.0
  %v5379 = vadd.f32 %v5350, 1.0
  %v5380 = vadd.f32 %v5352, 1.0
  %v5381 = vadd.f32 %v5354, 1.0
  %v5382 = vadd.f32 %v5356, 1.0
  %v5383 = vadd.f32 %v5358, 1.0
  %v5384 = vadd.f32 %v5360, 1.0
  %v5385 = vadd.f32 %v5362, 1.0
  %v5386 = vadd.f32 %v5364, 1.0
  %v5387 = vadd.f32 %v5366, 1.0
  %v5388 = vadd.f32 %v5368, 1.0
  %v5389 = vadd.f32 %v5370, 1.0
  %v5390 = vadd.f32 %v5372, 1.0
  %v5391 = vadd.f32 %v5374, 1.0
  %v5392 = vadd.f32 %v5376, 1.0
  %v5393 = vrcp.pop %v5377
  %v5394 = vmul.f32 1.0, %v5393
  %v5395 = vrcp.pop %v5378
  %v5396 = vmul.f32 1.0, %v5395
  %v5397 = vrcp.pop %v5379
  %v5398 = vmul.f32 1.0, %v5397
  %v5399 = vrcp.pop %v5380
  %v5400 = vmul.f32 1.0, %v5399
  %v5401 = vrcp.pop %v5381
  %v5402 = vmul.f32 1.0, %v5401
  %v5403 = vrcp.pop %v5382
  %v5404 = vmul.f32 1.0, %v5403
  %v5405 = vrcp.pop %v5383
  %v5406 = vmul.f32 1.0, %v5405
  %v5407 = vrcp.pop %v5384
  %v5408 = vmul.f32 1.0, %v5407
  %v5409 = vrcp.pop %v5385
  %v5410 = vmul.f32 1.0, %v5409
  %v5411 = vrcp.pop %v5386
  %v5412 = vmul.f32 1.0, %v5411
  %v5413 = vrcp.pop %v5387
  %v5414 = vmul.f32 1.0, %v5413
  %v5415 = vrcp.pop %v5388
  %v5416 = vmul.f32 1.0, %v5415
  %v5417 = vrcp.pop %v5389
  %v5418 = vmul.f32 1.0, %v5417
  %v5419 = vrcp.pop %v5390
  %v5420 = vmul.f32 1.0, %v5419
  %v5421 = vrcp.pop %v5391
  %v5422 = vmul.f32 1.0, %v5421
  %v5423 = vrcp.pop %v5392
  %v5424 = vmul.f32 1.0, %v5423
  %5425 = vst.msk [vmem:[%s6] sm:$0xff] %vm2496, %v5394
  %5426 = vst.msk [vmem:[%s6 + $0x8] sm:$0xff] %vm2496, %v5396
  %5427 = vst.msk [vmem:[%s6 + $0x10] sm:$0xff] %vm2496, %v5398
  %5428 = vst.msk [vmem:[%s6 + $0x18] sm:$0xff] %vm2496, %v5400
  %5429 = vst.msk [vmem:[%s6 + $0x20] sm:$0xff] %vm2496, %v5402
  %5430 = vst.msk [vmem:[%s6 + $0x28] sm:$0xff] %vm2496, %v5404
  %5431 = vst.msk [vmem:[%s6 + $0x30] sm:$0xff] %vm2496, %v5406
  %5432 = vst.msk [vmem:[%s6 + $0x38] sm:$0xff] %vm2496, %v5408
  %5433 = vst.msk [vmem:[%s6 + $0x40] sm:$0xff] %vm2496, %v5410
  %5434 = vst.msk [vmem:[%s6 + $0x48] sm:$0xff] %vm2496, %v5412
  %5435 = vst.msk [vmem:[%s6 + $0x50] sm:$0xff] %vm2496, %v5414
  %5436 = vst.msk [vmem:[%s6 + $0x58] sm:$0xff] %vm2496, %v5416
  %5437 = vst.msk [vmem:[%s6 + $0x60] sm:$0xff] %vm2496, %v5418
  %5438 = vst.msk [vmem:[%s6 + $0x68] sm:$0xff] %vm2496, %v5420
  %5439 = vst.msk [vmem:[%s6 + $0x70] sm:$0xff] %vm2496, %v5422
  %5440 = vst.msk [vmem:[%s6 + $0x78] sm:$0xff] %vm2496, %v5424
  // Predicated region
  $region26: #{tpu_custom_call.1} parent=0 // pred_check
    _
  $region27: #{tpu_custom_call.1} parent=0 // pred_check_branch
    %5442 = sbr.rel (0) target = $region29
  $region28: #{tpu_custom_call.1} parent=0 // pred_region
    _
  $region29: #{tpu_custom_call.1} parent=0 // pred_fallthru
    _
  // Predicated region
  $region30: #{tpu_custom_call.1} parent=0 // pred_check
    _
  $region31: #{tpu_custom_call.1} parent=0 // pred_check_branch
    %5444 = sbr.rel (0) target = $region33
  $region32: #{tpu_custom_call.1} parent=0 // pred_region
    _
  $region33: #{tpu_custom_call.1} parent=0 // pred_fallthru
    _

</llo_original>
